<compile_context>
chip_gen: v7x
topology: tpu7x:2x2x1
jax: 0.10.0
libtpu: 0.0.40
codegen_flags: <defaults>
</compile_context>

<pallas_src>
import jax
import jax.numpy as jnp
from jax.experimental import pallas as pl
from jax.experimental.pallas import tpu as pltpu

_LANE, _SUB = 128, 8


# ----------------------------------------------------------------------------- kernel

def _lstm_regressor_kernel(
    x_ref,      # (TB, BT, Ip)     bf16  time-major chunk of x
    wih0_ref,   # (Ip, 4*Hp)       bf16  layer-0 input weights (gate-padded cols)
    whh0_ref,   # (Hp, 4*Hp)       bf16  layer-0 recurrent weights
    b0_ref,     # (1, 4*Hp)        f32   b_ih_l0 + b_hh_l0
    w1_ref,     # (2*Hp, 4*Hp)     bf16  fused [Wih1; Whh1]
    b1_ref,     # (1, 4*Hp)        f32   b_ih_l1 + b_hh_l1
    wfc_ref,    # (1, Hp)          f32   fc weight row
    bfc_ref,    # (1, 1)           f32
    out_ref,    # (BT, 1)          f32   resident across the time axis
    xg_ref,     # (TB, BT, 4*Hp)   f32   hoisted layer-0 input projection (+bias)
    hh_ref,     # (BT, 2*Hp)       bf16  persistent [h0 | h1] bf16 shadow
    c0_ref, c1_ref, h1_ref,        # (BT, Hp) f32 carried state
):
    t_chunk = pl.program_id(1)
    n_chunks = pl.num_programs(1)
    tb, bt, ip = x_ref.shape
    hp = c0_ref.shape[1]

    @pl.when(t_chunk == 0)
    def _init():
        hh_ref[...] = jnp.zeros_like(hh_ref)
        c0_ref[...] = jnp.zeros_like(c0_ref)
        c1_ref[...] = jnp.zeros_like(c1_ref)
        h1_ref[...] = jnp.zeros_like(h1_ref)

    # ---- Hoisted layer-0 input projection: one large-M MXU matmul per chunk, off the
    # serial dependency chain, bias folded in, written time-major so the inner loop
    # reads xg_ref[tt] with a cheap leading-dim index. (BT is a multiple of 8, so the
    # (TB, BT) -> TB*BT sublane collapse is layout-compatible.)
    x_flat = x_ref[...].reshape(tb * bt, ip)
    xg = jnp.dot(x_flat, wih0_ref[...], preferred_element_type=jnp.float32) + b0_ref[...]
    xg_ref[...] = xg.reshape(tb, bt, 4 * hp)

    def step(tt, carry):
        # ---- layer 0: gates = xg[tt] + h0 @ Whh0  (K = Hp only, no concat/cast) ----
        g0 = xg_ref[tt] + jnp.dot(hh_ref[:, :hp], whh0_ref[...],
                                  preferred_element_type=jnp.float32)
        # PyTorch gate order [i, f, g, o]; each slice is a whole 128-lane block.
        i0 = jax.nn.sigmoid(g0[:, 0 * hp:1 * hp])
        f0 = jax.nn.sigmoid(g0[:, 1 * hp:2 * hp])
        gg0 = jnp.tanh(g0[:, 2 * hp:3 * hp])
        o0 = jax.nn.sigmoid(g0[:, 3 * hp:4 * hp])
        c0 = f0 * c0_ref[...] + i0 * gg0
        h0 = o0 * jnp.tanh(c0)
        c0_ref[...] = c0
        hh_ref[:, :hp] = h0.astype(jnp.bfloat16)        # in-place, no concatenate

        # ---- layer 1: gates = [h0 | h1] @ [Wih1; Whh1] + b1 (single K = 2*Hp pass) --
        g1 = jnp.dot(hh_ref[...], w1_ref[...],
                     preferred_element_type=jnp.float32) + b1_ref[...]
        i1 = jax.nn.sigmoid(g1[:, 0 * hp:1 * hp])
        f1 = jax.nn.sigmoid(g1[:, 1 * hp:2 * hp])
        gg1 = jnp.tanh(g1[:, 2 * hp:3 * hp])
        o1 = jax.nn.sigmoid(g1[:, 3 * hp:4 * hp])
        c1 = f1 * c1_ref[...] + i1 * gg1
        h1 = o1 * jnp.tanh(c1)
        c1_ref[...] = c1
        h1_ref[...] = h1
        hh_ref[:, hp:] = h1.astype(jnp.bfloat16)
        return carry

    # fori_loop (not a static Python unroll) bounds vreg live ranges / compile time.
    unroll = True if tb <= 16 else 8
    jax.lax.fori_loop(0, tb, step, 0, unroll=unroll)

    @pl.when(t_chunk == n_chunks - 1)
    def _finalize():
        # fc(hidden -> 1) as a VPU multiply + lane reduction (avoids an N=1 MXU matmul).
        out_ref[...] = (
            jnp.sum(h1_ref[...] * wfc_ref[...], axis=-1, keepdims=True) + bfc_ref[...]
        )


# ----------------------------------------------------------------------------- helpers

def _round_up(n, m):
    return ((n + m - 1) // m) * m


def _vmem_capacity_bytes():
    try:
        cap = int(pltpu.get_tpu_info().vmem_capacity_bytes)
        if cap > 0:
            return cap
    except Exception:
        pass
    return 64 * 1024 * 1024          # conservative default (v7x-sized)


def _num_tensorcores():
    try:
        info = pltpu.get_tpu_info()
        for name in ("num_cores", "core_count", "num_tensorcores", "tensorcores_per_chip"):
            v = getattr(info, name, None)
            if v is None:
                continue
            try:
                v = int(v)
            except (TypeError, ValueError):
                continue
            if v > 0:
                return v
    except Exception:
        pass
    return 1


# ----------------------------------------------------------------------------- wrapper

def lstm_regressor_pallas(x, params, *, max_t_block=64):
    """x: (B, S, I) float32 batch_first; params in PyTorch layout. Returns (B, 1) f32."""
    B, S, I = x.shape
    H = params["w_hh_l0"].shape[1]
    Hp = _round_up(H, _LANE)
    Ip = _round_up(I, _LANE)
    Bp = _round_up(B, _SUB)

    # ---- weight prep (transpose / gate-pad / fuse / bf16). The wrapper is jitted, so
    # this fuses into the compiled program and is cached per shape (not per call). ----
    def gate_pad_cols(w_t):   # (in, 4H) -> (in, 4Hp): pad each gate block to Hp lanes
        return jnp.concatenate(
            [jnp.pad(w_t[:, g * H:(g + 1) * H], ((0, 0), (0, Hp - H))) for g in range(4)],
            axis=1)

    def gate_pad_bias(b):     # (4H,) -> (1, 4Hp)
        return jnp.concatenate(
            [jnp.pad(b[g * H:(g + 1) * H], (0, Hp - H)) for g in range(4)]
        ).reshape(1, 4 * Hp)

    wih0 = jnp.pad(gate_pad_cols(params["w_ih_l0"].T),
                   ((0, Ip - I), (0, 0))).astype(jnp.bfloat16)           # (Ip, 4Hp)
    whh0 = jnp.pad(gate_pad_cols(params["w_hh_l0"].T),
                   ((0, Hp - H), (0, 0))).astype(jnp.bfloat16)           # (Hp, 4Hp)
    b0 = gate_pad_bias(params["b_ih_l0"] + params["b_hh_l0"])            # (1, 4Hp) f32
    w1 = jnp.concatenate(
        [jnp.pad(gate_pad_cols(params["w_ih_l1"].T), ((0, Hp - H), (0, 0))),
         jnp.pad(gate_pad_cols(params["w_hh_l1"].T), ((0, Hp - H), (0, 0)))],
        axis=0).astype(jnp.bfloat16)                                      # (2Hp, 4Hp)
    b1 = gate_pad_bias(params["b_ih_l1"] + params["b_hh_l1"])            # (1, 4Hp) f32
    wfc = jnp.pad(params["fc_w"], ((0, 0), (0, Hp - H)))                 # (1, Hp)  f32
    bfc = params["fc_b"].reshape(1, 1)                                   # (1, 1)   f32

    # ---- tiling ----
    vmem_cap = _vmem_capacity_bytes()
    n_cores = _num_tensorcores()

    # Batch tile: largest multiple-of-8 divisor of Bp up to 128 sublanes (fills MXU M);
    # on multi-TensorCore chips (v7x) keep >= 2 tiles so both cores get work.
    bt_cands = [d for d in range(_SUB, min(Bp, 128) + 1, _SUB) if Bp % d == 0]
    BT = max(bt_cands)
    if n_cores >= 2 and Bp >= 2 * _SUB:
        two = [d for d in bt_cands if Bp // d >= 2]
        if two:
            BT = max(two)

    weight_bytes = 2 * (wih0.size + whh0.size + w1.size)                 # bf16 bytes
    single_buffer_weights = weight_bytes > (8 << 20)   # only matters at large H (v7x)
    eff_weight_bytes = weight_bytes * (1 if single_buffer_weights else 2)
    fixed_bytes = (eff_weight_bytes
                   + BT * 2 * Hp * 2 + 3 * BT * Hp * 4                   # hh + c0/c1/h1
                   + 2 * (2 * 4 * Hp * 4 + Hp * 4 + 4)                   # biases / fc
                   + 2 * BT * 4)                                         # output block

    def chunk_bytes(tb):
        return 2 * tb * BT * Ip * 2 + tb * BT * 4 * Hp * 4   # 2x x-chunk bf16 + xg f32

    # Time block: largest divisor of S (<= max_t_block) whose footprint fits the budget.
    budget = int(0.6 * vmem_cap)
    TB = 1
    for d in sorted((d for d in range(1, min(S, max_t_block) + 1) if S % d == 0),
                    reverse=True):
        if fixed_bytes + chunk_bytes(d) <= budget:
            TB = d
            break
    nb, nt = Bp // BT, S // TB

    footprint = fixed_bytes + chunk_bytes(TB)
    vmem_limit = int(min(max(int(footprint * 1.5) + (8 << 20), 32 << 20),
                         int(0.85 * vmem_cap)))

    # x: time-major (S, Bp, Ip) bf16 so the hoisted projection result can be written
    # time-major and the inner loop indexes it on the leading dim (jit fuses this pad).
    x_p = jnp.pad(jnp.transpose(x, (1, 0, 2)),
                  ((0, 0), (0, Bp - B), (0, Ip - I))).astype(jnp.bfloat16)

    const2 = lambda b, t: (0, 0)
    # Constant-index weight specs: single-buffer only when large enough to matter for
    # VMEM (v7x 64 MiB); at small H the default double-buffering is harmless.
    wmode = {"pipeline_mode": pl.Buffered(1)} if single_buffer_weights else {}

    out = pl.pallas_call(
        _lstm_regressor_kernel,
        out_shape=jax.ShapeDtypeStruct((Bp, 1), jnp.float32),
        grid=(nb, nt),
        in_specs=[
            pl.BlockSpec((TB, BT, Ip), lambda b, t: (t, b, 0)),
            pl.BlockSpec(wih0.shape, const2, **wmode),
            pl.BlockSpec(whh0.shape, const2, **wmode),
            pl.BlockSpec(b0.shape, const2, **wmode),
            pl.BlockSpec(w1.shape, const2, **wmode),
            pl.BlockSpec(b1.shape, const2, **wmode),
            pl.BlockSpec(wfc.shape, const2, **wmode),
            pl.BlockSpec(bfc.shape, const2, **wmode),
        ],
        out_specs=pl.BlockSpec((BT, 1), lambda b, t: (b, 0)),
        scratch_shapes=[
            pltpu.VMEM((TB, BT, 4 * Hp), jnp.float32),   # xg: hoisted layer-0 projection
            pltpu.VMEM((BT, 2 * Hp), jnp.bfloat16),      # hh: [h0 | h1] bf16 shadow
            pltpu.VMEM((BT, Hp), jnp.float32),           # c0
            pltpu.VMEM((BT, Hp), jnp.float32),           # c1
            pltpu.VMEM((BT, Hp), jnp.float32),           # h1 (f32, feeds the fc head)
        ],
        compiler_params=pltpu.CompilerParams(
            dimension_semantics=("parallel", "arbitrary"),   # batch ||, time serial
            vmem_limit_bytes=vmem_limit,
        ),
    )(x_p, wih0, whh0, b0, w1, b1, wfc, bfc)
    return out[:B]


lstm_regressor = jax.jit(lstm_regressor_pallas, static_argnames=("max_t_block",))


# ----------------------------------------------------------------------------- init + reference

def init_params(key, input_size, hidden_size):
    """PyTorch-layout LSTM/Linear params, uniform(-1/sqrt(H), 1/sqrt(H)), gates [i,f,g,o]."""
    H = hidden_size
    k = 1.0 / (H ** 0.5)
    keys = jax.random.split(key, 10)

    def u(kk, shape):
        return jax.random.uniform(kk, shape, jnp.float32, -k, k)

    return dict(
        w_ih_l0=u(keys[0], (4 * H, input_size)),
        w_hh_l0=u(keys[1], (4 * H, H)),
        b_ih_l0=u(keys[2], (4 * H,)),
        b_hh_l0=u(keys[3], (4 * H,)),
        w_ih_l1=u(keys[4], (4 * H, H)),
        w_hh_l1=u(keys[5], (4 * H, H)),
        b_ih_l1=u(keys[6], (4 * H,)),
        b_hh_l1=u(keys[7], (4 * H,)),
        fc_w=u(keys[8], (1, H)),
        fc_b=u(keys[9], (1,)),
    )


def lstm_regressor_ref(x, params):
    """Pure-JAX reference with torch.nn.LSTM semantics (gate order i,f,g,o).

    Matmul operands are cast to bf16 (f32 accumulation) to mirror the kernel's MXU
    path; state/elementwise math and the fc head stay f32.
    """
    B, S, _ = x.shape
    H = params["w_hh_l0"].shape[1]
    bf = lambda a: a.astype(jnp.bfloat16)

    def cell(x_in, h, c, w_ih, w_hh, b_ih, b_hh):
        gates = (
            jnp.dot(bf(x_in), bf(w_ih.T), preferred_element_type=jnp.float32)
            + jnp.dot(bf(h), bf(w_hh.T), preferred_element_type=jnp.float32)
            + b_ih + b_hh
        )
        i = jax.nn.sigmoid(gates[:, 0 * H:1 * H])
        f = jax.nn.sigmoid(gates[:, 1 * H:2 * H])
        g = jnp.tanh(gates[:, 2 * H:3 * H])
        o = jax.nn.sigmoid(gates[:, 3 * H:4 * H])
        c_new = f * c + i * g
        h_new = o * jnp.tanh(c_new)
        return h_new, c_new

    def step(carry, x_t):
        h0, c0, h1, c1 = carry
        h0, c0 = cell(x_t, h0, c0, params["w_ih_l0"], params["w_hh_l0"],
                      params["b_ih_l0"], params["b_hh_l0"])
        h1, c1 = cell(h0, h1, c1, params["w_ih_l1"], params["w_hh_l1"],
                      params["b_ih_l1"], params["b_hh_l1"])
        return (h0, c0, h1, c1), None

    z = jnp.zeros((B, H), jnp.float32)
    (_, _, h1, _), _ = jax.lax.scan(step, (z, z, z, z), jnp.transpose(x, (1, 0, 2)))
    return h1 @ params["fc_w"].T + params["fc_b"]


# ----------------------------------------------------------------------------- demo

if __name__ == "__main__":
    B, S, I, H = 2, 8, 4, 64   # batch, seq_len, input_size, hidden_size (module default H=64)

    key = jax.random.PRNGKey(0)
    k_x, k_p = jax.random.split(key)
    x = jax.random.normal(k_x, (B, S, I), dtype=jnp.float32)
    params = init_params(k_p, I, H)

    out = jax.block_until_ready(lstm_regressor(x, params))
    ref = lstm_regressor_ref(x, params)

    assert out.shape == (B, 1)
    max_err = float(jnp.max(jnp.abs(out - ref)))
    # Tolerance covers f32 accumulation-order differences between the fused-kernel and
    # reference matmul structures over the recurrence (operand bf16 rounding is shared).
    assert jnp.allclose(out, ref, atol=1e-3, rtol=1e-3), (out, ref, max_err)

    print("KERNEL_OK")
</pallas_src>

<mosaic_0001>
module attributes {stable_mosaic.version = 11 : i64} {
  func.func @_lstm_regressor_kernel(%arg0: i32, %arg1: i32, %arg2: memref<8x8x128xbf16, #tpu.memory_space<vmem>>, %arg3: memref<128x512xbf16, #tpu.memory_space<vmem>>, %arg4: memref<128x512xbf16, #tpu.memory_space<vmem>>, %arg5: memref<1x512xf32, #tpu.memory_space<vmem>>, %arg6: memref<256x512xbf16, #tpu.memory_space<vmem>>, %arg7: memref<1x512xf32, #tpu.memory_space<vmem>>, %arg8: memref<1x128xf32, #tpu.memory_space<vmem>>, %arg9: memref<1x1xf32, #tpu.memory_space<vmem>>, %arg10: memref<8x1xf32, #tpu.memory_space<vmem>>, %arg11: memref<8x8x512xf32, #tpu.memory_space<vmem>>, %arg12: memref<8x256xbf16, #tpu.memory_space<vmem>>, %arg13: memref<8x128xf32, #tpu.memory_space<vmem>>, %arg14: memref<8x128xf32, #tpu.memory_space<vmem>>, %arg15: memref<8x128xf32, #tpu.memory_space<vmem>>) attributes {dimension_semantics = [#tpu.dimension_semantics<parallel>, #tpu.dimension_semantics<arbitrary>], iteration_bounds = array<i64: 1, 1>, scalar_prefetch = 0 : i64, scratch_operands = 5 : i64, tpu.core_type = #tpu.core_type<tc>, window_params = [{transform_indices = @transform_0, window_bounds = array<i64: 8, 8, 128>}, {pipeline_mode = #tpu.pipeline_mode<synchronous>, transform_indices = @transform_1, window_bounds = array<i64: 128, 512>}, {pipeline_mode = #tpu.pipeline_mode<synchronous>, transform_indices = @transform_2, window_bounds = array<i64: 128, 512>}, {pipeline_mode = #tpu.pipeline_mode<synchronous>, transform_indices = @transform_3, window_bounds = array<i64: 1, 512>}, {pipeline_mode = #tpu.pipeline_mode<synchronous>, transform_indices = @transform_4, window_bounds = array<i64: 256, 512>}, {pipeline_mode = #tpu.pipeline_mode<synchronous>, transform_indices = @transform_5, window_bounds = array<i64: 1, 512>}, {pipeline_mode = #tpu.pipeline_mode<synchronous>, transform_indices = @transform_6, window_bounds = array<i64: 1, 128>}, {pipeline_mode = #tpu.pipeline_mode<synchronous>, transform_indices = @transform_7, window_bounds = array<i64: 1, 1>}, {transform_indices = @transform_8, window_bounds = array<i64: 8, 1>}]} {
    %c0_i32 = arith.constant 0 : i32
    %0 = arith.cmpi eq, %arg1, %c0_i32 : i32
    %1 = arith.extui %0 : i1 to i32
    %c0_i32_0 = arith.constant 0 : i32
    %2 = arith.cmpi ne, %1, %c0_i32_0 : i32
    scf.if %2 {
      %cst_284 = arith.constant 0.000000e+00 : bf16
      %591 = vector.broadcast %cst_284 : bf16 to vector<8x256xbf16>
      %c0_285 = arith.constant 0 : index
      %c0_286 = arith.constant 0 : index
      %592 = vector.load %arg12[%c0_285, %c0_286] : memref<8x256xbf16, #tpu.memory_space<vmem>>, vector<8x256xbf16>
      tpu.vector_store %arg12[%c0_285, %c0_286], %591 {strides = array<i32>} : memref<8x256xbf16, #tpu.memory_space<vmem>>, vector<8x256xbf16>,
      %cst_287 = arith.constant 0.000000e+00 : f32
      %593 = vector.broadcast %cst_287 : f32 to vector<8x128xf32>
      %c0_288 = arith.constant 0 : index
      %c0_289 = arith.constant 0 : index
      %594 = vector.load %arg13[%c0_288, %c0_289] : memref<8x128xf32, #tpu.memory_space<vmem>>, vector<8x128xf32>
      tpu.vector_store %arg13[%c0_288, %c0_289], %593 {strides = array<i32>} : memref<8x128xf32, #tpu.memory_space<vmem>>, vector<8x128xf32>,
      %cst_290 = arith.constant 0.000000e+00 : f32
      %595 = vector.broadcast %cst_290 : f32 to vector<8x128xf32>
      %c0_291 = arith.constant 0 : index
      %c0_292 = arith.constant 0 : index
      %596 = vector.load %arg14[%c0_291, %c0_292] : memref<8x128xf32, #tpu.memory_space<vmem>>, vector<8x128xf32>
      tpu.vector_store %arg14[%c0_291, %c0_292], %595 {strides = array<i32>} : memref<8x128xf32, #tpu.memory_space<vmem>>, vector<8x128xf32>,
      %cst_293 = arith.constant 0.000000e+00 : f32
      %597 = vector.broadcast %cst_293 : f32 to vector<8x128xf32>
      %c0_294 = arith.constant 0 : index
      %c0_295 = arith.constant 0 : index
      %598 = vector.load %arg15[%c0_294, %c0_295] : memref<8x128xf32, #tpu.memory_space<vmem>>, vector<8x128xf32>
      tpu.vector_store %arg15[%c0_294, %c0_295], %597 {strides = array<i32>} : memref<8x128xf32, #tpu.memory_space<vmem>>, vector<8x128xf32>,
    } else {
    }
    %c0 = arith.constant 0 : index
    %c0_1 = arith.constant 0 : index
    %c0_2 = arith.constant 0 : index
    %3 = vector.load %arg2[%c0, %c0_1, %c0_2] : memref<8x8x128xbf16, #tpu.memory_space<vmem>>, vector<8x8x128xbf16>
    %4 = vector.shape_cast %3 : vector<8x8x128xbf16> to vector<64x128xbf16>
    %c0_3 = arith.constant 0 : index
    %c0_4 = arith.constant 0 : index
    %5 = vector.load %arg3[%c0_3, %c0_4] : memref<128x512xbf16, #tpu.memory_space<vmem>>, vector<128x512xbf16>
    %cst = arith.constant dense<0.000000e+00> : vector<64x512xf32>
    %6 = tpu.matmul %4, %5, %cst {dimension_numbers = #tpu.dot_dimension_numbers<[1], [0], [0], [1], [0, 0, 1, 1], [], []>} : vector<64x128xbf16>, vector<128x512xbf16>, vector<64x512xf32> -> vector<64x512xf32>
    %c0_5 = arith.constant 0 : index
    %c0_6 = arith.constant 0 : index
    %7 = vector.load %arg5[%c0_5, %c0_6] : memref<1x512xf32, #tpu.memory_space<vmem>>, vector<1x512xf32>
    %8 = vector.broadcast %7 : vector<1x512xf32> to vector<64x512xf32>
    %9 = arith.addf %6, %8 : vector<64x512xf32>
    %10 = vector.shape_cast %9 : vector<64x512xf32> to vector<8x8x512xf32>
    %c0_7 = arith.constant 0 : index
    %c0_8 = arith.constant 0 : index
    %c0_9 = arith.constant 0 : index
    %11 = vector.load %arg11[%c0_7, %c0_8, %c0_9] : memref<8x8x512xf32, #tpu.memory_space<vmem>>, vector<8x8x512xf32>
    tpu.vector_store %arg11[%c0_7, %c0_8, %c0_9], %10 {strides = array<i32>} : memref<8x8x512xf32, #tpu.memory_space<vmem>>, vector<8x8x512xf32>,
    %c0_i32_10 = arith.constant 0 : i32
    %12 = arith.index_cast %c0_i32_10 : i32 to index
    %c0_11 = arith.constant 0 : index
    %c0_12 = arith.constant 0 : index
    %13 = vector.load %arg11[%12, %c0_11, %c0_12] : memref<8x8x512xf32, #tpu.memory_space<vmem>>, vector<1x8x512xf32>
    %14 = vector.shape_cast %13 : vector<1x8x512xf32> to vector<8x512xf32>
    %c0_13 = arith.constant 0 : index
    %c0_14 = arith.constant 0 : index
    %15 = vector.load %arg12[%c0_13, %c0_14] : memref<8x256xbf16, #tpu.memory_space<vmem>>, vector<8x128xbf16>
    %c0_15 = arith.constant 0 : index
    %c0_16 = arith.constant 0 : index
    %16 = vector.load %arg4[%c0_15, %c0_16] : memref<128x512xbf16, #tpu.memory_space<vmem>>, vector<128x512xbf16>
    %cst_17 = arith.constant dense<0.000000e+00> : vector<8x512xf32>
    %17 = tpu.matmul %15, %16, %cst_17 {dimension_numbers = #tpu.dot_dimension_numbers<[1], [0], [0], [1], [0, 0, 1, 1], [], []>} : vector<8x128xbf16>, vector<128x512xbf16>, vector<8x512xf32> -> vector<8x512xf32>
    %18 = arith.addf %14, %17 : vector<8x512xf32>
    %19 = vector.extract_strided_slice %18 {offsets = [0, 0], sizes = [8, 128], strides = [1, 1]} : vector<8x512xf32> to vector<8x128xf32>
    %20 = arith.negf %19 : vector<8x128xf32>
    %21 = math.exp %20 : vector<8x128xf32>
    %cst_18 = arith.constant 1.000000e+00 : f32
    %22 = vector.broadcast %cst_18 : f32 to vector<8x128xf32>
    %23 = arith.addf %22, %21 : vector<8x128xf32>
    %24 = arith.divf %22, %23 : vector<8x128xf32>
    %25 = vector.extract_strided_slice %18 {offsets = [0, 128], sizes = [8, 128], strides = [1, 1]} : vector<8x512xf32> to vector<8x128xf32>
    %26 = arith.negf %25 : vector<8x128xf32>
    %27 = math.exp %26 : vector<8x128xf32>
    %cst_19 = arith.constant 1.000000e+00 : f32
    %28 = vector.broadcast %cst_19 : f32 to vector<8x128xf32>
    %29 = arith.addf %28, %27 : vector<8x128xf32>
    %30 = arith.divf %28, %29 : vector<8x128xf32>
    %31 = vector.extract_strided_slice %18 {offsets = [0, 256], sizes = [8, 128], strides = [1, 1]} : vector<8x512xf32> to vector<8x128xf32>
    %32 = math.tanh %31 : vector<8x128xf32>
    %33 = vector.extract_strided_slice %18 {offsets = [0, 384], sizes = [8, 128], strides = [1, 1]} : vector<8x512xf32> to vector<8x128xf32>
    %34 = arith.negf %33 : vector<8x128xf32>
    %35 = math.exp %34 : vector<8x128xf32>
    %cst_20 = arith.constant 1.000000e+00 : f32
    %36 = vector.broadcast %cst_20 : f32 to vector<8x128xf32>
    %37 = arith.addf %36, %35 : vector<8x128xf32>
    %38 = arith.divf %36, %37 : vector<8x128xf32>
    %c0_21 = arith.constant 0 : index
    %c0_22 = arith.constant 0 : index
    %39 = vector.load %arg13[%c0_21, %c0_22] : memref<8x128xf32, #tpu.memory_space<vmem>>, vector<8x128xf32>
    %40 = arith.mulf %30, %39 : vector<8x128xf32>
    %41 = arith.mulf %24, %32 : vector<8x128xf32>
    %42 = arith.addf %40, %41 : vector<8x128xf32>
    %43 = math.tanh %42 : vector<8x128xf32>
    %44 = arith.mulf %38, %43 : vector<8x128xf32>
    %c0_23 = arith.constant 0 : index
    %c0_24 = arith.constant 0 : index
    %45 = vector.load %arg13[%c0_23, %c0_24] : memref<8x128xf32, #tpu.memory_space<vmem>>, vector<8x128xf32>
    tpu.vector_store %arg13[%c0_23, %c0_24], %42 {strides = array<i32>} : memref<8x128xf32, #tpu.memory_space<vmem>>, vector<8x128xf32>,
    %46 = arith.truncf %44 : vector<8x128xf32> to vector<8x128xbf16>
    %c0_25 = arith.constant 0 : index
    %c0_26 = arith.constant 0 : index
    %47 = vector.load %arg12[%c0_25, %c0_26] : memref<8x256xbf16, #tpu.memory_space<vmem>>, vector<8x128xbf16>
    tpu.vector_store %arg12[%c0_25, %c0_26], %46 {strides = array<i32>} : memref<8x256xbf16, #tpu.memory_space<vmem>>, vector<8x128xbf16>,
    %c0_27 = arith.constant 0 : index
    %c0_28 = arith.constant 0 : index
    %48 = vector.load %arg12[%c0_27, %c0_28] : memref<8x256xbf16, #tpu.memory_space<vmem>>, vector<8x256xbf16>
    %c0_29 = arith.constant 0 : index
    %c0_30 = arith.constant 0 : index
    %49 = vector.load %arg6[%c0_29, %c0_30] : memref<256x512xbf16, #tpu.memory_space<vmem>>, vector<256x512xbf16>
    %cst_31 = arith.constant dense<0.000000e+00> : vector<8x512xf32>
    %50 = tpu.matmul %48, %49, %cst_31 {dimension_numbers = #tpu.dot_dimension_numbers<[1], [0], [0], [1], [0, 0, 1, 1], [], []>} : vector<8x256xbf16>, vector<256x512xbf16>, vector<8x512xf32> -> vector<8x512xf32>
    %c0_32 = arith.constant 0 : index
    %c0_33 = arith.constant 0 : index
    %51 = vector.load %arg7[%c0_32, %c0_33] : memref<1x512xf32, #tpu.memory_space<vmem>>, vector<1x512xf32>
    %52 = vector.broadcast %51 : vector<1x512xf32> to vector<8x512xf32>
    %53 = arith.addf %50, %52 : vector<8x512xf32>
    %54 = vector.extract_strided_slice %53 {offsets = [0, 0], sizes = [8, 128], strides = [1, 1]} : vector<8x512xf32> to vector<8x128xf32>
    %55 = arith.negf %54 : vector<8x128xf32>
    %56 = math.exp %55 : vector<8x128xf32>
    %cst_34 = arith.constant 1.000000e+00 : f32
    %57 = vector.broadcast %cst_34 : f32 to vector<8x128xf32>
    %58 = arith.addf %57, %56 : vector<8x128xf32>
    %59 = arith.divf %57, %58 : vector<8x128xf32>
    %60 = vector.extract_strided_slice %53 {offsets = [0, 128], sizes = [8, 128], strides = [1, 1]} : vector<8x512xf32> to vector<8x128xf32>
    %61 = arith.negf %60 : vector<8x128xf32>
    %62 = math.exp %61 : vector<8x128xf32>
    %cst_35 = arith.constant 1.000000e+00 : f32
    %63 = vector.broadcast %cst_35 : f32 to vector<8x128xf32>
    %64 = arith.addf %63, %62 : vector<8x128xf32>
    %65 = arith.divf %63, %64 : vector<8x128xf32>
    %66 = vector.extract_strided_slice %53 {offsets = [0, 256], sizes = [8, 128], strides = [1, 1]} : vector<8x512xf32> to vector<8x128xf32>
    %67 = math.tanh %66 : vector<8x128xf32>
    %68 = vector.extract_strided_slice %53 {offsets = [0, 384], sizes = [8, 128], strides = [1, 1]} : vector<8x512xf32> to vector<8x128xf32>
    %69 = arith.negf %68 : vector<8x128xf32>
    %70 = math.exp %69 : vector<8x128xf32>
    %cst_36 = arith.constant 1.000000e+00 : f32
    %71 = vector.broadcast %cst_36 : f32 to vector<8x128xf32>
    %72 = arith.addf %71, %70 : vector<8x128xf32>
    %73 = arith.divf %71, %72 : vector<8x128xf32>
    %c0_37 = arith.constant 0 : index
    %c0_38 = arith.constant 0 : index
    %74 = vector.load %arg14[%c0_37, %c0_38] : memref<8x128xf32, #tpu.memory_space<vmem>>, vector<8x128xf32>
    %75 = arith.mulf %65, %74 : vector<8x128xf32>
    %76 = arith.mulf %59, %67 : vector<8x128xf32>
    %77 = arith.addf %75, %76 : vector<8x128xf32>
    %78 = math.tanh %77 : vector<8x128xf32>
    %79 = arith.mulf %73, %78 : vector<8x128xf32>
    %c0_39 = arith.constant 0 : index
    %c0_40 = arith.constant 0 : index
    %80 = vector.load %arg14[%c0_39, %c0_40] : memref<8x128xf32, #tpu.memory_space<vmem>>, vector<8x128xf32>
    tpu.vector_store %arg14[%c0_39, %c0_40], %77 {strides = array<i32>} : memref<8x128xf32, #tpu.memory_space<vmem>>, vector<8x128xf32>,
    %c0_41 = arith.constant 0 : index
    %c0_42 = arith.constant 0 : index
    %81 = vector.load %arg15[%c0_41, %c0_42] : memref<8x128xf32, #tpu.memory_space<vmem>>, vector<8x128xf32>
    tpu.vector_store %arg15[%c0_41, %c0_42], %79 {strides = array<i32>} : memref<8x128xf32, #tpu.memory_space<vmem>>, vector<8x128xf32>,
    %82 = arith.truncf %79 : vector<8x128xf32> to vector<8x128xbf16>
    %c0_43 = arith.constant 0 : index
    %c128 = arith.constant 128 : index
    %83 = vector.load %arg12[%c0_43, %c128] : memref<8x256xbf16, #tpu.memory_space<vmem>>, vector<8x128xbf16>
    tpu.vector_store %arg12[%c0_43, %c128], %82 {strides = array<i32>} : memref<8x256xbf16, #tpu.memory_space<vmem>>, vector<8x128xbf16>,
    %c1_i32 = arith.constant 1 : i32
    %84 = arith.index_cast %c1_i32 : i32 to index
    %c0_44 = arith.constant 0 : index
    %c0_45 = arith.constant 0 : index
    %85 = vector.load %arg11[%84, %c0_44, %c0_45] : memref<8x8x512xf32, #tpu.memory_space<vmem>>, vector<1x8x512xf32>
    %86 = vector.shape_cast %85 : vector<1x8x512xf32> to vector<8x512xf32>
    %c0_46 = arith.constant 0 : index
    %c0_47 = arith.constant 0 : index
    %87 = vector.load %arg12[%c0_46, %c0_47] : memref<8x256xbf16, #tpu.memory_space<vmem>>, vector<8x128xbf16>
    %c0_48 = arith.constant 0 : index
    %c0_49 = arith.constant 0 : index
    %88 = vector.load %arg4[%c0_48, %c0_49] : memref<128x512xbf16, #tpu.memory_space<vmem>>, vector<128x512xbf16>
    %cst_50 = arith.constant dense<0.000000e+00> : vector<8x512xf32>
    %89 = tpu.matmul %87, %88, %cst_50 {dimension_numbers = #tpu.dot_dimension_numbers<[1], [0], [0], [1], [0, 0, 1, 1], [], []>} : vector<8x128xbf16>, vector<128x512xbf16>, vector<8x512xf32> -> vector<8x512xf32>
    %90 = arith.addf %86, %89 : vector<8x512xf32>
    %91 = vector.extract_strided_slice %90 {offsets = [0, 0], sizes = [8, 128], strides = [1, 1]} : vector<8x512xf32> to vector<8x128xf32>
    %92 = arith.negf %91 : vector<8x128xf32>
    %93 = math.exp %92 : vector<8x128xf32>
    %cst_51 = arith.constant 1.000000e+00 : f32
    %94 = vector.broadcast %cst_51 : f32 to vector<8x128xf32>
    %95 = arith.addf %94, %93 : vector<8x128xf32>
    %96 = arith.divf %94, %95 : vector<8x128xf32>
    %97 = vector.extract_strided_slice %90 {offsets = [0, 128], sizes = [8, 128], strides = [1, 1]} : vector<8x512xf32> to vector<8x128xf32>
    %98 = arith.negf %97 : vector<8x128xf32>
    %99 = math.exp %98 : vector<8x128xf32>
    %cst_52 = arith.constant 1.000000e+00 : f32
    %100 = vector.broadcast %cst_52 : f32 to vector<8x128xf32>
    %101 = arith.addf %100, %99 : vector<8x128xf32>
    %102 = arith.divf %100, %101 : vector<8x128xf32>
    %103 = vector.extract_strided_slice %90 {offsets = [0, 256], sizes = [8, 128], strides = [1, 1]} : vector<8x512xf32> to vector<8x128xf32>
    %104 = math.tanh %103 : vector<8x128xf32>
    %105 = vector.extract_strided_slice %90 {offsets = [0, 384], sizes = [8, 128], strides = [1, 1]} : vector<8x512xf32> to vector<8x128xf32>
    %106 = arith.negf %105 : vector<8x128xf32>
    %107 = math.exp %106 : vector<8x128xf32>
    %cst_53 = arith.constant 1.000000e+00 : f32
    %108 = vector.broadcast %cst_53 : f32 to vector<8x128xf32>
    %109 = arith.addf %108, %107 : vector<8x128xf32>
    %110 = arith.divf %108, %109 : vector<8x128xf32>
    %c0_54 = arith.constant 0 : index
    %c0_55 = arith.constant 0 : index
    %111 = vector.load %arg13[%c0_54, %c0_55] : memref<8x128xf32, #tpu.memory_space<vmem>>, vector<8x128xf32>
    %112 = arith.mulf %102, %111 : vector<8x128xf32>
    %113 = arith.mulf %96, %104 : vector<8x128xf32>
    %114 = arith.addf %112, %113 : vector<8x128xf32>
    %115 = math.tanh %114 : vector<8x128xf32>
    %116 = arith.mulf %110, %115 : vector<8x128xf32>
    %c0_56 = arith.constant 0 : index
    %c0_57 = arith.constant 0 : index
    %117 = vector.load %arg13[%c0_56, %c0_57] : memref<8x128xf32, #tpu.memory_space<vmem>>, vector<8x128xf32>
    tpu.vector_store %arg13[%c0_56, %c0_57], %114 {strides = array<i32>} : memref<8x128xf32, #tpu.memory_space<vmem>>, vector<8x128xf32>,
    %118 = arith.truncf %116 : vector<8x128xf32> to vector<8x128xbf16>
    %c0_58 = arith.constant 0 : index
    %c0_59 = arith.constant 0 : index
    %119 = vector.load %arg12[%c0_58, %c0_59] : memref<8x256xbf16, #tpu.memory_space<vmem>>, vector<8x128xbf16>
    tpu.vector_store %arg12[%c0_58, %c0_59], %118 {strides = array<i32>} : memref<8x256xbf16, #tpu.memory_space<vmem>>, vector<8x128xbf16>,
    %c0_60 = arith.constant 0 : index
    %c0_61 = arith.constant 0 : index
    %120 = vector.load %arg12[%c0_60, %c0_61] : memref<8x256xbf16, #tpu.memory_space<vmem>>, vector<8x256xbf16>
    %c0_62 = arith.constant 0 : index
    %c0_63 = arith.constant 0 : index
    %121 = vector.load %arg6[%c0_62, %c0_63] : memref<256x512xbf16, #tpu.memory_space<vmem>>, vector<256x512xbf16>
    %cst_64 = arith.constant dense<0.000000e+00> : vector<8x512xf32>
    %122 = tpu.matmul %120, %121, %cst_64 {dimension_numbers = #tpu.dot_dimension_numbers<[1], [0], [0], [1], [0, 0, 1, 1], [], []>} : vector<8x256xbf16>, vector<256x512xbf16>, vector<8x512xf32> -> vector<8x512xf32>
    %c0_65 = arith.constant 0 : index
    %c0_66 = arith.constant 0 : index
    %123 = vector.load %arg7[%c0_65, %c0_66] : memref<1x512xf32, #tpu.memory_space<vmem>>, vector<1x512xf32>
    %124 = vector.broadcast %123 : vector<1x512xf32> to vector<8x512xf32>
    %125 = arith.addf %122, %124 : vector<8x512xf32>
    %126 = vector.extract_strided_slice %125 {offsets = [0, 0], sizes = [8, 128], strides = [1, 1]} : vector<8x512xf32> to vector<8x128xf32>
    %127 = arith.negf %126 : vector<8x128xf32>
    %128 = math.exp %127 : vector<8x128xf32>
    %cst_67 = arith.constant 1.000000e+00 : f32
    %129 = vector.broadcast %cst_67 : f32 to vector<8x128xf32>
    %130 = arith.addf %129, %128 : vector<8x128xf32>
    %131 = arith.divf %129, %130 : vector<8x128xf32>
    %132 = vector.extract_strided_slice %125 {offsets = [0, 128], sizes = [8, 128], strides = [1, 1]} : vector<8x512xf32> to vector<8x128xf32>
    %133 = arith.negf %132 : vector<8x128xf32>
    %134 = math.exp %133 : vector<8x128xf32>
    %cst_68 = arith.constant 1.000000e+00 : f32
    %135 = vector.broadcast %cst_68 : f32 to vector<8x128xf32>
    %136 = arith.addf %135, %134 : vector<8x128xf32>
    %137 = arith.divf %135, %136 : vector<8x128xf32>
    %138 = vector.extract_strided_slice %125 {offsets = [0, 256], sizes = [8, 128], strides = [1, 1]} : vector<8x512xf32> to vector<8x128xf32>
    %139 = math.tanh %138 : vector<8x128xf32>
    %140 = vector.extract_strided_slice %125 {offsets = [0, 384], sizes = [8, 128], strides = [1, 1]} : vector<8x512xf32> to vector<8x128xf32>
    %141 = arith.negf %140 : vector<8x128xf32>
    %142 = math.exp %141 : vector<8x128xf32>
    %cst_69 = arith.constant 1.000000e+00 : f32
    %143 = vector.broadcast %cst_69 : f32 to vector<8x128xf32>
    %144 = arith.addf %143, %142 : vector<8x128xf32>
    %145 = arith.divf %143, %144 : vector<8x128xf32>
    %c0_70 = arith.constant 0 : index
    %c0_71 = arith.constant 0 : index
    %146 = vector.load %arg14[%c0_70, %c0_71] : memref<8x128xf32, #tpu.memory_space<vmem>>, vector<8x128xf32>
    %147 = arith.mulf %137, %146 : vector<8x128xf32>
    %148 = arith.mulf %131, %139 : vector<8x128xf32>
    %149 = arith.addf %147, %148 : vector<8x128xf32>
    %150 = math.tanh %149 : vector<8x128xf32>
    %151 = arith.mulf %145, %150 : vector<8x128xf32>
    %c0_72 = arith.constant 0 : index
    %c0_73 = arith.constant 0 : index
    %152 = vector.load %arg14[%c0_72, %c0_73] : memref<8x128xf32, #tpu.memory_space<vmem>>, vector<8x128xf32>
    tpu.vector_store %arg14[%c0_72, %c0_73], %149 {strides = array<i32>} : memref<8x128xf32, #tpu.memory_space<vmem>>, vector<8x128xf32>,
    %c0_74 = arith.constant 0 : index
    %c0_75 = arith.constant 0 : index
    %153 = vector.load %arg15[%c0_74, %c0_75] : memref<8x128xf32, #tpu.memory_space<vmem>>, vector<8x128xf32>
    tpu.vector_store %arg15[%c0_74, %c0_75], %151 {strides = array<i32>} : memref<8x128xf32, #tpu.memory_space<vmem>>, vector<8x128xf32>,
    %154 = arith.truncf %151 : vector<8x128xf32> to vector<8x128xbf16>
    %c0_76 = arith.constant 0 : index
    %c128_77 = arith.constant 128 : index
    %155 = vector.load %arg12[%c0_76, %c128_77] : memref<8x256xbf16, #tpu.memory_space<vmem>>, vector<8x128xbf16>
    tpu.vector_store %arg12[%c0_76, %c128_77], %154 {strides = array<i32>} : memref<8x256xbf16, #tpu.memory_space<vmem>>, vector<8x128xbf16>,
    %c2_i32 = arith.constant 2 : i32
    %156 = arith.index_cast %c2_i32 : i32 to index
    %c0_78 = arith.constant 0 : index
    %c0_79 = arith.constant 0 : index
    %157 = vector.load %arg11[%156, %c0_78, %c0_79] : memref<8x8x512xf32, #tpu.memory_space<vmem>>, vector<1x8x512xf32>
    %158 = vector.shape_cast %157 : vector<1x8x512xf32> to vector<8x512xf32>
    %c0_80 = arith.constant 0 : index
    %c0_81 = arith.constant 0 : index
    %159 = vector.load %arg12[%c0_80, %c0_81] : memref<8x256xbf16, #tpu.memory_space<vmem>>, vector<8x128xbf16>
    %c0_82 = arith.constant 0 : index
    %c0_83 = arith.constant 0 : index
    %160 = vector.load %arg4[%c0_82, %c0_83] : memref<128x512xbf16, #tpu.memory_space<vmem>>, vector<128x512xbf16>
    %cst_84 = arith.constant dense<0.000000e+00> : vector<8x512xf32>
    %161 = tpu.matmul %159, %160, %cst_84 {dimension_numbers = #tpu.dot_dimension_numbers<[1], [0], [0], [1], [0, 0, 1, 1], [], []>} : vector<8x128xbf16>, vector<128x512xbf16>, vector<8x512xf32> -> vector<8x512xf32>
    %162 = arith.addf %158, %161 : vector<8x512xf32>
    %163 = vector.extract_strided_slice %162 {offsets = [0, 0], sizes = [8, 128], strides = [1, 1]} : vector<8x512xf32> to vector<8x128xf32>
    %164 = arith.negf %163 : vector<8x128xf32>
    %165 = math.exp %164 : vector<8x128xf32>
    %cst_85 = arith.constant 1.000000e+00 : f32
    %166 = vector.broadcast %cst_85 : f32 to vector<8x128xf32>
    %167 = arith.addf %166, %165 : vector<8x128xf32>
    %168 = arith.divf %166, %167 : vector<8x128xf32>
    %169 = vector.extract_strided_slice %162 {offsets = [0, 128], sizes = [8, 128], strides = [1, 1]} : vector<8x512xf32> to vector<8x128xf32>
    %170 = arith.negf %169 : vector<8x128xf32>
    %171 = math.exp %170 : vector<8x128xf32>
    %cst_86 = arith.constant 1.000000e+00 : f32
    %172 = vector.broadcast %cst_86 : f32 to vector<8x128xf32>
    %173 = arith.addf %172, %171 : vector<8x128xf32>
    %174 = arith.divf %172, %173 : vector<8x128xf32>
    %175 = vector.extract_strided_slice %162 {offsets = [0, 256], sizes = [8, 128], strides = [1, 1]} : vector<8x512xf32> to vector<8x128xf32>
    %176 = math.tanh %175 : vector<8x128xf32>
    %177 = vector.extract_strided_slice %162 {offsets = [0, 384], sizes = [8, 128], strides = [1, 1]} : vector<8x512xf32> to vector<8x128xf32>
    %178 = arith.negf %177 : vector<8x128xf32>
    %179 = math.exp %178 : vector<8x128xf32>
    %cst_87 = arith.constant 1.000000e+00 : f32
    %180 = vector.broadcast %cst_87 : f32 to vector<8x128xf32>
    %181 = arith.addf %180, %179 : vector<8x128xf32>
    %182 = arith.divf %180, %181 : vector<8x128xf32>
    %c0_88 = arith.constant 0 : index
    %c0_89 = arith.constant 0 : index
    %183 = vector.load %arg13[%c0_88, %c0_89] : memref<8x128xf32, #tpu.memory_space<vmem>>, vector<8x128xf32>
    %184 = arith.mulf %174, %183 : vector<8x128xf32>
    %185 = arith.mulf %168, %176 : vector<8x128xf32>
    %186 = arith.addf %184, %185 : vector<8x128xf32>
    %187 = math.tanh %186 : vector<8x128xf32>
    %188 = arith.mulf %182, %187 : vector<8x128xf32>
    %c0_90 = arith.constant 0 : index
    %c0_91 = arith.constant 0 : index
    %189 = vector.load %arg13[%c0_90, %c0_91] : memref<8x128xf32, #tpu.memory_space<vmem>>, vector<8x128xf32>
    tpu.vector_store %arg13[%c0_90, %c0_91], %186 {strides = array<i32>} : memref<8x128xf32, #tpu.memory_space<vmem>>, vector<8x128xf32>,
    %190 = arith.truncf %188 : vector<8x128xf32> to vector<8x128xbf16>
    %c0_92 = arith.constant 0 : index
    %c0_93 = arith.constant 0 : index
    %191 = vector.load %arg12[%c0_92, %c0_93] : memref<8x256xbf16, #tpu.memory_space<vmem>>, vector<8x128xbf16>
    tpu.vector_store %arg12[%c0_92, %c0_93], %190 {strides = array<i32>} : memref<8x256xbf16, #tpu.memory_space<vmem>>, vector<8x128xbf16>,
    %c0_94 = arith.constant 0 : index
    %c0_95 = arith.constant 0 : index
    %192 = vector.load %arg12[%c0_94, %c0_95] : memref<8x256xbf16, #tpu.memory_space<vmem>>, vector<8x256xbf16>
    %c0_96 = arith.constant 0 : index
    %c0_97 = arith.constant 0 : index
    %193 = vector.load %arg6[%c0_96, %c0_97] : memref<256x512xbf16, #tpu.memory_space<vmem>>, vector<256x512xbf16>
    %cst_98 = arith.constant dense<0.000000e+00> : vector<8x512xf32>
    %194 = tpu.matmul %192, %193, %cst_98 {dimension_numbers = #tpu.dot_dimension_numbers<[1], [0], [0], [1], [0, 0, 1, 1], [], []>} : vector<8x256xbf16>, vector<256x512xbf16>, vector<8x512xf32> -> vector<8x512xf32>
    %c0_99 = arith.constant 0 : index
    %c0_100 = arith.constant 0 : index
    %195 = vector.load %arg7[%c0_99, %c0_100] : memref<1x512xf32, #tpu.memory_space<vmem>>, vector<1x512xf32>
    %196 = vector.broadcast %195 : vector<1x512xf32> to vector<8x512xf32>
    %197 = arith.addf %194, %196 : vector<8x512xf32>
    %198 = vector.extract_strided_slice %197 {offsets = [0, 0], sizes = [8, 128], strides = [1, 1]} : vector<8x512xf32> to vector<8x128xf32>
    %199 = arith.negf %198 : vector<8x128xf32>
    %200 = math.exp %199 : vector<8x128xf32>
    %cst_101 = arith.constant 1.000000e+00 : f32
    %201 = vector.broadcast %cst_101 : f32 to vector<8x128xf32>
    %202 = arith.addf %201, %200 : vector<8x128xf32>
    %203 = arith.divf %201, %202 : vector<8x128xf32>
    %204 = vector.extract_strided_slice %197 {offsets = [0, 128], sizes = [8, 128], strides = [1, 1]} : vector<8x512xf32> to vector<8x128xf32>
    %205 = arith.negf %204 : vector<8x128xf32>
    %206 = math.exp %205 : vector<8x128xf32>
    %cst_102 = arith.constant 1.000000e+00 : f32
    %207 = vector.broadcast %cst_102 : f32 to vector<8x128xf32>
    %208 = arith.addf %207, %206 : vector<8x128xf32>
    %209 = arith.divf %207, %208 : vector<8x128xf32>
    %210 = vector.extract_strided_slice %197 {offsets = [0, 256], sizes = [8, 128], strides = [1, 1]} : vector<8x512xf32> to vector<8x128xf32>
    %211 = math.tanh %210 : vector<8x128xf32>
    %212 = vector.extract_strided_slice %197 {offsets = [0, 384], sizes = [8, 128], strides = [1, 1]} : vector<8x512xf32> to vector<8x128xf32>
    %213 = arith.negf %212 : vector<8x128xf32>
    %214 = math.exp %213 : vector<8x128xf32>
    %cst_103 = arith.constant 1.000000e+00 : f32
    %215 = vector.broadcast %cst_103 : f32 to vector<8x128xf32>
    %216 = arith.addf %215, %214 : vector<8x128xf32>
    %217 = arith.divf %215, %216 : vector<8x128xf32>
    %c0_104 = arith.constant 0 : index
    %c0_105 = arith.constant 0 : index
    %218 = vector.load %arg14[%c0_104, %c0_105] : memref<8x128xf32, #tpu.memory_space<vmem>>, vector<8x128xf32>
    %219 = arith.mulf %209, %218 : vector<8x128xf32>
    %220 = arith.mulf %203, %211 : vector<8x128xf32>
    %221 = arith.addf %219, %220 : vector<8x128xf32>
    %222 = math.tanh %221 : vector<8x128xf32>
    %223 = arith.mulf %217, %222 : vector<8x128xf32>
    %c0_106 = arith.constant 0 : index
    %c0_107 = arith.constant 0 : index
    %224 = vector.load %arg14[%c0_106, %c0_107] : memref<8x128xf32, #tpu.memory_space<vmem>>, vector<8x128xf32>
    tpu.vector_store %arg14[%c0_106, %c0_107], %221 {strides = array<i32>} : memref<8x128xf32, #tpu.memory_space<vmem>>, vector<8x128xf32>,
    %c0_108 = arith.constant 0 : index
    %c0_109 = arith.constant 0 : index
    %225 = vector.load %arg15[%c0_108, %c0_109] : memref<8x128xf32, #tpu.memory_space<vmem>>, vector<8x128xf32>
    tpu.vector_store %arg15[%c0_108, %c0_109], %223 {strides = array<i32>} : memref<8x128xf32, #tpu.memory_space<vmem>>, vector<8x128xf32>,
    %226 = arith.truncf %223 : vector<8x128xf32> to vector<8x128xbf16>
    %c0_110 = arith.constant 0 : index
    %c128_111 = arith.constant 128 : index
    %227 = vector.load %arg12[%c0_110, %c128_111] : memref<8x256xbf16, #tpu.memory_space<vmem>>, vector<8x128xbf16>
    tpu.vector_store %arg12[%c0_110, %c128_111], %226 {strides = array<i32>} : memref<8x256xbf16, #tpu.memory_space<vmem>>, vector<8x128xbf16>,
    %c3_i32 = arith.constant 3 : i32
    %228 = arith.index_cast %c3_i32 : i32 to index
    %c0_112 = arith.constant 0 : index
    %c0_113 = arith.constant 0 : index
    %229 = vector.load %arg11[%228, %c0_112, %c0_113] : memref<8x8x512xf32, #tpu.memory_space<vmem>>, vector<1x8x512xf32>
    %230 = vector.shape_cast %229 : vector<1x8x512xf32> to vector<8x512xf32>
    %c0_114 = arith.constant 0 : index
    %c0_115 = arith.constant 0 : index
    %231 = vector.load %arg12[%c0_114, %c0_115] : memref<8x256xbf16, #tpu.memory_space<vmem>>, vector<8x128xbf16>
    %c0_116 = arith.constant 0 : index
    %c0_117 = arith.constant 0 : index
    %232 = vector.load %arg4[%c0_116, %c0_117] : memref<128x512xbf16, #tpu.memory_space<vmem>>, vector<128x512xbf16>
    %cst_118 = arith.constant dense<0.000000e+00> : vector<8x512xf32>
    %233 = tpu.matmul %231, %232, %cst_118 {dimension_numbers = #tpu.dot_dimension_numbers<[1], [0], [0], [1], [0, 0, 1, 1], [], []>} : vector<8x128xbf16>, vector<128x512xbf16>, vector<8x512xf32> -> vector<8x512xf32>
    %234 = arith.addf %230, %233 : vector<8x512xf32>
    %235 = vector.extract_strided_slice %234 {offsets = [0, 0], sizes = [8, 128], strides = [1, 1]} : vector<8x512xf32> to vector<8x128xf32>
    %236 = arith.negf %235 : vector<8x128xf32>
    %237 = math.exp %236 : vector<8x128xf32>
    %cst_119 = arith.constant 1.000000e+00 : f32
    %238 = vector.broadcast %cst_119 : f32 to vector<8x128xf32>
    %239 = arith.addf %238, %237 : vector<8x128xf32>
    %240 = arith.divf %238, %239 : vector<8x128xf32>
    %241 = vector.extract_strided_slice %234 {offsets = [0, 128], sizes = [8, 128], strides = [1, 1]} : vector<8x512xf32> to vector<8x128xf32>
    %242 = arith.negf %241 : vector<8x128xf32>
    %243 = math.exp %242 : vector<8x128xf32>
    %cst_120 = arith.constant 1.000000e+00 : f32
    %244 = vector.broadcast %cst_120 : f32 to vector<8x128xf32>
    %245 = arith.addf %244, %243 : vector<8x128xf32>
    %246 = arith.divf %244, %245 : vector<8x128xf32>
    %247 = vector.extract_strided_slice %234 {offsets = [0, 256], sizes = [8, 128], strides = [1, 1]} : vector<8x512xf32> to vector<8x128xf32>
    %248 = math.tanh %247 : vector<8x128xf32>
    %249 = vector.extract_strided_slice %234 {offsets = [0, 384], sizes = [8, 128], strides = [1, 1]} : vector<8x512xf32> to vector<8x128xf32>
    %250 = arith.negf %249 : vector<8x128xf32>
    %251 = math.exp %250 : vector<8x128xf32>
    %cst_121 = arith.constant 1.000000e+00 : f32
    %252 = vector.broadcast %cst_121 : f32 to vector<8x128xf32>
    %253 = arith.addf %252, %251 : vector<8x128xf32>
    %254 = arith.divf %252, %253 : vector<8x128xf32>
    %c0_122 = arith.constant 0 : index
    %c0_123 = arith.constant 0 : index
    %255 = vector.load %arg13[%c0_122, %c0_123] : memref<8x128xf32, #tpu.memory_space<vmem>>, vector<8x128xf32>
    %256 = arith.mulf %246, %255 : vector<8x128xf32>
    %257 = arith.mulf %240, %248 : vector<8x128xf32>
    %258 = arith.addf %256, %257 : vector<8x128xf32>
    %259 = math.tanh %258 : vector<8x128xf32>
    %260 = arith.mulf %254, %259 : vector<8x128xf32>
    %c0_124 = arith.constant 0 : index
    %c0_125 = arith.constant 0 : index
    %261 = vector.load %arg13[%c0_124, %c0_125] : memref<8x128xf32, #tpu.memory_space<vmem>>, vector<8x128xf32>
    tpu.vector_store %arg13[%c0_124, %c0_125], %258 {strides = array<i32>} : memref<8x128xf32, #tpu.memory_space<vmem>>, vector<8x128xf32>,
    %262 = arith.truncf %260 : vector<8x128xf32> to vector<8x128xbf16>
    %c0_126 = arith.constant 0 : index
    %c0_127 = arith.constant 0 : index
    %263 = vector.load %arg12[%c0_126, %c0_127] : memref<8x256xbf16, #tpu.memory_space<vmem>>, vector<8x128xbf16>
    tpu.vector_store %arg12[%c0_126, %c0_127], %262 {strides = array<i32>} : memref<8x256xbf16, #tpu.memory_space<vmem>>, vector<8x128xbf16>,
    %c0_128 = arith.constant 0 : index
    %c0_129 = arith.constant 0 : index
    %264 = vector.load %arg12[%c0_128, %c0_129] : memref<8x256xbf16, #tpu.memory_space<vmem>>, vector<8x256xbf16>
    %c0_130 = arith.constant 0 : index
    %c0_131 = arith.constant 0 : index
    %265 = vector.load %arg6[%c0_130, %c0_131] : memref<256x512xbf16, #tpu.memory_space<vmem>>, vector<256x512xbf16>
    %cst_132 = arith.constant dense<0.000000e+00> : vector<8x512xf32>
    %266 = tpu.matmul %264, %265, %cst_132 {dimension_numbers = #tpu.dot_dimension_numbers<[1], [0], [0], [1], [0, 0, 1, 1], [], []>} : vector<8x256xbf16>, vector<256x512xbf16>, vector<8x512xf32> -> vector<8x512xf32>
    %c0_133 = arith.constant 0 : index
    %c0_134 = arith.constant 0 : index
    %267 = vector.load %arg7[%c0_133, %c0_134] : memref<1x512xf32, #tpu.memory_space<vmem>>, vector<1x512xf32>
    %268 = vector.broadcast %267 : vector<1x512xf32> to vector<8x512xf32>
    %269 = arith.addf %266, %268 : vector<8x512xf32>
    %270 = vector.extract_strided_slice %269 {offsets = [0, 0], sizes = [8, 128], strides = [1, 1]} : vector<8x512xf32> to vector<8x128xf32>
    %271 = arith.negf %270 : vector<8x128xf32>
    %272 = math.exp %271 : vector<8x128xf32>
    %cst_135 = arith.constant 1.000000e+00 : f32
    %273 = vector.broadcast %cst_135 : f32 to vector<8x128xf32>
    %274 = arith.addf %273, %272 : vector<8x128xf32>
    %275 = arith.divf %273, %274 : vector<8x128xf32>
    %276 = vector.extract_strided_slice %269 {offsets = [0, 128], sizes = [8, 128], strides = [1, 1]} : vector<8x512xf32> to vector<8x128xf32>
    %277 = arith.negf %276 : vector<8x128xf32>
    %278 = math.exp %277 : vector<8x128xf32>
    %cst_136 = arith.constant 1.000000e+00 : f32
    %279 = vector.broadcast %cst_136 : f32 to vector<8x128xf32>
    %280 = arith.addf %279, %278 : vector<8x128xf32>
    %281 = arith.divf %279, %280 : vector<8x128xf32>
    %282 = vector.extract_strided_slice %269 {offsets = [0, 256], sizes = [8, 128], strides = [1, 1]} : vector<8x512xf32> to vector<8x128xf32>
    %283 = math.tanh %282 : vector<8x128xf32>
    %284 = vector.extract_strided_slice %269 {offsets = [0, 384], sizes = [8, 128], strides = [1, 1]} : vector<8x512xf32> to vector<8x128xf32>
    %285 = arith.negf %284 : vector<8x128xf32>
    %286 = math.exp %285 : vector<8x128xf32>
    %cst_137 = arith.constant 1.000000e+00 : f32
    %287 = vector.broadcast %cst_137 : f32 to vector<8x128xf32>
    %288 = arith.addf %287, %286 : vector<8x128xf32>
    %289 = arith.divf %287, %288 : vector<8x128xf32>
    %c0_138 = arith.constant 0 : index
    %c0_139 = arith.constant 0 : index
    %290 = vector.load %arg14[%c0_138, %c0_139] : memref<8x128xf32, #tpu.memory_space<vmem>>, vector<8x128xf32>
    %291 = arith.mulf %281, %290 : vector<8x128xf32>
    %292 = arith.mulf %275, %283 : vector<8x128xf32>
    %293 = arith.addf %291, %292 : vector<8x128xf32>
    %294 = math.tanh %293 : vector<8x128xf32>
    %295 = arith.mulf %289, %294 : vector<8x128xf32>
    %c0_140 = arith.constant 0 : index
    %c0_141 = arith.constant 0 : index
    %296 = vector.load %arg14[%c0_140, %c0_141] : memref<8x128xf32, #tpu.memory_space<vmem>>, vector<8x128xf32>
    tpu.vector_store %arg14[%c0_140, %c0_141], %293 {strides = array<i32>} : memref<8x128xf32, #tpu.memory_space<vmem>>, vector<8x128xf32>,
    %c0_142 = arith.constant 0 : index
    %c0_143 = arith.constant 0 : index
    %297 = vector.load %arg15[%c0_142, %c0_143] : memref<8x128xf32, #tpu.memory_space<vmem>>, vector<8x128xf32>
    tpu.vector_store %arg15[%c0_142, %c0_143], %295 {strides = array<i32>} : memref<8x128xf32, #tpu.memory_space<vmem>>, vector<8x128xf32>,
    %298 = arith.truncf %295 : vector<8x128xf32> to vector<8x128xbf16>
    %c0_144 = arith.constant 0 : index
    %c128_145 = arith.constant 128 : index
    %299 = vector.load %arg12[%c0_144, %c128_145] : memref<8x256xbf16, #tpu.memory_space<vmem>>, vector<8x128xbf16>
    tpu.vector_store %arg12[%c0_144, %c128_145], %298 {strides = array<i32>} : memref<8x256xbf16, #tpu.memory_space<vmem>>, vector<8x128xbf16>,
    %c4_i32 = arith.constant 4 : i32
    %300 = arith.index_cast %c4_i32 : i32 to index
    %c0_146 = arith.constant 0 : index
    %c0_147 = arith.constant 0 : index
    %301 = vector.load %arg11[%300, %c0_146, %c0_147] : memref<8x8x512xf32, #tpu.memory_space<vmem>>, vector<1x8x512xf32>
    %302 = vector.shape_cast %301 : vector<1x8x512xf32> to vector<8x512xf32>
    %c0_148 = arith.constant 0 : index
    %c0_149 = arith.constant 0 : index
    %303 = vector.load %arg12[%c0_148, %c0_149] : memref<8x256xbf16, #tpu.memory_space<vmem>>, vector<8x128xbf16>
    %c0_150 = arith.constant 0 : index
    %c0_151 = arith.constant 0 : index
    %304 = vector.load %arg4[%c0_150, %c0_151] : memref<128x512xbf16, #tpu.memory_space<vmem>>, vector<128x512xbf16>
    %cst_152 = arith.constant dense<0.000000e+00> : vector<8x512xf32>
    %305 = tpu.matmul %303, %304, %cst_152 {dimension_numbers = #tpu.dot_dimension_numbers<[1], [0], [0], [1], [0, 0, 1, 1], [], []>} : vector<8x128xbf16>, vector<128x512xbf16>, vector<8x512xf32> -> vector<8x512xf32>
    %306 = arith.addf %302, %305 : vector<8x512xf32>
    %307 = vector.extract_strided_slice %306 {offsets = [0, 0], sizes = [8, 128], strides = [1, 1]} : vector<8x512xf32> to vector<8x128xf32>
    %308 = arith.negf %307 : vector<8x128xf32>
    %309 = math.exp %308 : vector<8x128xf32>
    %cst_153 = arith.constant 1.000000e+00 : f32
    %310 = vector.broadcast %cst_153 : f32 to vector<8x128xf32>
    %311 = arith.addf %310, %309 : vector<8x128xf32>
    %312 = arith.divf %310, %311 : vector<8x128xf32>
    %313 = vector.extract_strided_slice %306 {offsets = [0, 128], sizes = [8, 128], strides = [1, 1]} : vector<8x512xf32> to vector<8x128xf32>
    %314 = arith.negf %313 : vector<8x128xf32>
    %315 = math.exp %314 : vector<8x128xf32>
    %cst_154 = arith.constant 1.000000e+00 : f32
    %316 = vector.broadcast %cst_154 : f32 to vector<8x128xf32>
    %317 = arith.addf %316, %315 : vector<8x128xf32>
    %318 = arith.divf %316, %317 : vector<8x128xf32>
    %319 = vector.extract_strided_slice %306 {offsets = [0, 256], sizes = [8, 128], strides = [1, 1]} : vector<8x512xf32> to vector<8x128xf32>
    %320 = math.tanh %319 : vector<8x128xf32>
    %321 = vector.extract_strided_slice %306 {offsets = [0, 384], sizes = [8, 128], strides = [1, 1]} : vector<8x512xf32> to vector<8x128xf32>
    %322 = arith.negf %321 : vector<8x128xf32>
    %323 = math.exp %322 : vector<8x128xf32>
    %cst_155 = arith.constant 1.000000e+00 : f32
    %324 = vector.broadcast %cst_155 : f32 to vector<8x128xf32>
    %325 = arith.addf %324, %323 : vector<8x128xf32>
    %326 = arith.divf %324, %325 : vector<8x128xf32>
    %c0_156 = arith.constant 0 : index
    %c0_157 = arith.constant 0 : index
    %327 = vector.load %arg13[%c0_156, %c0_157] : memref<8x128xf32, #tpu.memory_space<vmem>>, vector<8x128xf32>
    %328 = arith.mulf %318, %327 : vector<8x128xf32>
    %329 = arith.mulf %312, %320 : vector<8x128xf32>
    %330 = arith.addf %328, %329 : vector<8x128xf32>
    %331 = math.tanh %330 : vector<8x128xf32>
    %332 = arith.mulf %326, %331 : vector<8x128xf32>
    %c0_158 = arith.constant 0 : index
    %c0_159 = arith.constant 0 : index
    %333 = vector.load %arg13[%c0_158, %c0_159] : memref<8x128xf32, #tpu.memory_space<vmem>>, vector<8x128xf32>
    tpu.vector_store %arg13[%c0_158, %c0_159], %330 {strides = array<i32>} : memref<8x128xf32, #tpu.memory_space<vmem>>, vector<8x128xf32>,
    %334 = arith.truncf %332 : vector<8x128xf32> to vector<8x128xbf16>
    %c0_160 = arith.constant 0 : index
    %c0_161 = arith.constant 0 : index
    %335 = vector.load %arg12[%c0_160, %c0_161] : memref<8x256xbf16, #tpu.memory_space<vmem>>, vector<8x128xbf16>
    tpu.vector_store %arg12[%c0_160, %c0_161], %334 {strides = array<i32>} : memref<8x256xbf16, #tpu.memory_space<vmem>>, vector<8x128xbf16>,
    %c0_162 = arith.constant 0 : index
    %c0_163 = arith.constant 0 : index
    %336 = vector.load %arg12[%c0_162, %c0_163] : memref<8x256xbf16, #tpu.memory_space<vmem>>, vector<8x256xbf16>
    %c0_164 = arith.constant 0 : index
    %c0_165 = arith.constant 0 : index
    %337 = vector.load %arg6[%c0_164, %c0_165] : memref<256x512xbf16, #tpu.memory_space<vmem>>, vector<256x512xbf16>
    %cst_166 = arith.constant dense<0.000000e+00> : vector<8x512xf32>
    %338 = tpu.matmul %336, %337, %cst_166 {dimension_numbers = #tpu.dot_dimension_numbers<[1], [0], [0], [1], [0, 0, 1, 1], [], []>} : vector<8x256xbf16>, vector<256x512xbf16>, vector<8x512xf32> -> vector<8x512xf32>
    %c0_167 = arith.constant 0 : index
    %c0_168 = arith.constant 0 : index
    %339 = vector.load %arg7[%c0_167, %c0_168] : memref<1x512xf32, #tpu.memory_space<vmem>>, vector<1x512xf32>
    %340 = vector.broadcast %339 : vector<1x512xf32> to vector<8x512xf32>
    %341 = arith.addf %338, %340 : vector<8x512xf32>
    %342 = vector.extract_strided_slice %341 {offsets = [0, 0], sizes = [8, 128], strides = [1, 1]} : vector<8x512xf32> to vector<8x128xf32>
    %343 = arith.negf %342 : vector<8x128xf32>
    %344 = math.exp %343 : vector<8x128xf32>
    %cst_169 = arith.constant 1.000000e+00 : f32
    %345 = vector.broadcast %cst_169 : f32 to vector<8x128xf32>
    %346 = arith.addf %345, %344 : vector<8x128xf32>
    %347 = arith.divf %345, %346 : vector<8x128xf32>
    %348 = vector.extract_strided_slice %341 {offsets = [0, 128], sizes = [8, 128], strides = [1, 1]} : vector<8x512xf32> to vector<8x128xf32>
    %349 = arith.negf %348 : vector<8x128xf32>
    %350 = math.exp %349 : vector<8x128xf32>
    %cst_170 = arith.constant 1.000000e+00 : f32
    %351 = vector.broadcast %cst_170 : f32 to vector<8x128xf32>
    %352 = arith.addf %351, %350 : vector<8x128xf32>
    %353 = arith.divf %351, %352 : vector<8x128xf32>
    %354 = vector.extract_strided_slice %341 {offsets = [0, 256], sizes = [8, 128], strides = [1, 1]} : vector<8x512xf32> to vector<8x128xf32>
    %355 = math.tanh %354 : vector<8x128xf32>
    %356 = vector.extract_strided_slice %341 {offsets = [0, 384], sizes = [8, 128], strides = [1, 1]} : vector<8x512xf32> to vector<8x128xf32>
    %357 = arith.negf %356 : vector<8x128xf32>
    %358 = math.exp %357 : vector<8x128xf32>
    %cst_171 = arith.constant 1.000000e+00 : f32
    %359 = vector.broadcast %cst_171 : f32 to vector<8x128xf32>
    %360 = arith.addf %359, %358 : vector<8x128xf32>
    %361 = arith.divf %359, %360 : vector<8x128xf32>
    %c0_172 = arith.constant 0 : index
    %c0_173 = arith.constant 0 : index
    %362 = vector.load %arg14[%c0_172, %c0_173] : memref<8x128xf32, #tpu.memory_space<vmem>>, vector<8x128xf32>
    %363 = arith.mulf %353, %362 : vector<8x128xf32>
    %364 = arith.mulf %347, %355 : vector<8x128xf32>
    %365 = arith.addf %363, %364 : vector<8x128xf32>
    %366 = math.tanh %365 : vector<8x128xf32>
    %367 = arith.mulf %361, %366 : vector<8x128xf32>
    %c0_174 = arith.constant 0 : index
    %c0_175 = arith.constant 0 : index
    %368 = vector.load %arg14[%c0_174, %c0_175] : memref<8x128xf32, #tpu.memory_space<vmem>>, vector<8x128xf32>
    tpu.vector_store %arg14[%c0_174, %c0_175], %365 {strides = array<i32>} : memref<8x128xf32, #tpu.memory_space<vmem>>, vector<8x128xf32>,
    %c0_176 = arith.constant 0 : index
    %c0_177 = arith.constant 0 : index
    %369 = vector.load %arg15[%c0_176, %c0_177] : memref<8x128xf32, #tpu.memory_space<vmem>>, vector<8x128xf32>
    tpu.vector_store %arg15[%c0_176, %c0_177], %367 {strides = array<i32>} : memref<8x128xf32, #tpu.memory_space<vmem>>, vector<8x128xf32>,
    %370 = arith.truncf %367 : vector<8x128xf32> to vector<8x128xbf16>
    %c0_178 = arith.constant 0 : index
    %c128_179 = arith.constant 128 : index
    %371 = vector.load %arg12[%c0_178, %c128_179] : memref<8x256xbf16, #tpu.memory_space<vmem>>, vector<8x128xbf16>
    tpu.vector_store %arg12[%c0_178, %c128_179], %370 {strides = array<i32>} : memref<8x256xbf16, #tpu.memory_space<vmem>>, vector<8x128xbf16>,
    %c5_i32 = arith.constant 5 : i32
    %372 = arith.index_cast %c5_i32 : i32 to index
    %c0_180 = arith.constant 0 : index
    %c0_181 = arith.constant 0 : index
    %373 = vector.load %arg11[%372, %c0_180, %c0_181] : memref<8x8x512xf32, #tpu.memory_space<vmem>>, vector<1x8x512xf32>
    %374 = vector.shape_cast %373 : vector<1x8x512xf32> to vector<8x512xf32>
    %c0_182 = arith.constant 0 : index
    %c0_183 = arith.constant 0 : index
    %375 = vector.load %arg12[%c0_182, %c0_183] : memref<8x256xbf16, #tpu.memory_space<vmem>>, vector<8x128xbf16>
    %c0_184 = arith.constant 0 : index
    %c0_185 = arith.constant 0 : index
    %376 = vector.load %arg4[%c0_184, %c0_185] : memref<128x512xbf16, #tpu.memory_space<vmem>>, vector<128x512xbf16>
    %cst_186 = arith.constant dense<0.000000e+00> : vector<8x512xf32>
    %377 = tpu.matmul %375, %376, %cst_186 {dimension_numbers = #tpu.dot_dimension_numbers<[1], [0], [0], [1], [0, 0, 1, 1], [], []>} : vector<8x128xbf16>, vector<128x512xbf16>, vector<8x512xf32> -> vector<8x512xf32>
    %378 = arith.addf %374, %377 : vector<8x512xf32>
    %379 = vector.extract_strided_slice %378 {offsets = [0, 0], sizes = [8, 128], strides = [1, 1]} : vector<8x512xf32> to vector<8x128xf32>
    %380 = arith.negf %379 : vector<8x128xf32>
    %381 = math.exp %380 : vector<8x128xf32>
    %cst_187 = arith.constant 1.000000e+00 : f32
    %382 = vector.broadcast %cst_187 : f32 to vector<8x128xf32>
    %383 = arith.addf %382, %381 : vector<8x128xf32>
    %384 = arith.divf %382, %383 : vector<8x128xf32>
    %385 = vector.extract_strided_slice %378 {offsets = [0, 128], sizes = [8, 128], strides = [1, 1]} : vector<8x512xf32> to vector<8x128xf32>
    %386 = arith.negf %385 : vector<8x128xf32>
    %387 = math.exp %386 : vector<8x128xf32>
    %cst_188 = arith.constant 1.000000e+00 : f32
    %388 = vector.broadcast %cst_188 : f32 to vector<8x128xf32>
    %389 = arith.addf %388, %387 : vector<8x128xf32>
    %390 = arith.divf %388, %389 : vector<8x128xf32>
    %391 = vector.extract_strided_slice %378 {offsets = [0, 256], sizes = [8, 128], strides = [1, 1]} : vector<8x512xf32> to vector<8x128xf32>
    %392 = math.tanh %391 : vector<8x128xf32>
    %393 = vector.extract_strided_slice %378 {offsets = [0, 384], sizes = [8, 128], strides = [1, 1]} : vector<8x512xf32> to vector<8x128xf32>
    %394 = arith.negf %393 : vector<8x128xf32>
    %395 = math.exp %394 : vector<8x128xf32>
    %cst_189 = arith.constant 1.000000e+00 : f32
    %396 = vector.broadcast %cst_189 : f32 to vector<8x128xf32>
    %397 = arith.addf %396, %395 : vector<8x128xf32>
    %398 = arith.divf %396, %397 : vector<8x128xf32>
    %c0_190 = arith.constant 0 : index
    %c0_191 = arith.constant 0 : index
    %399 = vector.load %arg13[%c0_190, %c0_191] : memref<8x128xf32, #tpu.memory_space<vmem>>, vector<8x128xf32>
    %400 = arith.mulf %390, %399 : vector<8x128xf32>
    %401 = arith.mulf %384, %392 : vector<8x128xf32>
    %402 = arith.addf %400, %401 : vector<8x128xf32>
    %403 = math.tanh %402 : vector<8x128xf32>
    %404 = arith.mulf %398, %403 : vector<8x128xf32>
    %c0_192 = arith.constant 0 : index
    %c0_193 = arith.constant 0 : index
    %405 = vector.load %arg13[%c0_192, %c0_193] : memref<8x128xf32, #tpu.memory_space<vmem>>, vector<8x128xf32>
    tpu.vector_store %arg13[%c0_192, %c0_193], %402 {strides = array<i32>} : memref<8x128xf32, #tpu.memory_space<vmem>>, vector<8x128xf32>,
    %406 = arith.truncf %404 : vector<8x128xf32> to vector<8x128xbf16>
    %c0_194 = arith.constant 0 : index
    %c0_195 = arith.constant 0 : index
    %407 = vector.load %arg12[%c0_194, %c0_195] : memref<8x256xbf16, #tpu.memory_space<vmem>>, vector<8x128xbf16>
    tpu.vector_store %arg12[%c0_194, %c0_195], %406 {strides = array<i32>} : memref<8x256xbf16, #tpu.memory_space<vmem>>, vector<8x128xbf16>,
    %c0_196 = arith.constant 0 : index
    %c0_197 = arith.constant 0 : index
    %408 = vector.load %arg12[%c0_196, %c0_197] : memref<8x256xbf16, #tpu.memory_space<vmem>>, vector<8x256xbf16>
    %c0_198 = arith.constant 0 : index
    %c0_199 = arith.constant 0 : index
    %409 = vector.load %arg6[%c0_198, %c0_199] : memref<256x512xbf16, #tpu.memory_space<vmem>>, vector<256x512xbf16>
    %cst_200 = arith.constant dense<0.000000e+00> : vector<8x512xf32>
    %410 = tpu.matmul %408, %409, %cst_200 {dimension_numbers = #tpu.dot_dimension_numbers<[1], [0], [0], [1], [0, 0, 1, 1], [], []>} : vector<8x256xbf16>, vector<256x512xbf16>, vector<8x512xf32> -> vector<8x512xf32>
    %c0_201 = arith.constant 0 : index
    %c0_202 = arith.constant 0 : index
    %411 = vector.load %arg7[%c0_201, %c0_202] : memref<1x512xf32, #tpu.memory_space<vmem>>, vector<1x512xf32>
    %412 = vector.broadcast %411 : vector<1x512xf32> to vector<8x512xf32>
    %413 = arith.addf %410, %412 : vector<8x512xf32>
    %414 = vector.extract_strided_slice %413 {offsets = [0, 0], sizes = [8, 128], strides = [1, 1]} : vector<8x512xf32> to vector<8x128xf32>
    %415 = arith.negf %414 : vector<8x128xf32>
    %416 = math.exp %415 : vector<8x128xf32>
    %cst_203 = arith.constant 1.000000e+00 : f32
    %417 = vector.broadcast %cst_203 : f32 to vector<8x128xf32>
    %418 = arith.addf %417, %416 : vector<8x128xf32>
    %419 = arith.divf %417, %418 : vector<8x128xf32>
    %420 = vector.extract_strided_slice %413 {offsets = [0, 128], sizes = [8, 128], strides = [1, 1]} : vector<8x512xf32> to vector<8x128xf32>
    %421 = arith.negf %420 : vector<8x128xf32>
    %422 = math.exp %421 : vector<8x128xf32>
    %cst_204 = arith.constant 1.000000e+00 : f32
    %423 = vector.broadcast %cst_204 : f32 to vector<8x128xf32>
    %424 = arith.addf %423, %422 : vector<8x128xf32>
    %425 = arith.divf %423, %424 : vector<8x128xf32>
    %426 = vector.extract_strided_slice %413 {offsets = [0, 256], sizes = [8, 128], strides = [1, 1]} : vector<8x512xf32> to vector<8x128xf32>
    %427 = math.tanh %426 : vector<8x128xf32>
    %428 = vector.extract_strided_slice %413 {offsets = [0, 384], sizes = [8, 128], strides = [1, 1]} : vector<8x512xf32> to vector<8x128xf32>
    %429 = arith.negf %428 : vector<8x128xf32>
    %430 = math.exp %429 : vector<8x128xf32>
    %cst_205 = arith.constant 1.000000e+00 : f32
    %431 = vector.broadcast %cst_205 : f32 to vector<8x128xf32>
    %432 = arith.addf %431, %430 : vector<8x128xf32>
    %433 = arith.divf %431, %432 : vector<8x128xf32>
    %c0_206 = arith.constant 0 : index
    %c0_207 = arith.constant 0 : index
    %434 = vector.load %arg14[%c0_206, %c0_207] : memref<8x128xf32, #tpu.memory_space<vmem>>, vector<8x128xf32>
    %435 = arith.mulf %425, %434 : vector<8x128xf32>
    %436 = arith.mulf %419, %427 : vector<8x128xf32>
    %437 = arith.addf %435, %436 : vector<8x128xf32>
    %438 = math.tanh %437 : vector<8x128xf32>
    %439 = arith.mulf %433, %438 : vector<8x128xf32>
    %c0_208 = arith.constant 0 : index
    %c0_209 = arith.constant 0 : index
    %440 = vector.load %arg14[%c0_208, %c0_209] : memref<8x128xf32, #tpu.memory_space<vmem>>, vector<8x128xf32>
    tpu.vector_store %arg14[%c0_208, %c0_209], %437 {strides = array<i32>} : memref<8x128xf32, #tpu.memory_space<vmem>>, vector<8x128xf32>,
    %c0_210 = arith.constant 0 : index
    %c0_211 = arith.constant 0 : index
    %441 = vector.load %arg15[%c0_210, %c0_211] : memref<8x128xf32, #tpu.memory_space<vmem>>, vector<8x128xf32>
    tpu.vector_store %arg15[%c0_210, %c0_211], %439 {strides = array<i32>} : memref<8x128xf32, #tpu.memory_space<vmem>>, vector<8x128xf32>,
    %442 = arith.truncf %439 : vector<8x128xf32> to vector<8x128xbf16>
    %c0_212 = arith.constant 0 : index
    %c128_213 = arith.constant 128 : index
    %443 = vector.load %arg12[%c0_212, %c128_213] : memref<8x256xbf16, #tpu.memory_space<vmem>>, vector<8x128xbf16>
    tpu.vector_store %arg12[%c0_212, %c128_213], %442 {strides = array<i32>} : memref<8x256xbf16, #tpu.memory_space<vmem>>, vector<8x128xbf16>,
    %c6_i32 = arith.constant 6 : i32
    %444 = arith.index_cast %c6_i32 : i32 to index
    %c0_214 = arith.constant 0 : index
    %c0_215 = arith.constant 0 : index
    %445 = vector.load %arg11[%444, %c0_214, %c0_215] : memref<8x8x512xf32, #tpu.memory_space<vmem>>, vector<1x8x512xf32>
    %446 = vector.shape_cast %445 : vector<1x8x512xf32> to vector<8x512xf32>
    %c0_216 = arith.constant 0 : index
    %c0_217 = arith.constant 0 : index
    %447 = vector.load %arg12[%c0_216, %c0_217] : memref<8x256xbf16, #tpu.memory_space<vmem>>, vector<8x128xbf16>
    %c0_218 = arith.constant 0 : index
    %c0_219 = arith.constant 0 : index
    %448 = vector.load %arg4[%c0_218, %c0_219] : memref<128x512xbf16, #tpu.memory_space<vmem>>, vector<128x512xbf16>
    %cst_220 = arith.constant dense<0.000000e+00> : vector<8x512xf32>
    %449 = tpu.matmul %447, %448, %cst_220 {dimension_numbers = #tpu.dot_dimension_numbers<[1], [0], [0], [1], [0, 0, 1, 1], [], []>} : vector<8x128xbf16>, vector<128x512xbf16>, vector<8x512xf32> -> vector<8x512xf32>
    %450 = arith.addf %446, %449 : vector<8x512xf32>
    %451 = vector.extract_strided_slice %450 {offsets = [0, 0], sizes = [8, 128], strides = [1, 1]} : vector<8x512xf32> to vector<8x128xf32>
    %452 = arith.negf %451 : vector<8x128xf32>
    %453 = math.exp %452 : vector<8x128xf32>
    %cst_221 = arith.constant 1.000000e+00 : f32
    %454 = vector.broadcast %cst_221 : f32 to vector<8x128xf32>
    %455 = arith.addf %454, %453 : vector<8x128xf32>
    %456 = arith.divf %454, %455 : vector<8x128xf32>
    %457 = vector.extract_strided_slice %450 {offsets = [0, 128], sizes = [8, 128], strides = [1, 1]} : vector<8x512xf32> to vector<8x128xf32>
    %458 = arith.negf %457 : vector<8x128xf32>
    %459 = math.exp %458 : vector<8x128xf32>
    %cst_222 = arith.constant 1.000000e+00 : f32
    %460 = vector.broadcast %cst_222 : f32 to vector<8x128xf32>
    %461 = arith.addf %460, %459 : vector<8x128xf32>
    %462 = arith.divf %460, %461 : vector<8x128xf32>
    %463 = vector.extract_strided_slice %450 {offsets = [0, 256], sizes = [8, 128], strides = [1, 1]} : vector<8x512xf32> to vector<8x128xf32>
    %464 = math.tanh %463 : vector<8x128xf32>
    %465 = vector.extract_strided_slice %450 {offsets = [0, 384], sizes = [8, 128], strides = [1, 1]} : vector<8x512xf32> to vector<8x128xf32>
    %466 = arith.negf %465 : vector<8x128xf32>
    %467 = math.exp %466 : vector<8x128xf32>
    %cst_223 = arith.constant 1.000000e+00 : f32
    %468 = vector.broadcast %cst_223 : f32 to vector<8x128xf32>
    %469 = arith.addf %468, %467 : vector<8x128xf32>
    %470 = arith.divf %468, %469 : vector<8x128xf32>
    %c0_224 = arith.constant 0 : index
    %c0_225 = arith.constant 0 : index
    %471 = vector.load %arg13[%c0_224, %c0_225] : memref<8x128xf32, #tpu.memory_space<vmem>>, vector<8x128xf32>
    %472 = arith.mulf %462, %471 : vector<8x128xf32>
    %473 = arith.mulf %456, %464 : vector<8x128xf32>
    %474 = arith.addf %472, %473 : vector<8x128xf32>
    %475 = math.tanh %474 : vector<8x128xf32>
    %476 = arith.mulf %470, %475 : vector<8x128xf32>
    %c0_226 = arith.constant 0 : index
    %c0_227 = arith.constant 0 : index
    %477 = vector.load %arg13[%c0_226, %c0_227] : memref<8x128xf32, #tpu.memory_space<vmem>>, vector<8x128xf32>
    tpu.vector_store %arg13[%c0_226, %c0_227], %474 {strides = array<i32>} : memref<8x128xf32, #tpu.memory_space<vmem>>, vector<8x128xf32>,
    %478 = arith.truncf %476 : vector<8x128xf32> to vector<8x128xbf16>
    %c0_228 = arith.constant 0 : index
    %c0_229 = arith.constant 0 : index
    %479 = vector.load %arg12[%c0_228, %c0_229] : memref<8x256xbf16, #tpu.memory_space<vmem>>, vector<8x128xbf16>
    tpu.vector_store %arg12[%c0_228, %c0_229], %478 {strides = array<i32>} : memref<8x256xbf16, #tpu.memory_space<vmem>>, vector<8x128xbf16>,
    %c0_230 = arith.constant 0 : index
    %c0_231 = arith.constant 0 : index
    %480 = vector.load %arg12[%c0_230, %c0_231] : memref<8x256xbf16, #tpu.memory_space<vmem>>, vector<8x256xbf16>
    %c0_232 = arith.constant 0 : index
    %c0_233 = arith.constant 0 : index
    %481 = vector.load %arg6[%c0_232, %c0_233] : memref<256x512xbf16, #tpu.memory_space<vmem>>, vector<256x512xbf16>
    %cst_234 = arith.constant dense<0.000000e+00> : vector<8x512xf32>
    %482 = tpu.matmul %480, %481, %cst_234 {dimension_numbers = #tpu.dot_dimension_numbers<[1], [0], [0], [1], [0, 0, 1, 1], [], []>} : vector<8x256xbf16>, vector<256x512xbf16>, vector<8x512xf32> -> vector<8x512xf32>
    %c0_235 = arith.constant 0 : index
    %c0_236 = arith.constant 0 : index
    %483 = vector.load %arg7[%c0_235, %c0_236] : memref<1x512xf32, #tpu.memory_space<vmem>>, vector<1x512xf32>
    %484 = vector.broadcast %483 : vector<1x512xf32> to vector<8x512xf32>
    %485 = arith.addf %482, %484 : vector<8x512xf32>
    %486 = vector.extract_strided_slice %485 {offsets = [0, 0], sizes = [8, 128], strides = [1, 1]} : vector<8x512xf32> to vector<8x128xf32>
    %487 = arith.negf %486 : vector<8x128xf32>
    %488 = math.exp %487 : vector<8x128xf32>
    %cst_237 = arith.constant 1.000000e+00 : f32
    %489 = vector.broadcast %cst_237 : f32 to vector<8x128xf32>
    %490 = arith.addf %489, %488 : vector<8x128xf32>
    %491 = arith.divf %489, %490 : vector<8x128xf32>
    %492 = vector.extract_strided_slice %485 {offsets = [0, 128], sizes = [8, 128], strides = [1, 1]} : vector<8x512xf32> to vector<8x128xf32>
    %493 = arith.negf %492 : vector<8x128xf32>
    %494 = math.exp %493 : vector<8x128xf32>
    %cst_238 = arith.constant 1.000000e+00 : f32
    %495 = vector.broadcast %cst_238 : f32 to vector<8x128xf32>
    %496 = arith.addf %495, %494 : vector<8x128xf32>
    %497 = arith.divf %495, %496 : vector<8x128xf32>
    %498 = vector.extract_strided_slice %485 {offsets = [0, 256], sizes = [8, 128], strides = [1, 1]} : vector<8x512xf32> to vector<8x128xf32>
    %499 = math.tanh %498 : vector<8x128xf32>
    %500 = vector.extract_strided_slice %485 {offsets = [0, 384], sizes = [8, 128], strides = [1, 1]} : vector<8x512xf32> to vector<8x128xf32>
    %501 = arith.negf %500 : vector<8x128xf32>
    %502 = math.exp %501 : vector<8x128xf32>
    %cst_239 = arith.constant 1.000000e+00 : f32
    %503 = vector.broadcast %cst_239 : f32 to vector<8x128xf32>
    %504 = arith.addf %503, %502 : vector<8x128xf32>
    %505 = arith.divf %503, %504 : vector<8x128xf32>
    %c0_240 = arith.constant 0 : index
    %c0_241 = arith.constant 0 : index
    %506 = vector.load %arg14[%c0_240, %c0_241] : memref<8x128xf32, #tpu.memory_space<vmem>>, vector<8x128xf32>
    %507 = arith.mulf %497, %506 : vector<8x128xf32>
    %508 = arith.mulf %491, %499 : vector<8x128xf32>
    %509 = arith.addf %507, %508 : vector<8x128xf32>
    %510 = math.tanh %509 : vector<8x128xf32>
    %511 = arith.mulf %505, %510 : vector<8x128xf32>
    %c0_242 = arith.constant 0 : index
    %c0_243 = arith.constant 0 : index
    %512 = vector.load %arg14[%c0_242, %c0_243] : memref<8x128xf32, #tpu.memory_space<vmem>>, vector<8x128xf32>
    tpu.vector_store %arg14[%c0_242, %c0_243], %509 {strides = array<i32>} : memref<8x128xf32, #tpu.memory_space<vmem>>, vector<8x128xf32>,
    %c0_244 = arith.constant 0 : index
    %c0_245 = arith.constant 0 : index
    %513 = vector.load %arg15[%c0_244, %c0_245] : memref<8x128xf32, #tpu.memory_space<vmem>>, vector<8x128xf32>
    tpu.vector_store %arg15[%c0_244, %c0_245], %511 {strides = array<i32>} : memref<8x128xf32, #tpu.memory_space<vmem>>, vector<8x128xf32>,
    %514 = arith.truncf %511 : vector<8x128xf32> to vector<8x128xbf16>
    %c0_246 = arith.constant 0 : index
    %c128_247 = arith.constant 128 : index
    %515 = vector.load %arg12[%c0_246, %c128_247] : memref<8x256xbf16, #tpu.memory_space<vmem>>, vector<8x128xbf16>
    tpu.vector_store %arg12[%c0_246, %c128_247], %514 {strides = array<i32>} : memref<8x256xbf16, #tpu.memory_space<vmem>>, vector<8x128xbf16>,
    %c7_i32 = arith.constant 7 : i32
    %516 = arith.index_cast %c7_i32 : i32 to index
    %c0_248 = arith.constant 0 : index
    %c0_249 = arith.constant 0 : index
    %517 = vector.load %arg11[%516, %c0_248, %c0_249] : memref<8x8x512xf32, #tpu.memory_space<vmem>>, vector<1x8x512xf32>
    %518 = vector.shape_cast %517 : vector<1x8x512xf32> to vector<8x512xf32>
    %c0_250 = arith.constant 0 : index
    %c0_251 = arith.constant 0 : index
    %519 = vector.load %arg12[%c0_250, %c0_251] : memref<8x256xbf16, #tpu.memory_space<vmem>>, vector<8x128xbf16>
    %c0_252 = arith.constant 0 : index
    %c0_253 = arith.constant 0 : index
    %520 = vector.load %arg4[%c0_252, %c0_253] : memref<128x512xbf16, #tpu.memory_space<vmem>>, vector<128x512xbf16>
    %cst_254 = arith.constant dense<0.000000e+00> : vector<8x512xf32>
    %521 = tpu.matmul %519, %520, %cst_254 {dimension_numbers = #tpu.dot_dimension_numbers<[1], [0], [0], [1], [0, 0, 1, 1], [], []>} : vector<8x128xbf16>, vector<128x512xbf16>, vector<8x512xf32> -> vector<8x512xf32>
    %522 = arith.addf %518, %521 : vector<8x512xf32>
    %523 = vector.extract_strided_slice %522 {offsets = [0, 0], sizes = [8, 128], strides = [1, 1]} : vector<8x512xf32> to vector<8x128xf32>
    %524 = arith.negf %523 : vector<8x128xf32>
    %525 = math.exp %524 : vector<8x128xf32>
    %cst_255 = arith.constant 1.000000e+00 : f32
    %526 = vector.broadcast %cst_255 : f32 to vector<8x128xf32>
    %527 = arith.addf %526, %525 : vector<8x128xf32>
    %528 = arith.divf %526, %527 : vector<8x128xf32>
    %529 = vector.extract_strided_slice %522 {offsets = [0, 128], sizes = [8, 128], strides = [1, 1]} : vector<8x512xf32> to vector<8x128xf32>
    %530 = arith.negf %529 : vector<8x128xf32>
    %531 = math.exp %530 : vector<8x128xf32>
    %cst_256 = arith.constant 1.000000e+00 : f32
    %532 = vector.broadcast %cst_256 : f32 to vector<8x128xf32>
    %533 = arith.addf %532, %531 : vector<8x128xf32>
    %534 = arith.divf %532, %533 : vector<8x128xf32>
    %535 = vector.extract_strided_slice %522 {offsets = [0, 256], sizes = [8, 128], strides = [1, 1]} : vector<8x512xf32> to vector<8x128xf32>
    %536 = math.tanh %535 : vector<8x128xf32>
    %537 = vector.extract_strided_slice %522 {offsets = [0, 384], sizes = [8, 128], strides = [1, 1]} : vector<8x512xf32> to vector<8x128xf32>
    %538 = arith.negf %537 : vector<8x128xf32>
    %539 = math.exp %538 : vector<8x128xf32>
    %cst_257 = arith.constant 1.000000e+00 : f32
    %540 = vector.broadcast %cst_257 : f32 to vector<8x128xf32>
    %541 = arith.addf %540, %539 : vector<8x128xf32>
    %542 = arith.divf %540, %541 : vector<8x128xf32>
    %c0_258 = arith.constant 0 : index
    %c0_259 = arith.constant 0 : index
    %543 = vector.load %arg13[%c0_258, %c0_259] : memref<8x128xf32, #tpu.memory_space<vmem>>, vector<8x128xf32>
    %544 = arith.mulf %534, %543 : vector<8x128xf32>
    %545 = arith.mulf %528, %536 : vector<8x128xf32>
    %546 = arith.addf %544, %545 : vector<8x128xf32>
    %547 = math.tanh %546 : vector<8x128xf32>
    %548 = arith.mulf %542, %547 : vector<8x128xf32>
    %c0_260 = arith.constant 0 : index
    %c0_261 = arith.constant 0 : index
    %549 = vector.load %arg13[%c0_260, %c0_261] : memref<8x128xf32, #tpu.memory_space<vmem>>, vector<8x128xf32>
    tpu.vector_store %arg13[%c0_260, %c0_261], %546 {strides = array<i32>} : memref<8x128xf32, #tpu.memory_space<vmem>>, vector<8x128xf32>,
    %550 = arith.truncf %548 : vector<8x128xf32> to vector<8x128xbf16>
    %c0_262 = arith.constant 0 : index
    %c0_263 = arith.constant 0 : index
    %551 = vector.load %arg12[%c0_262, %c0_263] : memref<8x256xbf16, #tpu.memory_space<vmem>>, vector<8x128xbf16>
    tpu.vector_store %arg12[%c0_262, %c0_263], %550 {strides = array<i32>} : memref<8x256xbf16, #tpu.memory_space<vmem>>, vector<8x128xbf16>,
    %c0_264 = arith.constant 0 : index
    %c0_265 = arith.constant 0 : index
    %552 = vector.load %arg12[%c0_264, %c0_265] : memref<8x256xbf16, #tpu.memory_space<vmem>>, vector<8x256xbf16>
    %c0_266 = arith.constant 0 : index
    %c0_267 = arith.constant 0 : index
    %553 = vector.load %arg6[%c0_266, %c0_267] : memref<256x512xbf16, #tpu.memory_space<vmem>>, vector<256x512xbf16>
    %cst_268 = arith.constant dense<0.000000e+00> : vector<8x512xf32>
    %554 = tpu.matmul %552, %553, %cst_268 {dimension_numbers = #tpu.dot_dimension_numbers<[1], [0], [0], [1], [0, 0, 1, 1], [], []>} : vector<8x256xbf16>, vector<256x512xbf16>, vector<8x512xf32> -> vector<8x512xf32>
    %c0_269 = arith.constant 0 : index
    %c0_270 = arith.constant 0 : index
    %555 = vector.load %arg7[%c0_269, %c0_270] : memref<1x512xf32, #tpu.memory_space<vmem>>, vector<1x512xf32>
    %556 = vector.broadcast %555 : vector<1x512xf32> to vector<8x512xf32>
    %557 = arith.addf %554, %556 : vector<8x512xf32>
    %558 = vector.extract_strided_slice %557 {offsets = [0, 0], sizes = [8, 128], strides = [1, 1]} : vector<8x512xf32> to vector<8x128xf32>
    %559 = arith.negf %558 : vector<8x128xf32>
    %560 = math.exp %559 : vector<8x128xf32>
    %cst_271 = arith.constant 1.000000e+00 : f32
    %561 = vector.broadcast %cst_271 : f32 to vector<8x128xf32>
    %562 = arith.addf %561, %560 : vector<8x128xf32>
    %563 = arith.divf %561, %562 : vector<8x128xf32>
    %564 = vector.extract_strided_slice %557 {offsets = [0, 128], sizes = [8, 128], strides = [1, 1]} : vector<8x512xf32> to vector<8x128xf32>
    %565 = arith.negf %564 : vector<8x128xf32>
    %566 = math.exp %565 : vector<8x128xf32>
    %cst_272 = arith.constant 1.000000e+00 : f32
    %567 = vector.broadcast %cst_272 : f32 to vector<8x128xf32>
    %568 = arith.addf %567, %566 : vector<8x128xf32>
    %569 = arith.divf %567, %568 : vector<8x128xf32>
    %570 = vector.extract_strided_slice %557 {offsets = [0, 256], sizes = [8, 128], strides = [1, 1]} : vector<8x512xf32> to vector<8x128xf32>
    %571 = math.tanh %570 : vector<8x128xf32>
    %572 = vector.extract_strided_slice %557 {offsets = [0, 384], sizes = [8, 128], strides = [1, 1]} : vector<8x512xf32> to vector<8x128xf32>
    %573 = arith.negf %572 : vector<8x128xf32>
    %574 = math.exp %573 : vector<8x128xf32>
    %cst_273 = arith.constant 1.000000e+00 : f32
    %575 = vector.broadcast %cst_273 : f32 to vector<8x128xf32>
    %576 = arith.addf %575, %574 : vector<8x128xf32>
    %577 = arith.divf %575, %576 : vector<8x128xf32>
    %c0_274 = arith.constant 0 : index
    %c0_275 = arith.constant 0 : index
    %578 = vector.load %arg14[%c0_274, %c0_275] : memref<8x128xf32, #tpu.memory_space<vmem>>, vector<8x128xf32>
    %579 = arith.mulf %569, %578 : vector<8x128xf32>
    %580 = arith.mulf %563, %571 : vector<8x128xf32>
    %581 = arith.addf %579, %580 : vector<8x128xf32>
    %582 = math.tanh %581 : vector<8x128xf32>
    %583 = arith.mulf %577, %582 : vector<8x128xf32>
    %c0_276 = arith.constant 0 : index
    %c0_277 = arith.constant 0 : index
    %584 = vector.load %arg14[%c0_276, %c0_277] : memref<8x128xf32, #tpu.memory_space<vmem>>, vector<8x128xf32>
    tpu.vector_store %arg14[%c0_276, %c0_277], %581 {strides = array<i32>} : memref<8x128xf32, #tpu.memory_space<vmem>>, vector<8x128xf32>,
    %c0_278 = arith.constant 0 : index
    %c0_279 = arith.constant 0 : index
    %585 = vector.load %arg15[%c0_278, %c0_279] : memref<8x128xf32, #tpu.memory_space<vmem>>, vector<8x128xf32>
    tpu.vector_store %arg15[%c0_278, %c0_279], %583 {strides = array<i32>} : memref<8x128xf32, #tpu.memory_space<vmem>>, vector<8x128xf32>,
    %586 = arith.truncf %583 : vector<8x128xf32> to vector<8x128xbf16>
    %c0_280 = arith.constant 0 : index
    %c128_281 = arith.constant 128 : index
    %587 = vector.load %arg12[%c0_280, %c128_281] : memref<8x256xbf16, #tpu.memory_space<vmem>>, vector<8x128xbf16>
    tpu.vector_store %arg12[%c0_280, %c128_281], %586 {strides = array<i32>} : memref<8x256xbf16, #tpu.memory_space<vmem>>, vector<8x128xbf16>,
    %c8_i32 = arith.constant 8 : i32
    %c0_i32_282 = arith.constant 0 : i32
    %588 = arith.cmpi eq, %arg1, %c0_i32_282 : i32
    %589 = arith.extui %588 : i1 to i32
    %c0_i32_283 = arith.constant 0 : i32
    %590 = arith.cmpi ne, %589, %c0_i32_283 : i32
    scf.if %590 {
      %c0_284 = arith.constant 0 : index
      %c0_285 = arith.constant 0 : index
      %591 = vector.load %arg15[%c0_284, %c0_285] : memref<8x128xf32, #tpu.memory_space<vmem>>, vector<8x128xf32>
      %c0_286 = arith.constant 0 : index
      %c0_287 = arith.constant 0 : index
      %592 = vector.load %arg8[%c0_286, %c0_287] : memref<1x128xf32, #tpu.memory_space<vmem>>, vector<1x128xf32>
      %593 = vector.broadcast %592 : vector<1x128xf32> to vector<8x128xf32>
      %594 = arith.mulf %591, %593 : vector<8x128xf32>
      %cst_288 = arith.constant dense<0.000000e+00> : vector<8xf32>
      %595 = vector.multi_reduction <add>, %594, %cst_288 [1] : vector<8x128xf32> to vector<8xf32>
      %596 = vector.shape_cast %595 : vector<8xf32> to vector<8x1xf32>
      %c0_289 = arith.constant 0 : index
      %c0_290 = arith.constant 0 : index
      %597 = vector.load %arg9[%c0_289, %c0_290] : memref<1x1xf32, #tpu.memory_space<vmem>>, vector<1x1xf32>
      %598 = vector.broadcast %597 : vector<1x1xf32> to vector<8x1xf32>
      %599 = arith.addf %596, %598 : vector<8x1xf32>
      %c0_291 = arith.constant 0 : index
      %c0_292 = arith.constant 0 : index
      %600 = vector.load %arg10[%c0_291, %c0_292] : memref<8x1xf32, #tpu.memory_space<vmem>>, vector<8x1xf32>
      tpu.vector_store %arg10[%c0_291, %c0_292], %599 {strides = array<i32>} : memref<8x1xf32, #tpu.memory_space<vmem>>, vector<8x1xf32>,
    } else {
    }
    return
  }
  func.func @transform_0(%arg0: i32, %arg1: i32) -> (i32, i32, i32) {
    %c0_i32 = arith.constant 0 : i32
    %c0_i32_0 = arith.constant 0 : i32
    return %arg1, %arg0, %c0_i32 : i32, i32, i32
  }
  func.func @transform_1(%arg0: i32, %arg1: i32) -> (i32, i32) {
    %c0_i32 = arith.constant 0 : i32
    %c0_i32_0 = arith.constant 0 : i32
    %c0_i32_1 = arith.constant 0 : i32
    return %c0_i32, %c0_i32_0 : i32, i32
  }
  func.func @transform_2(%arg0: i32, %arg1: i32) -> (i32, i32) {
    %c0_i32 = arith.constant 0 : i32
    %c0_i32_0 = arith.constant 0 : i32
    %c0_i32_1 = arith.constant 0 : i32
    return %c0_i32, %c0_i32_0 : i32, i32
  }
  func.func @transform_3(%arg0: i32, %arg1: i32) -> (i32, i32) {
    %c0_i32 = arith.constant 0 : i32
    %c0_i32_0 = arith.constant 0 : i32
    %c0_i32_1 = arith.constant 0 : i32
    return %c0_i32, %c0_i32_0 : i32, i32
  }
  func.func @transform_4(%arg0: i32, %arg1: i32) -> (i32, i32) {
    %c0_i32 = arith.constant 0 : i32
    %c0_i32_0 = arith.constant 0 : i32
    %c0_i32_1 = arith.constant 0 : i32
    return %c0_i32, %c0_i32_0 : i32, i32
  }
  func.func @transform_5(%arg0: i32, %arg1: i32) -> (i32, i32) {
    %c0_i32 = arith.constant 0 : i32
    %c0_i32_0 = arith.constant 0 : i32
    %c0_i32_1 = arith.constant 0 : i32
    return %c0_i32, %c0_i32_0 : i32, i32
  }
  func.func @transform_6(%arg0: i32, %arg1: i32) -> (i32, i32) {
    %c0_i32 = arith.constant 0 : i32
    %c0_i32_0 = arith.constant 0 : i32
    %c0_i32_1 = arith.constant 0 : i32
    return %c0_i32, %c0_i32_0 : i32, i32
  }
  func.func @transform_7(%arg0: i32, %arg1: i32) -> (i32, i32) {
    %c0_i32 = arith.constant 0 : i32
    %c0_i32_0 = arith.constant 0 : i32
    %c0_i32_1 = arith.constant 0 : i32
    return %c0_i32, %c0_i32_0 : i32, i32
  }
  func.func @transform_8(%arg0: i32, %arg1: i32) -> (i32, i32) {
    %c0_i32 = arith.constant 0 : i32
    %c0_i32_0 = arith.constant 0 : i32
    return %arg0, %c0_i32 : i32, i32
  }
}

</mosaic_0001>

<llo_original>
// kernel: lstm_regressor_pallas.1
$region0: #{lstm_regressor_pallas.1}
  #allocation0 [shape = 'u32[]', space=smem, size = 0x4, offset = 0x4, fixed_abs, tag = 'smem constant byte address 0x4 - core index']
  #allocation1 [shape = 'u32[144,128]{1,0:T(1,128)}', space=vmem, size = 0x12000, scoped, tag = 'internal scratch']
  #allocation2 [shape = 'f32[8,8,512]{2,1,0:T(8,128)}', space=vmem, size = 0x20000, scoped, tag = 'scratch operand']
  #allocation3 [shape = 'bf16[8,256]{1,0:T(8,128)(2,1)}', space=vmem, size = 0x1000, scoped, tag = 'scratch operand']
  #allocation4 [shape = 'f32[8,128]{1,0:T(8,128)}', space=vmem, size = 0x1000, scoped, tag = 'scratch operand']
  #allocation5 [shape = 'f32[8,128]{1,0:T(8,128)}', space=vmem, size = 0x1000, scoped, tag = 'scratch operand']
  #allocation6 [shape = 'f32[8,128]{1,0:T(8,128)}', space=vmem, size = 0x1000, scoped, tag = 'scratch operand']
  #allocation7 [shape = 'f32[1,1]{1,0:T(1,128)S(1)}', space=vmem, size = 0x200, scoped, tag = 'scoped memory for lstm_regressor_pallas.1']
  %s0 = inlined_call_operand.vmem [shape: bf16[8,8,128], index: 0, kind: input, shape index: {}]
  %s1 = inlined_call_operand.vmem [shape: bf16[128,512], index: 1, kind: input, shape index: {}]
  %s2 = inlined_call_operand.vmem [shape: bf16[128,512], index: 2, kind: input, shape index: {}]
  %s3 = inlined_call_operand.vmem [shape: f32[1,512], index: 3, kind: input, shape index: {}]
  %s4 = inlined_call_operand.vmem [shape: bf16[256,512], index: 4, kind: input, shape index: {}]
  %s5 = inlined_call_operand.vmem [shape: f32[1,512], index: 5, kind: input, shape index: {}]
  %s6 = inlined_call_operand.vmem [shape: f32[1,128], index: 6, kind: input, shape index: {}]
  %s7 = inlined_call_operand.<no memory space> [shape: f32[1,1], index: 7, kind: input, shape index: {}]
  %s8 = inlined_call_operand.vmem [shape: f32[8,1], index: 8, kind: output, shape index: {}]
  %s9 = sld [smem:[#allocation0]]
  $region50: #{lstm_regressor_pallas.1} parent=0
    _
  %s11 = ssub.s32 1, %s9
  %s12 = scalar_select 0, %s11, %s9
  %v13 = vstv %s7
  %14 = vst [vmem:[#allocation7] sm:$0x1] %v13
  // Predicated region
  $region2: #{lstm_regressor_pallas.1} parent=0 // pred_check
    _
  $region3: #{lstm_regressor_pallas.1} parent=0 // pred_check_branch
    %16 = sbr.rel (0) target = $region5
  $region4: #{lstm_regressor_pallas.1} parent=0 // pred_region
    _
  $region5: #{lstm_regressor_pallas.1} parent=0 // pred_fallthru
    _
  // Predicated region
  $region6: #{lstm_regressor_pallas.1} parent=0 // pred_check
    _
  $region7: #{lstm_regressor_pallas.1} parent=0 // pred_check_branch
    %18 = sbr.rel (0) target = $region9
  $region8: #{lstm_regressor_pallas.1} parent=0 // pred_region
    _
  $region9: #{lstm_regressor_pallas.1} parent=0 // pred_fallthru
    _
  // Predicated region
  $region10: #{lstm_regressor_pallas.1} parent=0 // pred_check
    _
  $region11: #{lstm_regressor_pallas.1} parent=0 // pred_check_branch
    %20 = sbr.rel (0) target = $region13
  $region12: #{lstm_regressor_pallas.1} parent=0 // pred_region
    _
  $region13: #{lstm_regressor_pallas.1} parent=0 // pred_fallthru
    _
  // Predicated region
  $region14: #{lstm_regressor_pallas.1} parent=0 // pred_check
    _
  $region15: #{lstm_regressor_pallas.1} parent=0 // pred_check_branch
    %22 = sbr.rel (0) target = $region17
  $region16: #{lstm_regressor_pallas.1} parent=0 // pred_region
    _
  $region17: #{lstm_regressor_pallas.1} parent=0 // pred_fallthru
    _
  // Predicated region
  $region18: #{lstm_regressor_pallas.1} parent=0 // pred_check
    _
  $region19: #{lstm_regressor_pallas.1} parent=0 // pred_check_branch
    %24 = sbr.rel (0) target = $region21
  $region20: #{lstm_regressor_pallas.1} parent=0 // pred_region
    _
  $region21: #{lstm_regressor_pallas.1} parent=0 // pred_fallthru
    _
  // Predicated region
  $region22: #{lstm_regressor_pallas.1} parent=0 // pred_check
    _
  $region23: #{lstm_regressor_pallas.1} parent=0 // pred_check_branch
    %26 = sbr.rel (0) target = $region25
  $region24: #{lstm_regressor_pallas.1} parent=0 // pred_region
    _
  $region25: #{lstm_regressor_pallas.1} parent=0 // pred_fallthru
    _
  // Predicated region
  $region26: #{lstm_regressor_pallas.1} parent=0 // pred_check
    _
  $region27: #{lstm_regressor_pallas.1} parent=0 // pred_check_branch
    %28 = sbr.rel (0) target = $region29
  $region28: #{lstm_regressor_pallas.1} parent=0 // pred_region
    _
  $region29: #{lstm_regressor_pallas.1} parent=0 // pred_fallthru
    _
  // Predicated region
  $region30: #{lstm_regressor_pallas.1} parent=0 // pred_check
    _
  $region31: #{lstm_regressor_pallas.1} parent=0 // pred_check_branch
    %30 = sbr.rel (0) target = $region33
  $region32: #{lstm_regressor_pallas.1} parent=0 // pred_region
    _
  $region33: #{lstm_regressor_pallas.1} parent=0 // pred_fallthru
    _
  %p32 = scmp.eq.s32.totalorder 0, 0
  // Predicated region
  $region34: #{lstm_regressor_pallas.1} parent=0 // pred_check
    %p33 = pneg %p32
  $region35: #{lstm_regressor_pallas.1} parent=0 // pred_check_branch
    %35 = sbr.rel (%p33) target = $region37
  $region36: #{lstm_regressor_pallas.1} parent=0 // pred_region
    %36 = vst [vmem:[#allocation3] sm:$0xff] 0
    %37 = vst [vmem:[#allocation4] sm:$0xff] 0.0
    %38 = vst [vmem:[#allocation5] sm:$0xff] 0.0
    %39 = vst [vmem:[#allocation6] sm:$0xff] 0.0
  $region37: #{lstm_regressor_pallas.1} parent=0 // pred_fallthru
    _
  %v40 = vld [vmem:[%s0] sm:$0xf]
  %v41 = vld [vmem:[%s0 + $0x4] sm:$0xf]
  %v42 = vld [vmem:[%s0 + $0x8] sm:$0xf]
  %v43 = vld [vmem:[%s0 + $0xc] sm:$0xf]
  %v44 = vld [vmem:[%s0 + $0x10] sm:$0xf]
  %v45 = vld [vmem:[%s0 + $0x14] sm:$0xf]
  %v46 = vld [vmem:[%s0 + $0x18] sm:$0xf]
  %v47 = vld [vmem:[%s0 + $0x1c] sm:$0xf]
  %v48 = vld [vmem:[%s1] sm:$0xff]
  %v49 = vld [vmem:[%s1 + $0x8] sm:$0xff]
  %v50 = vld [vmem:[%s1 + $0x10] sm:$0xff]
  %v51 = vld [vmem:[%s1 + $0x18] sm:$0xff]
  %v52 = vld [vmem:[%s1 + $0x20] sm:$0xff]
  %v53 = vld [vmem:[%s1 + $0x28] sm:$0xff]
  %v54 = vld [vmem:[%s1 + $0x30] sm:$0xff]
  %v55 = vld [vmem:[%s1 + $0x38] sm:$0xff]
  %v56 = vld [vmem:[%s1 + $0x40] sm:$0xff]
  %v57 = vld [vmem:[%s1 + $0x48] sm:$0xff]
  %v58 = vld [vmem:[%s1 + $0x50] sm:$0xff]
  %v59 = vld [vmem:[%s1 + $0x58] sm:$0xff]
  %v60 = vld [vmem:[%s1 + $0x60] sm:$0xff]
  %v61 = vld [vmem:[%s1 + $0x68] sm:$0xff]
  %v62 = vld [vmem:[%s1 + $0x70] sm:$0xff]
  %v63 = vld [vmem:[%s1 + $0x78] sm:$0xff]
  %v64 = vld [vmem:[%s1 + $0x80] sm:$0xff]
  %v65 = vld [vmem:[%s1 + $0x88] sm:$0xff]
  %v66 = vld [vmem:[%s1 + $0x90] sm:$0xff]
  %v67 = vld [vmem:[%s1 + $0x98] sm:$0xff]
  %v68 = vld [vmem:[%s1 + $0xa0] sm:$0xff]
  %v69 = vld [vmem:[%s1 + $0xa8] sm:$0xff]
  %v70 = vld [vmem:[%s1 + $0xb0] sm:$0xff]
  %v71 = vld [vmem:[%s1 + $0xb8] sm:$0xff]
  %v72 = vld [vmem:[%s1 + $0xc0] sm:$0xff]
  %v73 = vld [vmem:[%s1 + $0xc8] sm:$0xff]
  %v74 = vld [vmem:[%s1 + $0xd0] sm:$0xff]
  %v75 = vld [vmem:[%s1 + $0xd8] sm:$0xff]
  %v76 = vld [vmem:[%s1 + $0xe0] sm:$0xff]
  %v77 = vld [vmem:[%s1 + $0xe8] sm:$0xff]
  %v78 = vld [vmem:[%s1 + $0xf0] sm:$0xff]
  %v79 = vld [vmem:[%s1 + $0xf8] sm:$0xff]
  %v80 = vld [vmem:[%s3] sm:$0xf]
  %v82 = vlaneseq
  %v83 = vshrl.u32 %v82, 7
  %v84 = vsub.s32 0, %v83
  %v85 = vrot.slane %v80, %v84
  %v86 = vlaneseq
  %v87 = vshrl.u32 %v86, 7
  %v88 = vsub.s32 1, %v87
  %v89 = vrot.slane %v80, %v88
  %v90 = vlaneseq
  %v91 = vshrl.u32 %v90, 7
  %v92 = vsub.s32 2, %v91
  %v93 = vrot.slane %v80, %v92
  %v94 = vlaneseq
  %v95 = vshrl.u32 %v94, 7
  %v96 = vsub.s32 3, %v95
  %v97 = vrot.slane %v80, %v96
  %v110 = vunpack.c.l.b16 %v40
  %v111 = vunpack.c.l.b16 %v41
  %v112 = vunpack.c.l.b16 %v42
  %v113 = vunpack.c.l.b16 %v43
  %v114 = vunpack.c.l.b16 %v44
  %v115 = vunpack.c.l.b16 %v45
  %v116 = vunpack.c.l.b16 %v46
  %v117 = vunpack.c.l.b16 %v47
  %v118 = vpack.c.b16 %v111, %v110
  %v119 = vpack.c.b16 %v113, %v112
  %v120 = vpack.c.b16 %v115, %v114
  %v121 = vpack.c.b16 %v117, %v116
  %v158 = vunpack.c.l.b16 %v48
  %v159 = vunpack.c.h.b16 %v48
  %v160 = vunpack.c.l.b16 %v49
  %v161 = vunpack.c.h.b16 %v49
  %v162 = vunpack.c.l.b16 %v50
  %v163 = vunpack.c.h.b16 %v50
  %v164 = vunpack.c.l.b16 %v51
  %v165 = vunpack.c.h.b16 %v51
  %v166 = vunpack.c.l.b16 %v52
  %v167 = vunpack.c.h.b16 %v52
  %v168 = vunpack.c.l.b16 %v53
  %v169 = vunpack.c.h.b16 %v53
  %v170 = vunpack.c.l.b16 %v54
  %v171 = vunpack.c.h.b16 %v54
  %v172 = vunpack.c.l.b16 %v55
  %v173 = vunpack.c.h.b16 %v55
  %v174 = vunpack.c.l.b16 %v56
  %v175 = vunpack.c.h.b16 %v56
  %v176 = vunpack.c.l.b16 %v57
  %v177 = vunpack.c.h.b16 %v57
  %v178 = vunpack.c.l.b16 %v58
  %v179 = vunpack.c.h.b16 %v58
  %v180 = vunpack.c.l.b16 %v59
  %v181 = vunpack.c.h.b16 %v59
  %v182 = vunpack.c.l.b16 %v60
  %v183 = vunpack.c.h.b16 %v60
  %v184 = vunpack.c.l.b16 %v61
  %v185 = vunpack.c.h.b16 %v61
  %v186 = vunpack.c.l.b16 %v62
  %v187 = vunpack.c.h.b16 %v62
  %v188 = vunpack.c.l.b16 %v63
  %v189 = vunpack.c.h.b16 %v63
  %v190 = vunpack.c.l.b16 %v64
  %v191 = vunpack.c.h.b16 %v64
  %v192 = vunpack.c.l.b16 %v65
  %v193 = vunpack.c.h.b16 %v65
  %v194 = vunpack.c.l.b16 %v66
  %v195 = vunpack.c.h.b16 %v66
  %v196 = vunpack.c.l.b16 %v67
  %v197 = vunpack.c.h.b16 %v67
  %v198 = vunpack.c.l.b16 %v68
  %v199 = vunpack.c.h.b16 %v68
  %v200 = vunpack.c.l.b16 %v69
  %v201 = vunpack.c.h.b16 %v69
  %v202 = vunpack.c.l.b16 %v70
  %v203 = vunpack.c.h.b16 %v70
  %v204 = vunpack.c.l.b16 %v71
  %v205 = vunpack.c.h.b16 %v71
  %v206 = vunpack.c.l.b16 %v72
  %v207 = vunpack.c.h.b16 %v72
  %v208 = vunpack.c.l.b16 %v73
  %v209 = vunpack.c.h.b16 %v73
  %v210 = vunpack.c.l.b16 %v74
  %v211 = vunpack.c.h.b16 %v74
  %v212 = vunpack.c.l.b16 %v75
  %v213 = vunpack.c.h.b16 %v75
  %v214 = vunpack.c.l.b16 %v76
  %v215 = vunpack.c.h.b16 %v76
  %v216 = vunpack.c.l.b16 %v77
  %v217 = vunpack.c.h.b16 %v77
  %v218 = vunpack.c.l.b16 %v78
  %v219 = vunpack.c.h.b16 %v78
  %v220 = vunpack.c.l.b16 %v79
  %v221 = vunpack.c.h.b16 %v79
  %v222 = vpack.c.b16 %v162, %v158
  %v223 = vpack.c.b16 %v163, %v159
  %v224 = vpack.c.b16 %v164, %v160
  %v225 = vpack.c.b16 %v165, %v161
  %v226 = vpack.c.b16 %v170, %v166
  %v227 = vpack.c.b16 %v171, %v167
  %v228 = vpack.c.b16 %v172, %v168
  %v229 = vpack.c.b16 %v173, %v169
  %v230 = vpack.c.b16 %v178, %v174
  %v231 = vpack.c.b16 %v179, %v175
  %v232 = vpack.c.b16 %v180, %v176
  %v233 = vpack.c.b16 %v181, %v177
  %v234 = vpack.c.b16 %v186, %v182
  %v235 = vpack.c.b16 %v187, %v183
  %v236 = vpack.c.b16 %v188, %v184
  %v237 = vpack.c.b16 %v189, %v185
  %v238 = vpack.c.b16 %v194, %v190
  %v239 = vpack.c.b16 %v195, %v191
  %v240 = vpack.c.b16 %v196, %v192
  %v241 = vpack.c.b16 %v197, %v193
  %v242 = vpack.c.b16 %v202, %v198
  %v243 = vpack.c.b16 %v203, %v199
  %v244 = vpack.c.b16 %v204, %v200
  %v245 = vpack.c.b16 %v205, %v201
  %v246 = vpack.c.b16 %v210, %v206
  %v247 = vpack.c.b16 %v211, %v207
  %v248 = vpack.c.b16 %v212, %v208
  %v249 = vpack.c.b16 %v213, %v209
  %v250 = vpack.c.b16 %v218, %v214
  %v251 = vpack.c.b16 %v219, %v215
  %v252 = vpack.c.b16 %v220, %v216
  %v253 = vpack.c.b16 %v221, %v217
  %286 = vmatprep.subr.bf16.mxu0 %v223
  %287 = vmatpush1.bf16.msra.mxu0 %v222
  %288 = vmatprep.subr.bf16.mxu0 %v227
  %289 = vmatpush1.bf16.msra.mxu0 %v226
  %290 = vmatprep.subr.bf16.mxu0 %v231
  %291 = vmatpush1.bf16.msra.mxu0 %v230
  %292 = vmatprep.subr.bf16.mxu0 %v235
  %293 = vmatpush1.bf16.msra.mxu0 %v234
  %294 = vmatprep.subr.bf16.mxu0 %v239
  %295 = vmatpush1.bf16.msra.mxu0 %v238
  %296 = vmatprep.subr.bf16.mxu0 %v243
  %297 = vmatpush1.bf16.msra.mxu0 %v242
  %298 = vmatprep.subr.bf16.mxu0 %v247
  %299 = vmatpush1.bf16.msra.mxu0 %v246
  %300 = vmatprep.subr.bf16.mxu0 %v251
  %301 = vmatpush1.bf16.msra.mxu0 %v250
  %302 = vmatprep.subr.bf16.mxu0 0
  %303 = vmatpush1.bf16.msra.mxu0 0
  %304 = vmatprep.subr.bf16.mxu0 0
  %305 = vmatpush1.bf16.msra.mxu0 0
  %306 = vmatprep.subr.bf16.mxu0 0
  %307 = vmatpush1.bf16.msra.mxu0 0
  %308 = vmatprep.subr.bf16.mxu0 0
  %309 = vmatpush1.bf16.msra.mxu0 0
  %310 = vmatprep.subr.bf16.mxu0 0
  %311 = vmatpush1.bf16.msra.mxu0 0
  %312 = vmatprep.subr.bf16.mxu0 0
  %313 = vmatpush1.bf16.msra.mxu0 0
  %314 = vmatprep.subr.bf16.mxu0 0
  %315 = vmatpush1.bf16.msra.mxu0 0
  %316 = vmatprep.subr.bf16.mxu0 0
  %317 = vmatpush1.bf16.msra.mxu0 0
  %318 = vmatprep.mubr.bf16.mxu0 0
  %319 = vmatmul.mubr.bf16.gmra.mrb[0].mxu0 %v118
  %v320 = vpop.f32.mrb[0].mxu0
  %v321 = vadd.f32 %v85, %v320
  %v322 = vpop.f32.mrb[0].mxu0
  %v323 = vadd.f32 %v89, %v322
  %v324 = vpop.f32.mrb[0].mxu0
  %v325 = vadd.f32 %v85, %v324
  %v326 = vpop.f32.mrb[0].mxu0
  %v327 = vadd.f32 %v89, %v326
  %328 = vmatprep.mubr.bf16.mxu0 0
  %329 = vmatmul.mubr.bf16.gmra.mrb[0].mxu0 %v119
  %v330 = vpop.f32.mrb[0].mxu0
  %v331 = vadd.f32 %v85, %v330
  %v332 = vpop.f32.mrb[0].mxu0
  %v333 = vadd.f32 %v89, %v332
  %v334 = vpop.f32.mrb[0].mxu0
  %v335 = vadd.f32 %v85, %v334
  %v336 = vpop.f32.mrb[0].mxu0
  %v337 = vadd.f32 %v89, %v336
  %338 = vmatprep.mubr.bf16.mxu0 0
  %339 = vmatmul.mubr.bf16.gmra.mrb[0].mxu0 %v120
  %v340 = vpop.f32.mrb[0].mxu0
  %v341 = vadd.f32 %v85, %v340
  %v342 = vpop.f32.mrb[0].mxu0
  %v343 = vadd.f32 %v89, %v342
  %v344 = vpop.f32.mrb[0].mxu0
  %v345 = vadd.f32 %v85, %v344
  %v346 = vpop.f32.mrb[0].mxu0
  %v347 = vadd.f32 %v89, %v346
  %348 = vmatprep.mubr.bf16.mxu0 0
  %349 = vmatmul.mubr.bf16.gmra.mrb[0].mxu0 %v121
  %v350 = vpop.f32.mrb[0].mxu0
  %v351 = vadd.f32 %v85, %v350
  %v352 = vpop.f32.mrb[0].mxu0
  %v353 = vadd.f32 %v89, %v352
  %v354 = vpop.f32.mrb[0].mxu0
  %v355 = vadd.f32 %v85, %v354
  %v356 = vpop.f32.mrb[0].mxu0
  %v357 = vadd.f32 %v89, %v356
  %358 = vdwg.mxu0
  %359 = vmatprep.subr.bf16.mxu0 %v225
  %360 = vmatpush1.bf16.msra.mxu0 %v224
  %361 = vmatprep.subr.bf16.mxu0 %v229
  %362 = vmatpush1.bf16.msra.mxu0 %v228
  %363 = vmatprep.subr.bf16.mxu0 %v233
  %364 = vmatpush1.bf16.msra.mxu0 %v232
  %365 = vmatprep.subr.bf16.mxu0 %v237
  %366 = vmatpush1.bf16.msra.mxu0 %v236
  %367 = vmatprep.subr.bf16.mxu0 %v241
  %368 = vmatpush1.bf16.msra.mxu0 %v240
  %369 = vmatprep.subr.bf16.mxu0 %v245
  %370 = vmatpush1.bf16.msra.mxu0 %v244
  %371 = vmatprep.subr.bf16.mxu0 %v249
  %372 = vmatpush1.bf16.msra.mxu0 %v248
  %373 = vmatprep.subr.bf16.mxu0 %v253
  %374 = vmatpush1.bf16.msra.mxu0 %v252
  %375 = vmatprep.subr.bf16.mxu0 0
  %376 = vmatpush1.bf16.msra.mxu0 0
  %377 = vmatprep.subr.bf16.mxu0 0
  %378 = vmatpush1.bf16.msra.mxu0 0
  %379 = vmatprep.subr.bf16.mxu0 0
  %380 = vmatpush1.bf16.msra.mxu0 0
  %381 = vmatprep.subr.bf16.mxu0 0
  %382 = vmatpush1.bf16.msra.mxu0 0
  %383 = vmatprep.subr.bf16.mxu0 0
  %384 = vmatpush1.bf16.msra.mxu0 0
  %385 = vmatprep.subr.bf16.mxu0 0
  %386 = vmatpush1.bf16.msra.mxu0 0
  %387 = vmatprep.subr.bf16.mxu0 0
  %388 = vmatpush1.bf16.msra.mxu0 0
  %389 = vmatprep.subr.bf16.mxu0 0
  %390 = vmatpush1.bf16.msra.mxu0 0
  %391 = vmatprep.mubr.bf16.mxu0 0
  %392 = vmatmul.mubr.bf16.gmra.mrb[0].mxu0 %v118
  %v393 = vpop.f32.mrb[0].mxu0
  %v394 = vadd.f32 %v93, %v393
  %v395 = vpop.f32.mrb[0].mxu0
  %v396 = vadd.f32 %v97, %v395
  %v397 = vpop.f32.mrb[0].mxu0
  %v398 = vadd.f32 %v93, %v397
  %v399 = vpop.f32.mrb[0].mxu0
  %v400 = vadd.f32 %v97, %v399
  %401 = vmatprep.mubr.bf16.mxu0 0
  %402 = vmatmul.mubr.bf16.gmra.mrb[0].mxu0 %v119
  %v403 = vpop.f32.mrb[0].mxu0
  %v404 = vadd.f32 %v93, %v403
  %v405 = vpop.f32.mrb[0].mxu0
  %v406 = vadd.f32 %v97, %v405
  %v407 = vpop.f32.mrb[0].mxu0
  %v408 = vadd.f32 %v93, %v407
  %v409 = vpop.f32.mrb[0].mxu0
  %v410 = vadd.f32 %v97, %v409
  %411 = vmatprep.mubr.bf16.mxu0 0
  %412 = vmatmul.mubr.bf16.gmra.mrb[0].mxu0 %v120
  %v413 = vpop.f32.mrb[0].mxu0
  %v414 = vadd.f32 %v93, %v413
  %v415 = vpop.f32.mrb[0].mxu0
  %v416 = vadd.f32 %v97, %v415
  %v417 = vpop.f32.mrb[0].mxu0
  %v418 = vadd.f32 %v93, %v417
  %v419 = vpop.f32.mrb[0].mxu0
  %v420 = vadd.f32 %v97, %v419
  %421 = vmatprep.mubr.bf16.mxu0 0
  %422 = vmatmul.mubr.bf16.gmra.mrb[0].mxu0 %v121
  %v423 = vpop.f32.mrb[0].mxu0
  %v424 = vadd.f32 %v93, %v423
  %v425 = vpop.f32.mrb[0].mxu0
  %v426 = vadd.f32 %v97, %v425
  %v427 = vpop.f32.mrb[0].mxu0
  %v428 = vadd.f32 %v93, %v427
  %v429 = vpop.f32.mrb[0].mxu0
  %v430 = vadd.f32 %v97, %v429
  %431 = vdwg.mxu0
  %432 = vst [vmem:[#allocation2] sm:$0xff] %v321
  %433 = vst [vmem:[#allocation2 + $0x8] sm:$0xff] %v323
  %434 = vst [vmem:[#allocation2 + $0x10] sm:$0xff] %v394
  %435 = vst [vmem:[#allocation2 + $0x18] sm:$0xff] %v396
  %436 = vst [vmem:[#allocation2 + $0x20] sm:$0xff] %v325
  %437 = vst [vmem:[#allocation2 + $0x28] sm:$0xff] %v327
  %438 = vst [vmem:[#allocation2 + $0x30] sm:$0xff] %v398
  %439 = vst [vmem:[#allocation2 + $0x38] sm:$0xff] %v400
  %440 = vst [vmem:[#allocation2 + $0x40] sm:$0xff] %v331
  %441 = vst [vmem:[#allocation2 + $0x48] sm:$0xff] %v333
  %442 = vst [vmem:[#allocation2 + $0x50] sm:$0xff] %v404
  %443 = vst [vmem:[#allocation2 + $0x58] sm:$0xff] %v406
  %444 = vst [vmem:[#allocation2 + $0x60] sm:$0xff] %v335
  %445 = vst [vmem:[#allocation2 + $0x68] sm:$0xff] %v337
  %446 = vst [vmem:[#allocation2 + $0x70] sm:$0xff] %v408
  %447 = vst [vmem:[#allocation2 + $0x78] sm:$0xff] %v410
  %448 = vst [vmem:[#allocation2 + $0x80] sm:$0xff] %v341
  %449 = vst [vmem:[#allocation2 + $0x88] sm:$0xff] %v343
  %450 = vst [vmem:[#allocation2 + $0x90] sm:$0xff] %v414
  %451 = vst [vmem:[#allocation2 + $0x98] sm:$0xff] %v416
  %452 = vst [vmem:[#allocation2 + $0xa0] sm:$0xff] %v345
  %453 = vst [vmem:[#allocation2 + $0xa8] sm:$0xff] %v347
  %454 = vst [vmem:[#allocation2 + $0xb0] sm:$0xff] %v418
  %455 = vst [vmem:[#allocation2 + $0xb8] sm:$0xff] %v420
  %456 = vst [vmem:[#allocation2 + $0xc0] sm:$0xff] %v351
  %457 = vst [vmem:[#allocation2 + $0xc8] sm:$0xff] %v353
  %458 = vst [vmem:[#allocation2 + $0xd0] sm:$0xff] %v424
  %459 = vst [vmem:[#allocation2 + $0xd8] sm:$0xff] %v426
  %460 = vst [vmem:[#allocation2 + $0xe0] sm:$0xff] %v355
  %461 = vst [vmem:[#allocation2 + $0xe8] sm:$0xff] %v357
  %462 = vst [vmem:[#allocation2 + $0xf0] sm:$0xff] %v428
  %463 = vst [vmem:[#allocation2 + $0xf8] sm:$0xff] %v430
  %v464 = vld [vmem:[#allocation2] sm:$0xff]
  %v465 = vld [vmem:[#allocation2 + $0x8] sm:$0xff]
  %v466 = vld [vmem:[#allocation2 + $0x10] sm:$0xff]
  %v467 = vld [vmem:[#allocation2 + $0x18] sm:$0xff]
  %v468 = vld [vmem:[#allocation3] sm:$0xf]
  %v469 = vld [vmem:[%s2] sm:$0xff]
  %v470 = vld [vmem:[%s2 + $0x8] sm:$0xff]
  %v471 = vld [vmem:[%s2 + $0x10] sm:$0xff]
  %v472 = vld [vmem:[%s2 + $0x18] sm:$0xff]
  %v473 = vld [vmem:[%s2 + $0x20] sm:$0xff]
  %v474 = vld [vmem:[%s2 + $0x28] sm:$0xff]
  %v475 = vld [vmem:[%s2 + $0x30] sm:$0xff]
  %v476 = vld [vmem:[%s2 + $0x38] sm:$0xff]
  %v477 = vld [vmem:[%s2 + $0x40] sm:$0xff]
  %v478 = vld [vmem:[%s2 + $0x48] sm:$0xff]
  %v479 = vld [vmem:[%s2 + $0x50] sm:$0xff]
  %v480 = vld [vmem:[%s2 + $0x58] sm:$0xff]
  %v481 = vld [vmem:[%s2 + $0x60] sm:$0xff]
  %v482 = vld [vmem:[%s2 + $0x68] sm:$0xff]
  %v483 = vld [vmem:[%s2 + $0x70] sm:$0xff]
  %v484 = vld [vmem:[%s2 + $0x78] sm:$0xff]
  %v485 = vld [vmem:[%s2 + $0x80] sm:$0xff]
  %v486 = vld [vmem:[%s2 + $0x88] sm:$0xff]
  %v487 = vld [vmem:[%s2 + $0x90] sm:$0xff]
  %v488 = vld [vmem:[%s2 + $0x98] sm:$0xff]
  %v489 = vld [vmem:[%s2 + $0xa0] sm:$0xff]
  %v490 = vld [vmem:[%s2 + $0xa8] sm:$0xff]
  %v491 = vld [vmem:[%s2 + $0xb0] sm:$0xff]
  %v492 = vld [vmem:[%s2 + $0xb8] sm:$0xff]
  %v493 = vld [vmem:[%s2 + $0xc0] sm:$0xff]
  %v494 = vld [vmem:[%s2 + $0xc8] sm:$0xff]
  %v495 = vld [vmem:[%s2 + $0xd0] sm:$0xff]
  %v496 = vld [vmem:[%s2 + $0xd8] sm:$0xff]
  %v497 = vld [vmem:[%s2 + $0xe0] sm:$0xff]
  %v498 = vld [vmem:[%s2 + $0xe8] sm:$0xff]
  %v499 = vld [vmem:[%s2 + $0xf0] sm:$0xff]
  %v500 = vld [vmem:[%s2 + $0xf8] sm:$0xff]
  %v533 = vunpack.c.l.b16 %v469
  %v534 = vunpack.c.h.b16 %v469
  %v535 = vunpack.c.l.b16 %v470
  %v536 = vunpack.c.h.b16 %v470
  %v537 = vunpack.c.l.b16 %v471
  %v538 = vunpack.c.h.b16 %v471
  %v539 = vunpack.c.l.b16 %v472
  %v540 = vunpack.c.h.b16 %v472
  %v541 = vunpack.c.l.b16 %v473
  %v542 = vunpack.c.h.b16 %v473
  %v543 = vunpack.c.l.b16 %v474
  %v544 = vunpack.c.h.b16 %v474
  %v545 = vunpack.c.l.b16 %v475
  %v546 = vunpack.c.h.b16 %v475
  %v547 = vunpack.c.l.b16 %v476
  %v548 = vunpack.c.h.b16 %v476
  %v549 = vunpack.c.l.b16 %v477
  %v550 = vunpack.c.h.b16 %v477
  %v551 = vunpack.c.l.b16 %v478
  %v552 = vunpack.c.h.b16 %v478
  %v553 = vunpack.c.l.b16 %v479
  %v554 = vunpack.c.h.b16 %v479
  %v555 = vunpack.c.l.b16 %v480
  %v556 = vunpack.c.h.b16 %v480
  %v557 = vunpack.c.l.b16 %v481
  %v558 = vunpack.c.h.b16 %v481
  %v559 = vunpack.c.l.b16 %v482
  %v560 = vunpack.c.h.b16 %v482
  %v561 = vunpack.c.l.b16 %v483
  %v562 = vunpack.c.h.b16 %v483
  %v563 = vunpack.c.l.b16 %v484
  %v564 = vunpack.c.h.b16 %v484
  %v565 = vunpack.c.l.b16 %v485
  %v566 = vunpack.c.h.b16 %v485
  %v567 = vunpack.c.l.b16 %v486
  %v568 = vunpack.c.h.b16 %v486
  %v569 = vunpack.c.l.b16 %v487
  %v570 = vunpack.c.h.b16 %v487
  %v571 = vunpack.c.l.b16 %v488
  %v572 = vunpack.c.h.b16 %v488
  %v573 = vunpack.c.l.b16 %v489
  %v574 = vunpack.c.h.b16 %v489
  %v575 = vunpack.c.l.b16 %v490
  %v576 = vunpack.c.h.b16 %v490
  %v577 = vunpack.c.l.b16 %v491
  %v578 = vunpack.c.h.b16 %v491
  %v579 = vunpack.c.l.b16 %v492
  %v580 = vunpack.c.h.b16 %v492
  %v581 = vunpack.c.l.b16 %v493
  %v582 = vunpack.c.h.b16 %v493
  %v583 = vunpack.c.l.b16 %v494
  %v584 = vunpack.c.h.b16 %v494
  %v585 = vunpack.c.l.b16 %v495
  %v586 = vunpack.c.h.b16 %v495
  %v587 = vunpack.c.l.b16 %v496
  %v588 = vunpack.c.h.b16 %v496
  %v589 = vunpack.c.l.b16 %v497
  %v590 = vunpack.c.h.b16 %v497
  %v591 = vunpack.c.l.b16 %v498
  %v592 = vunpack.c.h.b16 %v498
  %v593 = vunpack.c.l.b16 %v499
  %v594 = vunpack.c.h.b16 %v499
  %v595 = vunpack.c.l.b16 %v500
  %v596 = vunpack.c.h.b16 %v500
  %v597 = vpack.c.b16 %v537, %v533
  %v598 = vpack.c.b16 %v538, %v534
  %v599 = vpack.c.b16 %v539, %v535
  %v600 = vpack.c.b16 %v540, %v536
  %v601 = vpack.c.b16 %v545, %v541
  %v602 = vpack.c.b16 %v546, %v542
  %v603 = vpack.c.b16 %v547, %v543
  %v604 = vpack.c.b16 %v548, %v544
  %v605 = vpack.c.b16 %v553, %v549
  %v606 = vpack.c.b16 %v554, %v550
  %v607 = vpack.c.b16 %v555, %v551
  %v608 = vpack.c.b16 %v556, %v552
  %v609 = vpack.c.b16 %v561, %v557
  %v610 = vpack.c.b16 %v562, %v558
  %v611 = vpack.c.b16 %v563, %v559
  %v612 = vpack.c.b16 %v564, %v560
  %v613 = vpack.c.b16 %v569, %v565
  %v614 = vpack.c.b16 %v570, %v566
  %v615 = vpack.c.b16 %v571, %v567
  %v616 = vpack.c.b16 %v572, %v568
  %v617 = vpack.c.b16 %v577, %v573
  %v618 = vpack.c.b16 %v578, %v574
  %v619 = vpack.c.b16 %v579, %v575
  %v620 = vpack.c.b16 %v580, %v576
  %v621 = vpack.c.b16 %v585, %v581
  %v622 = vpack.c.b16 %v586, %v582
  %v623 = vpack.c.b16 %v587, %v583
  %v624 = vpack.c.b16 %v588, %v584
  %v625 = vpack.c.b16 %v593, %v589
  %v626 = vpack.c.b16 %v594, %v590
  %v627 = vpack.c.b16 %v595, %v591
  %v628 = vpack.c.b16 %v596, %v592
  %661 = vmatprep.subr.bf16.mxu0 %v598
  %662 = vmatpush1.bf16.msra.mxu0 %v597
  %663 = vmatprep.subr.bf16.mxu0 %v602
  %664 = vmatpush1.bf16.msra.mxu0 %v601
  %665 = vmatprep.subr.bf16.mxu0 %v606
  %666 = vmatpush1.bf16.msra.mxu0 %v605
  %667 = vmatprep.subr.bf16.mxu0 %v610
  %668 = vmatpush1.bf16.msra.mxu0 %v609
  %669 = vmatprep.subr.bf16.mxu0 %v614
  %670 = vmatpush1.bf16.msra.mxu0 %v613
  %671 = vmatprep.subr.bf16.mxu0 %v618
  %672 = vmatpush1.bf16.msra.mxu0 %v617
  %673 = vmatprep.subr.bf16.mxu0 %v622
  %674 = vmatpush1.bf16.msra.mxu0 %v621
  %675 = vmatprep.subr.bf16.mxu0 %v626
  %676 = vmatpush1.bf16.msra.mxu0 %v625
  %677 = vmatprep.subr.bf16.mxu0 0
  %678 = vmatpush1.bf16.msra.mxu0 0
  %679 = vmatprep.subr.bf16.mxu0 0
  %680 = vmatpush1.bf16.msra.mxu0 0
  %681 = vmatprep.subr.bf16.mxu0 0
  %682 = vmatpush1.bf16.msra.mxu0 0
  %683 = vmatprep.subr.bf16.mxu0 0
  %684 = vmatpush1.bf16.msra.mxu0 0
  %685 = vmatprep.subr.bf16.mxu0 0
  %686 = vmatpush1.bf16.msra.mxu0 0
  %687 = vmatprep.subr.bf16.mxu0 0
  %688 = vmatpush1.bf16.msra.mxu0 0
  %689 = vmatprep.subr.bf16.mxu0 0
  %690 = vmatpush1.bf16.msra.mxu0 0
  %691 = vmatprep.subr.bf16.mxu0 0
  %692 = vmatpush1.bf16.msra.mxu0 0
  %693 = vmatprep.mubr.bf16.mxu0 0
  %694 = vmatmul.mubr.bf16.gmra.mrb[0].mxu0 %v468
  %v695 = vpop.f32.mrb[0].mxu0
  %v696 = vadd.f32 0.0, %v695
  %v697 = vpop.f32.mrb[0].mxu0
  %v698 = vadd.f32 0.0, %v697
  %v699 = vpop.f32.mrb[0].mxu0
  %v700 = vpop.f32.mrb[0].mxu0
  %701 = vdwg.mxu0
  %702 = vmatprep.subr.bf16.mxu0 %v600
  %703 = vmatpush1.bf16.msra.mxu0 %v599
  %704 = vmatprep.subr.bf16.mxu0 %v604
  %705 = vmatpush1.bf16.msra.mxu0 %v603
  %706 = vmatprep.subr.bf16.mxu0 %v608
  %707 = vmatpush1.bf16.msra.mxu0 %v607
  %708 = vmatprep.subr.bf16.mxu0 %v612
  %709 = vmatpush1.bf16.msra.mxu0 %v611
  %710 = vmatprep.subr.bf16.mxu0 %v616
  %711 = vmatpush1.bf16.msra.mxu0 %v615
  %712 = vmatprep.subr.bf16.mxu0 %v620
  %713 = vmatpush1.bf16.msra.mxu0 %v619
  %714 = vmatprep.subr.bf16.mxu0 %v624
  %715 = vmatpush1.bf16.msra.mxu0 %v623
  %716 = vmatprep.subr.bf16.mxu0 %v628
  %717 = vmatpush1.bf16.msra.mxu0 %v627
  %718 = vmatprep.subr.bf16.mxu0 0
  %719 = vmatpush1.bf16.msra.mxu0 0
  %720 = vmatprep.subr.bf16.mxu0 0
  %721 = vmatpush1.bf16.msra.mxu0 0
  %722 = vmatprep.subr.bf16.mxu0 0
  %723 = vmatpush1.bf16.msra.mxu0 0
  %724 = vmatprep.subr.bf16.mxu0 0
  %725 = vmatpush1.bf16.msra.mxu0 0
  %726 = vmatprep.subr.bf16.mxu0 0
  %727 = vmatpush1.bf16.msra.mxu0 0
  %728 = vmatprep.subr.bf16.mxu0 0
  %729 = vmatpush1.bf16.msra.mxu0 0
  %730 = vmatprep.subr.bf16.mxu0 0
  %731 = vmatpush1.bf16.msra.mxu0 0
  %732 = vmatprep.subr.bf16.mxu0 0
  %733 = vmatpush1.bf16.msra.mxu0 0
  %734 = vmatprep.mubr.bf16.mxu0 0
  %735 = vmatmul.mubr.bf16.gmra.mrb[0].mxu0 %v468
  %v736 = vpop.f32.mrb[0].mxu0
  %v737 = vadd.f32 0.0, %v736
  %v738 = vpop.f32.mrb[0].mxu0
  %v739 = vadd.f32 0.0, %v738
  %v740 = vpop.f32.mrb[0].mxu0
  %v741 = vpop.f32.mrb[0].mxu0
  %742 = vdwg.mxu0
  %v743 = vadd.f32 %v464, %v696
  %v744 = vadd.f32 %v465, %v698
  %v745 = vadd.f32 %v466, %v737
  %v746 = vadd.f32 %v467, %v739
  %v747 = vxor.u32 %v743, 2147483648
  %v748 = vmul.f32 %v747, 1.442695
  %v749 = vpow.pop %v748
  %v750 = vadd.f32 %v749, 1.0
  %v751 = vrcp.pop %v750
  %v752 = vmul.f32 1.0, %v751
  %v753 = vxor.u32 %v744, 2147483648
  %v754 = vmul.f32 %v753, 1.442695
  %v755 = vpow.pop %v754
  %v756 = vadd.f32 %v755, 1.0
  %v757 = vrcp.pop %v756
  %v758 = vmul.f32 1.0, %v757
  %v759 = vtanh.pop %v745
  %v760 = vxor.u32 %v746, 2147483648
  %v761 = vmul.f32 %v760, 1.442695
  %v762 = vpow.pop %v761
  %v763 = vadd.f32 %v762, 1.0
  %v764 = vrcp.pop %v763
  %v765 = vmul.f32 1.0, %v764
  %v766 = vld [vmem:[#allocation4] sm:$0xff]
  %v767 = vmul.f32 %v758, %v766
  %v768 = vmul.f32 %v752, %v759
  %v769 = vadd.f32 %v767, %v768
  %v770 = vtanh.pop %v769
  %v771 = vmul.f32 %v765, %v770
  %772 = vst [vmem:[#allocation4] sm:$0xff] %v769
  %v773 = vpack.c.bf16 %v771, %v771
  %774 = vst [vmem:[#allocation3] sm:$0xf] %v773
  %v775 = vld [vmem:[#allocation3] sm:$0xff]
  %v776 = vld [vmem:[%s4] sm:$0xff]
  %v777 = vld [vmem:[%s4 + $0x8] sm:$0xff]
  %v778 = vld [vmem:[%s4 + $0x10] sm:$0xff]
  %v779 = vld [vmem:[%s4 + $0x18] sm:$0xff]
  %v780 = vld [vmem:[%s4 + $0x20] sm:$0xff]
  %v781 = vld [vmem:[%s4 + $0x28] sm:$0xff]
  %v782 = vld [vmem:[%s4 + $0x30] sm:$0xff]
  %v783 = vld [vmem:[%s4 + $0x38] sm:$0xff]
  %v784 = vld [vmem:[%s4 + $0x40] sm:$0xff]
  %v785 = vld [vmem:[%s4 + $0x48] sm:$0xff]
  %v786 = vld [vmem:[%s4 + $0x50] sm:$0xff]
  %v787 = vld [vmem:[%s4 + $0x58] sm:$0xff]
  %v788 = vld [vmem:[%s4 + $0x60] sm:$0xff]
  %v789 = vld [vmem:[%s4 + $0x68] sm:$0xff]
  %v790 = vld [vmem:[%s4 + $0x70] sm:$0xff]
  %v791 = vld [vmem:[%s4 + $0x78] sm:$0xff]
  %v792 = vld [vmem:[%s4 + $0x80] sm:$0xff]
  %v793 = vld [vmem:[%s4 + $0x88] sm:$0xff]
  %v794 = vld [vmem:[%s4 + $0x90] sm:$0xff]
  %v795 = vld [vmem:[%s4 + $0x98] sm:$0xff]
  %v796 = vld [vmem:[%s4 + $0xa0] sm:$0xff]
  %v797 = vld [vmem:[%s4 + $0xa8] sm:$0xff]
  %v798 = vld [vmem:[%s4 + $0xb0] sm:$0xff]
  %v799 = vld [vmem:[%s4 + $0xb8] sm:$0xff]
  %v800 = vld [vmem:[%s4 + $0xc0] sm:$0xff]
  %v801 = vld [vmem:[%s4 + $0xc8] sm:$0xff]
  %v802 = vld [vmem:[%s4 + $0xd0] sm:$0xff]
  %v803 = vld [vmem:[%s4 + $0xd8] sm:$0xff]
  %v804 = vld [vmem:[%s4 + $0xe0] sm:$0xff]
  %v805 = vld [vmem:[%s4 + $0xe8] sm:$0xff]
  %v806 = vld [vmem:[%s4 + $0xf0] sm:$0xff]
  %v807 = vld [vmem:[%s4 + $0xf8] sm:$0xff]
  %v808 = vld [vmem:[%s4 + $0x100] sm:$0xff]
  %v809 = vld [vmem:[%s4 + $0x108] sm:$0xff]
  %v810 = vld [vmem:[%s4 + $0x110] sm:$0xff]
  %v811 = vld [vmem:[%s4 + $0x118] sm:$0xff]
  %v812 = vld [vmem:[%s4 + $0x120] sm:$0xff]
  %v813 = vld [vmem:[%s4 + $0x128] sm:$0xff]
  %v814 = vld [vmem:[%s4 + $0x130] sm:$0xff]
  %v815 = vld [vmem:[%s4 + $0x138] sm:$0xff]
  %v816 = vld [vmem:[%s4 + $0x140] sm:$0xff]
  %v817 = vld [vmem:[%s4 + $0x148] sm:$0xff]
  %v818 = vld [vmem:[%s4 + $0x150] sm:$0xff]
  %v819 = vld [vmem:[%s4 + $0x158] sm:$0xff]
  %v820 = vld [vmem:[%s4 + $0x160] sm:$0xff]
  %v821 = vld [vmem:[%s4 + $0x168] sm:$0xff]
  %v822 = vld [vmem:[%s4 + $0x170] sm:$0xff]
  %v823 = vld [vmem:[%s4 + $0x178] sm:$0xff]
  %v824 = vld [vmem:[%s4 + $0x180] sm:$0xff]
  %v825 = vld [vmem:[%s4 + $0x188] sm:$0xff]
  %v826 = vld [vmem:[%s4 + $0x190] sm:$0xff]
  %v827 = vld [vmem:[%s4 + $0x198] sm:$0xff]
  %v828 = vld [vmem:[%s4 + $0x1a0] sm:$0xff]
  %v829 = vld [vmem:[%s4 + $0x1a8] sm:$0xff]
  %v830 = vld [vmem:[%s4 + $0x1b0] sm:$0xff]
  %v831 = vld [vmem:[%s4 + $0x1b8] sm:$0xff]
  %v832 = vld [vmem:[%s4 + $0x1c0] sm:$0xff]
  %v833 = vld [vmem:[%s4 + $0x1c8] sm:$0xff]
  %v834 = vld [vmem:[%s4 + $0x1d0] sm:$0xff]
  %v835 = vld [vmem:[%s4 + $0x1d8] sm:$0xff]
  %v836 = vld [vmem:[%s4 + $0x1e0] sm:$0xff]
  %v837 = vld [vmem:[%s4 + $0x1e8] sm:$0xff]
  %v838 = vld [vmem:[%s4 + $0x1f0] sm:$0xff]
  %v839 = vld [vmem:[%s4 + $0x1f8] sm:$0xff]
  %v840 = vld [vmem:[%s5] sm:$0xf]
  %v842 = vlaneseq
  %v843 = vshrl.u32 %v842, 7
  %v844 = vsub.s32 0, %v843
  %v845 = vrot.slane %v840, %v844
  %v846 = vlaneseq
  %v847 = vshrl.u32 %v846, 7
  %v848 = vsub.s32 1, %v847
  %v849 = vrot.slane %v840, %v848
  %v850 = vlaneseq
  %v851 = vshrl.u32 %v850, 7
  %v852 = vsub.s32 2, %v851
  %v853 = vrot.slane %v840, %v852
  %v854 = vlaneseq
  %v855 = vshrl.u32 %v854, 7
  %v856 = vsub.s32 3, %v855
  %v857 = vrot.slane %v840, %v856
  %v863 = vunpack.c.l.b16 %v775
  %v864 = vunpack.c.h.b16 %v775
  %v865 = vpack.c.b16 %v863, %v863
  %v866 = vpack.c.b16 %v864, %v864
  %v933 = vunpack.c.l.b16 %v776
  %v934 = vunpack.c.h.b16 %v776
  %v935 = vunpack.c.l.b16 %v777
  %v936 = vunpack.c.h.b16 %v777
  %v937 = vunpack.c.l.b16 %v778
  %v938 = vunpack.c.h.b16 %v778
  %v939 = vunpack.c.l.b16 %v779
  %v940 = vunpack.c.h.b16 %v779
  %v941 = vunpack.c.l.b16 %v780
  %v942 = vunpack.c.h.b16 %v780
  %v943 = vunpack.c.l.b16 %v781
  %v944 = vunpack.c.h.b16 %v781
  %v945 = vunpack.c.l.b16 %v782
  %v946 = vunpack.c.h.b16 %v782
  %v947 = vunpack.c.l.b16 %v783
  %v948 = vunpack.c.h.b16 %v783
  %v949 = vunpack.c.l.b16 %v784
  %v950 = vunpack.c.h.b16 %v784
  %v951 = vunpack.c.l.b16 %v785
  %v952 = vunpack.c.h.b16 %v785
  %v953 = vunpack.c.l.b16 %v786
  %v954 = vunpack.c.h.b16 %v786
  %v955 = vunpack.c.l.b16 %v787
  %v956 = vunpack.c.h.b16 %v787
  %v957 = vunpack.c.l.b16 %v788
  %v958 = vunpack.c.h.b16 %v788
  %v959 = vunpack.c.l.b16 %v789
  %v960 = vunpack.c.h.b16 %v789
  %v961 = vunpack.c.l.b16 %v790
  %v962 = vunpack.c.h.b16 %v790
  %v963 = vunpack.c.l.b16 %v791
  %v964 = vunpack.c.h.b16 %v791
  %v965 = vunpack.c.l.b16 %v792
  %v966 = vunpack.c.h.b16 %v792
  %v967 = vunpack.c.l.b16 %v793
  %v968 = vunpack.c.h.b16 %v793
  %v969 = vunpack.c.l.b16 %v794
  %v970 = vunpack.c.h.b16 %v794
  %v971 = vunpack.c.l.b16 %v795
  %v972 = vunpack.c.h.b16 %v795
  %v973 = vunpack.c.l.b16 %v796
  %v974 = vunpack.c.h.b16 %v796
  %v975 = vunpack.c.l.b16 %v797
  %v976 = vunpack.c.h.b16 %v797
  %v977 = vunpack.c.l.b16 %v798
  %v978 = vunpack.c.h.b16 %v798
  %v979 = vunpack.c.l.b16 %v799
  %v980 = vunpack.c.h.b16 %v799
  %v981 = vunpack.c.l.b16 %v800
  %v982 = vunpack.c.h.b16 %v800
  %v983 = vunpack.c.l.b16 %v801
  %v984 = vunpack.c.h.b16 %v801
  %v985 = vunpack.c.l.b16 %v802
  %v986 = vunpack.c.h.b16 %v802
  %v987 = vunpack.c.l.b16 %v803
  %v988 = vunpack.c.h.b16 %v803
  %v989 = vunpack.c.l.b16 %v804
  %v990 = vunpack.c.h.b16 %v804
  %v991 = vunpack.c.l.b16 %v805
  %v992 = vunpack.c.h.b16 %v805
  %v993 = vunpack.c.l.b16 %v806
  %v994 = vunpack.c.h.b16 %v806
  %v995 = vunpack.c.l.b16 %v807
  %v996 = vunpack.c.h.b16 %v807
  %v997 = vunpack.c.l.b16 %v808
  %v998 = vunpack.c.h.b16 %v808
  %v999 = vunpack.c.l.b16 %v809
  %v1000 = vunpack.c.h.b16 %v809
  %v1001 = vunpack.c.l.b16 %v810
  %v1002 = vunpack.c.h.b16 %v810
  %v1003 = vunpack.c.l.b16 %v811
  %v1004 = vunpack.c.h.b16 %v811
  %v1005 = vunpack.c.l.b16 %v812
  %v1006 = vunpack.c.h.b16 %v812
  %v1007 = vunpack.c.l.b16 %v813
  %v1008 = vunpack.c.h.b16 %v813
  %v1009 = vunpack.c.l.b16 %v814
  %v1010 = vunpack.c.h.b16 %v814
  %v1011 = vunpack.c.l.b16 %v815
  %v1012 = vunpack.c.h.b16 %v815
  %v1013 = vunpack.c.l.b16 %v816
  %v1014 = vunpack.c.h.b16 %v816
  %v1015 = vunpack.c.l.b16 %v817
  %v1016 = vunpack.c.h.b16 %v817
  %v1017 = vunpack.c.l.b16 %v818
  %v1018 = vunpack.c.h.b16 %v818
  %v1019 = vunpack.c.l.b16 %v819
  %v1020 = vunpack.c.h.b16 %v819
  %v1021 = vunpack.c.l.b16 %v820
  %v1022 = vunpack.c.h.b16 %v820
  %v1023 = vunpack.c.l.b16 %v821
  %v1024 = vunpack.c.h.b16 %v821
  %v1025 = vunpack.c.l.b16 %v822
  %v1026 = vunpack.c.h.b16 %v822
  %v1027 = vunpack.c.l.b16 %v823
  %v1028 = vunpack.c.h.b16 %v823
  %v1029 = vunpack.c.l.b16 %v824
  %v1030 = vunpack.c.h.b16 %v824
  %v1031 = vunpack.c.l.b16 %v825
  %v1032 = vunpack.c.h.b16 %v825
  %v1033 = vunpack.c.l.b16 %v826
  %v1034 = vunpack.c.h.b16 %v826
  %v1035 = vunpack.c.l.b16 %v827
  %v1036 = vunpack.c.h.b16 %v827
  %v1037 = vunpack.c.l.b16 %v828
  %v1038 = vunpack.c.h.b16 %v828
  %v1039 = vunpack.c.l.b16 %v829
  %v1040 = vunpack.c.h.b16 %v829
  %v1041 = vunpack.c.l.b16 %v830
  %v1042 = vunpack.c.h.b16 %v830
  %v1043 = vunpack.c.l.b16 %v831
  %v1044 = vunpack.c.h.b16 %v831
  %v1045 = vunpack.c.l.b16 %v832
  %v1046 = vunpack.c.h.b16 %v832
  %v1047 = vunpack.c.l.b16 %v833
  %v1048 = vunpack.c.h.b16 %v833
  %v1049 = vunpack.c.l.b16 %v834
  %v1050 = vunpack.c.h.b16 %v834
  %v1051 = vunpack.c.l.b16 %v835
  %v1052 = vunpack.c.h.b16 %v835
  %v1053 = vunpack.c.l.b16 %v836
  %v1054 = vunpack.c.h.b16 %v836
  %v1055 = vunpack.c.l.b16 %v837
  %v1056 = vunpack.c.h.b16 %v837
  %v1057 = vunpack.c.l.b16 %v838
  %v1058 = vunpack.c.h.b16 %v838
  %v1059 = vunpack.c.l.b16 %v839
  %v1060 = vunpack.c.h.b16 %v839
  %v1061 = vpack.c.b16 %v937, %v933
  %v1062 = vpack.c.b16 %v938, %v934
  %v1063 = vpack.c.b16 %v939, %v935
  %v1064 = vpack.c.b16 %v940, %v936
  %v1065 = vpack.c.b16 %v945, %v941
  %v1066 = vpack.c.b16 %v946, %v942
  %v1067 = vpack.c.b16 %v947, %v943
  %v1068 = vpack.c.b16 %v948, %v944
  %v1069 = vpack.c.b16 %v953, %v949
  %v1070 = vpack.c.b16 %v954, %v950
  %v1071 = vpack.c.b16 %v955, %v951
  %v1072 = vpack.c.b16 %v956, %v952
  %v1073 = vpack.c.b16 %v961, %v957
  %v1074 = vpack.c.b16 %v962, %v958
  %v1075 = vpack.c.b16 %v963, %v959
  %v1076 = vpack.c.b16 %v964, %v960
  %v1077 = vpack.c.b16 %v969, %v965
  %v1078 = vpack.c.b16 %v970, %v966
  %v1079 = vpack.c.b16 %v971, %v967
  %v1080 = vpack.c.b16 %v972, %v968
  %v1081 = vpack.c.b16 %v977, %v973
  %v1082 = vpack.c.b16 %v978, %v974
  %v1083 = vpack.c.b16 %v979, %v975
  %v1084 = vpack.c.b16 %v980, %v976
  %v1085 = vpack.c.b16 %v985, %v981
  %v1086 = vpack.c.b16 %v986, %v982
  %v1087 = vpack.c.b16 %v987, %v983
  %v1088 = vpack.c.b16 %v988, %v984
  %v1089 = vpack.c.b16 %v993, %v989
  %v1090 = vpack.c.b16 %v994, %v990
  %v1091 = vpack.c.b16 %v995, %v991
  %v1092 = vpack.c.b16 %v996, %v992
  %v1093 = vpack.c.b16 %v1001, %v997
  %v1094 = vpack.c.b16 %v1002, %v998
  %v1095 = vpack.c.b16 %v1003, %v999
  %v1096 = vpack.c.b16 %v1004, %v1000
  %v1097 = vpack.c.b16 %v1009, %v1005
  %v1098 = vpack.c.b16 %v1010, %v1006
  %v1099 = vpack.c.b16 %v1011, %v1007
  %v1100 = vpack.c.b16 %v1012, %v1008
  %v1101 = vpack.c.b16 %v1017, %v1013
  %v1102 = vpack.c.b16 %v1018, %v1014
  %v1103 = vpack.c.b16 %v1019, %v1015
  %v1104 = vpack.c.b16 %v1020, %v1016
  %v1105 = vpack.c.b16 %v1025, %v1021
  %v1106 = vpack.c.b16 %v1026, %v1022
  %v1107 = vpack.c.b16 %v1027, %v1023
  %v1108 = vpack.c.b16 %v1028, %v1024
  %v1109 = vpack.c.b16 %v1033, %v1029
  %v1110 = vpack.c.b16 %v1034, %v1030
  %v1111 = vpack.c.b16 %v1035, %v1031
  %v1112 = vpack.c.b16 %v1036, %v1032
  %v1113 = vpack.c.b16 %v1041, %v1037
  %v1114 = vpack.c.b16 %v1042, %v1038
  %v1115 = vpack.c.b16 %v1043, %v1039
  %v1116 = vpack.c.b16 %v1044, %v1040
  %v1117 = vpack.c.b16 %v1049, %v1045
  %v1118 = vpack.c.b16 %v1050, %v1046
  %v1119 = vpack.c.b16 %v1051, %v1047
  %v1120 = vpack.c.b16 %v1052, %v1048
  %v1121 = vpack.c.b16 %v1057, %v1053
  %v1122 = vpack.c.b16 %v1058, %v1054
  %v1123 = vpack.c.b16 %v1059, %v1055
  %v1124 = vpack.c.b16 %v1060, %v1056
  %1189 = vmatprep.subr.bf16.mxu0 %v1062
  %1190 = vmatpush1.bf16.msra.mxu0 %v1061
  %1191 = vmatprep.subr.bf16.mxu0 %v1066
  %1192 = vmatpush1.bf16.msra.mxu0 %v1065
  %1193 = vmatprep.subr.bf16.mxu0 %v1070
  %1194 = vmatpush1.bf16.msra.mxu0 %v1069
  %1195 = vmatprep.subr.bf16.mxu0 %v1074
  %1196 = vmatpush1.bf16.msra.mxu0 %v1073
  %1197 = vmatprep.subr.bf16.mxu0 %v1078
  %1198 = vmatpush1.bf16.msra.mxu0 %v1077
  %1199 = vmatprep.subr.bf16.mxu0 %v1082
  %1200 = vmatpush1.bf16.msra.mxu0 %v1081
  %1201 = vmatprep.subr.bf16.mxu0 %v1086
  %1202 = vmatpush1.bf16.msra.mxu0 %v1085
  %1203 = vmatprep.subr.bf16.mxu0 %v1090
  %1204 = vmatpush1.bf16.msra.mxu0 %v1089
  %1205 = vmatprep.subr.bf16.mxu0 %v1094
  %1206 = vmatpush1.bf16.msra.mxu0 %v1093
  %1207 = vmatprep.subr.bf16.mxu0 %v1098
  %1208 = vmatpush1.bf16.msra.mxu0 %v1097
  %1209 = vmatprep.subr.bf16.mxu0 %v1102
  %1210 = vmatpush1.bf16.msra.mxu0 %v1101
  %1211 = vmatprep.subr.bf16.mxu0 %v1106
  %1212 = vmatpush1.bf16.msra.mxu0 %v1105
  %1213 = vmatprep.subr.bf16.mxu0 %v1110
  %1214 = vmatpush1.bf16.msra.mxu0 %v1109
  %1215 = vmatprep.subr.bf16.mxu0 %v1114
  %1216 = vmatpush1.bf16.msra.mxu0 %v1113
  %1217 = vmatprep.subr.bf16.mxu0 %v1118
  %1218 = vmatpush1.bf16.msra.mxu0 %v1117
  %1219 = vmatprep.subr.bf16.mxu0 %v1122
  %1220 = vmatpush1.bf16.msra.mxu0 %v1121
  %1221 = vmatprep.mubr.bf16.mxu0 %v866
  %1222 = vmatmul.mubr.bf16.gmra.mrb[0].mxu0 %v865
  %v1223 = vpop.f32.mrb[0].mxu0
  %v1224 = vadd.f32 %v845, %v1223
  %v1225 = vpop.f32.mrb[0].mxu0
  %v1226 = vadd.f32 %v849, %v1225
  %v1227 = vpop.f32.mrb[0].mxu0
  %v1228 = vpop.f32.mrb[0].mxu0
  %1229 = vdwg.mxu0
  %1230 = vmatprep.subr.bf16.mxu0 %v1064
  %1231 = vmatpush1.bf16.msra.mxu0 %v1063
  %1232 = vmatprep.subr.bf16.mxu0 %v1068
  %1233 = vmatpush1.bf16.msra.mxu0 %v1067
  %1234 = vmatprep.subr.bf16.mxu0 %v1072
  %1235 = vmatpush1.bf16.msra.mxu0 %v1071
  %1236 = vmatprep.subr.bf16.mxu0 %v1076
  %1237 = vmatpush1.bf16.msra.mxu0 %v1075
  %1238 = vmatprep.subr.bf16.mxu0 %v1080
  %1239 = vmatpush1.bf16.msra.mxu0 %v1079
  %1240 = vmatprep.subr.bf16.mxu0 %v1084
  %1241 = vmatpush1.bf16.msra.mxu0 %v1083
  %1242 = vmatprep.subr.bf16.mxu0 %v1088
  %1243 = vmatpush1.bf16.msra.mxu0 %v1087
  %1244 = vmatprep.subr.bf16.mxu0 %v1092
  %1245 = vmatpush1.bf16.msra.mxu0 %v1091
  %1246 = vmatprep.subr.bf16.mxu0 %v1096
  %1247 = vmatpush1.bf16.msra.mxu0 %v1095
  %1248 = vmatprep.subr.bf16.mxu0 %v1100
  %1249 = vmatpush1.bf16.msra.mxu0 %v1099
  %1250 = vmatprep.subr.bf16.mxu0 %v1104
  %1251 = vmatpush1.bf16.msra.mxu0 %v1103
  %1252 = vmatprep.subr.bf16.mxu0 %v1108
  %1253 = vmatpush1.bf16.msra.mxu0 %v1107
  %1254 = vmatprep.subr.bf16.mxu0 %v1112
  %1255 = vmatpush1.bf16.msra.mxu0 %v1111
  %1256 = vmatprep.subr.bf16.mxu0 %v1116
  %1257 = vmatpush1.bf16.msra.mxu0 %v1115
  %1258 = vmatprep.subr.bf16.mxu0 %v1120
  %1259 = vmatpush1.bf16.msra.mxu0 %v1119
  %1260 = vmatprep.subr.bf16.mxu0 %v1124
  %1261 = vmatpush1.bf16.msra.mxu0 %v1123
  %1262 = vmatprep.mubr.bf16.mxu0 %v866
  %1263 = vmatmul.mubr.bf16.gmra.mrb[0].mxu0 %v865
  %v1264 = vpop.f32.mrb[0].mxu0
  %v1265 = vadd.f32 %v853, %v1264
  %v1266 = vpop.f32.mrb[0].mxu0
  %v1267 = vadd.f32 %v857, %v1266
  %v1268 = vpop.f32.mrb[0].mxu0
  %v1269 = vpop.f32.mrb[0].mxu0
  %1270 = vdwg.mxu0
  %v1271 = vxor.u32 %v1224, 2147483648
  %v1272 = vmul.f32 %v1271, 1.442695
  %v1273 = vpow.pop %v1272
  %v1274 = vadd.f32 %v1273, 1.0
  %v1275 = vrcp.pop %v1274
  %v1276 = vmul.f32 1.0, %v1275
  %v1277 = vxor.u32 %v1226, 2147483648
  %v1278 = vmul.f32 %v1277, 1.442695
  %v1279 = vpow.pop %v1278
  %v1280 = vadd.f32 %v1279, 1.0
  %v1281 = vrcp.pop %v1280
  %v1282 = vmul.f32 1.0, %v1281
  %v1283 = vtanh.pop %v1265
  %v1284 = vxor.u32 %v1267, 2147483648
  %v1285 = vmul.f32 %v1284, 1.442695
  %v1286 = vpow.pop %v1285
  %v1287 = vadd.f32 %v1286, 1.0
  %v1288 = vrcp.pop %v1287
  %v1289 = vmul.f32 1.0, %v1288
  %v1290 = vld [vmem:[#allocation5] sm:$0xff]
  %v1291 = vmul.f32 %v1282, %v1290
  %v1292 = vmul.f32 %v1276, %v1283
  %v1293 = vadd.f32 %v1291, %v1292
  %v1294 = vtanh.pop %v1293
  %v1295 = vmul.f32 %v1289, %v1294
  %1296 = vst [vmem:[#allocation5] sm:$0xff] %v1293
  %1297 = vst [vmem:[#allocation6] sm:$0xff] %v1295
  %v1298 = vpack.c.bf16 %v1295, %v1295
  %1299 = vst [vmem:[#allocation3 + $0x4] sm:$0xf] %v1298
  %s1300 = scalar_lea.vmem [#allocation2], 32
  %v1301 = vld [vmem:[%s1300] sm:$0xff]
  %v1302 = vld [vmem:[%s1300 + $0x8] sm:$0xff]
  %v1303 = vld [vmem:[%s1300 + $0x10] sm:$0xff]
  %v1304 = vld [vmem:[%s1300 + $0x18] sm:$0xff]
  %v1305 = vld [vmem:[#allocation3] sm:$0xf]
  %v1306 = vld [vmem:[%s2] sm:$0xff]
  %v1307 = vld [vmem:[%s2 + $0x8] sm:$0xff]
  %v1308 = vld [vmem:[%s2 + $0x10] sm:$0xff]
  %v1309 = vld [vmem:[%s2 + $0x18] sm:$0xff]
  %v1310 = vld [vmem:[%s2 + $0x20] sm:$0xff]
  %v1311 = vld [vmem:[%s2 + $0x28] sm:$0xff]
  %v1312 = vld [vmem:[%s2 + $0x30] sm:$0xff]
  %v1313 = vld [vmem:[%s2 + $0x38] sm:$0xff]
  %v1314 = vld [vmem:[%s2 + $0x40] sm:$0xff]
  %v1315 = vld [vmem:[%s2 + $0x48] sm:$0xff]
  %v1316 = vld [vmem:[%s2 + $0x50] sm:$0xff]
  %v1317 = vld [vmem:[%s2 + $0x58] sm:$0xff]
  %v1318 = vld [vmem:[%s2 + $0x60] sm:$0xff]
  %v1319 = vld [vmem:[%s2 + $0x68] sm:$0xff]
  %v1320 = vld [vmem:[%s2 + $0x70] sm:$0xff]
  %v1321 = vld [vmem:[%s2 + $0x78] sm:$0xff]
  %v1322 = vld [vmem:[%s2 + $0x80] sm:$0xff]
  %v1323 = vld [vmem:[%s2 + $0x88] sm:$0xff]
  %v1324 = vld [vmem:[%s2 + $0x90] sm:$0xff]
  %v1325 = vld [vmem:[%s2 + $0x98] sm:$0xff]
  %v1326 = vld [vmem:[%s2 + $0xa0] sm:$0xff]
  %v1327 = vld [vmem:[%s2 + $0xa8] sm:$0xff]
  %v1328 = vld [vmem:[%s2 + $0xb0] sm:$0xff]
  %v1329 = vld [vmem:[%s2 + $0xb8] sm:$0xff]
  %v1330 = vld [vmem:[%s2 + $0xc0] sm:$0xff]
  %v1331 = vld [vmem:[%s2 + $0xc8] sm:$0xff]
  %v1332 = vld [vmem:[%s2 + $0xd0] sm:$0xff]
  %v1333 = vld [vmem:[%s2 + $0xd8] sm:$0xff]
  %v1334 = vld [vmem:[%s2 + $0xe0] sm:$0xff]
  %v1335 = vld [vmem:[%s2 + $0xe8] sm:$0xff]
  %v1336 = vld [vmem:[%s2 + $0xf0] sm:$0xff]
  %v1337 = vld [vmem:[%s2 + $0xf8] sm:$0xff]
  %v1370 = vunpack.c.l.b16 %v1306
  %v1371 = vunpack.c.h.b16 %v1306
  %v1372 = vunpack.c.l.b16 %v1307
  %v1373 = vunpack.c.h.b16 %v1307
  %v1374 = vunpack.c.l.b16 %v1308
  %v1375 = vunpack.c.h.b16 %v1308
  %v1376 = vunpack.c.l.b16 %v1309
  %v1377 = vunpack.c.h.b16 %v1309
  %v1378 = vunpack.c.l.b16 %v1310
  %v1379 = vunpack.c.h.b16 %v1310
  %v1380 = vunpack.c.l.b16 %v1311
  %v1381 = vunpack.c.h.b16 %v1311
  %v1382 = vunpack.c.l.b16 %v1312
  %v1383 = vunpack.c.h.b16 %v1312
  %v1384 = vunpack.c.l.b16 %v1313
  %v1385 = vunpack.c.h.b16 %v1313
  %v1386 = vunpack.c.l.b16 %v1314
  %v1387 = vunpack.c.h.b16 %v1314
  %v1388 = vunpack.c.l.b16 %v1315
  %v1389 = vunpack.c.h.b16 %v1315
  %v1390 = vunpack.c.l.b16 %v1316
  %v1391 = vunpack.c.h.b16 %v1316
  %v1392 = vunpack.c.l.b16 %v1317
  %v1393 = vunpack.c.h.b16 %v1317
  %v1394 = vunpack.c.l.b16 %v1318
  %v1395 = vunpack.c.h.b16 %v1318
  %v1396 = vunpack.c.l.b16 %v1319
  %v1397 = vunpack.c.h.b16 %v1319
  %v1398 = vunpack.c.l.b16 %v1320
  %v1399 = vunpack.c.h.b16 %v1320
  %v1400 = vunpack.c.l.b16 %v1321
  %v1401 = vunpack.c.h.b16 %v1321
  %v1402 = vunpack.c.l.b16 %v1322
  %v1403 = vunpack.c.h.b16 %v1322
  %v1404 = vunpack.c.l.b16 %v1323
  %v1405 = vunpack.c.h.b16 %v1323
  %v1406 = vunpack.c.l.b16 %v1324
  %v1407 = vunpack.c.h.b16 %v1324
  %v1408 = vunpack.c.l.b16 %v1325
  %v1409 = vunpack.c.h.b16 %v1325
  %v1410 = vunpack.c.l.b16 %v1326
  %v1411 = vunpack.c.h.b16 %v1326
  %v1412 = vunpack.c.l.b16 %v1327
  %v1413 = vunpack.c.h.b16 %v1327
  %v1414 = vunpack.c.l.b16 %v1328
  %v1415 = vunpack.c.h.b16 %v1328
  %v1416 = vunpack.c.l.b16 %v1329
  %v1417 = vunpack.c.h.b16 %v1329
  %v1418 = vunpack.c.l.b16 %v1330
  %v1419 = vunpack.c.h.b16 %v1330
  %v1420 = vunpack.c.l.b16 %v1331
  %v1421 = vunpack.c.h.b16 %v1331
  %v1422 = vunpack.c.l.b16 %v1332
  %v1423 = vunpack.c.h.b16 %v1332
  %v1424 = vunpack.c.l.b16 %v1333
  %v1425 = vunpack.c.h.b16 %v1333
  %v1426 = vunpack.c.l.b16 %v1334
  %v1427 = vunpack.c.h.b16 %v1334
  %v1428 = vunpack.c.l.b16 %v1335
  %v1429 = vunpack.c.h.b16 %v1335
  %v1430 = vunpack.c.l.b16 %v1336
  %v1431 = vunpack.c.h.b16 %v1336
  %v1432 = vunpack.c.l.b16 %v1337
  %v1433 = vunpack.c.h.b16 %v1337
  %v1434 = vpack.c.b16 %v1374, %v1370
  %v1435 = vpack.c.b16 %v1375, %v1371
  %v1436 = vpack.c.b16 %v1376, %v1372
  %v1437 = vpack.c.b16 %v1377, %v1373
  %v1438 = vpack.c.b16 %v1382, %v1378
  %v1439 = vpack.c.b16 %v1383, %v1379
  %v1440 = vpack.c.b16 %v1384, %v1380
  %v1441 = vpack.c.b16 %v1385, %v1381
  %v1442 = vpack.c.b16 %v1390, %v1386
  %v1443 = vpack.c.b16 %v1391, %v1387
  %v1444 = vpack.c.b16 %v1392, %v1388
  %v1445 = vpack.c.b16 %v1393, %v1389
  %v1446 = vpack.c.b16 %v1398, %v1394
  %v1447 = vpack.c.b16 %v1399, %v1395
  %v1448 = vpack.c.b16 %v1400, %v1396
  %v1449 = vpack.c.b16 %v1401, %v1397
  %v1450 = vpack.c.b16 %v1406, %v1402
  %v1451 = vpack.c.b16 %v1407, %v1403
  %v1452 = vpack.c.b16 %v1408, %v1404
  %v1453 = vpack.c.b16 %v1409, %v1405
  %v1454 = vpack.c.b16 %v1414, %v1410
  %v1455 = vpack.c.b16 %v1415, %v1411
  %v1456 = vpack.c.b16 %v1416, %v1412
  %v1457 = vpack.c.b16 %v1417, %v1413
  %v1458 = vpack.c.b16 %v1422, %v1418
  %v1459 = vpack.c.b16 %v1423, %v1419
  %v1460 = vpack.c.b16 %v1424, %v1420
  %v1461 = vpack.c.b16 %v1425, %v1421
  %v1462 = vpack.c.b16 %v1430, %v1426
  %v1463 = vpack.c.b16 %v1431, %v1427
  %v1464 = vpack.c.b16 %v1432, %v1428
  %v1465 = vpack.c.b16 %v1433, %v1429
  %1498 = vmatprep.subr.bf16.mxu0 %v1435
  %1499 = vmatpush1.bf16.msra.mxu0 %v1434
  %1500 = vmatprep.subr.bf16.mxu0 %v1439
  %1501 = vmatpush1.bf16.msra.mxu0 %v1438
  %1502 = vmatprep.subr.bf16.mxu0 %v1443
  %1503 = vmatpush1.bf16.msra.mxu0 %v1442
  %1504 = vmatprep.subr.bf16.mxu0 %v1447
  %1505 = vmatpush1.bf16.msra.mxu0 %v1446
  %1506 = vmatprep.subr.bf16.mxu0 %v1451
  %1507 = vmatpush1.bf16.msra.mxu0 %v1450
  %1508 = vmatprep.subr.bf16.mxu0 %v1455
  %1509 = vmatpush1.bf16.msra.mxu0 %v1454
  %1510 = vmatprep.subr.bf16.mxu0 %v1459
  %1511 = vmatpush1.bf16.msra.mxu0 %v1458
  %1512 = vmatprep.subr.bf16.mxu0 %v1463
  %1513 = vmatpush1.bf16.msra.mxu0 %v1462
  %1514 = vmatprep.subr.bf16.mxu0 0
  %1515 = vmatpush1.bf16.msra.mxu0 0
  %1516 = vmatprep.subr.bf16.mxu0 0
  %1517 = vmatpush1.bf16.msra.mxu0 0
  %1518 = vmatprep.subr.bf16.mxu0 0
  %1519 = vmatpush1.bf16.msra.mxu0 0
  %1520 = vmatprep.subr.bf16.mxu0 0
  %1521 = vmatpush1.bf16.msra.mxu0 0
  %1522 = vmatprep.subr.bf16.mxu0 0
  %1523 = vmatpush1.bf16.msra.mxu0 0
  %1524 = vmatprep.subr.bf16.mxu0 0
  %1525 = vmatpush1.bf16.msra.mxu0 0
  %1526 = vmatprep.subr.bf16.mxu0 0
  %1527 = vmatpush1.bf16.msra.mxu0 0
  %1528 = vmatprep.subr.bf16.mxu0 0
  %1529 = vmatpush1.bf16.msra.mxu0 0
  %1530 = vmatprep.mubr.bf16.mxu0 0
  %1531 = vmatmul.mubr.bf16.gmra.mrb[0].mxu0 %v1305
  %v1532 = vpop.f32.mrb[0].mxu0
  %v1533 = vadd.f32 0.0, %v1532
  %v1534 = vpop.f32.mrb[0].mxu0
  %v1535 = vadd.f32 0.0, %v1534
  %v1536 = vpop.f32.mrb[0].mxu0
  %v1537 = vpop.f32.mrb[0].mxu0
  %1538 = vdwg.mxu0
  %1539 = vmatprep.subr.bf16.mxu0 %v1437
  %1540 = vmatpush1.bf16.msra.mxu0 %v1436
  %1541 = vmatprep.subr.bf16.mxu0 %v1441
  %1542 = vmatpush1.bf16.msra.mxu0 %v1440
  %1543 = vmatprep.subr.bf16.mxu0 %v1445
  %1544 = vmatpush1.bf16.msra.mxu0 %v1444
  %1545 = vmatprep.subr.bf16.mxu0 %v1449
  %1546 = vmatpush1.bf16.msra.mxu0 %v1448
  %1547 = vmatprep.subr.bf16.mxu0 %v1453
  %1548 = vmatpush1.bf16.msra.mxu0 %v1452
  %1549 = vmatprep.subr.bf16.mxu0 %v1457
  %1550 = vmatpush1.bf16.msra.mxu0 %v1456
  %1551 = vmatprep.subr.bf16.mxu0 %v1461
  %1552 = vmatpush1.bf16.msra.mxu0 %v1460
  %1553 = vmatprep.subr.bf16.mxu0 %v1465
  %1554 = vmatpush1.bf16.msra.mxu0 %v1464
  %1555 = vmatprep.subr.bf16.mxu0 0
  %1556 = vmatpush1.bf16.msra.mxu0 0
  %1557 = vmatprep.subr.bf16.mxu0 0
  %1558 = vmatpush1.bf16.msra.mxu0 0
  %1559 = vmatprep.subr.bf16.mxu0 0
  %1560 = vmatpush1.bf16.msra.mxu0 0
  %1561 = vmatprep.subr.bf16.mxu0 0
  %1562 = vmatpush1.bf16.msra.mxu0 0
  %1563 = vmatprep.subr.bf16.mxu0 0
  %1564 = vmatpush1.bf16.msra.mxu0 0
  %1565 = vmatprep.subr.bf16.mxu0 0
  %1566 = vmatpush1.bf16.msra.mxu0 0
  %1567 = vmatprep.subr.bf16.mxu0 0
  %1568 = vmatpush1.bf16.msra.mxu0 0
  %1569 = vmatprep.subr.bf16.mxu0 0
  %1570 = vmatpush1.bf16.msra.mxu0 0
  %1571 = vmatprep.mubr.bf16.mxu0 0
  %1572 = vmatmul.mubr.bf16.gmra.mrb[0].mxu0 %v1305
  %v1573 = vpop.f32.mrb[0].mxu0
  %v1574 = vadd.f32 0.0, %v1573
  %v1575 = vpop.f32.mrb[0].mxu0
  %v1576 = vadd.f32 0.0, %v1575
  %v1577 = vpop.f32.mrb[0].mxu0
  %v1578 = vpop.f32.mrb[0].mxu0
  %1579 = vdwg.mxu0
  %v1580 = vadd.f32 %v1301, %v1533
  %v1581 = vadd.f32 %v1302, %v1535
  %v1582 = vadd.f32 %v1303, %v1574
  %v1583 = vadd.f32 %v1304, %v1576
  %v1584 = vxor.u32 %v1580, 2147483648
  %v1585 = vmul.f32 %v1584, 1.442695
  %v1586 = vpow.pop %v1585
  %v1587 = vadd.f32 %v1586, 1.0
  %v1588 = vrcp.pop %v1587
  %v1589 = vmul.f32 1.0, %v1588
  %v1590 = vxor.u32 %v1581, 2147483648
  %v1591 = vmul.f32 %v1590, 1.442695
  %v1592 = vpow.pop %v1591
  %v1593 = vadd.f32 %v1592, 1.0
  %v1594 = vrcp.pop %v1593
  %v1595 = vmul.f32 1.0, %v1594
  %v1596 = vtanh.pop %v1582
  %v1597 = vxor.u32 %v1583, 2147483648
  %v1598 = vmul.f32 %v1597, 1.442695
  %v1599 = vpow.pop %v1598
  %v1600 = vadd.f32 %v1599, 1.0
  %v1601 = vrcp.pop %v1600
  %v1602 = vmul.f32 1.0, %v1601
  %v1603 = vld [vmem:[#allocation4] sm:$0xff]
  %v1604 = vmul.f32 %v1595, %v1603
  %v1605 = vmul.f32 %v1589, %v1596
  %v1606 = vadd.f32 %v1604, %v1605
  %v1607 = vtanh.pop %v1606
  %v1608 = vmul.f32 %v1602, %v1607
  %1609 = vst [vmem:[#allocation4] sm:$0xff] %v1606
  %v1610 = vpack.c.bf16 %v1608, %v1608
  %1611 = vst [vmem:[#allocation3] sm:$0xf] %v1610
  %v1612 = vld [vmem:[#allocation3] sm:$0xff]
  %v1613 = vld [vmem:[%s4] sm:$0xff]
  %v1614 = vld [vmem:[%s4 + $0x8] sm:$0xff]
  %v1615 = vld [vmem:[%s4 + $0x10] sm:$0xff]
  %v1616 = vld [vmem:[%s4 + $0x18] sm:$0xff]
  %v1617 = vld [vmem:[%s4 + $0x20] sm:$0xff]
  %v1618 = vld [vmem:[%s4 + $0x28] sm:$0xff]
  %v1619 = vld [vmem:[%s4 + $0x30] sm:$0xff]
  %v1620 = vld [vmem:[%s4 + $0x38] sm:$0xff]
  %v1621 = vld [vmem:[%s4 + $0x40] sm:$0xff]
  %v1622 = vld [vmem:[%s4 + $0x48] sm:$0xff]
  %v1623 = vld [vmem:[%s4 + $0x50] sm:$0xff]
  %v1624 = vld [vmem:[%s4 + $0x58] sm:$0xff]
  %v1625 = vld [vmem:[%s4 + $0x60] sm:$0xff]
  %v1626 = vld [vmem:[%s4 + $0x68] sm:$0xff]
  %v1627 = vld [vmem:[%s4 + $0x70] sm:$0xff]
  %v1628 = vld [vmem:[%s4 + $0x78] sm:$0xff]
  %v1629 = vld [vmem:[%s4 + $0x80] sm:$0xff]
  %v1630 = vld [vmem:[%s4 + $0x88] sm:$0xff]
  %v1631 = vld [vmem:[%s4 + $0x90] sm:$0xff]
  %v1632 = vld [vmem:[%s4 + $0x98] sm:$0xff]
  %v1633 = vld [vmem:[%s4 + $0xa0] sm:$0xff]
  %v1634 = vld [vmem:[%s4 + $0xa8] sm:$0xff]
  %v1635 = vld [vmem:[%s4 + $0xb0] sm:$0xff]
  %v1636 = vld [vmem:[%s4 + $0xb8] sm:$0xff]
  %v1637 = vld [vmem:[%s4 + $0xc0] sm:$0xff]
  %v1638 = vld [vmem:[%s4 + $0xc8] sm:$0xff]
  %v1639 = vld [vmem:[%s4 + $0xd0] sm:$0xff]
  %v1640 = vld [vmem:[%s4 + $0xd8] sm:$0xff]
  %v1641 = vld [vmem:[%s4 + $0xe0] sm:$0xff]
  %v1642 = vld [vmem:[%s4 + $0xe8] sm:$0xff]
  %v1643 = vld [vmem:[%s4 + $0xf0] sm:$0xff]
  %v1644 = vld [vmem:[%s4 + $0xf8] sm:$0xff]
  %v1645 = vld [vmem:[%s4 + $0x100] sm:$0xff]
  %v1646 = vld [vmem:[%s4 + $0x108] sm:$0xff]
  %v1647 = vld [vmem:[%s4 + $0x110] sm:$0xff]
  %v1648 = vld [vmem:[%s4 + $0x118] sm:$0xff]
  %v1649 = vld [vmem:[%s4 + $0x120] sm:$0xff]
  %v1650 = vld [vmem:[%s4 + $0x128] sm:$0xff]
  %v1651 = vld [vmem:[%s4 + $0x130] sm:$0xff]
  %v1652 = vld [vmem:[%s4 + $0x138] sm:$0xff]
  %v1653 = vld [vmem:[%s4 + $0x140] sm:$0xff]
  %v1654 = vld [vmem:[%s4 + $0x148] sm:$0xff]
  %v1655 = vld [vmem:[%s4 + $0x150] sm:$0xff]
  %v1656 = vld [vmem:[%s4 + $0x158] sm:$0xff]
  %v1657 = vld [vmem:[%s4 + $0x160] sm:$0xff]
  %v1658 = vld [vmem:[%s4 + $0x168] sm:$0xff]
  %v1659 = vld [vmem:[%s4 + $0x170] sm:$0xff]
  %v1660 = vld [vmem:[%s4 + $0x178] sm:$0xff]
  %v1661 = vld [vmem:[%s4 + $0x180] sm:$0xff]
  %v1662 = vld [vmem:[%s4 + $0x188] sm:$0xff]
  %v1663 = vld [vmem:[%s4 + $0x190] sm:$0xff]
  %v1664 = vld [vmem:[%s4 + $0x198] sm:$0xff]
  %v1665 = vld [vmem:[%s4 + $0x1a0] sm:$0xff]
  %v1666 = vld [vmem:[%s4 + $0x1a8] sm:$0xff]
  %v1667 = vld [vmem:[%s4 + $0x1b0] sm:$0xff]
  %v1668 = vld [vmem:[%s4 + $0x1b8] sm:$0xff]
  %v1669 = vld [vmem:[%s4 + $0x1c0] sm:$0xff]
  %v1670 = vld [vmem:[%s4 + $0x1c8] sm:$0xff]
  %v1671 = vld [vmem:[%s4 + $0x1d0] sm:$0xff]
  %v1672 = vld [vmem:[%s4 + $0x1d8] sm:$0xff]
  %v1673 = vld [vmem:[%s4 + $0x1e0] sm:$0xff]
  %v1674 = vld [vmem:[%s4 + $0x1e8] sm:$0xff]
  %v1675 = vld [vmem:[%s4 + $0x1f0] sm:$0xff]
  %v1676 = vld [vmem:[%s4 + $0x1f8] sm:$0xff]
  %v1677 = vld [vmem:[%s5] sm:$0xf]
  %v1679 = vlaneseq
  %v1680 = vshrl.u32 %v1679, 7
  %v1681 = vsub.s32 0, %v1680
  %v1682 = vrot.slane %v1677, %v1681
  %v1683 = vlaneseq
  %v1684 = vshrl.u32 %v1683, 7
  %v1685 = vsub.s32 1, %v1684
  %v1686 = vrot.slane %v1677, %v1685
  %v1687 = vlaneseq
  %v1688 = vshrl.u32 %v1687, 7
  %v1689 = vsub.s32 2, %v1688
  %v1690 = vrot.slane %v1677, %v1689
  %v1691 = vlaneseq
  %v1692 = vshrl.u32 %v1691, 7
  %v1693 = vsub.s32 3, %v1692
  %v1694 = vrot.slane %v1677, %v1693
  %v1700 = vunpack.c.l.b16 %v1612
  %v1701 = vunpack.c.h.b16 %v1612
  %v1702 = vpack.c.b16 %v1700, %v1700
  %v1703 = vpack.c.b16 %v1701, %v1701
  %v1770 = vunpack.c.l.b16 %v1613
  %v1771 = vunpack.c.h.b16 %v1613
  %v1772 = vunpack.c.l.b16 %v1614
  %v1773 = vunpack.c.h.b16 %v1614
  %v1774 = vunpack.c.l.b16 %v1615
  %v1775 = vunpack.c.h.b16 %v1615
  %v1776 = vunpack.c.l.b16 %v1616
  %v1777 = vunpack.c.h.b16 %v1616
  %v1778 = vunpack.c.l.b16 %v1617
  %v1779 = vunpack.c.h.b16 %v1617
  %v1780 = vunpack.c.l.b16 %v1618
  %v1781 = vunpack.c.h.b16 %v1618
  %v1782 = vunpack.c.l.b16 %v1619
  %v1783 = vunpack.c.h.b16 %v1619
  %v1784 = vunpack.c.l.b16 %v1620
  %v1785 = vunpack.c.h.b16 %v1620
  %v1786 = vunpack.c.l.b16 %v1621
  %v1787 = vunpack.c.h.b16 %v1621
  %v1788 = vunpack.c.l.b16 %v1622
  %v1789 = vunpack.c.h.b16 %v1622
  %v1790 = vunpack.c.l.b16 %v1623
  %v1791 = vunpack.c.h.b16 %v1623
  %v1792 = vunpack.c.l.b16 %v1624
  %v1793 = vunpack.c.h.b16 %v1624
  %v1794 = vunpack.c.l.b16 %v1625
  %v1795 = vunpack.c.h.b16 %v1625
  %v1796 = vunpack.c.l.b16 %v1626
  %v1797 = vunpack.c.h.b16 %v1626
  %v1798 = vunpack.c.l.b16 %v1627
  %v1799 = vunpack.c.h.b16 %v1627
  %v1800 = vunpack.c.l.b16 %v1628
  %v1801 = vunpack.c.h.b16 %v1628
  %v1802 = vunpack.c.l.b16 %v1629
  %v1803 = vunpack.c.h.b16 %v1629
  %v1804 = vunpack.c.l.b16 %v1630
  %v1805 = vunpack.c.h.b16 %v1630
  %v1806 = vunpack.c.l.b16 %v1631
  %v1807 = vunpack.c.h.b16 %v1631
  %v1808 = vunpack.c.l.b16 %v1632
  %v1809 = vunpack.c.h.b16 %v1632
  %v1810 = vunpack.c.l.b16 %v1633
  %v1811 = vunpack.c.h.b16 %v1633
  %v1812 = vunpack.c.l.b16 %v1634
  %v1813 = vunpack.c.h.b16 %v1634
  %v1814 = vunpack.c.l.b16 %v1635
  %v1815 = vunpack.c.h.b16 %v1635
  %v1816 = vunpack.c.l.b16 %v1636
  %v1817 = vunpack.c.h.b16 %v1636
  %v1818 = vunpack.c.l.b16 %v1637
  %v1819 = vunpack.c.h.b16 %v1637
  %v1820 = vunpack.c.l.b16 %v1638
  %v1821 = vunpack.c.h.b16 %v1638
  %v1822 = vunpack.c.l.b16 %v1639
  %v1823 = vunpack.c.h.b16 %v1639
  %v1824 = vunpack.c.l.b16 %v1640
  %v1825 = vunpack.c.h.b16 %v1640
  %v1826 = vunpack.c.l.b16 %v1641
  %v1827 = vunpack.c.h.b16 %v1641
  %v1828 = vunpack.c.l.b16 %v1642
  %v1829 = vunpack.c.h.b16 %v1642
  %v1830 = vunpack.c.l.b16 %v1643
  %v1831 = vunpack.c.h.b16 %v1643
  %v1832 = vunpack.c.l.b16 %v1644
  %v1833 = vunpack.c.h.b16 %v1644
  %v1834 = vunpack.c.l.b16 %v1645
  %v1835 = vunpack.c.h.b16 %v1645
  %v1836 = vunpack.c.l.b16 %v1646
  %v1837 = vunpack.c.h.b16 %v1646
  %v1838 = vunpack.c.l.b16 %v1647
  %v1839 = vunpack.c.h.b16 %v1647
  %v1840 = vunpack.c.l.b16 %v1648
  %v1841 = vunpack.c.h.b16 %v1648
  %v1842 = vunpack.c.l.b16 %v1649
  %v1843 = vunpack.c.h.b16 %v1649
  %v1844 = vunpack.c.l.b16 %v1650
  %v1845 = vunpack.c.h.b16 %v1650
  %v1846 = vunpack.c.l.b16 %v1651
  %v1847 = vunpack.c.h.b16 %v1651
  %v1848 = vunpack.c.l.b16 %v1652
  %v1849 = vunpack.c.h.b16 %v1652
  %v1850 = vunpack.c.l.b16 %v1653
  %v1851 = vunpack.c.h.b16 %v1653
  %v1852 = vunpack.c.l.b16 %v1654
  %v1853 = vunpack.c.h.b16 %v1654
  %v1854 = vunpack.c.l.b16 %v1655
  %v1855 = vunpack.c.h.b16 %v1655
  %v1856 = vunpack.c.l.b16 %v1656
  %v1857 = vunpack.c.h.b16 %v1656
  %v1858 = vunpack.c.l.b16 %v1657
  %v1859 = vunpack.c.h.b16 %v1657
  %v1860 = vunpack.c.l.b16 %v1658
  %v1861 = vunpack.c.h.b16 %v1658
  %v1862 = vunpack.c.l.b16 %v1659
  %v1863 = vunpack.c.h.b16 %v1659
  %v1864 = vunpack.c.l.b16 %v1660
  %v1865 = vunpack.c.h.b16 %v1660
  %v1866 = vunpack.c.l.b16 %v1661
  %v1867 = vunpack.c.h.b16 %v1661
  %v1868 = vunpack.c.l.b16 %v1662
  %v1869 = vunpack.c.h.b16 %v1662
  %v1870 = vunpack.c.l.b16 %v1663
  %v1871 = vunpack.c.h.b16 %v1663
  %v1872 = vunpack.c.l.b16 %v1664
  %v1873 = vunpack.c.h.b16 %v1664
  %v1874 = vunpack.c.l.b16 %v1665
  %v1875 = vunpack.c.h.b16 %v1665
  %v1876 = vunpack.c.l.b16 %v1666
  %v1877 = vunpack.c.h.b16 %v1666
  %v1878 = vunpack.c.l.b16 %v1667
  %v1879 = vunpack.c.h.b16 %v1667
  %v1880 = vunpack.c.l.b16 %v1668
  %v1881 = vunpack.c.h.b16 %v1668
  %v1882 = vunpack.c.l.b16 %v1669
  %v1883 = vunpack.c.h.b16 %v1669
  %v1884 = vunpack.c.l.b16 %v1670
  %v1885 = vunpack.c.h.b16 %v1670
  %v1886 = vunpack.c.l.b16 %v1671
  %v1887 = vunpack.c.h.b16 %v1671
  %v1888 = vunpack.c.l.b16 %v1672
  %v1889 = vunpack.c.h.b16 %v1672
  %v1890 = vunpack.c.l.b16 %v1673
  %v1891 = vunpack.c.h.b16 %v1673
  %v1892 = vunpack.c.l.b16 %v1674
  %v1893 = vunpack.c.h.b16 %v1674
  %v1894 = vunpack.c.l.b16 %v1675
  %v1895 = vunpack.c.h.b16 %v1675
  %v1896 = vunpack.c.l.b16 %v1676
  %v1897 = vunpack.c.h.b16 %v1676
  %v1898 = vpack.c.b16 %v1774, %v1770
  %v1899 = vpack.c.b16 %v1775, %v1771
  %v1900 = vpack.c.b16 %v1776, %v1772
  %v1901 = vpack.c.b16 %v1777, %v1773
  %v1902 = vpack.c.b16 %v1782, %v1778
  %v1903 = vpack.c.b16 %v1783, %v1779
  %v1904 = vpack.c.b16 %v1784, %v1780
  %v1905 = vpack.c.b16 %v1785, %v1781
  %v1906 = vpack.c.b16 %v1790, %v1786
  %v1907 = vpack.c.b16 %v1791, %v1787
  %v1908 = vpack.c.b16 %v1792, %v1788
  %v1909 = vpack.c.b16 %v1793, %v1789
  %v1910 = vpack.c.b16 %v1798, %v1794
  %v1911 = vpack.c.b16 %v1799, %v1795
  %v1912 = vpack.c.b16 %v1800, %v1796
  %v1913 = vpack.c.b16 %v1801, %v1797
  %v1914 = vpack.c.b16 %v1806, %v1802
  %v1915 = vpack.c.b16 %v1807, %v1803
  %v1916 = vpack.c.b16 %v1808, %v1804
  %v1917 = vpack.c.b16 %v1809, %v1805
  %v1918 = vpack.c.b16 %v1814, %v1810
  %v1919 = vpack.c.b16 %v1815, %v1811
  %v1920 = vpack.c.b16 %v1816, %v1812
  %v1921 = vpack.c.b16 %v1817, %v1813
  %v1922 = vpack.c.b16 %v1822, %v1818
  %v1923 = vpack.c.b16 %v1823, %v1819
  %v1924 = vpack.c.b16 %v1824, %v1820
  %v1925 = vpack.c.b16 %v1825, %v1821
  %v1926 = vpack.c.b16 %v1830, %v1826
  %v1927 = vpack.c.b16 %v1831, %v1827
  %v1928 = vpack.c.b16 %v1832, %v1828
  %v1929 = vpack.c.b16 %v1833, %v1829
  %v1930 = vpack.c.b16 %v1838, %v1834
  %v1931 = vpack.c.b16 %v1839, %v1835
  %v1932 = vpack.c.b16 %v1840, %v1836
  %v1933 = vpack.c.b16 %v1841, %v1837
  %v1934 = vpack.c.b16 %v1846, %v1842
  %v1935 = vpack.c.b16 %v1847, %v1843
  %v1936 = vpack.c.b16 %v1848, %v1844
  %v1937 = vpack.c.b16 %v1849, %v1845
  %v1938 = vpack.c.b16 %v1854, %v1850
  %v1939 = vpack.c.b16 %v1855, %v1851
  %v1940 = vpack.c.b16 %v1856, %v1852
  %v1941 = vpack.c.b16 %v1857, %v1853
  %v1942 = vpack.c.b16 %v1862, %v1858
  %v1943 = vpack.c.b16 %v1863, %v1859
  %v1944 = vpack.c.b16 %v1864, %v1860
  %v1945 = vpack.c.b16 %v1865, %v1861
  %v1946 = vpack.c.b16 %v1870, %v1866
  %v1947 = vpack.c.b16 %v1871, %v1867
  %v1948 = vpack.c.b16 %v1872, %v1868
  %v1949 = vpack.c.b16 %v1873, %v1869
  %v1950 = vpack.c.b16 %v1878, %v1874
  %v1951 = vpack.c.b16 %v1879, %v1875
  %v1952 = vpack.c.b16 %v1880, %v1876
  %v1953 = vpack.c.b16 %v1881, %v1877
  %v1954 = vpack.c.b16 %v1886, %v1882
  %v1955 = vpack.c.b16 %v1887, %v1883
  %v1956 = vpack.c.b16 %v1888, %v1884
  %v1957 = vpack.c.b16 %v1889, %v1885
  %v1958 = vpack.c.b16 %v1894, %v1890
  %v1959 = vpack.c.b16 %v1895, %v1891
  %v1960 = vpack.c.b16 %v1896, %v1892
  %v1961 = vpack.c.b16 %v1897, %v1893
  %2026 = vmatprep.subr.bf16.mxu0 %v1899
  %2027 = vmatpush1.bf16.msra.mxu0 %v1898
  %2028 = vmatprep.subr.bf16.mxu0 %v1903
  %2029 = vmatpush1.bf16.msra.mxu0 %v1902
  %2030 = vmatprep.subr.bf16.mxu0 %v1907
  %2031 = vmatpush1.bf16.msra.mxu0 %v1906
  %2032 = vmatprep.subr.bf16.mxu0 %v1911
  %2033 = vmatpush1.bf16.msra.mxu0 %v1910
  %2034 = vmatprep.subr.bf16.mxu0 %v1915
  %2035 = vmatpush1.bf16.msra.mxu0 %v1914
  %2036 = vmatprep.subr.bf16.mxu0 %v1919
  %2037 = vmatpush1.bf16.msra.mxu0 %v1918
  %2038 = vmatprep.subr.bf16.mxu0 %v1923
  %2039 = vmatpush1.bf16.msra.mxu0 %v1922
  %2040 = vmatprep.subr.bf16.mxu0 %v1927
  %2041 = vmatpush1.bf16.msra.mxu0 %v1926
  %2042 = vmatprep.subr.bf16.mxu0 %v1931
  %2043 = vmatpush1.bf16.msra.mxu0 %v1930
  %2044 = vmatprep.subr.bf16.mxu0 %v1935
  %2045 = vmatpush1.bf16.msra.mxu0 %v1934
  %2046 = vmatprep.subr.bf16.mxu0 %v1939
  %2047 = vmatpush1.bf16.msra.mxu0 %v1938
  %2048 = vmatprep.subr.bf16.mxu0 %v1943
  %2049 = vmatpush1.bf16.msra.mxu0 %v1942
  %2050 = vmatprep.subr.bf16.mxu0 %v1947
  %2051 = vmatpush1.bf16.msra.mxu0 %v1946
  %2052 = vmatprep.subr.bf16.mxu0 %v1951
  %2053 = vmatpush1.bf16.msra.mxu0 %v1950
  %2054 = vmatprep.subr.bf16.mxu0 %v1955
  %2055 = vmatpush1.bf16.msra.mxu0 %v1954
  %2056 = vmatprep.subr.bf16.mxu0 %v1959
  %2057 = vmatpush1.bf16.msra.mxu0 %v1958
  %2058 = vmatprep.mubr.bf16.mxu0 %v1703
  %2059 = vmatmul.mubr.bf16.gmra.mrb[0].mxu0 %v1702
  %v2060 = vpop.f32.mrb[0].mxu0
  %v2061 = vadd.f32 %v1682, %v2060
  %v2062 = vpop.f32.mrb[0].mxu0
  %v2063 = vadd.f32 %v1686, %v2062
  %v2064 = vpop.f32.mrb[0].mxu0
  %v2065 = vpop.f32.mrb[0].mxu0
  %2066 = vdwg.mxu0
  %2067 = vmatprep.subr.bf16.mxu0 %v1901
  %2068 = vmatpush1.bf16.msra.mxu0 %v1900
  %2069 = vmatprep.subr.bf16.mxu0 %v1905
  %2070 = vmatpush1.bf16.msra.mxu0 %v1904
  %2071 = vmatprep.subr.bf16.mxu0 %v1909
  %2072 = vmatpush1.bf16.msra.mxu0 %v1908
  %2073 = vmatprep.subr.bf16.mxu0 %v1913
  %2074 = vmatpush1.bf16.msra.mxu0 %v1912
  %2075 = vmatprep.subr.bf16.mxu0 %v1917
  %2076 = vmatpush1.bf16.msra.mxu0 %v1916
  %2077 = vmatprep.subr.bf16.mxu0 %v1921
  %2078 = vmatpush1.bf16.msra.mxu0 %v1920
  %2079 = vmatprep.subr.bf16.mxu0 %v1925
  %2080 = vmatpush1.bf16.msra.mxu0 %v1924
  %2081 = vmatprep.subr.bf16.mxu0 %v1929
  %2082 = vmatpush1.bf16.msra.mxu0 %v1928
  %2083 = vmatprep.subr.bf16.mxu0 %v1933
  %2084 = vmatpush1.bf16.msra.mxu0 %v1932
  %2085 = vmatprep.subr.bf16.mxu0 %v1937
  %2086 = vmatpush1.bf16.msra.mxu0 %v1936
  %2087 = vmatprep.subr.bf16.mxu0 %v1941
  %2088 = vmatpush1.bf16.msra.mxu0 %v1940
  %2089 = vmatprep.subr.bf16.mxu0 %v1945
  %2090 = vmatpush1.bf16.msra.mxu0 %v1944
  %2091 = vmatprep.subr.bf16.mxu0 %v1949
  %2092 = vmatpush1.bf16.msra.mxu0 %v1948
  %2093 = vmatprep.subr.bf16.mxu0 %v1953
  %2094 = vmatpush1.bf16.msra.mxu0 %v1952
  %2095 = vmatprep.subr.bf16.mxu0 %v1957
  %2096 = vmatpush1.bf16.msra.mxu0 %v1956
  %2097 = vmatprep.subr.bf16.mxu0 %v1961
  %2098 = vmatpush1.bf16.msra.mxu0 %v1960
  %2099 = vmatprep.mubr.bf16.mxu0 %v1703
  %2100 = vmatmul.mubr.bf16.gmra.mrb[0].mxu0 %v1702
  %v2101 = vpop.f32.mrb[0].mxu0
  %v2102 = vadd.f32 %v1690, %v2101
  %v2103 = vpop.f32.mrb[0].mxu0
  %v2104 = vadd.f32 %v1694, %v2103
  %v2105 = vpop.f32.mrb[0].mxu0
  %v2106 = vpop.f32.mrb[0].mxu0
  %2107 = vdwg.mxu0
  %v2108 = vxor.u32 %v2061, 2147483648
  %v2109 = vmul.f32 %v2108, 1.442695
  %v2110 = vpow.pop %v2109
  %v2111 = vadd.f32 %v2110, 1.0
  %v2112 = vrcp.pop %v2111
  %v2113 = vmul.f32 1.0, %v2112
  %v2114 = vxor.u32 %v2063, 2147483648
  %v2115 = vmul.f32 %v2114, 1.442695
  %v2116 = vpow.pop %v2115
  %v2117 = vadd.f32 %v2116, 1.0
  %v2118 = vrcp.pop %v2117
  %v2119 = vmul.f32 1.0, %v2118
  %v2120 = vtanh.pop %v2102
  %v2121 = vxor.u32 %v2104, 2147483648
  %v2122 = vmul.f32 %v2121, 1.442695
  %v2123 = vpow.pop %v2122
  %v2124 = vadd.f32 %v2123, 1.0
  %v2125 = vrcp.pop %v2124
  %v2126 = vmul.f32 1.0, %v2125
  %v2127 = vld [vmem:[#allocation5] sm:$0xff]
  %v2128 = vmul.f32 %v2119, %v2127
  %v2129 = vmul.f32 %v2113, %v2120
  %v2130 = vadd.f32 %v2128, %v2129
  %v2131 = vtanh.pop %v2130
  %v2132 = vmul.f32 %v2126, %v2131
  %2133 = vst [vmem:[#allocation5] sm:$0xff] %v2130
  %2134 = vst [vmem:[#allocation6] sm:$0xff] %v2132
  %v2135 = vpack.c.bf16 %v2132, %v2132
  %2136 = vst [vmem:[#allocation3 + $0x4] sm:$0xf] %v2135
  %s2137 = scalar_lea.vmem [#allocation2], 64
  %v2138 = vld [vmem:[%s2137] sm:$0xff]
  %v2139 = vld [vmem:[%s2137 + $0x8] sm:$0xff]
  %v2140 = vld [vmem:[%s2137 + $0x10] sm:$0xff]
  %v2141 = vld [vmem:[%s2137 + $0x18] sm:$0xff]
  %v2142 = vld [vmem:[#allocation3] sm:$0xf]
  %v2143 = vld [vmem:[%s2] sm:$0xff]
  %v2144 = vld [vmem:[%s2 + $0x8] sm:$0xff]
  %v2145 = vld [vmem:[%s2 + $0x10] sm:$0xff]
  %v2146 = vld [vmem:[%s2 + $0x18] sm:$0xff]
  %v2147 = vld [vmem:[%s2 + $0x20] sm:$0xff]
  %v2148 = vld [vmem:[%s2 + $0x28] sm:$0xff]
  %v2149 = vld [vmem:[%s2 + $0x30] sm:$0xff]
  %v2150 = vld [vmem:[%s2 + $0x38] sm:$0xff]
  %v2151 = vld [vmem:[%s2 + $0x40] sm:$0xff]
  %v2152 = vld [vmem:[%s2 + $0x48] sm:$0xff]
  %v2153 = vld [vmem:[%s2 + $0x50] sm:$0xff]
  %v2154 = vld [vmem:[%s2 + $0x58] sm:$0xff]
  %v2155 = vld [vmem:[%s2 + $0x60] sm:$0xff]
  %v2156 = vld [vmem:[%s2 + $0x68] sm:$0xff]
  %v2157 = vld [vmem:[%s2 + $0x70] sm:$0xff]
  %v2158 = vld [vmem:[%s2 + $0x78] sm:$0xff]
  %v2159 = vld [vmem:[%s2 + $0x80] sm:$0xff]
  %v2160 = vld [vmem:[%s2 + $0x88] sm:$0xff]
  %v2161 = vld [vmem:[%s2 + $0x90] sm:$0xff]
  %v2162 = vld [vmem:[%s2 + $0x98] sm:$0xff]
  %v2163 = vld [vmem:[%s2 + $0xa0] sm:$0xff]
  %v2164 = vld [vmem:[%s2 + $0xa8] sm:$0xff]
  %v2165 = vld [vmem:[%s2 + $0xb0] sm:$0xff]
  %v2166 = vld [vmem:[%s2 + $0xb8] sm:$0xff]
  %v2167 = vld [vmem:[%s2 + $0xc0] sm:$0xff]
  %v2168 = vld [vmem:[%s2 + $0xc8] sm:$0xff]
  %v2169 = vld [vmem:[%s2 + $0xd0] sm:$0xff]
  %v2170 = vld [vmem:[%s2 + $0xd8] sm:$0xff]
  %v2171 = vld [vmem:[%s2 + $0xe0] sm:$0xff]
  %v2172 = vld [vmem:[%s2 + $0xe8] sm:$0xff]
  %v2173 = vld [vmem:[%s2 + $0xf0] sm:$0xff]
  %v2174 = vld [vmem:[%s2 + $0xf8] sm:$0xff]
  %v2207 = vunpack.c.l.b16 %v2143
  %v2208 = vunpack.c.h.b16 %v2143
  %v2209 = vunpack.c.l.b16 %v2144
  %v2210 = vunpack.c.h.b16 %v2144
  %v2211 = vunpack.c.l.b16 %v2145
  %v2212 = vunpack.c.h.b16 %v2145
  %v2213 = vunpack.c.l.b16 %v2146
  %v2214 = vunpack.c.h.b16 %v2146
  %v2215 = vunpack.c.l.b16 %v2147
  %v2216 = vunpack.c.h.b16 %v2147
  %v2217 = vunpack.c.l.b16 %v2148
  %v2218 = vunpack.c.h.b16 %v2148
  %v2219 = vunpack.c.l.b16 %v2149
  %v2220 = vunpack.c.h.b16 %v2149
  %v2221 = vunpack.c.l.b16 %v2150
  %v2222 = vunpack.c.h.b16 %v2150
  %v2223 = vunpack.c.l.b16 %v2151
  %v2224 = vunpack.c.h.b16 %v2151
  %v2225 = vunpack.c.l.b16 %v2152
  %v2226 = vunpack.c.h.b16 %v2152
  %v2227 = vunpack.c.l.b16 %v2153
  %v2228 = vunpack.c.h.b16 %v2153
  %v2229 = vunpack.c.l.b16 %v2154
  %v2230 = vunpack.c.h.b16 %v2154
  %v2231 = vunpack.c.l.b16 %v2155
  %v2232 = vunpack.c.h.b16 %v2155
  %v2233 = vunpack.c.l.b16 %v2156
  %v2234 = vunpack.c.h.b16 %v2156
  %v2235 = vunpack.c.l.b16 %v2157
  %v2236 = vunpack.c.h.b16 %v2157
  %v2237 = vunpack.c.l.b16 %v2158
  %v2238 = vunpack.c.h.b16 %v2158
  %v2239 = vunpack.c.l.b16 %v2159
  %v2240 = vunpack.c.h.b16 %v2159
  %v2241 = vunpack.c.l.b16 %v2160
  %v2242 = vunpack.c.h.b16 %v2160
  %v2243 = vunpack.c.l.b16 %v2161
  %v2244 = vunpack.c.h.b16 %v2161
  %v2245 = vunpack.c.l.b16 %v2162
  %v2246 = vunpack.c.h.b16 %v2162
  %v2247 = vunpack.c.l.b16 %v2163
  %v2248 = vunpack.c.h.b16 %v2163
  %v2249 = vunpack.c.l.b16 %v2164
  %v2250 = vunpack.c.h.b16 %v2164
  %v2251 = vunpack.c.l.b16 %v2165
  %v2252 = vunpack.c.h.b16 %v2165
  %v2253 = vunpack.c.l.b16 %v2166
  %v2254 = vunpack.c.h.b16 %v2166
  %v2255 = vunpack.c.l.b16 %v2167
  %v2256 = vunpack.c.h.b16 %v2167
  %v2257 = vunpack.c.l.b16 %v2168
  %v2258 = vunpack.c.h.b16 %v2168
  %v2259 = vunpack.c.l.b16 %v2169
  %v2260 = vunpack.c.h.b16 %v2169
  %v2261 = vunpack.c.l.b16 %v2170
  %v2262 = vunpack.c.h.b16 %v2170
  %v2263 = vunpack.c.l.b16 %v2171
  %v2264 = vunpack.c.h.b16 %v2171
  %v2265 = vunpack.c.l.b16 %v2172
  %v2266 = vunpack.c.h.b16 %v2172
  %v2267 = vunpack.c.l.b16 %v2173
  %v2268 = vunpack.c.h.b16 %v2173
  %v2269 = vunpack.c.l.b16 %v2174
  %v2270 = vunpack.c.h.b16 %v2174
  %v2271 = vpack.c.b16 %v2211, %v2207
  %v2272 = vpack.c.b16 %v2212, %v2208
  %v2273 = vpack.c.b16 %v2213, %v2209
  %v2274 = vpack.c.b16 %v2214, %v2210
  %v2275 = vpack.c.b16 %v2219, %v2215
  %v2276 = vpack.c.b16 %v2220, %v2216
  %v2277 = vpack.c.b16 %v2221, %v2217
  %v2278 = vpack.c.b16 %v2222, %v2218
  %v2279 = vpack.c.b16 %v2227, %v2223
  %v2280 = vpack.c.b16 %v2228, %v2224
  %v2281 = vpack.c.b16 %v2229, %v2225
  %v2282 = vpack.c.b16 %v2230, %v2226
  %v2283 = vpack.c.b16 %v2235, %v2231
  %v2284 = vpack.c.b16 %v2236, %v2232
  %v2285 = vpack.c.b16 %v2237, %v2233
  %v2286 = vpack.c.b16 %v2238, %v2234
  %v2287 = vpack.c.b16 %v2243, %v2239
  %v2288 = vpack.c.b16 %v2244, %v2240
  %v2289 = vpack.c.b16 %v2245, %v2241
  %v2290 = vpack.c.b16 %v2246, %v2242
  %v2291 = vpack.c.b16 %v2251, %v2247
  %v2292 = vpack.c.b16 %v2252, %v2248
  %v2293 = vpack.c.b16 %v2253, %v2249
  %v2294 = vpack.c.b16 %v2254, %v2250
  %v2295 = vpack.c.b16 %v2259, %v2255
  %v2296 = vpack.c.b16 %v2260, %v2256
  %v2297 = vpack.c.b16 %v2261, %v2257
  %v2298 = vpack.c.b16 %v2262, %v2258
  %v2299 = vpack.c.b16 %v2267, %v2263
  %v2300 = vpack.c.b16 %v2268, %v2264
  %v2301 = vpack.c.b16 %v2269, %v2265
  %v2302 = vpack.c.b16 %v2270, %v2266
  %2335 = vmatprep.subr.bf16.mxu0 %v2272
  %2336 = vmatpush1.bf16.msra.mxu0 %v2271
  %2337 = vmatprep.subr.bf16.mxu0 %v2276
  %2338 = vmatpush1.bf16.msra.mxu0 %v2275
  %2339 = vmatprep.subr.bf16.mxu0 %v2280
  %2340 = vmatpush1.bf16.msra.mxu0 %v2279
  %2341 = vmatprep.subr.bf16.mxu0 %v2284
  %2342 = vmatpush1.bf16.msra.mxu0 %v2283
  %2343 = vmatprep.subr.bf16.mxu0 %v2288
  %2344 = vmatpush1.bf16.msra.mxu0 %v2287
  %2345 = vmatprep.subr.bf16.mxu0 %v2292
  %2346 = vmatpush1.bf16.msra.mxu0 %v2291
  %2347 = vmatprep.subr.bf16.mxu0 %v2296
  %2348 = vmatpush1.bf16.msra.mxu0 %v2295
  %2349 = vmatprep.subr.bf16.mxu0 %v2300
  %2350 = vmatpush1.bf16.msra.mxu0 %v2299
  %2351 = vmatprep.subr.bf16.mxu0 0
  %2352 = vmatpush1.bf16.msra.mxu0 0
  %2353 = vmatprep.subr.bf16.mxu0 0
  %2354 = vmatpush1.bf16.msra.mxu0 0
  %2355 = vmatprep.subr.bf16.mxu0 0
  %2356 = vmatpush1.bf16.msra.mxu0 0
  %2357 = vmatprep.subr.bf16.mxu0 0
  %2358 = vmatpush1.bf16.msra.mxu0 0
  %2359 = vmatprep.subr.bf16.mxu0 0
  %2360 = vmatpush1.bf16.msra.mxu0 0
  %2361 = vmatprep.subr.bf16.mxu0 0
  %2362 = vmatpush1.bf16.msra.mxu0 0
  %2363 = vmatprep.subr.bf16.mxu0 0
  %2364 = vmatpush1.bf16.msra.mxu0 0
  %2365 = vmatprep.subr.bf16.mxu0 0
  %2366 = vmatpush1.bf16.msra.mxu0 0
  %2367 = vmatprep.mubr.bf16.mxu0 0
  %2368 = vmatmul.mubr.bf16.gmra.mrb[0].mxu0 %v2142
  %v2369 = vpop.f32.mrb[0].mxu0
  %v2370 = vadd.f32 0.0, %v2369
  %v2371 = vpop.f32.mrb[0].mxu0
  %v2372 = vadd.f32 0.0, %v2371
  %v2373 = vpop.f32.mrb[0].mxu0
  %v2374 = vpop.f32.mrb[0].mxu0
  %2375 = vdwg.mxu0
  %2376 = vmatprep.subr.bf16.mxu0 %v2274
  %2377 = vmatpush1.bf16.msra.mxu0 %v2273
  %2378 = vmatprep.subr.bf16.mxu0 %v2278
  %2379 = vmatpush1.bf16.msra.mxu0 %v2277
  %2380 = vmatprep.subr.bf16.mxu0 %v2282
  %2381 = vmatpush1.bf16.msra.mxu0 %v2281
  %2382 = vmatprep.subr.bf16.mxu0 %v2286
  %2383 = vmatpush1.bf16.msra.mxu0 %v2285
  %2384 = vmatprep.subr.bf16.mxu0 %v2290
  %2385 = vmatpush1.bf16.msra.mxu0 %v2289
  %2386 = vmatprep.subr.bf16.mxu0 %v2294
  %2387 = vmatpush1.bf16.msra.mxu0 %v2293
  %2388 = vmatprep.subr.bf16.mxu0 %v2298
  %2389 = vmatpush1.bf16.msra.mxu0 %v2297
  %2390 = vmatprep.subr.bf16.mxu0 %v2302
  %2391 = vmatpush1.bf16.msra.mxu0 %v2301
  %2392 = vmatprep.subr.bf16.mxu0 0
  %2393 = vmatpush1.bf16.msra.mxu0 0
  %2394 = vmatprep.subr.bf16.mxu0 0
  %2395 = vmatpush1.bf16.msra.mxu0 0
  %2396 = vmatprep.subr.bf16.mxu0 0
  %2397 = vmatpush1.bf16.msra.mxu0 0
  %2398 = vmatprep.subr.bf16.mxu0 0
  %2399 = vmatpush1.bf16.msra.mxu0 0
  %2400 = vmatprep.subr.bf16.mxu0 0
  %2401 = vmatpush1.bf16.msra.mxu0 0
  %2402 = vmatprep.subr.bf16.mxu0 0
  %2403 = vmatpush1.bf16.msra.mxu0 0
  %2404 = vmatprep.subr.bf16.mxu0 0
  %2405 = vmatpush1.bf16.msra.mxu0 0
  %2406 = vmatprep.subr.bf16.mxu0 0
  %2407 = vmatpush1.bf16.msra.mxu0 0
  %2408 = vmatprep.mubr.bf16.mxu0 0
  %2409 = vmatmul.mubr.bf16.gmra.mrb[0].mxu0 %v2142
  %v2410 = vpop.f32.mrb[0].mxu0
  %v2411 = vadd.f32 0.0, %v2410
  %v2412 = vpop.f32.mrb[0].mxu0
  %v2413 = vadd.f32 0.0, %v2412
  %v2414 = vpop.f32.mrb[0].mxu0
  %v2415 = vpop.f32.mrb[0].mxu0
  %2416 = vdwg.mxu0
  %v2417 = vadd.f32 %v2138, %v2370
  %v2418 = vadd.f32 %v2139, %v2372
  %v2419 = vadd.f32 %v2140, %v2411
  %v2420 = vadd.f32 %v2141, %v2413
  %v2421 = vxor.u32 %v2417, 2147483648
  %v2422 = vmul.f32 %v2421, 1.442695
  %v2423 = vpow.pop %v2422
  %v2424 = vadd.f32 %v2423, 1.0
  %v2425 = vrcp.pop %v2424
  %v2426 = vmul.f32 1.0, %v2425
  %v2427 = vxor.u32 %v2418, 2147483648
  %v2428 = vmul.f32 %v2427, 1.442695
  %v2429 = vpow.pop %v2428
  %v2430 = vadd.f32 %v2429, 1.0
  %v2431 = vrcp.pop %v2430
  %v2432 = vmul.f32 1.0, %v2431
  %v2433 = vtanh.pop %v2419
  %v2434 = vxor.u32 %v2420, 2147483648
  %v2435 = vmul.f32 %v2434, 1.442695
  %v2436 = vpow.pop %v2435
  %v2437 = vadd.f32 %v2436, 1.0
  %v2438 = vrcp.pop %v2437
  %v2439 = vmul.f32 1.0, %v2438
  %v2440 = vld [vmem:[#allocation4] sm:$0xff]
  %v2441 = vmul.f32 %v2432, %v2440
  %v2442 = vmul.f32 %v2426, %v2433
  %v2443 = vadd.f32 %v2441, %v2442
  %v2444 = vtanh.pop %v2443
  %v2445 = vmul.f32 %v2439, %v2444
  %2446 = vst [vmem:[#allocation4] sm:$0xff] %v2443
  %v2447 = vpack.c.bf16 %v2445, %v2445
  %2448 = vst [vmem:[#allocation3] sm:$0xf] %v2447
  %v2449 = vld [vmem:[#allocation3] sm:$0xff]
  %v2450 = vld [vmem:[%s4] sm:$0xff]
  %v2451 = vld [vmem:[%s4 + $0x8] sm:$0xff]
  %v2452 = vld [vmem:[%s4 + $0x10] sm:$0xff]
  %v2453 = vld [vmem:[%s4 + $0x18] sm:$0xff]
  %v2454 = vld [vmem:[%s4 + $0x20] sm:$0xff]
  %v2455 = vld [vmem:[%s4 + $0x28] sm:$0xff]
  %v2456 = vld [vmem:[%s4 + $0x30] sm:$0xff]
  %v2457 = vld [vmem:[%s4 + $0x38] sm:$0xff]
  %v2458 = vld [vmem:[%s4 + $0x40] sm:$0xff]
  %v2459 = vld [vmem:[%s4 + $0x48] sm:$0xff]
  %v2460 = vld [vmem:[%s4 + $0x50] sm:$0xff]
  %v2461 = vld [vmem:[%s4 + $0x58] sm:$0xff]
  %v2462 = vld [vmem:[%s4 + $0x60] sm:$0xff]
  %v2463 = vld [vmem:[%s4 + $0x68] sm:$0xff]
  %v2464 = vld [vmem:[%s4 + $0x70] sm:$0xff]
  %v2465 = vld [vmem:[%s4 + $0x78] sm:$0xff]
  %v2466 = vld [vmem:[%s4 + $0x80] sm:$0xff]
  %v2467 = vld [vmem:[%s4 + $0x88] sm:$0xff]
  %v2468 = vld [vmem:[%s4 + $0x90] sm:$0xff]
  %v2469 = vld [vmem:[%s4 + $0x98] sm:$0xff]
  %v2470 = vld [vmem:[%s4 + $0xa0] sm:$0xff]
  %v2471 = vld [vmem:[%s4 + $0xa8] sm:$0xff]
  %v2472 = vld [vmem:[%s4 + $0xb0] sm:$0xff]
  %v2473 = vld [vmem:[%s4 + $0xb8] sm:$0xff]
  %v2474 = vld [vmem:[%s4 + $0xc0] sm:$0xff]
  %v2475 = vld [vmem:[%s4 + $0xc8] sm:$0xff]
  %v2476 = vld [vmem:[%s4 + $0xd0] sm:$0xff]
  %v2477 = vld [vmem:[%s4 + $0xd8] sm:$0xff]
  %v2478 = vld [vmem:[%s4 + $0xe0] sm:$0xff]
  %v2479 = vld [vmem:[%s4 + $0xe8] sm:$0xff]
  %v2480 = vld [vmem:[%s4 + $0xf0] sm:$0xff]
  %v2481 = vld [vmem:[%s4 + $0xf8] sm:$0xff]
  %v2482 = vld [vmem:[%s4 + $0x100] sm:$0xff]
  %v2483 = vld [vmem:[%s4 + $0x108] sm:$0xff]
  %v2484 = vld [vmem:[%s4 + $0x110] sm:$0xff]
  %v2485 = vld [vmem:[%s4 + $0x118] sm:$0xff]
  %v2486 = vld [vmem:[%s4 + $0x120] sm:$0xff]
  %v2487 = vld [vmem:[%s4 + $0x128] sm:$0xff]
  %v2488 = vld [vmem:[%s4 + $0x130] sm:$0xff]
  %v2489 = vld [vmem:[%s4 + $0x138] sm:$0xff]
  %v2490 = vld [vmem:[%s4 + $0x140] sm:$0xff]
  %v2491 = vld [vmem:[%s4 + $0x148] sm:$0xff]
  %v2492 = vld [vmem:[%s4 + $0x150] sm:$0xff]
  %v2493 = vld [vmem:[%s4 + $0x158] sm:$0xff]
  %v2494 = vld [vmem:[%s4 + $0x160] sm:$0xff]
  %v2495 = vld [vmem:[%s4 + $0x168] sm:$0xff]
  %v2496 = vld [vmem:[%s4 + $0x170] sm:$0xff]
  %v2497 = vld [vmem:[%s4 + $0x178] sm:$0xff]
  %v2498 = vld [vmem:[%s4 + $0x180] sm:$0xff]
  %v2499 = vld [vmem:[%s4 + $0x188] sm:$0xff]
  %v2500 = vld [vmem:[%s4 + $0x190] sm:$0xff]
  %v2501 = vld [vmem:[%s4 + $0x198] sm:$0xff]
  %v2502 = vld [vmem:[%s4 + $0x1a0] sm:$0xff]
  %v2503 = vld [vmem:[%s4 + $0x1a8] sm:$0xff]
  %v2504 = vld [vmem:[%s4 + $0x1b0] sm:$0xff]
  %v2505 = vld [vmem:[%s4 + $0x1b8] sm:$0xff]
  %v2506 = vld [vmem:[%s4 + $0x1c0] sm:$0xff]
  %v2507 = vld [vmem:[%s4 + $0x1c8] sm:$0xff]
  %v2508 = vld [vmem:[%s4 + $0x1d0] sm:$0xff]
  %v2509 = vld [vmem:[%s4 + $0x1d8] sm:$0xff]
  %v2510 = vld [vmem:[%s4 + $0x1e0] sm:$0xff]
  %v2511 = vld [vmem:[%s4 + $0x1e8] sm:$0xff]
  %v2512 = vld [vmem:[%s4 + $0x1f0] sm:$0xff]
  %v2513 = vld [vmem:[%s4 + $0x1f8] sm:$0xff]
  %v2514 = vld [vmem:[%s5] sm:$0xf]
  %v2516 = vlaneseq
  %v2517 = vshrl.u32 %v2516, 7
  %v2518 = vsub.s32 0, %v2517
  %v2519 = vrot.slane %v2514, %v2518
  %v2520 = vlaneseq
  %v2521 = vshrl.u32 %v2520, 7
  %v2522 = vsub.s32 1, %v2521
  %v2523 = vrot.slane %v2514, %v2522
  %v2524 = vlaneseq
  %v2525 = vshrl.u32 %v2524, 7
  %v2526 = vsub.s32 2, %v2525
  %v2527 = vrot.slane %v2514, %v2526
  %v2528 = vlaneseq
  %v2529 = vshrl.u32 %v2528, 7
  %v2530 = vsub.s32 3, %v2529
  %v2531 = vrot.slane %v2514, %v2530
  %v2537 = vunpack.c.l.b16 %v2449
  %v2538 = vunpack.c.h.b16 %v2449
  %v2539 = vpack.c.b16 %v2537, %v2537
  %v2540 = vpack.c.b16 %v2538, %v2538
  %v2607 = vunpack.c.l.b16 %v2450
  %v2608 = vunpack.c.h.b16 %v2450
  %v2609 = vunpack.c.l.b16 %v2451
  %v2610 = vunpack.c.h.b16 %v2451
  %v2611 = vunpack.c.l.b16 %v2452
  %v2612 = vunpack.c.h.b16 %v2452
  %v2613 = vunpack.c.l.b16 %v2453
  %v2614 = vunpack.c.h.b16 %v2453
  %v2615 = vunpack.c.l.b16 %v2454
  %v2616 = vunpack.c.h.b16 %v2454
  %v2617 = vunpack.c.l.b16 %v2455
  %v2618 = vunpack.c.h.b16 %v2455
  %v2619 = vunpack.c.l.b16 %v2456
  %v2620 = vunpack.c.h.b16 %v2456
  %v2621 = vunpack.c.l.b16 %v2457
  %v2622 = vunpack.c.h.b16 %v2457
  %v2623 = vunpack.c.l.b16 %v2458
  %v2624 = vunpack.c.h.b16 %v2458
  %v2625 = vunpack.c.l.b16 %v2459
  %v2626 = vunpack.c.h.b16 %v2459
  %v2627 = vunpack.c.l.b16 %v2460
  %v2628 = vunpack.c.h.b16 %v2460
  %v2629 = vunpack.c.l.b16 %v2461
  %v2630 = vunpack.c.h.b16 %v2461
  %v2631 = vunpack.c.l.b16 %v2462
  %v2632 = vunpack.c.h.b16 %v2462
  %v2633 = vunpack.c.l.b16 %v2463
  %v2634 = vunpack.c.h.b16 %v2463
  %v2635 = vunpack.c.l.b16 %v2464
  %v2636 = vunpack.c.h.b16 %v2464
  %v2637 = vunpack.c.l.b16 %v2465
  %v2638 = vunpack.c.h.b16 %v2465
  %v2639 = vunpack.c.l.b16 %v2466
  %v2640 = vunpack.c.h.b16 %v2466
  %v2641 = vunpack.c.l.b16 %v2467
  %v2642 = vunpack.c.h.b16 %v2467
  %v2643 = vunpack.c.l.b16 %v2468
  %v2644 = vunpack.c.h.b16 %v2468
  %v2645 = vunpack.c.l.b16 %v2469
  %v2646 = vunpack.c.h.b16 %v2469
  %v2647 = vunpack.c.l.b16 %v2470
  %v2648 = vunpack.c.h.b16 %v2470
  %v2649 = vunpack.c.l.b16 %v2471
  %v2650 = vunpack.c.h.b16 %v2471
  %v2651 = vunpack.c.l.b16 %v2472
  %v2652 = vunpack.c.h.b16 %v2472
  %v2653 = vunpack.c.l.b16 %v2473
  %v2654 = vunpack.c.h.b16 %v2473
  %v2655 = vunpack.c.l.b16 %v2474
  %v2656 = vunpack.c.h.b16 %v2474
  %v2657 = vunpack.c.l.b16 %v2475
  %v2658 = vunpack.c.h.b16 %v2475
  %v2659 = vunpack.c.l.b16 %v2476
  %v2660 = vunpack.c.h.b16 %v2476
  %v2661 = vunpack.c.l.b16 %v2477
  %v2662 = vunpack.c.h.b16 %v2477
  %v2663 = vunpack.c.l.b16 %v2478
  %v2664 = vunpack.c.h.b16 %v2478
  %v2665 = vunpack.c.l.b16 %v2479
  %v2666 = vunpack.c.h.b16 %v2479
  %v2667 = vunpack.c.l.b16 %v2480
  %v2668 = vunpack.c.h.b16 %v2480
  %v2669 = vunpack.c.l.b16 %v2481
  %v2670 = vunpack.c.h.b16 %v2481
  %v2671 = vunpack.c.l.b16 %v2482
  %v2672 = vunpack.c.h.b16 %v2482
  %v2673 = vunpack.c.l.b16 %v2483
  %v2674 = vunpack.c.h.b16 %v2483
  %v2675 = vunpack.c.l.b16 %v2484
  %v2676 = vunpack.c.h.b16 %v2484
  %v2677 = vunpack.c.l.b16 %v2485
  %v2678 = vunpack.c.h.b16 %v2485
  %v2679 = vunpack.c.l.b16 %v2486
  %v2680 = vunpack.c.h.b16 %v2486
  %v2681 = vunpack.c.l.b16 %v2487
  %v2682 = vunpack.c.h.b16 %v2487
  %v2683 = vunpack.c.l.b16 %v2488
  %v2684 = vunpack.c.h.b16 %v2488
  %v2685 = vunpack.c.l.b16 %v2489
  %v2686 = vunpack.c.h.b16 %v2489
  %v2687 = vunpack.c.l.b16 %v2490
  %v2688 = vunpack.c.h.b16 %v2490
  %v2689 = vunpack.c.l.b16 %v2491
  %v2690 = vunpack.c.h.b16 %v2491
  %v2691 = vunpack.c.l.b16 %v2492
  %v2692 = vunpack.c.h.b16 %v2492
  %v2693 = vunpack.c.l.b16 %v2493
  %v2694 = vunpack.c.h.b16 %v2493
  %v2695 = vunpack.c.l.b16 %v2494
  %v2696 = vunpack.c.h.b16 %v2494
  %v2697 = vunpack.c.l.b16 %v2495
  %v2698 = vunpack.c.h.b16 %v2495
  %v2699 = vunpack.c.l.b16 %v2496
  %v2700 = vunpack.c.h.b16 %v2496
  %v2701 = vunpack.c.l.b16 %v2497
  %v2702 = vunpack.c.h.b16 %v2497
  %v2703 = vunpack.c.l.b16 %v2498
  %v2704 = vunpack.c.h.b16 %v2498
  %v2705 = vunpack.c.l.b16 %v2499
  %v2706 = vunpack.c.h.b16 %v2499
  %v2707 = vunpack.c.l.b16 %v2500
  %v2708 = vunpack.c.h.b16 %v2500
  %v2709 = vunpack.c.l.b16 %v2501
  %v2710 = vunpack.c.h.b16 %v2501
  %v2711 = vunpack.c.l.b16 %v2502
  %v2712 = vunpack.c.h.b16 %v2502
  %v2713 = vunpack.c.l.b16 %v2503
  %v2714 = vunpack.c.h.b16 %v2503
  %v2715 = vunpack.c.l.b16 %v2504
  %v2716 = vunpack.c.h.b16 %v2504
  %v2717 = vunpack.c.l.b16 %v2505
  %v2718 = vunpack.c.h.b16 %v2505
  %v2719 = vunpack.c.l.b16 %v2506
  %v2720 = vunpack.c.h.b16 %v2506
  %v2721 = vunpack.c.l.b16 %v2507
  %v2722 = vunpack.c.h.b16 %v2507
  %v2723 = vunpack.c.l.b16 %v2508
  %v2724 = vunpack.c.h.b16 %v2508
  %v2725 = vunpack.c.l.b16 %v2509
  %v2726 = vunpack.c.h.b16 %v2509
  %v2727 = vunpack.c.l.b16 %v2510
  %v2728 = vunpack.c.h.b16 %v2510
  %v2729 = vunpack.c.l.b16 %v2511
  %v2730 = vunpack.c.h.b16 %v2511
  %v2731 = vunpack.c.l.b16 %v2512
  %v2732 = vunpack.c.h.b16 %v2512
  %v2733 = vunpack.c.l.b16 %v2513
  %v2734 = vunpack.c.h.b16 %v2513
  %v2735 = vpack.c.b16 %v2611, %v2607
  %v2736 = vpack.c.b16 %v2612, %v2608
  %v2737 = vpack.c.b16 %v2613, %v2609
  %v2738 = vpack.c.b16 %v2614, %v2610
  %v2739 = vpack.c.b16 %v2619, %v2615
  %v2740 = vpack.c.b16 %v2620, %v2616
  %v2741 = vpack.c.b16 %v2621, %v2617
  %v2742 = vpack.c.b16 %v2622, %v2618
  %v2743 = vpack.c.b16 %v2627, %v2623
  %v2744 = vpack.c.b16 %v2628, %v2624
  %v2745 = vpack.c.b16 %v2629, %v2625
  %v2746 = vpack.c.b16 %v2630, %v2626
  %v2747 = vpack.c.b16 %v2635, %v2631
  %v2748 = vpack.c.b16 %v2636, %v2632
  %v2749 = vpack.c.b16 %v2637, %v2633
  %v2750 = vpack.c.b16 %v2638, %v2634
  %v2751 = vpack.c.b16 %v2643, %v2639
  %v2752 = vpack.c.b16 %v2644, %v2640
  %v2753 = vpack.c.b16 %v2645, %v2641
  %v2754 = vpack.c.b16 %v2646, %v2642
  %v2755 = vpack.c.b16 %v2651, %v2647
  %v2756 = vpack.c.b16 %v2652, %v2648
  %v2757 = vpack.c.b16 %v2653, %v2649
  %v2758 = vpack.c.b16 %v2654, %v2650
  %v2759 = vpack.c.b16 %v2659, %v2655
  %v2760 = vpack.c.b16 %v2660, %v2656
  %v2761 = vpack.c.b16 %v2661, %v2657
  %v2762 = vpack.c.b16 %v2662, %v2658
  %v2763 = vpack.c.b16 %v2667, %v2663
  %v2764 = vpack.c.b16 %v2668, %v2664
  %v2765 = vpack.c.b16 %v2669, %v2665
  %v2766 = vpack.c.b16 %v2670, %v2666
  %v2767 = vpack.c.b16 %v2675, %v2671
  %v2768 = vpack.c.b16 %v2676, %v2672
  %v2769 = vpack.c.b16 %v2677, %v2673
  %v2770 = vpack.c.b16 %v2678, %v2674
  %v2771 = vpack.c.b16 %v2683, %v2679
  %v2772 = vpack.c.b16 %v2684, %v2680
  %v2773 = vpack.c.b16 %v2685, %v2681
  %v2774 = vpack.c.b16 %v2686, %v2682
  %v2775 = vpack.c.b16 %v2691, %v2687
  %v2776 = vpack.c.b16 %v2692, %v2688
  %v2777 = vpack.c.b16 %v2693, %v2689
  %v2778 = vpack.c.b16 %v2694, %v2690
  %v2779 = vpack.c.b16 %v2699, %v2695
  %v2780 = vpack.c.b16 %v2700, %v2696
  %v2781 = vpack.c.b16 %v2701, %v2697
  %v2782 = vpack.c.b16 %v2702, %v2698
  %v2783 = vpack.c.b16 %v2707, %v2703
  %v2784 = vpack.c.b16 %v2708, %v2704
  %v2785 = vpack.c.b16 %v2709, %v2705
  %v2786 = vpack.c.b16 %v2710, %v2706
  %v2787 = vpack.c.b16 %v2715, %v2711
  %v2788 = vpack.c.b16 %v2716, %v2712
  %v2789 = vpack.c.b16 %v2717, %v2713
  %v2790 = vpack.c.b16 %v2718, %v2714
  %v2791 = vpack.c.b16 %v2723, %v2719
  %v2792 = vpack.c.b16 %v2724, %v2720
  %v2793 = vpack.c.b16 %v2725, %v2721
  %v2794 = vpack.c.b16 %v2726, %v2722
  %v2795 = vpack.c.b16 %v2731, %v2727
  %v2796 = vpack.c.b16 %v2732, %v2728
  %v2797 = vpack.c.b16 %v2733, %v2729
  %v2798 = vpack.c.b16 %v2734, %v2730
  %2863 = vmatprep.subr.bf16.mxu0 %v2736
  %2864 = vmatpush1.bf16.msra.mxu0 %v2735
  %2865 = vmatprep.subr.bf16.mxu0 %v2740
  %2866 = vmatpush1.bf16.msra.mxu0 %v2739
  %2867 = vmatprep.subr.bf16.mxu0 %v2744
  %2868 = vmatpush1.bf16.msra.mxu0 %v2743
  %2869 = vmatprep.subr.bf16.mxu0 %v2748
  %2870 = vmatpush1.bf16.msra.mxu0 %v2747
  %2871 = vmatprep.subr.bf16.mxu0 %v2752
  %2872 = vmatpush1.bf16.msra.mxu0 %v2751
  %2873 = vmatprep.subr.bf16.mxu0 %v2756
  %2874 = vmatpush1.bf16.msra.mxu0 %v2755
  %2875 = vmatprep.subr.bf16.mxu0 %v2760
  %2876 = vmatpush1.bf16.msra.mxu0 %v2759
  %2877 = vmatprep.subr.bf16.mxu0 %v2764
  %2878 = vmatpush1.bf16.msra.mxu0 %v2763
  %2879 = vmatprep.subr.bf16.mxu0 %v2768
  %2880 = vmatpush1.bf16.msra.mxu0 %v2767
  %2881 = vmatprep.subr.bf16.mxu0 %v2772
  %2882 = vmatpush1.bf16.msra.mxu0 %v2771
  %2883 = vmatprep.subr.bf16.mxu0 %v2776
  %2884 = vmatpush1.bf16.msra.mxu0 %v2775
  %2885 = vmatprep.subr.bf16.mxu0 %v2780
  %2886 = vmatpush1.bf16.msra.mxu0 %v2779
  %2887 = vmatprep.subr.bf16.mxu0 %v2784
  %2888 = vmatpush1.bf16.msra.mxu0 %v2783
  %2889 = vmatprep.subr.bf16.mxu0 %v2788
  %2890 = vmatpush1.bf16.msra.mxu0 %v2787
  %2891 = vmatprep.subr.bf16.mxu0 %v2792
  %2892 = vmatpush1.bf16.msra.mxu0 %v2791
  %2893 = vmatprep.subr.bf16.mxu0 %v2796
  %2894 = vmatpush1.bf16.msra.mxu0 %v2795
  %2895 = vmatprep.mubr.bf16.mxu0 %v2540
  %2896 = vmatmul.mubr.bf16.gmra.mrb[0].mxu0 %v2539
  %v2897 = vpop.f32.mrb[0].mxu0
  %v2898 = vadd.f32 %v2519, %v2897
  %v2899 = vpop.f32.mrb[0].mxu0
  %v2900 = vadd.f32 %v2523, %v2899
  %v2901 = vpop.f32.mrb[0].mxu0
  %v2902 = vpop.f32.mrb[0].mxu0
  %2903 = vdwg.mxu0
  %2904 = vmatprep.subr.bf16.mxu0 %v2738
  %2905 = vmatpush1.bf16.msra.mxu0 %v2737
  %2906 = vmatprep.subr.bf16.mxu0 %v2742
  %2907 = vmatpush1.bf16.msra.mxu0 %v2741
  %2908 = vmatprep.subr.bf16.mxu0 %v2746
  %2909 = vmatpush1.bf16.msra.mxu0 %v2745
  %2910 = vmatprep.subr.bf16.mxu0 %v2750
  %2911 = vmatpush1.bf16.msra.mxu0 %v2749
  %2912 = vmatprep.subr.bf16.mxu0 %v2754
  %2913 = vmatpush1.bf16.msra.mxu0 %v2753
  %2914 = vmatprep.subr.bf16.mxu0 %v2758
  %2915 = vmatpush1.bf16.msra.mxu0 %v2757
  %2916 = vmatprep.subr.bf16.mxu0 %v2762
  %2917 = vmatpush1.bf16.msra.mxu0 %v2761
  %2918 = vmatprep.subr.bf16.mxu0 %v2766
  %2919 = vmatpush1.bf16.msra.mxu0 %v2765
  %2920 = vmatprep.subr.bf16.mxu0 %v2770
  %2921 = vmatpush1.bf16.msra.mxu0 %v2769
  %2922 = vmatprep.subr.bf16.mxu0 %v2774
  %2923 = vmatpush1.bf16.msra.mxu0 %v2773
  %2924 = vmatprep.subr.bf16.mxu0 %v2778
  %2925 = vmatpush1.bf16.msra.mxu0 %v2777
  %2926 = vmatprep.subr.bf16.mxu0 %v2782
  %2927 = vmatpush1.bf16.msra.mxu0 %v2781
  %2928 = vmatprep.subr.bf16.mxu0 %v2786
  %2929 = vmatpush1.bf16.msra.mxu0 %v2785
  %2930 = vmatprep.subr.bf16.mxu0 %v2790
  %2931 = vmatpush1.bf16.msra.mxu0 %v2789
  %2932 = vmatprep.subr.bf16.mxu0 %v2794
  %2933 = vmatpush1.bf16.msra.mxu0 %v2793
  %2934 = vmatprep.subr.bf16.mxu0 %v2798
  %2935 = vmatpush1.bf16.msra.mxu0 %v2797
  %2936 = vmatprep.mubr.bf16.mxu0 %v2540
  %2937 = vmatmul.mubr.bf16.gmra.mrb[0].mxu0 %v2539
  %v2938 = vpop.f32.mrb[0].mxu0
  %v2939 = vadd.f32 %v2527, %v2938
  %v2940 = vpop.f32.mrb[0].mxu0
  %v2941 = vadd.f32 %v2531, %v2940
  %v2942 = vpop.f32.mrb[0].mxu0
  %v2943 = vpop.f32.mrb[0].mxu0
  %2944 = vdwg.mxu0
  %v2945 = vxor.u32 %v2898, 2147483648
  %v2946 = vmul.f32 %v2945, 1.442695
  %v2947 = vpow.pop %v2946
  %v2948 = vadd.f32 %v2947, 1.0
  %v2949 = vrcp.pop %v2948
  %v2950 = vmul.f32 1.0, %v2949
  %v2951 = vxor.u32 %v2900, 2147483648
  %v2952 = vmul.f32 %v2951, 1.442695
  %v2953 = vpow.pop %v2952
  %v2954 = vadd.f32 %v2953, 1.0
  %v2955 = vrcp.pop %v2954
  %v2956 = vmul.f32 1.0, %v2955
  %v2957 = vtanh.pop %v2939
  %v2958 = vxor.u32 %v2941, 2147483648
  %v2959 = vmul.f32 %v2958, 1.442695
  %v2960 = vpow.pop %v2959
  %v2961 = vadd.f32 %v2960, 1.0
  %v2962 = vrcp.pop %v2961
  %v2963 = vmul.f32 1.0, %v2962
  %v2964 = vld [vmem:[#allocation5] sm:$0xff]
  %v2965 = vmul.f32 %v2956, %v2964
  %v2966 = vmul.f32 %v2950, %v2957
  %v2967 = vadd.f32 %v2965, %v2966
  %v2968 = vtanh.pop %v2967
  %v2969 = vmul.f32 %v2963, %v2968
  %2970 = vst [vmem:[#allocation5] sm:$0xff] %v2967
  %2971 = vst [vmem:[#allocation6] sm:$0xff] %v2969
  %v2972 = vpack.c.bf16 %v2969, %v2969
  %2973 = vst [vmem:[#allocation3 + $0x4] sm:$0xf] %v2972
  %s2974 = scalar_lea.vmem [#allocation2], 96
  %v2975 = vld [vmem:[%s2974] sm:$0xff]
  %v2976 = vld [vmem:[%s2974 + $0x8] sm:$0xff]
  %v2977 = vld [vmem:[%s2974 + $0x10] sm:$0xff]
  %v2978 = vld [vmem:[%s2974 + $0x18] sm:$0xff]
  %v2979 = vld [vmem:[#allocation3] sm:$0xf]
  %v2980 = vld [vmem:[%s2] sm:$0xff]
  %v2981 = vld [vmem:[%s2 + $0x8] sm:$0xff]
  %v2982 = vld [vmem:[%s2 + $0x10] sm:$0xff]
  %v2983 = vld [vmem:[%s2 + $0x18] sm:$0xff]
  %v2984 = vld [vmem:[%s2 + $0x20] sm:$0xff]
  %v2985 = vld [vmem:[%s2 + $0x28] sm:$0xff]
  %v2986 = vld [vmem:[%s2 + $0x30] sm:$0xff]
  %v2987 = vld [vmem:[%s2 + $0x38] sm:$0xff]
  %v2988 = vld [vmem:[%s2 + $0x40] sm:$0xff]
  %v2989 = vld [vmem:[%s2 + $0x48] sm:$0xff]
  %v2990 = vld [vmem:[%s2 + $0x50] sm:$0xff]
  %v2991 = vld [vmem:[%s2 + $0x58] sm:$0xff]
  %v2992 = vld [vmem:[%s2 + $0x60] sm:$0xff]
  %v2993 = vld [vmem:[%s2 + $0x68] sm:$0xff]
  %v2994 = vld [vmem:[%s2 + $0x70] sm:$0xff]
  %v2995 = vld [vmem:[%s2 + $0x78] sm:$0xff]
  %v2996 = vld [vmem:[%s2 + $0x80] sm:$0xff]
  %v2997 = vld [vmem:[%s2 + $0x88] sm:$0xff]
  %v2998 = vld [vmem:[%s2 + $0x90] sm:$0xff]
  %v2999 = vld [vmem:[%s2 + $0x98] sm:$0xff]
  %v3000 = vld [vmem:[%s2 + $0xa0] sm:$0xff]
  %v3001 = vld [vmem:[%s2 + $0xa8] sm:$0xff]
  %v3002 = vld [vmem:[%s2 + $0xb0] sm:$0xff]
  %v3003 = vld [vmem:[%s2 + $0xb8] sm:$0xff]
  %v3004 = vld [vmem:[%s2 + $0xc0] sm:$0xff]
  %v3005 = vld [vmem:[%s2 + $0xc8] sm:$0xff]
  %v3006 = vld [vmem:[%s2 + $0xd0] sm:$0xff]
  %v3007 = vld [vmem:[%s2 + $0xd8] sm:$0xff]
  %v3008 = vld [vmem:[%s2 + $0xe0] sm:$0xff]
  %v3009 = vld [vmem:[%s2 + $0xe8] sm:$0xff]
  %v3010 = vld [vmem:[%s2 + $0xf0] sm:$0xff]
  %v3011 = vld [vmem:[%s2 + $0xf8] sm:$0xff]
  %v3044 = vunpack.c.l.b16 %v2980
  %v3045 = vunpack.c.h.b16 %v2980
  %v3046 = vunpack.c.l.b16 %v2981
  %v3047 = vunpack.c.h.b16 %v2981
  %v3048 = vunpack.c.l.b16 %v2982
  %v3049 = vunpack.c.h.b16 %v2982
  %v3050 = vunpack.c.l.b16 %v2983
  %v3051 = vunpack.c.h.b16 %v2983
  %v3052 = vunpack.c.l.b16 %v2984
  %v3053 = vunpack.c.h.b16 %v2984
  %v3054 = vunpack.c.l.b16 %v2985
  %v3055 = vunpack.c.h.b16 %v2985
  %v3056 = vunpack.c.l.b16 %v2986
  %v3057 = vunpack.c.h.b16 %v2986
  %v3058 = vunpack.c.l.b16 %v2987
  %v3059 = vunpack.c.h.b16 %v2987
  %v3060 = vunpack.c.l.b16 %v2988
  %v3061 = vunpack.c.h.b16 %v2988
  %v3062 = vunpack.c.l.b16 %v2989
  %v3063 = vunpack.c.h.b16 %v2989
  %v3064 = vunpack.c.l.b16 %v2990
  %v3065 = vunpack.c.h.b16 %v2990
  %v3066 = vunpack.c.l.b16 %v2991
  %v3067 = vunpack.c.h.b16 %v2991
  %v3068 = vunpack.c.l.b16 %v2992
  %v3069 = vunpack.c.h.b16 %v2992
  %v3070 = vunpack.c.l.b16 %v2993
  %v3071 = vunpack.c.h.b16 %v2993
  %v3072 = vunpack.c.l.b16 %v2994
  %v3073 = vunpack.c.h.b16 %v2994
  %v3074 = vunpack.c.l.b16 %v2995
  %v3075 = vunpack.c.h.b16 %v2995
  %v3076 = vunpack.c.l.b16 %v2996
  %v3077 = vunpack.c.h.b16 %v2996
  %v3078 = vunpack.c.l.b16 %v2997
  %v3079 = vunpack.c.h.b16 %v2997
  %v3080 = vunpack.c.l.b16 %v2998
  %v3081 = vunpack.c.h.b16 %v2998
  %v3082 = vunpack.c.l.b16 %v2999
  %v3083 = vunpack.c.h.b16 %v2999
  %v3084 = vunpack.c.l.b16 %v3000
  %v3085 = vunpack.c.h.b16 %v3000
  %v3086 = vunpack.c.l.b16 %v3001
  %v3087 = vunpack.c.h.b16 %v3001
  %v3088 = vunpack.c.l.b16 %v3002
  %v3089 = vunpack.c.h.b16 %v3002
  %v3090 = vunpack.c.l.b16 %v3003
  %v3091 = vunpack.c.h.b16 %v3003
  %v3092 = vunpack.c.l.b16 %v3004
  %v3093 = vunpack.c.h.b16 %v3004
  %v3094 = vunpack.c.l.b16 %v3005
  %v3095 = vunpack.c.h.b16 %v3005
  %v3096 = vunpack.c.l.b16 %v3006
  %v3097 = vunpack.c.h.b16 %v3006
  %v3098 = vunpack.c.l.b16 %v3007
  %v3099 = vunpack.c.h.b16 %v3007
  %v3100 = vunpack.c.l.b16 %v3008
  %v3101 = vunpack.c.h.b16 %v3008
  %v3102 = vunpack.c.l.b16 %v3009
  %v3103 = vunpack.c.h.b16 %v3009
  %v3104 = vunpack.c.l.b16 %v3010
  %v3105 = vunpack.c.h.b16 %v3010
  %v3106 = vunpack.c.l.b16 %v3011
  %v3107 = vunpack.c.h.b16 %v3011
  %v3108 = vpack.c.b16 %v3048, %v3044
  %v3109 = vpack.c.b16 %v3049, %v3045
  %v3110 = vpack.c.b16 %v3050, %v3046
  %v3111 = vpack.c.b16 %v3051, %v3047
  %v3112 = vpack.c.b16 %v3056, %v3052
  %v3113 = vpack.c.b16 %v3057, %v3053
  %v3114 = vpack.c.b16 %v3058, %v3054
  %v3115 = vpack.c.b16 %v3059, %v3055
  %v3116 = vpack.c.b16 %v3064, %v3060
  %v3117 = vpack.c.b16 %v3065, %v3061
  %v3118 = vpack.c.b16 %v3066, %v3062
  %v3119 = vpack.c.b16 %v3067, %v3063
  %v3120 = vpack.c.b16 %v3072, %v3068
  %v3121 = vpack.c.b16 %v3073, %v3069
  %v3122 = vpack.c.b16 %v3074, %v3070
  %v3123 = vpack.c.b16 %v3075, %v3071
  %v3124 = vpack.c.b16 %v3080, %v3076
  %v3125 = vpack.c.b16 %v3081, %v3077
  %v3126 = vpack.c.b16 %v3082, %v3078
  %v3127 = vpack.c.b16 %v3083, %v3079
  %v3128 = vpack.c.b16 %v3088, %v3084
  %v3129 = vpack.c.b16 %v3089, %v3085
  %v3130 = vpack.c.b16 %v3090, %v3086
  %v3131 = vpack.c.b16 %v3091, %v3087
  %v3132 = vpack.c.b16 %v3096, %v3092
  %v3133 = vpack.c.b16 %v3097, %v3093
  %v3134 = vpack.c.b16 %v3098, %v3094
  %v3135 = vpack.c.b16 %v3099, %v3095
  %v3136 = vpack.c.b16 %v3104, %v3100
  %v3137 = vpack.c.b16 %v3105, %v3101
  %v3138 = vpack.c.b16 %v3106, %v3102
  %v3139 = vpack.c.b16 %v3107, %v3103
  %3172 = vmatprep.subr.bf16.mxu0 %v3109
  %3173 = vmatpush1.bf16.msra.mxu0 %v3108
  %3174 = vmatprep.subr.bf16.mxu0 %v3113
  %3175 = vmatpush1.bf16.msra.mxu0 %v3112
  %3176 = vmatprep.subr.bf16.mxu0 %v3117
  %3177 = vmatpush1.bf16.msra.mxu0 %v3116
  %3178 = vmatprep.subr.bf16.mxu0 %v3121
  %3179 = vmatpush1.bf16.msra.mxu0 %v3120
  %3180 = vmatprep.subr.bf16.mxu0 %v3125
  %3181 = vmatpush1.bf16.msra.mxu0 %v3124
  %3182 = vmatprep.subr.bf16.mxu0 %v3129
  %3183 = vmatpush1.bf16.msra.mxu0 %v3128
  %3184 = vmatprep.subr.bf16.mxu0 %v3133
  %3185 = vmatpush1.bf16.msra.mxu0 %v3132
  %3186 = vmatprep.subr.bf16.mxu0 %v3137
  %3187 = vmatpush1.bf16.msra.mxu0 %v3136
  %3188 = vmatprep.subr.bf16.mxu0 0
  %3189 = vmatpush1.bf16.msra.mxu0 0
  %3190 = vmatprep.subr.bf16.mxu0 0
  %3191 = vmatpush1.bf16.msra.mxu0 0
  %3192 = vmatprep.subr.bf16.mxu0 0
  %3193 = vmatpush1.bf16.msra.mxu0 0
  %3194 = vmatprep.subr.bf16.mxu0 0
  %3195 = vmatpush1.bf16.msra.mxu0 0
  %3196 = vmatprep.subr.bf16.mxu0 0
  %3197 = vmatpush1.bf16.msra.mxu0 0
  %3198 = vmatprep.subr.bf16.mxu0 0
  %3199 = vmatpush1.bf16.msra.mxu0 0
  %3200 = vmatprep.subr.bf16.mxu0 0
  %3201 = vmatpush1.bf16.msra.mxu0 0
  %3202 = vmatprep.subr.bf16.mxu0 0
  %3203 = vmatpush1.bf16.msra.mxu0 0
  %3204 = vmatprep.mubr.bf16.mxu0 0
  %3205 = vmatmul.mubr.bf16.gmra.mrb[0].mxu0 %v2979
  %v3206 = vpop.f32.mrb[0].mxu0
  %v3207 = vadd.f32 0.0, %v3206
  %v3208 = vpop.f32.mrb[0].mxu0
  %v3209 = vadd.f32 0.0, %v3208
  %v3210 = vpop.f32.mrb[0].mxu0
  %v3211 = vpop.f32.mrb[0].mxu0
  %3212 = vdwg.mxu0
  %3213 = vmatprep.subr.bf16.mxu0 %v3111
  %3214 = vmatpush1.bf16.msra.mxu0 %v3110
  %3215 = vmatprep.subr.bf16.mxu0 %v3115
  %3216 = vmatpush1.bf16.msra.mxu0 %v3114
  %3217 = vmatprep.subr.bf16.mxu0 %v3119
  %3218 = vmatpush1.bf16.msra.mxu0 %v3118
  %3219 = vmatprep.subr.bf16.mxu0 %v3123
  %3220 = vmatpush1.bf16.msra.mxu0 %v3122
  %3221 = vmatprep.subr.bf16.mxu0 %v3127
  %3222 = vmatpush1.bf16.msra.mxu0 %v3126
  %3223 = vmatprep.subr.bf16.mxu0 %v3131
  %3224 = vmatpush1.bf16.msra.mxu0 %v3130
  %3225 = vmatprep.subr.bf16.mxu0 %v3135
  %3226 = vmatpush1.bf16.msra.mxu0 %v3134
  %3227 = vmatprep.subr.bf16.mxu0 %v3139
  %3228 = vmatpush1.bf16.msra.mxu0 %v3138
  %3229 = vmatprep.subr.bf16.mxu0 0
  %3230 = vmatpush1.bf16.msra.mxu0 0
  %3231 = vmatprep.subr.bf16.mxu0 0
  %3232 = vmatpush1.bf16.msra.mxu0 0
  %3233 = vmatprep.subr.bf16.mxu0 0
  %3234 = vmatpush1.bf16.msra.mxu0 0
  %3235 = vmatprep.subr.bf16.mxu0 0
  %3236 = vmatpush1.bf16.msra.mxu0 0
  %3237 = vmatprep.subr.bf16.mxu0 0
  %3238 = vmatpush1.bf16.msra.mxu0 0
  %3239 = vmatprep.subr.bf16.mxu0 0
  %3240 = vmatpush1.bf16.msra.mxu0 0
  %3241 = vmatprep.subr.bf16.mxu0 0
  %3242 = vmatpush1.bf16.msra.mxu0 0
  %3243 = vmatprep.subr.bf16.mxu0 0
  %3244 = vmatpush1.bf16.msra.mxu0 0
  %3245 = vmatprep.mubr.bf16.mxu0 0
  %3246 = vmatmul.mubr.bf16.gmra.mrb[0].mxu0 %v2979
  %v3247 = vpop.f32.mrb[0].mxu0
  %v3248 = vadd.f32 0.0, %v3247
  %v3249 = vpop.f32.mrb[0].mxu0
  %v3250 = vadd.f32 0.0, %v3249
  %v3251 = vpop.f32.mrb[0].mxu0
  %v3252 = vpop.f32.mrb[0].mxu0
  %3253 = vdwg.mxu0
  %v3254 = vadd.f32 %v2975, %v3207
  %v3255 = vadd.f32 %v2976, %v3209
  %v3256 = vadd.f32 %v2977, %v3248
  %v3257 = vadd.f32 %v2978, %v3250
  %v3258 = vxor.u32 %v3254, 2147483648
  %v3259 = vmul.f32 %v3258, 1.442695
  %v3260 = vpow.pop %v3259
  %v3261 = vadd.f32 %v3260, 1.0
  %v3262 = vrcp.pop %v3261
  %v3263 = vmul.f32 1.0, %v3262
  %v3264 = vxor.u32 %v3255, 2147483648
  %v3265 = vmul.f32 %v3264, 1.442695
  %v3266 = vpow.pop %v3265
  %v3267 = vadd.f32 %v3266, 1.0
  %v3268 = vrcp.pop %v3267
  %v3269 = vmul.f32 1.0, %v3268
  %v3270 = vtanh.pop %v3256
  %v3271 = vxor.u32 %v3257, 2147483648
  %v3272 = vmul.f32 %v3271, 1.442695
  %v3273 = vpow.pop %v3272
  %v3274 = vadd.f32 %v3273, 1.0
  %v3275 = vrcp.pop %v3274
  %v3276 = vmul.f32 1.0, %v3275
  %v3277 = vld [vmem:[#allocation4] sm:$0xff]
  %v3278 = vmul.f32 %v3269, %v3277
  %v3279 = vmul.f32 %v3263, %v3270
  %v3280 = vadd.f32 %v3278, %v3279
  %v3281 = vtanh.pop %v3280
  %v3282 = vmul.f32 %v3276, %v3281
  %3283 = vst [vmem:[#allocation4] sm:$0xff] %v3280
  %v3284 = vpack.c.bf16 %v3282, %v3282
  %3285 = vst [vmem:[#allocation3] sm:$0xf] %v3284
  %v3286 = vld [vmem:[#allocation3] sm:$0xff]
  %v3287 = vld [vmem:[%s4] sm:$0xff]
  %v3288 = vld [vmem:[%s4 + $0x8] sm:$0xff]
  %v3289 = vld [vmem:[%s4 + $0x10] sm:$0xff]
  %v3290 = vld [vmem:[%s4 + $0x18] sm:$0xff]
  %v3291 = vld [vmem:[%s4 + $0x20] sm:$0xff]
  %v3292 = vld [vmem:[%s4 + $0x28] sm:$0xff]
  %v3293 = vld [vmem:[%s4 + $0x30] sm:$0xff]
  %v3294 = vld [vmem:[%s4 + $0x38] sm:$0xff]
  %v3295 = vld [vmem:[%s4 + $0x40] sm:$0xff]
  %v3296 = vld [vmem:[%s4 + $0x48] sm:$0xff]
  %v3297 = vld [vmem:[%s4 + $0x50] sm:$0xff]
  %v3298 = vld [vmem:[%s4 + $0x58] sm:$0xff]
  %v3299 = vld [vmem:[%s4 + $0x60] sm:$0xff]
  %v3300 = vld [vmem:[%s4 + $0x68] sm:$0xff]
  %v3301 = vld [vmem:[%s4 + $0x70] sm:$0xff]
  %v3302 = vld [vmem:[%s4 + $0x78] sm:$0xff]
  %v3303 = vld [vmem:[%s4 + $0x80] sm:$0xff]
  %v3304 = vld [vmem:[%s4 + $0x88] sm:$0xff]
  %v3305 = vld [vmem:[%s4 + $0x90] sm:$0xff]
  %v3306 = vld [vmem:[%s4 + $0x98] sm:$0xff]
  %v3307 = vld [vmem:[%s4 + $0xa0] sm:$0xff]
  %v3308 = vld [vmem:[%s4 + $0xa8] sm:$0xff]
  %v3309 = vld [vmem:[%s4 + $0xb0] sm:$0xff]
  %v3310 = vld [vmem:[%s4 + $0xb8] sm:$0xff]
  %v3311 = vld [vmem:[%s4 + $0xc0] sm:$0xff]
  %v3312 = vld [vmem:[%s4 + $0xc8] sm:$0xff]
  %v3313 = vld [vmem:[%s4 + $0xd0] sm:$0xff]
  %v3314 = vld [vmem:[%s4 + $0xd8] sm:$0xff]
  %v3315 = vld [vmem:[%s4 + $0xe0] sm:$0xff]
  %v3316 = vld [vmem:[%s4 + $0xe8] sm:$0xff]
  %v3317 = vld [vmem:[%s4 + $0xf0] sm:$0xff]
  %v3318 = vld [vmem:[%s4 + $0xf8] sm:$0xff]
  %v3319 = vld [vmem:[%s4 + $0x100] sm:$0xff]
  %v3320 = vld [vmem:[%s4 + $0x108] sm:$0xff]
  %v3321 = vld [vmem:[%s4 + $0x110] sm:$0xff]
  %v3322 = vld [vmem:[%s4 + $0x118] sm:$0xff]
  %v3323 = vld [vmem:[%s4 + $0x120] sm:$0xff]
  %v3324 = vld [vmem:[%s4 + $0x128] sm:$0xff]
  %v3325 = vld [vmem:[%s4 + $0x130] sm:$0xff]
  %v3326 = vld [vmem:[%s4 + $0x138] sm:$0xff]
  %v3327 = vld [vmem:[%s4 + $0x140] sm:$0xff]
  %v3328 = vld [vmem:[%s4 + $0x148] sm:$0xff]
  %v3329 = vld [vmem:[%s4 + $0x150] sm:$0xff]
  %v3330 = vld [vmem:[%s4 + $0x158] sm:$0xff]
  %v3331 = vld [vmem:[%s4 + $0x160] sm:$0xff]
  %v3332 = vld [vmem:[%s4 + $0x168] sm:$0xff]
  %v3333 = vld [vmem:[%s4 + $0x170] sm:$0xff]
  %v3334 = vld [vmem:[%s4 + $0x178] sm:$0xff]
  %v3335 = vld [vmem:[%s4 + $0x180] sm:$0xff]
  %v3336 = vld [vmem:[%s4 + $0x188] sm:$0xff]
  %v3337 = vld [vmem:[%s4 + $0x190] sm:$0xff]
  %v3338 = vld [vmem:[%s4 + $0x198] sm:$0xff]
  %v3339 = vld [vmem:[%s4 + $0x1a0] sm:$0xff]
  %v3340 = vld [vmem:[%s4 + $0x1a8] sm:$0xff]
  %v3341 = vld [vmem:[%s4 + $0x1b0] sm:$0xff]
  %v3342 = vld [vmem:[%s4 + $0x1b8] sm:$0xff]
  %v3343 = vld [vmem:[%s4 + $0x1c0] sm:$0xff]
  %v3344 = vld [vmem:[%s4 + $0x1c8] sm:$0xff]
  %v3345 = vld [vmem:[%s4 + $0x1d0] sm:$0xff]
  %v3346 = vld [vmem:[%s4 + $0x1d8] sm:$0xff]
  %v3347 = vld [vmem:[%s4 + $0x1e0] sm:$0xff]
  %v3348 = vld [vmem:[%s4 + $0x1e8] sm:$0xff]
  %v3349 = vld [vmem:[%s4 + $0x1f0] sm:$0xff]
  %v3350 = vld [vmem:[%s4 + $0x1f8] sm:$0xff]
  %v3351 = vld [vmem:[%s5] sm:$0xf]
  %v3353 = vlaneseq
  %v3354 = vshrl.u32 %v3353, 7
  %v3355 = vsub.s32 0, %v3354
  %v3356 = vrot.slane %v3351, %v3355
  %v3357 = vlaneseq
  %v3358 = vshrl.u32 %v3357, 7
  %v3359 = vsub.s32 1, %v3358
  %v3360 = vrot.slane %v3351, %v3359
  %v3361 = vlaneseq
  %v3362 = vshrl.u32 %v3361, 7
  %v3363 = vsub.s32 2, %v3362
  %v3364 = vrot.slane %v3351, %v3363
  %v3365 = vlaneseq
  %v3366 = vshrl.u32 %v3365, 7
  %v3367 = vsub.s32 3, %v3366
  %v3368 = vrot.slane %v3351, %v3367
  %v3374 = vunpack.c.l.b16 %v3286
  %v3375 = vunpack.c.h.b16 %v3286
  %v3376 = vpack.c.b16 %v3374, %v3374
  %v3377 = vpack.c.b16 %v3375, %v3375
  %v3444 = vunpack.c.l.b16 %v3287
  %v3445 = vunpack.c.h.b16 %v3287
  %v3446 = vunpack.c.l.b16 %v3288
  %v3447 = vunpack.c.h.b16 %v3288
  %v3448 = vunpack.c.l.b16 %v3289
  %v3449 = vunpack.c.h.b16 %v3289
  %v3450 = vunpack.c.l.b16 %v3290
  %v3451 = vunpack.c.h.b16 %v3290
  %v3452 = vunpack.c.l.b16 %v3291
  %v3453 = vunpack.c.h.b16 %v3291
  %v3454 = vunpack.c.l.b16 %v3292
  %v3455 = vunpack.c.h.b16 %v3292
  %v3456 = vunpack.c.l.b16 %v3293
  %v3457 = vunpack.c.h.b16 %v3293
  %v3458 = vunpack.c.l.b16 %v3294
  %v3459 = vunpack.c.h.b16 %v3294
  %v3460 = vunpack.c.l.b16 %v3295
  %v3461 = vunpack.c.h.b16 %v3295
  %v3462 = vunpack.c.l.b16 %v3296
  %v3463 = vunpack.c.h.b16 %v3296
  %v3464 = vunpack.c.l.b16 %v3297
  %v3465 = vunpack.c.h.b16 %v3297
  %v3466 = vunpack.c.l.b16 %v3298
  %v3467 = vunpack.c.h.b16 %v3298
  %v3468 = vunpack.c.l.b16 %v3299
  %v3469 = vunpack.c.h.b16 %v3299
  %v3470 = vunpack.c.l.b16 %v3300
  %v3471 = vunpack.c.h.b16 %v3300
  %v3472 = vunpack.c.l.b16 %v3301
  %v3473 = vunpack.c.h.b16 %v3301
  %v3474 = vunpack.c.l.b16 %v3302
  %v3475 = vunpack.c.h.b16 %v3302
  %v3476 = vunpack.c.l.b16 %v3303
  %v3477 = vunpack.c.h.b16 %v3303
  %v3478 = vunpack.c.l.b16 %v3304
  %v3479 = vunpack.c.h.b16 %v3304
  %v3480 = vunpack.c.l.b16 %v3305
  %v3481 = vunpack.c.h.b16 %v3305
  %v3482 = vunpack.c.l.b16 %v3306
  %v3483 = vunpack.c.h.b16 %v3306
  %v3484 = vunpack.c.l.b16 %v3307
  %v3485 = vunpack.c.h.b16 %v3307
  %v3486 = vunpack.c.l.b16 %v3308
  %v3487 = vunpack.c.h.b16 %v3308
  %v3488 = vunpack.c.l.b16 %v3309
  %v3489 = vunpack.c.h.b16 %v3309
  %v3490 = vunpack.c.l.b16 %v3310
  %v3491 = vunpack.c.h.b16 %v3310
  %v3492 = vunpack.c.l.b16 %v3311
  %v3493 = vunpack.c.h.b16 %v3311
  %v3494 = vunpack.c.l.b16 %v3312
  %v3495 = vunpack.c.h.b16 %v3312
  %v3496 = vunpack.c.l.b16 %v3313
  %v3497 = vunpack.c.h.b16 %v3313
  %v3498 = vunpack.c.l.b16 %v3314
  %v3499 = vunpack.c.h.b16 %v3314
  %v3500 = vunpack.c.l.b16 %v3315
  %v3501 = vunpack.c.h.b16 %v3315
  %v3502 = vunpack.c.l.b16 %v3316
  %v3503 = vunpack.c.h.b16 %v3316
  %v3504 = vunpack.c.l.b16 %v3317
  %v3505 = vunpack.c.h.b16 %v3317
  %v3506 = vunpack.c.l.b16 %v3318
  %v3507 = vunpack.c.h.b16 %v3318
  %v3508 = vunpack.c.l.b16 %v3319
  %v3509 = vunpack.c.h.b16 %v3319
  %v3510 = vunpack.c.l.b16 %v3320
  %v3511 = vunpack.c.h.b16 %v3320
  %v3512 = vunpack.c.l.b16 %v3321
  %v3513 = vunpack.c.h.b16 %v3321
  %v3514 = vunpack.c.l.b16 %v3322
  %v3515 = vunpack.c.h.b16 %v3322
  %v3516 = vunpack.c.l.b16 %v3323
  %v3517 = vunpack.c.h.b16 %v3323
  %v3518 = vunpack.c.l.b16 %v3324
  %v3519 = vunpack.c.h.b16 %v3324
  %v3520 = vunpack.c.l.b16 %v3325
  %v3521 = vunpack.c.h.b16 %v3325
  %v3522 = vunpack.c.l.b16 %v3326
  %v3523 = vunpack.c.h.b16 %v3326
  %v3524 = vunpack.c.l.b16 %v3327
  %v3525 = vunpack.c.h.b16 %v3327
  %v3526 = vunpack.c.l.b16 %v3328
  %v3527 = vunpack.c.h.b16 %v3328
  %v3528 = vunpack.c.l.b16 %v3329
  %v3529 = vunpack.c.h.b16 %v3329
  %v3530 = vunpack.c.l.b16 %v3330
  %v3531 = vunpack.c.h.b16 %v3330
  %v3532 = vunpack.c.l.b16 %v3331
  %v3533 = vunpack.c.h.b16 %v3331
  %v3534 = vunpack.c.l.b16 %v3332
  %v3535 = vunpack.c.h.b16 %v3332
  %v3536 = vunpack.c.l.b16 %v3333
  %v3537 = vunpack.c.h.b16 %v3333
  %v3538 = vunpack.c.l.b16 %v3334
  %v3539 = vunpack.c.h.b16 %v3334
  %v3540 = vunpack.c.l.b16 %v3335
  %v3541 = vunpack.c.h.b16 %v3335
  %v3542 = vunpack.c.l.b16 %v3336
  %v3543 = vunpack.c.h.b16 %v3336
  %v3544 = vunpack.c.l.b16 %v3337
  %v3545 = vunpack.c.h.b16 %v3337
  %v3546 = vunpack.c.l.b16 %v3338
  %v3547 = vunpack.c.h.b16 %v3338
  %v3548 = vunpack.c.l.b16 %v3339
  %v3549 = vunpack.c.h.b16 %v3339
  %v3550 = vunpack.c.l.b16 %v3340
  %v3551 = vunpack.c.h.b16 %v3340
  %v3552 = vunpack.c.l.b16 %v3341
  %v3553 = vunpack.c.h.b16 %v3341
  %v3554 = vunpack.c.l.b16 %v3342
  %v3555 = vunpack.c.h.b16 %v3342
  %v3556 = vunpack.c.l.b16 %v3343
  %v3557 = vunpack.c.h.b16 %v3343
  %v3558 = vunpack.c.l.b16 %v3344
  %v3559 = vunpack.c.h.b16 %v3344
  %v3560 = vunpack.c.l.b16 %v3345
  %v3561 = vunpack.c.h.b16 %v3345
  %v3562 = vunpack.c.l.b16 %v3346
  %v3563 = vunpack.c.h.b16 %v3346
  %v3564 = vunpack.c.l.b16 %v3347
  %v3565 = vunpack.c.h.b16 %v3347
  %v3566 = vunpack.c.l.b16 %v3348
  %v3567 = vunpack.c.h.b16 %v3348
  %v3568 = vunpack.c.l.b16 %v3349
  %v3569 = vunpack.c.h.b16 %v3349
  %v3570 = vunpack.c.l.b16 %v3350
  %v3571 = vunpack.c.h.b16 %v3350
  %v3572 = vpack.c.b16 %v3448, %v3444
  %v3573 = vpack.c.b16 %v3449, %v3445
  %v3574 = vpack.c.b16 %v3450, %v3446
  %v3575 = vpack.c.b16 %v3451, %v3447
  %v3576 = vpack.c.b16 %v3456, %v3452
  %v3577 = vpack.c.b16 %v3457, %v3453
  %v3578 = vpack.c.b16 %v3458, %v3454
  %v3579 = vpack.c.b16 %v3459, %v3455
  %v3580 = vpack.c.b16 %v3464, %v3460
  %v3581 = vpack.c.b16 %v3465, %v3461
  %v3582 = vpack.c.b16 %v3466, %v3462
  %v3583 = vpack.c.b16 %v3467, %v3463
  %v3584 = vpack.c.b16 %v3472, %v3468
  %v3585 = vpack.c.b16 %v3473, %v3469
  %v3586 = vpack.c.b16 %v3474, %v3470
  %v3587 = vpack.c.b16 %v3475, %v3471
  %v3588 = vpack.c.b16 %v3480, %v3476
  %v3589 = vpack.c.b16 %v3481, %v3477
  %v3590 = vpack.c.b16 %v3482, %v3478
  %v3591 = vpack.c.b16 %v3483, %v3479
  %v3592 = vpack.c.b16 %v3488, %v3484
  %v3593 = vpack.c.b16 %v3489, %v3485
  %v3594 = vpack.c.b16 %v3490, %v3486
  %v3595 = vpack.c.b16 %v3491, %v3487
  %v3596 = vpack.c.b16 %v3496, %v3492
  %v3597 = vpack.c.b16 %v3497, %v3493
  %v3598 = vpack.c.b16 %v3498, %v3494
  %v3599 = vpack.c.b16 %v3499, %v3495
  %v3600 = vpack.c.b16 %v3504, %v3500
  %v3601 = vpack.c.b16 %v3505, %v3501
  %v3602 = vpack.c.b16 %v3506, %v3502
  %v3603 = vpack.c.b16 %v3507, %v3503
  %v3604 = vpack.c.b16 %v3512, %v3508
  %v3605 = vpack.c.b16 %v3513, %v3509
  %v3606 = vpack.c.b16 %v3514, %v3510
  %v3607 = vpack.c.b16 %v3515, %v3511
  %v3608 = vpack.c.b16 %v3520, %v3516
  %v3609 = vpack.c.b16 %v3521, %v3517
  %v3610 = vpack.c.b16 %v3522, %v3518
  %v3611 = vpack.c.b16 %v3523, %v3519
  %v3612 = vpack.c.b16 %v3528, %v3524
  %v3613 = vpack.c.b16 %v3529, %v3525
  %v3614 = vpack.c.b16 %v3530, %v3526
  %v3615 = vpack.c.b16 %v3531, %v3527
  %v3616 = vpack.c.b16 %v3536, %v3532
  %v3617 = vpack.c.b16 %v3537, %v3533
  %v3618 = vpack.c.b16 %v3538, %v3534
  %v3619 = vpack.c.b16 %v3539, %v3535
  %v3620 = vpack.c.b16 %v3544, %v3540
  %v3621 = vpack.c.b16 %v3545, %v3541
  %v3622 = vpack.c.b16 %v3546, %v3542
  %v3623 = vpack.c.b16 %v3547, %v3543
  %v3624 = vpack.c.b16 %v3552, %v3548
  %v3625 = vpack.c.b16 %v3553, %v3549
  %v3626 = vpack.c.b16 %v3554, %v3550
  %v3627 = vpack.c.b16 %v3555, %v3551
  %v3628 = vpack.c.b16 %v3560, %v3556
  %v3629 = vpack.c.b16 %v3561, %v3557
  %v3630 = vpack.c.b16 %v3562, %v3558
  %v3631 = vpack.c.b16 %v3563, %v3559
  %v3632 = vpack.c.b16 %v3568, %v3564
  %v3633 = vpack.c.b16 %v3569, %v3565
  %v3634 = vpack.c.b16 %v3570, %v3566
  %v3635 = vpack.c.b16 %v3571, %v3567
  %3700 = vmatprep.subr.bf16.mxu0 %v3573
  %3701 = vmatpush1.bf16.msra.mxu0 %v3572
  %3702 = vmatprep.subr.bf16.mxu0 %v3577
  %3703 = vmatpush1.bf16.msra.mxu0 %v3576
  %3704 = vmatprep.subr.bf16.mxu0 %v3581
  %3705 = vmatpush1.bf16.msra.mxu0 %v3580
  %3706 = vmatprep.subr.bf16.mxu0 %v3585
  %3707 = vmatpush1.bf16.msra.mxu0 %v3584
  %3708 = vmatprep.subr.bf16.mxu0 %v3589
  %3709 = vmatpush1.bf16.msra.mxu0 %v3588
  %3710 = vmatprep.subr.bf16.mxu0 %v3593
  %3711 = vmatpush1.bf16.msra.mxu0 %v3592
  %3712 = vmatprep.subr.bf16.mxu0 %v3597
  %3713 = vmatpush1.bf16.msra.mxu0 %v3596
  %3714 = vmatprep.subr.bf16.mxu0 %v3601
  %3715 = vmatpush1.bf16.msra.mxu0 %v3600
  %3716 = vmatprep.subr.bf16.mxu0 %v3605
  %3717 = vmatpush1.bf16.msra.mxu0 %v3604
  %3718 = vmatprep.subr.bf16.mxu0 %v3609
  %3719 = vmatpush1.bf16.msra.mxu0 %v3608
  %3720 = vmatprep.subr.bf16.mxu0 %v3613
  %3721 = vmatpush1.bf16.msra.mxu0 %v3612
  %3722 = vmatprep.subr.bf16.mxu0 %v3617
  %3723 = vmatpush1.bf16.msra.mxu0 %v3616
  %3724 = vmatprep.subr.bf16.mxu0 %v3621
  %3725 = vmatpush1.bf16.msra.mxu0 %v3620
  %3726 = vmatprep.subr.bf16.mxu0 %v3625
  %3727 = vmatpush1.bf16.msra.mxu0 %v3624
  %3728 = vmatprep.subr.bf16.mxu0 %v3629
  %3729 = vmatpush1.bf16.msra.mxu0 %v3628
  %3730 = vmatprep.subr.bf16.mxu0 %v3633
  %3731 = vmatpush1.bf16.msra.mxu0 %v3632
  %3732 = vmatprep.mubr.bf16.mxu0 %v3377
  %3733 = vmatmul.mubr.bf16.gmra.mrb[0].mxu0 %v3376
  %v3734 = vpop.f32.mrb[0].mxu0
  %v3735 = vadd.f32 %v3356, %v3734
  %v3736 = vpop.f32.mrb[0].mxu0
  %v3737 = vadd.f32 %v3360, %v3736
  %v3738 = vpop.f32.mrb[0].mxu0
  %v3739 = vpop.f32.mrb[0].mxu0
  %3740 = vdwg.mxu0
  %3741 = vmatprep.subr.bf16.mxu0 %v3575
  %3742 = vmatpush1.bf16.msra.mxu0 %v3574
  %3743 = vmatprep.subr.bf16.mxu0 %v3579
  %3744 = vmatpush1.bf16.msra.mxu0 %v3578
  %3745 = vmatprep.subr.bf16.mxu0 %v3583
  %3746 = vmatpush1.bf16.msra.mxu0 %v3582
  %3747 = vmatprep.subr.bf16.mxu0 %v3587
  %3748 = vmatpush1.bf16.msra.mxu0 %v3586
  %3749 = vmatprep.subr.bf16.mxu0 %v3591
  %3750 = vmatpush1.bf16.msra.mxu0 %v3590
  %3751 = vmatprep.subr.bf16.mxu0 %v3595
  %3752 = vmatpush1.bf16.msra.mxu0 %v3594
  %3753 = vmatprep.subr.bf16.mxu0 %v3599
  %3754 = vmatpush1.bf16.msra.mxu0 %v3598
  %3755 = vmatprep.subr.bf16.mxu0 %v3603
  %3756 = vmatpush1.bf16.msra.mxu0 %v3602
  %3757 = vmatprep.subr.bf16.mxu0 %v3607
  %3758 = vmatpush1.bf16.msra.mxu0 %v3606
  %3759 = vmatprep.subr.bf16.mxu0 %v3611
  %3760 = vmatpush1.bf16.msra.mxu0 %v3610
  %3761 = vmatprep.subr.bf16.mxu0 %v3615
  %3762 = vmatpush1.bf16.msra.mxu0 %v3614
  %3763 = vmatprep.subr.bf16.mxu0 %v3619
  %3764 = vmatpush1.bf16.msra.mxu0 %v3618
  %3765 = vmatprep.subr.bf16.mxu0 %v3623
  %3766 = vmatpush1.bf16.msra.mxu0 %v3622
  %3767 = vmatprep.subr.bf16.mxu0 %v3627
  %3768 = vmatpush1.bf16.msra.mxu0 %v3626
  %3769 = vmatprep.subr.bf16.mxu0 %v3631
  %3770 = vmatpush1.bf16.msra.mxu0 %v3630
  %3771 = vmatprep.subr.bf16.mxu0 %v3635
  %3772 = vmatpush1.bf16.msra.mxu0 %v3634
  %3773 = vmatprep.mubr.bf16.mxu0 %v3377
  %3774 = vmatmul.mubr.bf16.gmra.mrb[0].mxu0 %v3376
  %v3775 = vpop.f32.mrb[0].mxu0
  %v3776 = vadd.f32 %v3364, %v3775
  %v3777 = vpop.f32.mrb[0].mxu0
  %v3778 = vadd.f32 %v3368, %v3777
  %v3779 = vpop.f32.mrb[0].mxu0
  %v3780 = vpop.f32.mrb[0].mxu0
  %3781 = vdwg.mxu0
  %v3782 = vxor.u32 %v3735, 2147483648
  %v3783 = vmul.f32 %v3782, 1.442695
  %v3784 = vpow.pop %v3783
  %v3785 = vadd.f32 %v3784, 1.0
  %v3786 = vrcp.pop %v3785
  %v3787 = vmul.f32 1.0, %v3786
  %v3788 = vxor.u32 %v3737, 2147483648
  %v3789 = vmul.f32 %v3788, 1.442695
  %v3790 = vpow.pop %v3789
  %v3791 = vadd.f32 %v3790, 1.0
  %v3792 = vrcp.pop %v3791
  %v3793 = vmul.f32 1.0, %v3792
  %v3794 = vtanh.pop %v3776
  %v3795 = vxor.u32 %v3778, 2147483648
  %v3796 = vmul.f32 %v3795, 1.442695
  %v3797 = vpow.pop %v3796
  %v3798 = vadd.f32 %v3797, 1.0
  %v3799 = vrcp.pop %v3798
  %v3800 = vmul.f32 1.0, %v3799
  %v3801 = vld [vmem:[#allocation5] sm:$0xff]
  %v3802 = vmul.f32 %v3793, %v3801
  %v3803 = vmul.f32 %v3787, %v3794
  %v3804 = vadd.f32 %v3802, %v3803
  %v3805 = vtanh.pop %v3804
  %v3806 = vmul.f32 %v3800, %v3805
  %3807 = vst [vmem:[#allocation5] sm:$0xff] %v3804
  %3808 = vst [vmem:[#allocation6] sm:$0xff] %v3806
  %v3809 = vpack.c.bf16 %v3806, %v3806
  %3810 = vst [vmem:[#allocation3 + $0x4] sm:$0xf] %v3809
  %s3811 = scalar_lea.vmem [#allocation2], 128
  %v3812 = vld [vmem:[%s3811] sm:$0xff]
  %v3813 = vld [vmem:[%s3811 + $0x8] sm:$0xff]
  %v3814 = vld [vmem:[%s3811 + $0x10] sm:$0xff]
  %v3815 = vld [vmem:[%s3811 + $0x18] sm:$0xff]
  %v3816 = vld [vmem:[#allocation3] sm:$0xf]
  %v3817 = vld [vmem:[%s2] sm:$0xff]
  %v3818 = vld [vmem:[%s2 + $0x8] sm:$0xff]
  %v3819 = vld [vmem:[%s2 + $0x10] sm:$0xff]
  %v3820 = vld [vmem:[%s2 + $0x18] sm:$0xff]
  %v3821 = vld [vmem:[%s2 + $0x20] sm:$0xff]
  %v3822 = vld [vmem:[%s2 + $0x28] sm:$0xff]
  %v3823 = vld [vmem:[%s2 + $0x30] sm:$0xff]
  %v3824 = vld [vmem:[%s2 + $0x38] sm:$0xff]
  %v3825 = vld [vmem:[%s2 + $0x40] sm:$0xff]
  %v3826 = vld [vmem:[%s2 + $0x48] sm:$0xff]
  %v3827 = vld [vmem:[%s2 + $0x50] sm:$0xff]
  %v3828 = vld [vmem:[%s2 + $0x58] sm:$0xff]
  %v3829 = vld [vmem:[%s2 + $0x60] sm:$0xff]
  %v3830 = vld [vmem:[%s2 + $0x68] sm:$0xff]
  %v3831 = vld [vmem:[%s2 + $0x70] sm:$0xff]
  %v3832 = vld [vmem:[%s2 + $0x78] sm:$0xff]
  %v3833 = vld [vmem:[%s2 + $0x80] sm:$0xff]
  %v3834 = vld [vmem:[%s2 + $0x88] sm:$0xff]
  %v3835 = vld [vmem:[%s2 + $0x90] sm:$0xff]
  %v3836 = vld [vmem:[%s2 + $0x98] sm:$0xff]
  %v3837 = vld [vmem:[%s2 + $0xa0] sm:$0xff]
  %v3838 = vld [vmem:[%s2 + $0xa8] sm:$0xff]
  %v3839 = vld [vmem:[%s2 + $0xb0] sm:$0xff]
  %v3840 = vld [vmem:[%s2 + $0xb8] sm:$0xff]
  %v3841 = vld [vmem:[%s2 + $0xc0] sm:$0xff]
  %v3842 = vld [vmem:[%s2 + $0xc8] sm:$0xff]
  %v3843 = vld [vmem:[%s2 + $0xd0] sm:$0xff]
  %v3844 = vld [vmem:[%s2 + $0xd8] sm:$0xff]
  %v3845 = vld [vmem:[%s2 + $0xe0] sm:$0xff]
  %v3846 = vld [vmem:[%s2 + $0xe8] sm:$0xff]
  %v3847 = vld [vmem:[%s2 + $0xf0] sm:$0xff]
  %v3848 = vld [vmem:[%s2 + $0xf8] sm:$0xff]
  %v3881 = vunpack.c.l.b16 %v3817
  %v3882 = vunpack.c.h.b16 %v3817
  %v3883 = vunpack.c.l.b16 %v3818
  %v3884 = vunpack.c.h.b16 %v3818
  %v3885 = vunpack.c.l.b16 %v3819
  %v3886 = vunpack.c.h.b16 %v3819
  %v3887 = vunpack.c.l.b16 %v3820
  %v3888 = vunpack.c.h.b16 %v3820
  %v3889 = vunpack.c.l.b16 %v3821
  %v3890 = vunpack.c.h.b16 %v3821
  %v3891 = vunpack.c.l.b16 %v3822
  %v3892 = vunpack.c.h.b16 %v3822
  %v3893 = vunpack.c.l.b16 %v3823
  %v3894 = vunpack.c.h.b16 %v3823
  %v3895 = vunpack.c.l.b16 %v3824
  %v3896 = vunpack.c.h.b16 %v3824
  %v3897 = vunpack.c.l.b16 %v3825
  %v3898 = vunpack.c.h.b16 %v3825
  %v3899 = vunpack.c.l.b16 %v3826
  %v3900 = vunpack.c.h.b16 %v3826
  %v3901 = vunpack.c.l.b16 %v3827
  %v3902 = vunpack.c.h.b16 %v3827
  %v3903 = vunpack.c.l.b16 %v3828
  %v3904 = vunpack.c.h.b16 %v3828
  %v3905 = vunpack.c.l.b16 %v3829
  %v3906 = vunpack.c.h.b16 %v3829
  %v3907 = vunpack.c.l.b16 %v3830
  %v3908 = vunpack.c.h.b16 %v3830
  %v3909 = vunpack.c.l.b16 %v3831
  %v3910 = vunpack.c.h.b16 %v3831
  %v3911 = vunpack.c.l.b16 %v3832
  %v3912 = vunpack.c.h.b16 %v3832
  %v3913 = vunpack.c.l.b16 %v3833
  %v3914 = vunpack.c.h.b16 %v3833
  %v3915 = vunpack.c.l.b16 %v3834
  %v3916 = vunpack.c.h.b16 %v3834
  %v3917 = vunpack.c.l.b16 %v3835
  %v3918 = vunpack.c.h.b16 %v3835
  %v3919 = vunpack.c.l.b16 %v3836
  %v3920 = vunpack.c.h.b16 %v3836
  %v3921 = vunpack.c.l.b16 %v3837
  %v3922 = vunpack.c.h.b16 %v3837
  %v3923 = vunpack.c.l.b16 %v3838
  %v3924 = vunpack.c.h.b16 %v3838
  %v3925 = vunpack.c.l.b16 %v3839
  %v3926 = vunpack.c.h.b16 %v3839
  %v3927 = vunpack.c.l.b16 %v3840
  %v3928 = vunpack.c.h.b16 %v3840
  %v3929 = vunpack.c.l.b16 %v3841
  %v3930 = vunpack.c.h.b16 %v3841
  %v3931 = vunpack.c.l.b16 %v3842
  %v3932 = vunpack.c.h.b16 %v3842
  %v3933 = vunpack.c.l.b16 %v3843
  %v3934 = vunpack.c.h.b16 %v3843
  %v3935 = vunpack.c.l.b16 %v3844
  %v3936 = vunpack.c.h.b16 %v3844
  %v3937 = vunpack.c.l.b16 %v3845
  %v3938 = vunpack.c.h.b16 %v3845
  %v3939 = vunpack.c.l.b16 %v3846
  %v3940 = vunpack.c.h.b16 %v3846
  %v3941 = vunpack.c.l.b16 %v3847
  %v3942 = vunpack.c.h.b16 %v3847
  %v3943 = vunpack.c.l.b16 %v3848
  %v3944 = vunpack.c.h.b16 %v3848
  %v3945 = vpack.c.b16 %v3885, %v3881
  %v3946 = vpack.c.b16 %v3886, %v3882
  %v3947 = vpack.c.b16 %v3887, %v3883
  %v3948 = vpack.c.b16 %v3888, %v3884
  %v3949 = vpack.c.b16 %v3893, %v3889
  %v3950 = vpack.c.b16 %v3894, %v3890
  %v3951 = vpack.c.b16 %v3895, %v3891
  %v3952 = vpack.c.b16 %v3896, %v3892
  %v3953 = vpack.c.b16 %v3901, %v3897
  %v3954 = vpack.c.b16 %v3902, %v3898
  %v3955 = vpack.c.b16 %v3903, %v3899
  %v3956 = vpack.c.b16 %v3904, %v3900
  %v3957 = vpack.c.b16 %v3909, %v3905
  %v3958 = vpack.c.b16 %v3910, %v3906
  %v3959 = vpack.c.b16 %v3911, %v3907
  %v3960 = vpack.c.b16 %v3912, %v3908
  %v3961 = vpack.c.b16 %v3917, %v3913
  %v3962 = vpack.c.b16 %v3918, %v3914
  %v3963 = vpack.c.b16 %v3919, %v3915
  %v3964 = vpack.c.b16 %v3920, %v3916
  %v3965 = vpack.c.b16 %v3925, %v3921
  %v3966 = vpack.c.b16 %v3926, %v3922
  %v3967 = vpack.c.b16 %v3927, %v3923
  %v3968 = vpack.c.b16 %v3928, %v3924
  %v3969 = vpack.c.b16 %v3933, %v3929
  %v3970 = vpack.c.b16 %v3934, %v3930
  %v3971 = vpack.c.b16 %v3935, %v3931
  %v3972 = vpack.c.b16 %v3936, %v3932
  %v3973 = vpack.c.b16 %v3941, %v3937
  %v3974 = vpack.c.b16 %v3942, %v3938
  %v3975 = vpack.c.b16 %v3943, %v3939
  %v3976 = vpack.c.b16 %v3944, %v3940
  %4009 = vmatprep.subr.bf16.mxu0 %v3946
  %4010 = vmatpush1.bf16.msra.mxu0 %v3945
  %4011 = vmatprep.subr.bf16.mxu0 %v3950
  %4012 = vmatpush1.bf16.msra.mxu0 %v3949
  %4013 = vmatprep.subr.bf16.mxu0 %v3954
  %4014 = vmatpush1.bf16.msra.mxu0 %v3953
  %4015 = vmatprep.subr.bf16.mxu0 %v3958
  %4016 = vmatpush1.bf16.msra.mxu0 %v3957
  %4017 = vmatprep.subr.bf16.mxu0 %v3962
  %4018 = vmatpush1.bf16.msra.mxu0 %v3961
  %4019 = vmatprep.subr.bf16.mxu0 %v3966
  %4020 = vmatpush1.bf16.msra.mxu0 %v3965
  %4021 = vmatprep.subr.bf16.mxu0 %v3970
  %4022 = vmatpush1.bf16.msra.mxu0 %v3969
  %4023 = vmatprep.subr.bf16.mxu0 %v3974
  %4024 = vmatpush1.bf16.msra.mxu0 %v3973
  %4025 = vmatprep.subr.bf16.mxu0 0
  %4026 = vmatpush1.bf16.msra.mxu0 0
  %4027 = vmatprep.subr.bf16.mxu0 0
  %4028 = vmatpush1.bf16.msra.mxu0 0
  %4029 = vmatprep.subr.bf16.mxu0 0
  %4030 = vmatpush1.bf16.msra.mxu0 0
  %4031 = vmatprep.subr.bf16.mxu0 0
  %4032 = vmatpush1.bf16.msra.mxu0 0
  %4033 = vmatprep.subr.bf16.mxu0 0
  %4034 = vmatpush1.bf16.msra.mxu0 0
  %4035 = vmatprep.subr.bf16.mxu0 0
  %4036 = vmatpush1.bf16.msra.mxu0 0
  %4037 = vmatprep.subr.bf16.mxu0 0
  %4038 = vmatpush1.bf16.msra.mxu0 0
  %4039 = vmatprep.subr.bf16.mxu0 0
  %4040 = vmatpush1.bf16.msra.mxu0 0
  %4041 = vmatprep.mubr.bf16.mxu0 0
  %4042 = vmatmul.mubr.bf16.gmra.mrb[0].mxu0 %v3816
  %v4043 = vpop.f32.mrb[0].mxu0
  %v4044 = vadd.f32 0.0, %v4043
  %v4045 = vpop.f32.mrb[0].mxu0
  %v4046 = vadd.f32 0.0, %v4045
  %v4047 = vpop.f32.mrb[0].mxu0
  %v4048 = vpop.f32.mrb[0].mxu0
  %4049 = vdwg.mxu0
  %4050 = vmatprep.subr.bf16.mxu0 %v3948
  %4051 = vmatpush1.bf16.msra.mxu0 %v3947
  %4052 = vmatprep.subr.bf16.mxu0 %v3952
  %4053 = vmatpush1.bf16.msra.mxu0 %v3951
  %4054 = vmatprep.subr.bf16.mxu0 %v3956
  %4055 = vmatpush1.bf16.msra.mxu0 %v3955
  %4056 = vmatprep.subr.bf16.mxu0 %v3960
  %4057 = vmatpush1.bf16.msra.mxu0 %v3959
  %4058 = vmatprep.subr.bf16.mxu0 %v3964
  %4059 = vmatpush1.bf16.msra.mxu0 %v3963
  %4060 = vmatprep.subr.bf16.mxu0 %v3968
  %4061 = vmatpush1.bf16.msra.mxu0 %v3967
  %4062 = vmatprep.subr.bf16.mxu0 %v3972
  %4063 = vmatpush1.bf16.msra.mxu0 %v3971
  %4064 = vmatprep.subr.bf16.mxu0 %v3976
  %4065 = vmatpush1.bf16.msra.mxu0 %v3975
  %4066 = vmatprep.subr.bf16.mxu0 0
  %4067 = vmatpush1.bf16.msra.mxu0 0
  %4068 = vmatprep.subr.bf16.mxu0 0
  %4069 = vmatpush1.bf16.msra.mxu0 0
  %4070 = vmatprep.subr.bf16.mxu0 0
  %4071 = vmatpush1.bf16.msra.mxu0 0
  %4072 = vmatprep.subr.bf16.mxu0 0
  %4073 = vmatpush1.bf16.msra.mxu0 0
  %4074 = vmatprep.subr.bf16.mxu0 0
  %4075 = vmatpush1.bf16.msra.mxu0 0
  %4076 = vmatprep.subr.bf16.mxu0 0
  %4077 = vmatpush1.bf16.msra.mxu0 0
  %4078 = vmatprep.subr.bf16.mxu0 0
  %4079 = vmatpush1.bf16.msra.mxu0 0
  %4080 = vmatprep.subr.bf16.mxu0 0
  %4081 = vmatpush1.bf16.msra.mxu0 0
  %4082 = vmatprep.mubr.bf16.mxu0 0
  %4083 = vmatmul.mubr.bf16.gmra.mrb[0].mxu0 %v3816
  %v4084 = vpop.f32.mrb[0].mxu0
  %v4085 = vadd.f32 0.0, %v4084
  %v4086 = vpop.f32.mrb[0].mxu0
  %v4087 = vadd.f32 0.0, %v4086
  %v4088 = vpop.f32.mrb[0].mxu0
  %v4089 = vpop.f32.mrb[0].mxu0
  %4090 = vdwg.mxu0
  %v4091 = vadd.f32 %v3812, %v4044
  %v4092 = vadd.f32 %v3813, %v4046
  %v4093 = vadd.f32 %v3814, %v4085
  %v4094 = vadd.f32 %v3815, %v4087
  %v4095 = vxor.u32 %v4091, 2147483648
  %v4096 = vmul.f32 %v4095, 1.442695
  %v4097 = vpow.pop %v4096
  %v4098 = vadd.f32 %v4097, 1.0
  %v4099 = vrcp.pop %v4098
  %v4100 = vmul.f32 1.0, %v4099
  %v4101 = vxor.u32 %v4092, 2147483648
  %v4102 = vmul.f32 %v4101, 1.442695
  %v4103 = vpow.pop %v4102
  %v4104 = vadd.f32 %v4103, 1.0
  %v4105 = vrcp.pop %v4104
  %v4106 = vmul.f32 1.0, %v4105
  %v4107 = vtanh.pop %v4093
  %v4108 = vxor.u32 %v4094, 2147483648
  %v4109 = vmul.f32 %v4108, 1.442695
  %v4110 = vpow.pop %v4109
  %v4111 = vadd.f32 %v4110, 1.0
  %v4112 = vrcp.pop %v4111
  %v4113 = vmul.f32 1.0, %v4112
  %v4114 = vld [vmem:[#allocation4] sm:$0xff]
  %v4115 = vmul.f32 %v4106, %v4114
  %v4116 = vmul.f32 %v4100, %v4107
  %v4117 = vadd.f32 %v4115, %v4116
  %v4118 = vtanh.pop %v4117
  %v4119 = vmul.f32 %v4113, %v4118
  %4120 = vst [vmem:[#allocation4] sm:$0xff] %v4117
  %v4121 = vpack.c.bf16 %v4119, %v4119
  %4122 = vst [vmem:[#allocation3] sm:$0xf] %v4121
  %v4123 = vld [vmem:[#allocation3] sm:$0xff]
  %v4124 = vld [vmem:[%s4] sm:$0xff]
  %v4125 = vld [vmem:[%s4 + $0x8] sm:$0xff]
  %v4126 = vld [vmem:[%s4 + $0x10] sm:$0xff]
  %v4127 = vld [vmem:[%s4 + $0x18] sm:$0xff]
  %v4128 = vld [vmem:[%s4 + $0x20] sm:$0xff]
  %v4129 = vld [vmem:[%s4 + $0x28] sm:$0xff]
  %v4130 = vld [vmem:[%s4 + $0x30] sm:$0xff]
  %v4131 = vld [vmem:[%s4 + $0x38] sm:$0xff]
  %v4132 = vld [vmem:[%s4 + $0x40] sm:$0xff]
  %v4133 = vld [vmem:[%s4 + $0x48] sm:$0xff]
  %v4134 = vld [vmem:[%s4 + $0x50] sm:$0xff]
  %v4135 = vld [vmem:[%s4 + $0x58] sm:$0xff]
  %v4136 = vld [vmem:[%s4 + $0x60] sm:$0xff]
  %v4137 = vld [vmem:[%s4 + $0x68] sm:$0xff]
  %v4138 = vld [vmem:[%s4 + $0x70] sm:$0xff]
  %v4139 = vld [vmem:[%s4 + $0x78] sm:$0xff]
  %v4140 = vld [vmem:[%s4 + $0x80] sm:$0xff]
  %v4141 = vld [vmem:[%s4 + $0x88] sm:$0xff]
  %v4142 = vld [vmem:[%s4 + $0x90] sm:$0xff]
  %v4143 = vld [vmem:[%s4 + $0x98] sm:$0xff]
  %v4144 = vld [vmem:[%s4 + $0xa0] sm:$0xff]
  %v4145 = vld [vmem:[%s4 + $0xa8] sm:$0xff]
  %v4146 = vld [vmem:[%s4 + $0xb0] sm:$0xff]
  %v4147 = vld [vmem:[%s4 + $0xb8] sm:$0xff]
  %v4148 = vld [vmem:[%s4 + $0xc0] sm:$0xff]
  %v4149 = vld [vmem:[%s4 + $0xc8] sm:$0xff]
  %v4150 = vld [vmem:[%s4 + $0xd0] sm:$0xff]
  %v4151 = vld [vmem:[%s4 + $0xd8] sm:$0xff]
  %v4152 = vld [vmem:[%s4 + $0xe0] sm:$0xff]
  %v4153 = vld [vmem:[%s4 + $0xe8] sm:$0xff]
  %v4154 = vld [vmem:[%s4 + $0xf0] sm:$0xff]
  %v4155 = vld [vmem:[%s4 + $0xf8] sm:$0xff]
  %v4156 = vld [vmem:[%s4 + $0x100] sm:$0xff]
  %v4157 = vld [vmem:[%s4 + $0x108] sm:$0xff]
  %v4158 = vld [vmem:[%s4 + $0x110] sm:$0xff]
  %v4159 = vld [vmem:[%s4 + $0x118] sm:$0xff]
  %v4160 = vld [vmem:[%s4 + $0x120] sm:$0xff]
  %v4161 = vld [vmem:[%s4 + $0x128] sm:$0xff]
  %v4162 = vld [vmem:[%s4 + $0x130] sm:$0xff]
  %v4163 = vld [vmem:[%s4 + $0x138] sm:$0xff]
  %v4164 = vld [vmem:[%s4 + $0x140] sm:$0xff]
  %v4165 = vld [vmem:[%s4 + $0x148] sm:$0xff]
  %v4166 = vld [vmem:[%s4 + $0x150] sm:$0xff]
  %v4167 = vld [vmem:[%s4 + $0x158] sm:$0xff]
  %v4168 = vld [vmem:[%s4 + $0x160] sm:$0xff]
  %v4169 = vld [vmem:[%s4 + $0x168] sm:$0xff]
  %v4170 = vld [vmem:[%s4 + $0x170] sm:$0xff]
  %v4171 = vld [vmem:[%s4 + $0x178] sm:$0xff]
  %v4172 = vld [vmem:[%s4 + $0x180] sm:$0xff]
  %v4173 = vld [vmem:[%s4 + $0x188] sm:$0xff]
  %v4174 = vld [vmem:[%s4 + $0x190] sm:$0xff]
  %v4175 = vld [vmem:[%s4 + $0x198] sm:$0xff]
  %v4176 = vld [vmem:[%s4 + $0x1a0] sm:$0xff]
  %v4177 = vld [vmem:[%s4 + $0x1a8] sm:$0xff]
  %v4178 = vld [vmem:[%s4 + $0x1b0] sm:$0xff]
  %v4179 = vld [vmem:[%s4 + $0x1b8] sm:$0xff]
  %v4180 = vld [vmem:[%s4 + $0x1c0] sm:$0xff]
  %v4181 = vld [vmem:[%s4 + $0x1c8] sm:$0xff]
  %v4182 = vld [vmem:[%s4 + $0x1d0] sm:$0xff]
  %v4183 = vld [vmem:[%s4 + $0x1d8] sm:$0xff]
  %v4184 = vld [vmem:[%s4 + $0x1e0] sm:$0xff]
  %v4185 = vld [vmem:[%s4 + $0x1e8] sm:$0xff]
  %v4186 = vld [vmem:[%s4 + $0x1f0] sm:$0xff]
  %v4187 = vld [vmem:[%s4 + $0x1f8] sm:$0xff]
  %v4188 = vld [vmem:[%s5] sm:$0xf]
  %v4190 = vlaneseq
  %v4191 = vshrl.u32 %v4190, 7
  %v4192 = vsub.s32 0, %v4191
  %v4193 = vrot.slane %v4188, %v4192
  %v4194 = vlaneseq
  %v4195 = vshrl.u32 %v4194, 7
  %v4196 = vsub.s32 1, %v4195
  %v4197 = vrot.slane %v4188, %v4196
  %v4198 = vlaneseq
  %v4199 = vshrl.u32 %v4198, 7
  %v4200 = vsub.s32 2, %v4199
  %v4201 = vrot.slane %v4188, %v4200
  %v4202 = vlaneseq
  %v4203 = vshrl.u32 %v4202, 7
  %v4204 = vsub.s32 3, %v4203
  %v4205 = vrot.slane %v4188, %v4204
  %v4211 = vunpack.c.l.b16 %v4123
  %v4212 = vunpack.c.h.b16 %v4123
  %v4213 = vpack.c.b16 %v4211, %v4211
  %v4214 = vpack.c.b16 %v4212, %v4212
  %v4281 = vunpack.c.l.b16 %v4124
  %v4282 = vunpack.c.h.b16 %v4124
  %v4283 = vunpack.c.l.b16 %v4125
  %v4284 = vunpack.c.h.b16 %v4125
  %v4285 = vunpack.c.l.b16 %v4126
  %v4286 = vunpack.c.h.b16 %v4126
  %v4287 = vunpack.c.l.b16 %v4127
  %v4288 = vunpack.c.h.b16 %v4127
  %v4289 = vunpack.c.l.b16 %v4128
  %v4290 = vunpack.c.h.b16 %v4128
  %v4291 = vunpack.c.l.b16 %v4129
  %v4292 = vunpack.c.h.b16 %v4129
  %v4293 = vunpack.c.l.b16 %v4130
  %v4294 = vunpack.c.h.b16 %v4130
  %v4295 = vunpack.c.l.b16 %v4131
  %v4296 = vunpack.c.h.b16 %v4131
  %v4297 = vunpack.c.l.b16 %v4132
  %v4298 = vunpack.c.h.b16 %v4132
  %v4299 = vunpack.c.l.b16 %v4133
  %v4300 = vunpack.c.h.b16 %v4133
  %v4301 = vunpack.c.l.b16 %v4134
  %v4302 = vunpack.c.h.b16 %v4134
  %v4303 = vunpack.c.l.b16 %v4135
  %v4304 = vunpack.c.h.b16 %v4135
  %v4305 = vunpack.c.l.b16 %v4136
  %v4306 = vunpack.c.h.b16 %v4136
  %v4307 = vunpack.c.l.b16 %v4137
  %v4308 = vunpack.c.h.b16 %v4137
  %v4309 = vunpack.c.l.b16 %v4138
  %v4310 = vunpack.c.h.b16 %v4138
  %v4311 = vunpack.c.l.b16 %v4139
  %v4312 = vunpack.c.h.b16 %v4139
  %v4313 = vunpack.c.l.b16 %v4140
  %v4314 = vunpack.c.h.b16 %v4140
  %v4315 = vunpack.c.l.b16 %v4141
  %v4316 = vunpack.c.h.b16 %v4141
  %v4317 = vunpack.c.l.b16 %v4142
  %v4318 = vunpack.c.h.b16 %v4142
  %v4319 = vunpack.c.l.b16 %v4143
  %v4320 = vunpack.c.h.b16 %v4143
  %v4321 = vunpack.c.l.b16 %v4144
  %v4322 = vunpack.c.h.b16 %v4144
  %v4323 = vunpack.c.l.b16 %v4145
  %v4324 = vunpack.c.h.b16 %v4145
  %v4325 = vunpack.c.l.b16 %v4146
  %v4326 = vunpack.c.h.b16 %v4146
  %v4327 = vunpack.c.l.b16 %v4147
  %v4328 = vunpack.c.h.b16 %v4147
  %v4329 = vunpack.c.l.b16 %v4148
  %v4330 = vunpack.c.h.b16 %v4148
  %v4331 = vunpack.c.l.b16 %v4149
  %v4332 = vunpack.c.h.b16 %v4149
  %v4333 = vunpack.c.l.b16 %v4150
  %v4334 = vunpack.c.h.b16 %v4150
  %v4335 = vunpack.c.l.b16 %v4151
  %v4336 = vunpack.c.h.b16 %v4151
  %v4337 = vunpack.c.l.b16 %v4152
  %v4338 = vunpack.c.h.b16 %v4152
  %v4339 = vunpack.c.l.b16 %v4153
  %v4340 = vunpack.c.h.b16 %v4153
  %v4341 = vunpack.c.l.b16 %v4154
  %v4342 = vunpack.c.h.b16 %v4154
  %v4343 = vunpack.c.l.b16 %v4155
  %v4344 = vunpack.c.h.b16 %v4155
  %v4345 = vunpack.c.l.b16 %v4156
  %v4346 = vunpack.c.h.b16 %v4156
  %v4347 = vunpack.c.l.b16 %v4157
  %v4348 = vunpack.c.h.b16 %v4157
  %v4349 = vunpack.c.l.b16 %v4158
  %v4350 = vunpack.c.h.b16 %v4158
  %v4351 = vunpack.c.l.b16 %v4159
  %v4352 = vunpack.c.h.b16 %v4159
  %v4353 = vunpack.c.l.b16 %v4160
  %v4354 = vunpack.c.h.b16 %v4160
  %v4355 = vunpack.c.l.b16 %v4161
  %v4356 = vunpack.c.h.b16 %v4161
  %v4357 = vunpack.c.l.b16 %v4162
  %v4358 = vunpack.c.h.b16 %v4162
  %v4359 = vunpack.c.l.b16 %v4163
  %v4360 = vunpack.c.h.b16 %v4163
  %v4361 = vunpack.c.l.b16 %v4164
  %v4362 = vunpack.c.h.b16 %v4164
  %v4363 = vunpack.c.l.b16 %v4165
  %v4364 = vunpack.c.h.b16 %v4165
  %v4365 = vunpack.c.l.b16 %v4166
  %v4366 = vunpack.c.h.b16 %v4166
  %v4367 = vunpack.c.l.b16 %v4167
  %v4368 = vunpack.c.h.b16 %v4167
  %v4369 = vunpack.c.l.b16 %v4168
  %v4370 = vunpack.c.h.b16 %v4168
  %v4371 = vunpack.c.l.b16 %v4169
  %v4372 = vunpack.c.h.b16 %v4169
  %v4373 = vunpack.c.l.b16 %v4170
  %v4374 = vunpack.c.h.b16 %v4170
  %v4375 = vunpack.c.l.b16 %v4171
  %v4376 = vunpack.c.h.b16 %v4171
  %v4377 = vunpack.c.l.b16 %v4172
  %v4378 = vunpack.c.h.b16 %v4172
  %v4379 = vunpack.c.l.b16 %v4173
  %v4380 = vunpack.c.h.b16 %v4173
  %v4381 = vunpack.c.l.b16 %v4174
  %v4382 = vunpack.c.h.b16 %v4174
  %v4383 = vunpack.c.l.b16 %v4175
  %v4384 = vunpack.c.h.b16 %v4175
  %v4385 = vunpack.c.l.b16 %v4176
  %v4386 = vunpack.c.h.b16 %v4176
  %v4387 = vunpack.c.l.b16 %v4177
  %v4388 = vunpack.c.h.b16 %v4177
  %v4389 = vunpack.c.l.b16 %v4178
  %v4390 = vunpack.c.h.b16 %v4178
  %v4391 = vunpack.c.l.b16 %v4179
  %v4392 = vunpack.c.h.b16 %v4179
  %v4393 = vunpack.c.l.b16 %v4180
  %v4394 = vunpack.c.h.b16 %v4180
  %v4395 = vunpack.c.l.b16 %v4181
  %v4396 = vunpack.c.h.b16 %v4181
  %v4397 = vunpack.c.l.b16 %v4182
  %v4398 = vunpack.c.h.b16 %v4182
  %v4399 = vunpack.c.l.b16 %v4183
  %v4400 = vunpack.c.h.b16 %v4183
  %v4401 = vunpack.c.l.b16 %v4184
  %v4402 = vunpack.c.h.b16 %v4184
  %v4403 = vunpack.c.l.b16 %v4185
  %v4404 = vunpack.c.h.b16 %v4185
  %v4405 = vunpack.c.l.b16 %v4186
  %v4406 = vunpack.c.h.b16 %v4186
  %v4407 = vunpack.c.l.b16 %v4187
  %v4408 = vunpack.c.h.b16 %v4187
  %v4409 = vpack.c.b16 %v4285, %v4281
  %v4410 = vpack.c.b16 %v4286, %v4282
  %v4411 = vpack.c.b16 %v4287, %v4283
  %v4412 = vpack.c.b16 %v4288, %v4284
  %v4413 = vpack.c.b16 %v4293, %v4289
  %v4414 = vpack.c.b16 %v4294, %v4290
  %v4415 = vpack.c.b16 %v4295, %v4291
  %v4416 = vpack.c.b16 %v4296, %v4292
  %v4417 = vpack.c.b16 %v4301, %v4297
  %v4418 = vpack.c.b16 %v4302, %v4298
  %v4419 = vpack.c.b16 %v4303, %v4299
  %v4420 = vpack.c.b16 %v4304, %v4300
  %v4421 = vpack.c.b16 %v4309, %v4305
  %v4422 = vpack.c.b16 %v4310, %v4306
  %v4423 = vpack.c.b16 %v4311, %v4307
  %v4424 = vpack.c.b16 %v4312, %v4308
  %v4425 = vpack.c.b16 %v4317, %v4313
  %v4426 = vpack.c.b16 %v4318, %v4314
  %v4427 = vpack.c.b16 %v4319, %v4315
  %v4428 = vpack.c.b16 %v4320, %v4316
  %v4429 = vpack.c.b16 %v4325, %v4321
  %v4430 = vpack.c.b16 %v4326, %v4322
  %v4431 = vpack.c.b16 %v4327, %v4323
  %v4432 = vpack.c.b16 %v4328, %v4324
  %v4433 = vpack.c.b16 %v4333, %v4329
  %v4434 = vpack.c.b16 %v4334, %v4330
  %v4435 = vpack.c.b16 %v4335, %v4331
  %v4436 = vpack.c.b16 %v4336, %v4332
  %v4437 = vpack.c.b16 %v4341, %v4337
  %v4438 = vpack.c.b16 %v4342, %v4338
  %v4439 = vpack.c.b16 %v4343, %v4339
  %v4440 = vpack.c.b16 %v4344, %v4340
  %v4441 = vpack.c.b16 %v4349, %v4345
  %v4442 = vpack.c.b16 %v4350, %v4346
  %v4443 = vpack.c.b16 %v4351, %v4347
  %v4444 = vpack.c.b16 %v4352, %v4348
  %v4445 = vpack.c.b16 %v4357, %v4353
  %v4446 = vpack.c.b16 %v4358, %v4354
  %v4447 = vpack.c.b16 %v4359, %v4355
  %v4448 = vpack.c.b16 %v4360, %v4356
  %v4449 = vpack.c.b16 %v4365, %v4361
  %v4450 = vpack.c.b16 %v4366, %v4362
  %v4451 = vpack.c.b16 %v4367, %v4363
  %v4452 = vpack.c.b16 %v4368, %v4364
  %v4453 = vpack.c.b16 %v4373, %v4369
  %v4454 = vpack.c.b16 %v4374, %v4370
  %v4455 = vpack.c.b16 %v4375, %v4371
  %v4456 = vpack.c.b16 %v4376, %v4372
  %v4457 = vpack.c.b16 %v4381, %v4377
  %v4458 = vpack.c.b16 %v4382, %v4378
  %v4459 = vpack.c.b16 %v4383, %v4379
  %v4460 = vpack.c.b16 %v4384, %v4380
  %v4461 = vpack.c.b16 %v4389, %v4385
  %v4462 = vpack.c.b16 %v4390, %v4386
  %v4463 = vpack.c.b16 %v4391, %v4387
  %v4464 = vpack.c.b16 %v4392, %v4388
  %v4465 = vpack.c.b16 %v4397, %v4393
  %v4466 = vpack.c.b16 %v4398, %v4394
  %v4467 = vpack.c.b16 %v4399, %v4395
  %v4468 = vpack.c.b16 %v4400, %v4396
  %v4469 = vpack.c.b16 %v4405, %v4401
  %v4470 = vpack.c.b16 %v4406, %v4402
  %v4471 = vpack.c.b16 %v4407, %v4403
  %v4472 = vpack.c.b16 %v4408, %v4404
  %4537 = vmatprep.subr.bf16.mxu0 %v4410
  %4538 = vmatpush1.bf16.msra.mxu0 %v4409
  %4539 = vmatprep.subr.bf16.mxu0 %v4414
  %4540 = vmatpush1.bf16.msra.mxu0 %v4413
  %4541 = vmatprep.subr.bf16.mxu0 %v4418
  %4542 = vmatpush1.bf16.msra.mxu0 %v4417
  %4543 = vmatprep.subr.bf16.mxu0 %v4422
  %4544 = vmatpush1.bf16.msra.mxu0 %v4421
  %4545 = vmatprep.subr.bf16.mxu0 %v4426
  %4546 = vmatpush1.bf16.msra.mxu0 %v4425
  %4547 = vmatprep.subr.bf16.mxu0 %v4430
  %4548 = vmatpush1.bf16.msra.mxu0 %v4429
  %4549 = vmatprep.subr.bf16.mxu0 %v4434
  %4550 = vmatpush1.bf16.msra.mxu0 %v4433
  %4551 = vmatprep.subr.bf16.mxu0 %v4438
  %4552 = vmatpush1.bf16.msra.mxu0 %v4437
  %4553 = vmatprep.subr.bf16.mxu0 %v4442
  %4554 = vmatpush1.bf16.msra.mxu0 %v4441
  %4555 = vmatprep.subr.bf16.mxu0 %v4446
  %4556 = vmatpush1.bf16.msra.mxu0 %v4445
  %4557 = vmatprep.subr.bf16.mxu0 %v4450
  %4558 = vmatpush1.bf16.msra.mxu0 %v4449
  %4559 = vmatprep.subr.bf16.mxu0 %v4454
  %4560 = vmatpush1.bf16.msra.mxu0 %v4453
  %4561 = vmatprep.subr.bf16.mxu0 %v4458
  %4562 = vmatpush1.bf16.msra.mxu0 %v4457
  %4563 = vmatprep.subr.bf16.mxu0 %v4462
  %4564 = vmatpush1.bf16.msra.mxu0 %v4461
  %4565 = vmatprep.subr.bf16.mxu0 %v4466
  %4566 = vmatpush1.bf16.msra.mxu0 %v4465
  %4567 = vmatprep.subr.bf16.mxu0 %v4470
  %4568 = vmatpush1.bf16.msra.mxu0 %v4469
  %4569 = vmatprep.mubr.bf16.mxu0 %v4214
  %4570 = vmatmul.mubr.bf16.gmra.mrb[0].mxu0 %v4213
  %v4571 = vpop.f32.mrb[0].mxu0
  %v4572 = vadd.f32 %v4193, %v4571
  %v4573 = vpop.f32.mrb[0].mxu0
  %v4574 = vadd.f32 %v4197, %v4573
  %v4575 = vpop.f32.mrb[0].mxu0
  %v4576 = vpop.f32.mrb[0].mxu0
  %4577 = vdwg.mxu0
  %4578 = vmatprep.subr.bf16.mxu0 %v4412
  %4579 = vmatpush1.bf16.msra.mxu0 %v4411
  %4580 = vmatprep.subr.bf16.mxu0 %v4416
  %4581 = vmatpush1.bf16.msra.mxu0 %v4415
  %4582 = vmatprep.subr.bf16.mxu0 %v4420
  %4583 = vmatpush1.bf16.msra.mxu0 %v4419
  %4584 = vmatprep.subr.bf16.mxu0 %v4424
  %4585 = vmatpush1.bf16.msra.mxu0 %v4423
  %4586 = vmatprep.subr.bf16.mxu0 %v4428
  %4587 = vmatpush1.bf16.msra.mxu0 %v4427
  %4588 = vmatprep.subr.bf16.mxu0 %v4432
  %4589 = vmatpush1.bf16.msra.mxu0 %v4431
  %4590 = vmatprep.subr.bf16.mxu0 %v4436
  %4591 = vmatpush1.bf16.msra.mxu0 %v4435
  %4592 = vmatprep.subr.bf16.mxu0 %v4440
  %4593 = vmatpush1.bf16.msra.mxu0 %v4439
  %4594 = vmatprep.subr.bf16.mxu0 %v4444
  %4595 = vmatpush1.bf16.msra.mxu0 %v4443
  %4596 = vmatprep.subr.bf16.mxu0 %v4448
  %4597 = vmatpush1.bf16.msra.mxu0 %v4447
  %4598 = vmatprep.subr.bf16.mxu0 %v4452
  %4599 = vmatpush1.bf16.msra.mxu0 %v4451
  %4600 = vmatprep.subr.bf16.mxu0 %v4456
  %4601 = vmatpush1.bf16.msra.mxu0 %v4455
  %4602 = vmatprep.subr.bf16.mxu0 %v4460
  %4603 = vmatpush1.bf16.msra.mxu0 %v4459
  %4604 = vmatprep.subr.bf16.mxu0 %v4464
  %4605 = vmatpush1.bf16.msra.mxu0 %v4463
  %4606 = vmatprep.subr.bf16.mxu0 %v4468
  %4607 = vmatpush1.bf16.msra.mxu0 %v4467
  %4608 = vmatprep.subr.bf16.mxu0 %v4472
  %4609 = vmatpush1.bf16.msra.mxu0 %v4471
  %4610 = vmatprep.mubr.bf16.mxu0 %v4214
  %4611 = vmatmul.mubr.bf16.gmra.mrb[0].mxu0 %v4213
  %v4612 = vpop.f32.mrb[0].mxu0
  %v4613 = vadd.f32 %v4201, %v4612
  %v4614 = vpop.f32.mrb[0].mxu0
  %v4615 = vadd.f32 %v4205, %v4614
  %v4616 = vpop.f32.mrb[0].mxu0
  %v4617 = vpop.f32.mrb[0].mxu0
  %4618 = vdwg.mxu0
  %v4619 = vxor.u32 %v4572, 2147483648
  %v4620 = vmul.f32 %v4619, 1.442695
  %v4621 = vpow.pop %v4620
  %v4622 = vadd.f32 %v4621, 1.0
  %v4623 = vrcp.pop %v4622
  %v4624 = vmul.f32 1.0, %v4623
  %v4625 = vxor.u32 %v4574, 2147483648
  %v4626 = vmul.f32 %v4625, 1.442695
  %v4627 = vpow.pop %v4626
  %v4628 = vadd.f32 %v4627, 1.0
  %v4629 = vrcp.pop %v4628
  %v4630 = vmul.f32 1.0, %v4629
  %v4631 = vtanh.pop %v4613
  %v4632 = vxor.u32 %v4615, 2147483648
  %v4633 = vmul.f32 %v4632, 1.442695
  %v4634 = vpow.pop %v4633
  %v4635 = vadd.f32 %v4634, 1.0
  %v4636 = vrcp.pop %v4635
  %v4637 = vmul.f32 1.0, %v4636
  %v4638 = vld [vmem:[#allocation5] sm:$0xff]
  %v4639 = vmul.f32 %v4630, %v4638
  %v4640 = vmul.f32 %v4624, %v4631
  %v4641 = vadd.f32 %v4639, %v4640
  %v4642 = vtanh.pop %v4641
  %v4643 = vmul.f32 %v4637, %v4642
  %4644 = vst [vmem:[#allocation5] sm:$0xff] %v4641
  %4645 = vst [vmem:[#allocation6] sm:$0xff] %v4643
  %v4646 = vpack.c.bf16 %v4643, %v4643
  %4647 = vst [vmem:[#allocation3 + $0x4] sm:$0xf] %v4646
  %s4648 = scalar_lea.vmem [#allocation2], 160
  %v4649 = vld [vmem:[%s4648] sm:$0xff]
  %v4650 = vld [vmem:[%s4648 + $0x8] sm:$0xff]
  %v4651 = vld [vmem:[%s4648 + $0x10] sm:$0xff]
  %v4652 = vld [vmem:[%s4648 + $0x18] sm:$0xff]
  %v4653 = vld [vmem:[#allocation3] sm:$0xf]
  %v4654 = vld [vmem:[%s2] sm:$0xff]
  %v4655 = vld [vmem:[%s2 + $0x8] sm:$0xff]
  %v4656 = vld [vmem:[%s2 + $0x10] sm:$0xff]
  %v4657 = vld [vmem:[%s2 + $0x18] sm:$0xff]
  %v4658 = vld [vmem:[%s2 + $0x20] sm:$0xff]
  %v4659 = vld [vmem:[%s2 + $0x28] sm:$0xff]
  %v4660 = vld [vmem:[%s2 + $0x30] sm:$0xff]
  %v4661 = vld [vmem:[%s2 + $0x38] sm:$0xff]
  %v4662 = vld [vmem:[%s2 + $0x40] sm:$0xff]
  %v4663 = vld [vmem:[%s2 + $0x48] sm:$0xff]
  %v4664 = vld [vmem:[%s2 + $0x50] sm:$0xff]
  %v4665 = vld [vmem:[%s2 + $0x58] sm:$0xff]
  %v4666 = vld [vmem:[%s2 + $0x60] sm:$0xff]
  %v4667 = vld [vmem:[%s2 + $0x68] sm:$0xff]
  %v4668 = vld [vmem:[%s2 + $0x70] sm:$0xff]
  %v4669 = vld [vmem:[%s2 + $0x78] sm:$0xff]
  %v4670 = vld [vmem:[%s2 + $0x80] sm:$0xff]
  %v4671 = vld [vmem:[%s2 + $0x88] sm:$0xff]
  %v4672 = vld [vmem:[%s2 + $0x90] sm:$0xff]
  %v4673 = vld [vmem:[%s2 + $0x98] sm:$0xff]
  %v4674 = vld [vmem:[%s2 + $0xa0] sm:$0xff]
  %v4675 = vld [vmem:[%s2 + $0xa8] sm:$0xff]
  %v4676 = vld [vmem:[%s2 + $0xb0] sm:$0xff]
  %v4677 = vld [vmem:[%s2 + $0xb8] sm:$0xff]
  %v4678 = vld [vmem:[%s2 + $0xc0] sm:$0xff]
  %v4679 = vld [vmem:[%s2 + $0xc8] sm:$0xff]
  %v4680 = vld [vmem:[%s2 + $0xd0] sm:$0xff]
  %v4681 = vld [vmem:[%s2 + $0xd8] sm:$0xff]
  %v4682 = vld [vmem:[%s2 + $0xe0] sm:$0xff]
  %v4683 = vld [vmem:[%s2 + $0xe8] sm:$0xff]
  %v4684 = vld [vmem:[%s2 + $0xf0] sm:$0xff]
  %v4685 = vld [vmem:[%s2 + $0xf8] sm:$0xff]
  %v4718 = vunpack.c.l.b16 %v4654
  %v4719 = vunpack.c.h.b16 %v4654
  %v4720 = vunpack.c.l.b16 %v4655
  %v4721 = vunpack.c.h.b16 %v4655
  %v4722 = vunpack.c.l.b16 %v4656
  %v4723 = vunpack.c.h.b16 %v4656
  %v4724 = vunpack.c.l.b16 %v4657
  %v4725 = vunpack.c.h.b16 %v4657
  %v4726 = vunpack.c.l.b16 %v4658
  %v4727 = vunpack.c.h.b16 %v4658
  %v4728 = vunpack.c.l.b16 %v4659
  %v4729 = vunpack.c.h.b16 %v4659
  %v4730 = vunpack.c.l.b16 %v4660
  %v4731 = vunpack.c.h.b16 %v4660
  %v4732 = vunpack.c.l.b16 %v4661
  %v4733 = vunpack.c.h.b16 %v4661
  %v4734 = vunpack.c.l.b16 %v4662
  %v4735 = vunpack.c.h.b16 %v4662
  %v4736 = vunpack.c.l.b16 %v4663
  %v4737 = vunpack.c.h.b16 %v4663
  %v4738 = vunpack.c.l.b16 %v4664
  %v4739 = vunpack.c.h.b16 %v4664
  %v4740 = vunpack.c.l.b16 %v4665
  %v4741 = vunpack.c.h.b16 %v4665
  %v4742 = vunpack.c.l.b16 %v4666
  %v4743 = vunpack.c.h.b16 %v4666
  %v4744 = vunpack.c.l.b16 %v4667
  %v4745 = vunpack.c.h.b16 %v4667
  %v4746 = vunpack.c.l.b16 %v4668
  %v4747 = vunpack.c.h.b16 %v4668
  %v4748 = vunpack.c.l.b16 %v4669
  %v4749 = vunpack.c.h.b16 %v4669
  %v4750 = vunpack.c.l.b16 %v4670
  %v4751 = vunpack.c.h.b16 %v4670
  %v4752 = vunpack.c.l.b16 %v4671
  %v4753 = vunpack.c.h.b16 %v4671
  %v4754 = vunpack.c.l.b16 %v4672
  %v4755 = vunpack.c.h.b16 %v4672
  %v4756 = vunpack.c.l.b16 %v4673
  %v4757 = vunpack.c.h.b16 %v4673
  %v4758 = vunpack.c.l.b16 %v4674
  %v4759 = vunpack.c.h.b16 %v4674
  %v4760 = vunpack.c.l.b16 %v4675
  %v4761 = vunpack.c.h.b16 %v4675
  %v4762 = vunpack.c.l.b16 %v4676
  %v4763 = vunpack.c.h.b16 %v4676
  %v4764 = vunpack.c.l.b16 %v4677
  %v4765 = vunpack.c.h.b16 %v4677
  %v4766 = vunpack.c.l.b16 %v4678
  %v4767 = vunpack.c.h.b16 %v4678
  %v4768 = vunpack.c.l.b16 %v4679
  %v4769 = vunpack.c.h.b16 %v4679
  %v4770 = vunpack.c.l.b16 %v4680
  %v4771 = vunpack.c.h.b16 %v4680
  %v4772 = vunpack.c.l.b16 %v4681
  %v4773 = vunpack.c.h.b16 %v4681
  %v4774 = vunpack.c.l.b16 %v4682
  %v4775 = vunpack.c.h.b16 %v4682
  %v4776 = vunpack.c.l.b16 %v4683
  %v4777 = vunpack.c.h.b16 %v4683
  %v4778 = vunpack.c.l.b16 %v4684
  %v4779 = vunpack.c.h.b16 %v4684
  %v4780 = vunpack.c.l.b16 %v4685
  %v4781 = vunpack.c.h.b16 %v4685
  %v4782 = vpack.c.b16 %v4722, %v4718
  %v4783 = vpack.c.b16 %v4723, %v4719
  %v4784 = vpack.c.b16 %v4724, %v4720
  %v4785 = vpack.c.b16 %v4725, %v4721
  %v4786 = vpack.c.b16 %v4730, %v4726
  %v4787 = vpack.c.b16 %v4731, %v4727
  %v4788 = vpack.c.b16 %v4732, %v4728
  %v4789 = vpack.c.b16 %v4733, %v4729
  %v4790 = vpack.c.b16 %v4738, %v4734
  %v4791 = vpack.c.b16 %v4739, %v4735
  %v4792 = vpack.c.b16 %v4740, %v4736
  %v4793 = vpack.c.b16 %v4741, %v4737
  %v4794 = vpack.c.b16 %v4746, %v4742
  %v4795 = vpack.c.b16 %v4747, %v4743
  %v4796 = vpack.c.b16 %v4748, %v4744
  %v4797 = vpack.c.b16 %v4749, %v4745
  %v4798 = vpack.c.b16 %v4754, %v4750
  %v4799 = vpack.c.b16 %v4755, %v4751
  %v4800 = vpack.c.b16 %v4756, %v4752
  %v4801 = vpack.c.b16 %v4757, %v4753
  %v4802 = vpack.c.b16 %v4762, %v4758
  %v4803 = vpack.c.b16 %v4763, %v4759
  %v4804 = vpack.c.b16 %v4764, %v4760
  %v4805 = vpack.c.b16 %v4765, %v4761
  %v4806 = vpack.c.b16 %v4770, %v4766
  %v4807 = vpack.c.b16 %v4771, %v4767
  %v4808 = vpack.c.b16 %v4772, %v4768
  %v4809 = vpack.c.b16 %v4773, %v4769
  %v4810 = vpack.c.b16 %v4778, %v4774
  %v4811 = vpack.c.b16 %v4779, %v4775
  %v4812 = vpack.c.b16 %v4780, %v4776
  %v4813 = vpack.c.b16 %v4781, %v4777
  %4846 = vmatprep.subr.bf16.mxu0 %v4783
  %4847 = vmatpush1.bf16.msra.mxu0 %v4782
  %4848 = vmatprep.subr.bf16.mxu0 %v4787
  %4849 = vmatpush1.bf16.msra.mxu0 %v4786
  %4850 = vmatprep.subr.bf16.mxu0 %v4791
  %4851 = vmatpush1.bf16.msra.mxu0 %v4790
  %4852 = vmatprep.subr.bf16.mxu0 %v4795
  %4853 = vmatpush1.bf16.msra.mxu0 %v4794
  %4854 = vmatprep.subr.bf16.mxu0 %v4799
  %4855 = vmatpush1.bf16.msra.mxu0 %v4798
  %4856 = vmatprep.subr.bf16.mxu0 %v4803
  %4857 = vmatpush1.bf16.msra.mxu0 %v4802
  %4858 = vmatprep.subr.bf16.mxu0 %v4807
  %4859 = vmatpush1.bf16.msra.mxu0 %v4806
  %4860 = vmatprep.subr.bf16.mxu0 %v4811
  %4861 = vmatpush1.bf16.msra.mxu0 %v4810
  %4862 = vmatprep.subr.bf16.mxu0 0
  %4863 = vmatpush1.bf16.msra.mxu0 0
  %4864 = vmatprep.subr.bf16.mxu0 0
  %4865 = vmatpush1.bf16.msra.mxu0 0
  %4866 = vmatprep.subr.bf16.mxu0 0
  %4867 = vmatpush1.bf16.msra.mxu0 0
  %4868 = vmatprep.subr.bf16.mxu0 0
  %4869 = vmatpush1.bf16.msra.mxu0 0
  %4870 = vmatprep.subr.bf16.mxu0 0
  %4871 = vmatpush1.bf16.msra.mxu0 0
  %4872 = vmatprep.subr.bf16.mxu0 0
  %4873 = vmatpush1.bf16.msra.mxu0 0
  %4874 = vmatprep.subr.bf16.mxu0 0
  %4875 = vmatpush1.bf16.msra.mxu0 0
  %4876 = vmatprep.subr.bf16.mxu0 0
  %4877 = vmatpush1.bf16.msra.mxu0 0
  %4878 = vmatprep.mubr.bf16.mxu0 0
  %4879 = vmatmul.mubr.bf16.gmra.mrb[0].mxu0 %v4653
  %v4880 = vpop.f32.mrb[0].mxu0
  %v4881 = vadd.f32 0.0, %v4880
  %v4882 = vpop.f32.mrb[0].mxu0
  %v4883 = vadd.f32 0.0, %v4882
  %v4884 = vpop.f32.mrb[0].mxu0
  %v4885 = vpop.f32.mrb[0].mxu0
  %4886 = vdwg.mxu0
  %4887 = vmatprep.subr.bf16.mxu0 %v4785
  %4888 = vmatpush1.bf16.msra.mxu0 %v4784
  %4889 = vmatprep.subr.bf16.mxu0 %v4789
  %4890 = vmatpush1.bf16.msra.mxu0 %v4788
  %4891 = vmatprep.subr.bf16.mxu0 %v4793
  %4892 = vmatpush1.bf16.msra.mxu0 %v4792
  %4893 = vmatprep.subr.bf16.mxu0 %v4797
  %4894 = vmatpush1.bf16.msra.mxu0 %v4796
  %4895 = vmatprep.subr.bf16.mxu0 %v4801
  %4896 = vmatpush1.bf16.msra.mxu0 %v4800
  %4897 = vmatprep.subr.bf16.mxu0 %v4805
  %4898 = vmatpush1.bf16.msra.mxu0 %v4804
  %4899 = vmatprep.subr.bf16.mxu0 %v4809
  %4900 = vmatpush1.bf16.msra.mxu0 %v4808
  %4901 = vmatprep.subr.bf16.mxu0 %v4813
  %4902 = vmatpush1.bf16.msra.mxu0 %v4812
  %4903 = vmatprep.subr.bf16.mxu0 0
  %4904 = vmatpush1.bf16.msra.mxu0 0
  %4905 = vmatprep.subr.bf16.mxu0 0
  %4906 = vmatpush1.bf16.msra.mxu0 0
  %4907 = vmatprep.subr.bf16.mxu0 0
  %4908 = vmatpush1.bf16.msra.mxu0 0
  %4909 = vmatprep.subr.bf16.mxu0 0
  %4910 = vmatpush1.bf16.msra.mxu0 0
  %4911 = vmatprep.subr.bf16.mxu0 0
  %4912 = vmatpush1.bf16.msra.mxu0 0
  %4913 = vmatprep.subr.bf16.mxu0 0
  %4914 = vmatpush1.bf16.msra.mxu0 0
  %4915 = vmatprep.subr.bf16.mxu0 0
  %4916 = vmatpush1.bf16.msra.mxu0 0
  %4917 = vmatprep.subr.bf16.mxu0 0
  %4918 = vmatpush1.bf16.msra.mxu0 0
  %4919 = vmatprep.mubr.bf16.mxu0 0
  %4920 = vmatmul.mubr.bf16.gmra.mrb[0].mxu0 %v4653
  %v4921 = vpop.f32.mrb[0].mxu0
  %v4922 = vadd.f32 0.0, %v4921
  %v4923 = vpop.f32.mrb[0].mxu0
  %v4924 = vadd.f32 0.0, %v4923
  %v4925 = vpop.f32.mrb[0].mxu0
  %v4926 = vpop.f32.mrb[0].mxu0
  %4927 = vdwg.mxu0
  %v4928 = vadd.f32 %v4649, %v4881
  %v4929 = vadd.f32 %v4650, %v4883
  %v4930 = vadd.f32 %v4651, %v4922
  %v4931 = vadd.f32 %v4652, %v4924
  %v4932 = vxor.u32 %v4928, 2147483648
  %v4933 = vmul.f32 %v4932, 1.442695
  %v4934 = vpow.pop %v4933
  %v4935 = vadd.f32 %v4934, 1.0
  %v4936 = vrcp.pop %v4935
  %v4937 = vmul.f32 1.0, %v4936
  %v4938 = vxor.u32 %v4929, 2147483648
  %v4939 = vmul.f32 %v4938, 1.442695
  %v4940 = vpow.pop %v4939
  %v4941 = vadd.f32 %v4940, 1.0
  %v4942 = vrcp.pop %v4941
  %v4943 = vmul.f32 1.0, %v4942
  %v4944 = vtanh.pop %v4930
  %v4945 = vxor.u32 %v4931, 2147483648
  %v4946 = vmul.f32 %v4945, 1.442695
  %v4947 = vpow.pop %v4946
  %v4948 = vadd.f32 %v4947, 1.0
  %v4949 = vrcp.pop %v4948
  %v4950 = vmul.f32 1.0, %v4949
  %v4951 = vld [vmem:[#allocation4] sm:$0xff]
  %v4952 = vmul.f32 %v4943, %v4951
  %v4953 = vmul.f32 %v4937, %v4944
  %v4954 = vadd.f32 %v4952, %v4953
  %v4955 = vtanh.pop %v4954
  %v4956 = vmul.f32 %v4950, %v4955
  %4957 = vst [vmem:[#allocation4] sm:$0xff] %v4954
  %v4958 = vpack.c.bf16 %v4956, %v4956
  %4959 = vst [vmem:[#allocation3] sm:$0xf] %v4958
  %v4960 = vld [vmem:[#allocation3] sm:$0xff]
  %v4961 = vld [vmem:[%s4] sm:$0xff]
  %v4962 = vld [vmem:[%s4 + $0x8] sm:$0xff]
  %v4963 = vld [vmem:[%s4 + $0x10] sm:$0xff]
  %v4964 = vld [vmem:[%s4 + $0x18] sm:$0xff]
  %v4965 = vld [vmem:[%s4 + $0x20] sm:$0xff]
  %v4966 = vld [vmem:[%s4 + $0x28] sm:$0xff]
  %v4967 = vld [vmem:[%s4 + $0x30] sm:$0xff]
  %v4968 = vld [vmem:[%s4 + $0x38] sm:$0xff]
  %v4969 = vld [vmem:[%s4 + $0x40] sm:$0xff]
  %v4970 = vld [vmem:[%s4 + $0x48] sm:$0xff]
  %v4971 = vld [vmem:[%s4 + $0x50] sm:$0xff]
  %v4972 = vld [vmem:[%s4 + $0x58] sm:$0xff]
  %v4973 = vld [vmem:[%s4 + $0x60] sm:$0xff]
  %v4974 = vld [vmem:[%s4 + $0x68] sm:$0xff]
  %v4975 = vld [vmem:[%s4 + $0x70] sm:$0xff]
  %v4976 = vld [vmem:[%s4 + $0x78] sm:$0xff]
  %v4977 = vld [vmem:[%s4 + $0x80] sm:$0xff]
  %v4978 = vld [vmem:[%s4 + $0x88] sm:$0xff]
  %v4979 = vld [vmem:[%s4 + $0x90] sm:$0xff]
  %v4980 = vld [vmem:[%s4 + $0x98] sm:$0xff]
  %v4981 = vld [vmem:[%s4 + $0xa0] sm:$0xff]
  %v4982 = vld [vmem:[%s4 + $0xa8] sm:$0xff]
  %v4983 = vld [vmem:[%s4 + $0xb0] sm:$0xff]
  %v4984 = vld [vmem:[%s4 + $0xb8] sm:$0xff]
  %v4985 = vld [vmem:[%s4 + $0xc0] sm:$0xff]
  %v4986 = vld [vmem:[%s4 + $0xc8] sm:$0xff]
  %v4987 = vld [vmem:[%s4 + $0xd0] sm:$0xff]
  %v4988 = vld [vmem:[%s4 + $0xd8] sm:$0xff]
  %v4989 = vld [vmem:[%s4 + $0xe0] sm:$0xff]
  %v4990 = vld [vmem:[%s4 + $0xe8] sm:$0xff]
  %v4991 = vld [vmem:[%s4 + $0xf0] sm:$0xff]
  %v4992 = vld [vmem:[%s4 + $0xf8] sm:$0xff]
  %v4993 = vld [vmem:[%s4 + $0x100] sm:$0xff]
  %v4994 = vld [vmem:[%s4 + $0x108] sm:$0xff]
  %v4995 = vld [vmem:[%s4 + $0x110] sm:$0xff]
  %v4996 = vld [vmem:[%s4 + $0x118] sm:$0xff]
  %v4997 = vld [vmem:[%s4 + $0x120] sm:$0xff]
  %v4998 = vld [vmem:[%s4 + $0x128] sm:$0xff]
  %v4999 = vld [vmem:[%s4 + $0x130] sm:$0xff]
  %v5000 = vld [vmem:[%s4 + $0x138] sm:$0xff]
  %v5001 = vld [vmem:[%s4 + $0x140] sm:$0xff]
  %v5002 = vld [vmem:[%s4 + $0x148] sm:$0xff]
  %v5003 = vld [vmem:[%s4 + $0x150] sm:$0xff]
  %v5004 = vld [vmem:[%s4 + $0x158] sm:$0xff]
  %v5005 = vld [vmem:[%s4 + $0x160] sm:$0xff]
  %v5006 = vld [vmem:[%s4 + $0x168] sm:$0xff]
  %v5007 = vld [vmem:[%s4 + $0x170] sm:$0xff]
  %v5008 = vld [vmem:[%s4 + $0x178] sm:$0xff]
  %v5009 = vld [vmem:[%s4 + $0x180] sm:$0xff]
  %v5010 = vld [vmem:[%s4 + $0x188] sm:$0xff]
  %v5011 = vld [vmem:[%s4 + $0x190] sm:$0xff]
  %v5012 = vld [vmem:[%s4 + $0x198] sm:$0xff]
  %v5013 = vld [vmem:[%s4 + $0x1a0] sm:$0xff]
  %v5014 = vld [vmem:[%s4 + $0x1a8] sm:$0xff]
  %v5015 = vld [vmem:[%s4 + $0x1b0] sm:$0xff]
  %v5016 = vld [vmem:[%s4 + $0x1b8] sm:$0xff]
  %v5017 = vld [vmem:[%s4 + $0x1c0] sm:$0xff]
  %v5018 = vld [vmem:[%s4 + $0x1c8] sm:$0xff]
  %v5019 = vld [vmem:[%s4 + $0x1d0] sm:$0xff]
  %v5020 = vld [vmem:[%s4 + $0x1d8] sm:$0xff]
  %v5021 = vld [vmem:[%s4 + $0x1e0] sm:$0xff]
  %v5022 = vld [vmem:[%s4 + $0x1e8] sm:$0xff]
  %v5023 = vld [vmem:[%s4 + $0x1f0] sm:$0xff]
  %v5024 = vld [vmem:[%s4 + $0x1f8] sm:$0xff]
  %v5025 = vld [vmem:[%s5] sm:$0xf]
  %v5027 = vlaneseq
  %v5028 = vshrl.u32 %v5027, 7
  %v5029 = vsub.s32 0, %v5028
  %v5030 = vrot.slane %v5025, %v5029
  %v5031 = vlaneseq
  %v5032 = vshrl.u32 %v5031, 7
  %v5033 = vsub.s32 1, %v5032
  %v5034 = vrot.slane %v5025, %v5033
  %v5035 = vlaneseq
  %v5036 = vshrl.u32 %v5035, 7
  %v5037 = vsub.s32 2, %v5036
  %v5038 = vrot.slane %v5025, %v5037
  %v5039 = vlaneseq
  %v5040 = vshrl.u32 %v5039, 7
  %v5041 = vsub.s32 3, %v5040
  %v5042 = vrot.slane %v5025, %v5041
  %v5048 = vunpack.c.l.b16 %v4960
  %v5049 = vunpack.c.h.b16 %v4960
  %v5050 = vpack.c.b16 %v5048, %v5048
  %v5051 = vpack.c.b16 %v5049, %v5049
  %v5118 = vunpack.c.l.b16 %v4961
  %v5119 = vunpack.c.h.b16 %v4961
  %v5120 = vunpack.c.l.b16 %v4962
  %v5121 = vunpack.c.h.b16 %v4962
  %v5122 = vunpack.c.l.b16 %v4963
  %v5123 = vunpack.c.h.b16 %v4963
  %v5124 = vunpack.c.l.b16 %v4964
  %v5125 = vunpack.c.h.b16 %v4964
  %v5126 = vunpack.c.l.b16 %v4965
  %v5127 = vunpack.c.h.b16 %v4965
  %v5128 = vunpack.c.l.b16 %v4966
  %v5129 = vunpack.c.h.b16 %v4966
  %v5130 = vunpack.c.l.b16 %v4967
  %v5131 = vunpack.c.h.b16 %v4967
  %v5132 = vunpack.c.l.b16 %v4968
  %v5133 = vunpack.c.h.b16 %v4968
  %v5134 = vunpack.c.l.b16 %v4969
  %v5135 = vunpack.c.h.b16 %v4969
  %v5136 = vunpack.c.l.b16 %v4970
  %v5137 = vunpack.c.h.b16 %v4970
  %v5138 = vunpack.c.l.b16 %v4971
  %v5139 = vunpack.c.h.b16 %v4971
  %v5140 = vunpack.c.l.b16 %v4972
  %v5141 = vunpack.c.h.b16 %v4972
  %v5142 = vunpack.c.l.b16 %v4973
  %v5143 = vunpack.c.h.b16 %v4973
  %v5144 = vunpack.c.l.b16 %v4974
  %v5145 = vunpack.c.h.b16 %v4974
  %v5146 = vunpack.c.l.b16 %v4975
  %v5147 = vunpack.c.h.b16 %v4975
  %v5148 = vunpack.c.l.b16 %v4976
  %v5149 = vunpack.c.h.b16 %v4976
  %v5150 = vunpack.c.l.b16 %v4977
  %v5151 = vunpack.c.h.b16 %v4977
  %v5152 = vunpack.c.l.b16 %v4978
  %v5153 = vunpack.c.h.b16 %v4978
  %v5154 = vunpack.c.l.b16 %v4979
  %v5155 = vunpack.c.h.b16 %v4979
  %v5156 = vunpack.c.l.b16 %v4980
  %v5157 = vunpack.c.h.b16 %v4980
  %v5158 = vunpack.c.l.b16 %v4981
  %v5159 = vunpack.c.h.b16 %v4981
  %v5160 = vunpack.c.l.b16 %v4982
  %v5161 = vunpack.c.h.b16 %v4982
  %v5162 = vunpack.c.l.b16 %v4983
  %v5163 = vunpack.c.h.b16 %v4983
  %v5164 = vunpack.c.l.b16 %v4984
  %v5165 = vunpack.c.h.b16 %v4984
  %v5166 = vunpack.c.l.b16 %v4985
  %v5167 = vunpack.c.h.b16 %v4985
  %v5168 = vunpack.c.l.b16 %v4986
  %v5169 = vunpack.c.h.b16 %v4986
  %v5170 = vunpack.c.l.b16 %v4987
  %v5171 = vunpack.c.h.b16 %v4987
  %v5172 = vunpack.c.l.b16 %v4988
  %v5173 = vunpack.c.h.b16 %v4988
  %v5174 = vunpack.c.l.b16 %v4989
  %v5175 = vunpack.c.h.b16 %v4989
  %v5176 = vunpack.c.l.b16 %v4990
  %v5177 = vunpack.c.h.b16 %v4990
  %v5178 = vunpack.c.l.b16 %v4991
  %v5179 = vunpack.c.h.b16 %v4991
  %v5180 = vunpack.c.l.b16 %v4992
  %v5181 = vunpack.c.h.b16 %v4992
  %v5182 = vunpack.c.l.b16 %v4993
  %v5183 = vunpack.c.h.b16 %v4993
  %v5184 = vunpack.c.l.b16 %v4994
  %v5185 = vunpack.c.h.b16 %v4994
  %v5186 = vunpack.c.l.b16 %v4995
  %v5187 = vunpack.c.h.b16 %v4995
  %v5188 = vunpack.c.l.b16 %v4996
  %v5189 = vunpack.c.h.b16 %v4996
  %v5190 = vunpack.c.l.b16 %v4997
  %v5191 = vunpack.c.h.b16 %v4997
  %v5192 = vunpack.c.l.b16 %v4998
  %v5193 = vunpack.c.h.b16 %v4998
  %v5194 = vunpack.c.l.b16 %v4999
  %v5195 = vunpack.c.h.b16 %v4999
  %v5196 = vunpack.c.l.b16 %v5000
  %v5197 = vunpack.c.h.b16 %v5000
  %v5198 = vunpack.c.l.b16 %v5001
  %v5199 = vunpack.c.h.b16 %v5001
  %v5200 = vunpack.c.l.b16 %v5002
  %v5201 = vunpack.c.h.b16 %v5002
  %v5202 = vunpack.c.l.b16 %v5003
  %v5203 = vunpack.c.h.b16 %v5003
  %v5204 = vunpack.c.l.b16 %v5004
  %v5205 = vunpack.c.h.b16 %v5004
  %v5206 = vunpack.c.l.b16 %v5005
  %v5207 = vunpack.c.h.b16 %v5005
  %v5208 = vunpack.c.l.b16 %v5006
  %v5209 = vunpack.c.h.b16 %v5006
  %v5210 = vunpack.c.l.b16 %v5007
  %v5211 = vunpack.c.h.b16 %v5007
  %v5212 = vunpack.c.l.b16 %v5008
  %v5213 = vunpack.c.h.b16 %v5008
  %v5214 = vunpack.c.l.b16 %v5009
  %v5215 = vunpack.c.h.b16 %v5009
  %v5216 = vunpack.c.l.b16 %v5010
  %v5217 = vunpack.c.h.b16 %v5010
  %v5218 = vunpack.c.l.b16 %v5011
  %v5219 = vunpack.c.h.b16 %v5011
  %v5220 = vunpack.c.l.b16 %v5012
  %v5221 = vunpack.c.h.b16 %v5012
  %v5222 = vunpack.c.l.b16 %v5013
  %v5223 = vunpack.c.h.b16 %v5013
  %v5224 = vunpack.c.l.b16 %v5014
  %v5225 = vunpack.c.h.b16 %v5014
  %v5226 = vunpack.c.l.b16 %v5015
  %v5227 = vunpack.c.h.b16 %v5015
  %v5228 = vunpack.c.l.b16 %v5016
  %v5229 = vunpack.c.h.b16 %v5016
  %v5230 = vunpack.c.l.b16 %v5017
  %v5231 = vunpack.c.h.b16 %v5017
  %v5232 = vunpack.c.l.b16 %v5018
  %v5233 = vunpack.c.h.b16 %v5018
  %v5234 = vunpack.c.l.b16 %v5019
  %v5235 = vunpack.c.h.b16 %v5019
  %v5236 = vunpack.c.l.b16 %v5020
  %v5237 = vunpack.c.h.b16 %v5020
  %v5238 = vunpack.c.l.b16 %v5021
  %v5239 = vunpack.c.h.b16 %v5021
  %v5240 = vunpack.c.l.b16 %v5022
  %v5241 = vunpack.c.h.b16 %v5022
  %v5242 = vunpack.c.l.b16 %v5023
  %v5243 = vunpack.c.h.b16 %v5023
  %v5244 = vunpack.c.l.b16 %v5024
  %v5245 = vunpack.c.h.b16 %v5024
  %v5246 = vpack.c.b16 %v5122, %v5118
  %v5247 = vpack.c.b16 %v5123, %v5119
  %v5248 = vpack.c.b16 %v5124, %v5120
  %v5249 = vpack.c.b16 %v5125, %v5121
  %v5250 = vpack.c.b16 %v5130, %v5126
  %v5251 = vpack.c.b16 %v5131, %v5127
  %v5252 = vpack.c.b16 %v5132, %v5128
  %v5253 = vpack.c.b16 %v5133, %v5129
  %v5254 = vpack.c.b16 %v5138, %v5134
  %v5255 = vpack.c.b16 %v5139, %v5135
  %v5256 = vpack.c.b16 %v5140, %v5136
  %v5257 = vpack.c.b16 %v5141, %v5137
  %v5258 = vpack.c.b16 %v5146, %v5142
  %v5259 = vpack.c.b16 %v5147, %v5143
  %v5260 = vpack.c.b16 %v5148, %v5144
  %v5261 = vpack.c.b16 %v5149, %v5145
  %v5262 = vpack.c.b16 %v5154, %v5150
  %v5263 = vpack.c.b16 %v5155, %v5151
  %v5264 = vpack.c.b16 %v5156, %v5152
  %v5265 = vpack.c.b16 %v5157, %v5153
  %v5266 = vpack.c.b16 %v5162, %v5158
  %v5267 = vpack.c.b16 %v5163, %v5159
  %v5268 = vpack.c.b16 %v5164, %v5160
  %v5269 = vpack.c.b16 %v5165, %v5161
  %v5270 = vpack.c.b16 %v5170, %v5166
  %v5271 = vpack.c.b16 %v5171, %v5167
  %v5272 = vpack.c.b16 %v5172, %v5168
  %v5273 = vpack.c.b16 %v5173, %v5169
  %v5274 = vpack.c.b16 %v5178, %v5174
  %v5275 = vpack.c.b16 %v5179, %v5175
  %v5276 = vpack.c.b16 %v5180, %v5176
  %v5277 = vpack.c.b16 %v5181, %v5177
  %v5278 = vpack.c.b16 %v5186, %v5182
  %v5279 = vpack.c.b16 %v5187, %v5183
  %v5280 = vpack.c.b16 %v5188, %v5184
  %v5281 = vpack.c.b16 %v5189, %v5185
  %v5282 = vpack.c.b16 %v5194, %v5190
  %v5283 = vpack.c.b16 %v5195, %v5191
  %v5284 = vpack.c.b16 %v5196, %v5192
  %v5285 = vpack.c.b16 %v5197, %v5193
  %v5286 = vpack.c.b16 %v5202, %v5198
  %v5287 = vpack.c.b16 %v5203, %v5199
  %v5288 = vpack.c.b16 %v5204, %v5200
  %v5289 = vpack.c.b16 %v5205, %v5201
  %v5290 = vpack.c.b16 %v5210, %v5206
  %v5291 = vpack.c.b16 %v5211, %v5207
  %v5292 = vpack.c.b16 %v5212, %v5208
  %v5293 = vpack.c.b16 %v5213, %v5209
  %v5294 = vpack.c.b16 %v5218, %v5214
  %v5295 = vpack.c.b16 %v5219, %v5215
  %v5296 = vpack.c.b16 %v5220, %v5216
  %v5297 = vpack.c.b16 %v5221, %v5217
  %v5298 = vpack.c.b16 %v5226, %v5222
  %v5299 = vpack.c.b16 %v5227, %v5223
  %v5300 = vpack.c.b16 %v5228, %v5224
  %v5301 = vpack.c.b16 %v5229, %v5225
  %v5302 = vpack.c.b16 %v5234, %v5230
  %v5303 = vpack.c.b16 %v5235, %v5231
  %v5304 = vpack.c.b16 %v5236, %v5232
  %v5305 = vpack.c.b16 %v5237, %v5233
  %v5306 = vpack.c.b16 %v5242, %v5238
  %v5307 = vpack.c.b16 %v5243, %v5239
  %v5308 = vpack.c.b16 %v5244, %v5240
  %v5309 = vpack.c.b16 %v5245, %v5241
  %5374 = vmatprep.subr.bf16.mxu0 %v5247
  %5375 = vmatpush1.bf16.msra.mxu0 %v5246
  %5376 = vmatprep.subr.bf16.mxu0 %v5251
  %5377 = vmatpush1.bf16.msra.mxu0 %v5250
  %5378 = vmatprep.subr.bf16.mxu0 %v5255
  %5379 = vmatpush1.bf16.msra.mxu0 %v5254
  %5380 = vmatprep.subr.bf16.mxu0 %v5259
  %5381 = vmatpush1.bf16.msra.mxu0 %v5258
  %5382 = vmatprep.subr.bf16.mxu0 %v5263
  %5383 = vmatpush1.bf16.msra.mxu0 %v5262
  %5384 = vmatprep.subr.bf16.mxu0 %v5267
  %5385 = vmatpush1.bf16.msra.mxu0 %v5266
  %5386 = vmatprep.subr.bf16.mxu0 %v5271
  %5387 = vmatpush1.bf16.msra.mxu0 %v5270
  %5388 = vmatprep.subr.bf16.mxu0 %v5275
  %5389 = vmatpush1.bf16.msra.mxu0 %v5274
  %5390 = vmatprep.subr.bf16.mxu0 %v5279
  %5391 = vmatpush1.bf16.msra.mxu0 %v5278
  %5392 = vmatprep.subr.bf16.mxu0 %v5283
  %5393 = vmatpush1.bf16.msra.mxu0 %v5282
  %5394 = vmatprep.subr.bf16.mxu0 %v5287
  %5395 = vmatpush1.bf16.msra.mxu0 %v5286
  %5396 = vmatprep.subr.bf16.mxu0 %v5291
  %5397 = vmatpush1.bf16.msra.mxu0 %v5290
  %5398 = vmatprep.subr.bf16.mxu0 %v5295
  %5399 = vmatpush1.bf16.msra.mxu0 %v5294
  %5400 = vmatprep.subr.bf16.mxu0 %v5299
  %5401 = vmatpush1.bf16.msra.mxu0 %v5298
  %5402 = vmatprep.subr.bf16.mxu0 %v5303
  %5403 = vmatpush1.bf16.msra.mxu0 %v5302
  %5404 = vmatprep.subr.bf16.mxu0 %v5307
  %5405 = vmatpush1.bf16.msra.mxu0 %v5306
  %5406 = vmatprep.mubr.bf16.mxu0 %v5051
  %5407 = vmatmul.mubr.bf16.gmra.mrb[0].mxu0 %v5050
  %v5408 = vpop.f32.mrb[0].mxu0
  %v5409 = vadd.f32 %v5030, %v5408
  %v5410 = vpop.f32.mrb[0].mxu0
  %v5411 = vadd.f32 %v5034, %v5410
  %v5412 = vpop.f32.mrb[0].mxu0
  %v5413 = vpop.f32.mrb[0].mxu0
  %5414 = vdwg.mxu0
  %5415 = vmatprep.subr.bf16.mxu0 %v5249
  %5416 = vmatpush1.bf16.msra.mxu0 %v5248
  %5417 = vmatprep.subr.bf16.mxu0 %v5253
  %5418 = vmatpush1.bf16.msra.mxu0 %v5252
  %5419 = vmatprep.subr.bf16.mxu0 %v5257
  %5420 = vmatpush1.bf16.msra.mxu0 %v5256
  %5421 = vmatprep.subr.bf16.mxu0 %v5261
  %5422 = vmatpush1.bf16.msra.mxu0 %v5260
  %5423 = vmatprep.subr.bf16.mxu0 %v5265
  %5424 = vmatpush1.bf16.msra.mxu0 %v5264
  %5425 = vmatprep.subr.bf16.mxu0 %v5269
  %5426 = vmatpush1.bf16.msra.mxu0 %v5268
  %5427 = vmatprep.subr.bf16.mxu0 %v5273
  %5428 = vmatpush1.bf16.msra.mxu0 %v5272
  %5429 = vmatprep.subr.bf16.mxu0 %v5277
  %5430 = vmatpush1.bf16.msra.mxu0 %v5276
  %5431 = vmatprep.subr.bf16.mxu0 %v5281
  %5432 = vmatpush1.bf16.msra.mxu0 %v5280
  %5433 = vmatprep.subr.bf16.mxu0 %v5285
  %5434 = vmatpush1.bf16.msra.mxu0 %v5284
  %5435 = vmatprep.subr.bf16.mxu0 %v5289
  %5436 = vmatpush1.bf16.msra.mxu0 %v5288
  %5437 = vmatprep.subr.bf16.mxu0 %v5293
  %5438 = vmatpush1.bf16.msra.mxu0 %v5292
  %5439 = vmatprep.subr.bf16.mxu0 %v5297
  %5440 = vmatpush1.bf16.msra.mxu0 %v5296
  %5441 = vmatprep.subr.bf16.mxu0 %v5301
  %5442 = vmatpush1.bf16.msra.mxu0 %v5300
  %5443 = vmatprep.subr.bf16.mxu0 %v5305
  %5444 = vmatpush1.bf16.msra.mxu0 %v5304
  %5445 = vmatprep.subr.bf16.mxu0 %v5309
  %5446 = vmatpush1.bf16.msra.mxu0 %v5308
  %5447 = vmatprep.mubr.bf16.mxu0 %v5051
  %5448 = vmatmul.mubr.bf16.gmra.mrb[0].mxu0 %v5050
  %v5449 = vpop.f32.mrb[0].mxu0
  %v5450 = vadd.f32 %v5038, %v5449
  %v5451 = vpop.f32.mrb[0].mxu0
  %v5452 = vadd.f32 %v5042, %v5451
  %v5453 = vpop.f32.mrb[0].mxu0
  %v5454 = vpop.f32.mrb[0].mxu0
  %5455 = vdwg.mxu0
  %v5456 = vxor.u32 %v5409, 2147483648
  %v5457 = vmul.f32 %v5456, 1.442695
  %v5458 = vpow.pop %v5457
  %v5459 = vadd.f32 %v5458, 1.0
  %v5460 = vrcp.pop %v5459
  %v5461 = vmul.f32 1.0, %v5460
  %v5462 = vxor.u32 %v5411, 2147483648
  %v5463 = vmul.f32 %v5462, 1.442695
  %v5464 = vpow.pop %v5463
  %v5465 = vadd.f32 %v5464, 1.0
  %v5466 = vrcp.pop %v5465
  %v5467 = vmul.f32 1.0, %v5466
  %v5468 = vtanh.pop %v5450
  %v5469 = vxor.u32 %v5452, 2147483648
  %v5470 = vmul.f32 %v5469, 1.442695
  %v5471 = vpow.pop %v5470
  %v5472 = vadd.f32 %v5471, 1.0
  %v5473 = vrcp.pop %v5472
  %v5474 = vmul.f32 1.0, %v5473
  %v5475 = vld [vmem:[#allocation5] sm:$0xff]
  %v5476 = vmul.f32 %v5467, %v5475
  %v5477 = vmul.f32 %v5461, %v5468
  %v5478 = vadd.f32 %v5476, %v5477
  %v5479 = vtanh.pop %v5478
  %v5480 = vmul.f32 %v5474, %v5479
  %5481 = vst [vmem:[#allocation5] sm:$0xff] %v5478
  %5482 = vst [vmem:[#allocation6] sm:$0xff] %v5480
  %v5483 = vpack.c.bf16 %v5480, %v5480
  %5484 = vst [vmem:[#allocation3 + $0x4] sm:$0xf] %v5483
  %s5485 = scalar_lea.vmem [#allocation2], 192
  %v5486 = vld [vmem:[%s5485] sm:$0xff]
  %v5487 = vld [vmem:[%s5485 + $0x8] sm:$0xff]
  %v5488 = vld [vmem:[%s5485 + $0x10] sm:$0xff]
  %v5489 = vld [vmem:[%s5485 + $0x18] sm:$0xff]
  %v5490 = vld [vmem:[#allocation3] sm:$0xf]
  %v5491 = vld [vmem:[%s2] sm:$0xff]
  %v5492 = vld [vmem:[%s2 + $0x8] sm:$0xff]
  %v5493 = vld [vmem:[%s2 + $0x10] sm:$0xff]
  %v5494 = vld [vmem:[%s2 + $0x18] sm:$0xff]
  %v5495 = vld [vmem:[%s2 + $0x20] sm:$0xff]
  %v5496 = vld [vmem:[%s2 + $0x28] sm:$0xff]
  %v5497 = vld [vmem:[%s2 + $0x30] sm:$0xff]
  %v5498 = vld [vmem:[%s2 + $0x38] sm:$0xff]
  %v5499 = vld [vmem:[%s2 + $0x40] sm:$0xff]
  %v5500 = vld [vmem:[%s2 + $0x48] sm:$0xff]
  %v5501 = vld [vmem:[%s2 + $0x50] sm:$0xff]
  %v5502 = vld [vmem:[%s2 + $0x58] sm:$0xff]
  %v5503 = vld [vmem:[%s2 + $0x60] sm:$0xff]
  %v5504 = vld [vmem:[%s2 + $0x68] sm:$0xff]
  %v5505 = vld [vmem:[%s2 + $0x70] sm:$0xff]
  %v5506 = vld [vmem:[%s2 + $0x78] sm:$0xff]
  %v5507 = vld [vmem:[%s2 + $0x80] sm:$0xff]
  %v5508 = vld [vmem:[%s2 + $0x88] sm:$0xff]
  %v5509 = vld [vmem:[%s2 + $0x90] sm:$0xff]
  %v5510 = vld [vmem:[%s2 + $0x98] sm:$0xff]
  %v5511 = vld [vmem:[%s2 + $0xa0] sm:$0xff]
  %v5512 = vld [vmem:[%s2 + $0xa8] sm:$0xff]
  %v5513 = vld [vmem:[%s2 + $0xb0] sm:$0xff]
  %v5514 = vld [vmem:[%s2 + $0xb8] sm:$0xff]
  %v5515 = vld [vmem:[%s2 + $0xc0] sm:$0xff]
  %v5516 = vld [vmem:[%s2 + $0xc8] sm:$0xff]
  %v5517 = vld [vmem:[%s2 + $0xd0] sm:$0xff]
  %v5518 = vld [vmem:[%s2 + $0xd8] sm:$0xff]
  %v5519 = vld [vmem:[%s2 + $0xe0] sm:$0xff]
  %v5520 = vld [vmem:[%s2 + $0xe8] sm:$0xff]
  %v5521 = vld [vmem:[%s2 + $0xf0] sm:$0xff]
  %v5522 = vld [vmem:[%s2 + $0xf8] sm:$0xff]
  %v5555 = vunpack.c.l.b16 %v5491
  %v5556 = vunpack.c.h.b16 %v5491
  %v5557 = vunpack.c.l.b16 %v5492
  %v5558 = vunpack.c.h.b16 %v5492
  %v5559 = vunpack.c.l.b16 %v5493
  %v5560 = vunpack.c.h.b16 %v5493
  %v5561 = vunpack.c.l.b16 %v5494
  %v5562 = vunpack.c.h.b16 %v5494
  %v5563 = vunpack.c.l.b16 %v5495
  %v5564 = vunpack.c.h.b16 %v5495
  %v5565 = vunpack.c.l.b16 %v5496
  %v5566 = vunpack.c.h.b16 %v5496
  %v5567 = vunpack.c.l.b16 %v5497
  %v5568 = vunpack.c.h.b16 %v5497
  %v5569 = vunpack.c.l.b16 %v5498
  %v5570 = vunpack.c.h.b16 %v5498
  %v5571 = vunpack.c.l.b16 %v5499
  %v5572 = vunpack.c.h.b16 %v5499
  %v5573 = vunpack.c.l.b16 %v5500
  %v5574 = vunpack.c.h.b16 %v5500
  %v5575 = vunpack.c.l.b16 %v5501
  %v5576 = vunpack.c.h.b16 %v5501
  %v5577 = vunpack.c.l.b16 %v5502
  %v5578 = vunpack.c.h.b16 %v5502
  %v5579 = vunpack.c.l.b16 %v5503
  %v5580 = vunpack.c.h.b16 %v5503
  %v5581 = vunpack.c.l.b16 %v5504
  %v5582 = vunpack.c.h.b16 %v5504
  %v5583 = vunpack.c.l.b16 %v5505
  %v5584 = vunpack.c.h.b16 %v5505
  %v5585 = vunpack.c.l.b16 %v5506
  %v5586 = vunpack.c.h.b16 %v5506
  %v5587 = vunpack.c.l.b16 %v5507
  %v5588 = vunpack.c.h.b16 %v5507
  %v5589 = vunpack.c.l.b16 %v5508
  %v5590 = vunpack.c.h.b16 %v5508
  %v5591 = vunpack.c.l.b16 %v5509
  %v5592 = vunpack.c.h.b16 %v5509
  %v5593 = vunpack.c.l.b16 %v5510
  %v5594 = vunpack.c.h.b16 %v5510
  %v5595 = vunpack.c.l.b16 %v5511
  %v5596 = vunpack.c.h.b16 %v5511
  %v5597 = vunpack.c.l.b16 %v5512
  %v5598 = vunpack.c.h.b16 %v5512
  %v5599 = vunpack.c.l.b16 %v5513
  %v5600 = vunpack.c.h.b16 %v5513
  %v5601 = vunpack.c.l.b16 %v5514
  %v5602 = vunpack.c.h.b16 %v5514
  %v5603 = vunpack.c.l.b16 %v5515
  %v5604 = vunpack.c.h.b16 %v5515
  %v5605 = vunpack.c.l.b16 %v5516
  %v5606 = vunpack.c.h.b16 %v5516
  %v5607 = vunpack.c.l.b16 %v5517
  %v5608 = vunpack.c.h.b16 %v5517
  %v5609 = vunpack.c.l.b16 %v5518
  %v5610 = vunpack.c.h.b16 %v5518
  %v5611 = vunpack.c.l.b16 %v5519
  %v5612 = vunpack.c.h.b16 %v5519
  %v5613 = vunpack.c.l.b16 %v5520
  %v5614 = vunpack.c.h.b16 %v5520
  %v5615 = vunpack.c.l.b16 %v5521
  %v5616 = vunpack.c.h.b16 %v5521
  %v5617 = vunpack.c.l.b16 %v5522
  %v5618 = vunpack.c.h.b16 %v5522
  %v5619 = vpack.c.b16 %v5559, %v5555
  %v5620 = vpack.c.b16 %v5560, %v5556
  %v5621 = vpack.c.b16 %v5561, %v5557
  %v5622 = vpack.c.b16 %v5562, %v5558
  %v5623 = vpack.c.b16 %v5567, %v5563
  %v5624 = vpack.c.b16 %v5568, %v5564
  %v5625 = vpack.c.b16 %v5569, %v5565
  %v5626 = vpack.c.b16 %v5570, %v5566
  %v5627 = vpack.c.b16 %v5575, %v5571
  %v5628 = vpack.c.b16 %v5576, %v5572
  %v5629 = vpack.c.b16 %v5577, %v5573
  %v5630 = vpack.c.b16 %v5578, %v5574
  %v5631 = vpack.c.b16 %v5583, %v5579
  %v5632 = vpack.c.b16 %v5584, %v5580
  %v5633 = vpack.c.b16 %v5585, %v5581
  %v5634 = vpack.c.b16 %v5586, %v5582
  %v5635 = vpack.c.b16 %v5591, %v5587
  %v5636 = vpack.c.b16 %v5592, %v5588
  %v5637 = vpack.c.b16 %v5593, %v5589
  %v5638 = vpack.c.b16 %v5594, %v5590
  %v5639 = vpack.c.b16 %v5599, %v5595
  %v5640 = vpack.c.b16 %v5600, %v5596
  %v5641 = vpack.c.b16 %v5601, %v5597
  %v5642 = vpack.c.b16 %v5602, %v5598
  %v5643 = vpack.c.b16 %v5607, %v5603
  %v5644 = vpack.c.b16 %v5608, %v5604
  %v5645 = vpack.c.b16 %v5609, %v5605
  %v5646 = vpack.c.b16 %v5610, %v5606
  %v5647 = vpack.c.b16 %v5615, %v5611
  %v5648 = vpack.c.b16 %v5616, %v5612
  %v5649 = vpack.c.b16 %v5617, %v5613
  %v5650 = vpack.c.b16 %v5618, %v5614
  %5683 = vmatprep.subr.bf16.mxu0 %v5620
  %5684 = vmatpush1.bf16.msra.mxu0 %v5619
  %5685 = vmatprep.subr.bf16.mxu0 %v5624
  %5686 = vmatpush1.bf16.msra.mxu0 %v5623
  %5687 = vmatprep.subr.bf16.mxu0 %v5628
  %5688 = vmatpush1.bf16.msra.mxu0 %v5627
  %5689 = vmatprep.subr.bf16.mxu0 %v5632
  %5690 = vmatpush1.bf16.msra.mxu0 %v5631
  %5691 = vmatprep.subr.bf16.mxu0 %v5636
  %5692 = vmatpush1.bf16.msra.mxu0 %v5635
  %5693 = vmatprep.subr.bf16.mxu0 %v5640
  %5694 = vmatpush1.bf16.msra.mxu0 %v5639
  %5695 = vmatprep.subr.bf16.mxu0 %v5644
  %5696 = vmatpush1.bf16.msra.mxu0 %v5643
  %5697 = vmatprep.subr.bf16.mxu0 %v5648
  %5698 = vmatpush1.bf16.msra.mxu0 %v5647
  %5699 = vmatprep.subr.bf16.mxu0 0
  %5700 = vmatpush1.bf16.msra.mxu0 0
  %5701 = vmatprep.subr.bf16.mxu0 0
  %5702 = vmatpush1.bf16.msra.mxu0 0
  %5703 = vmatprep.subr.bf16.mxu0 0
  %5704 = vmatpush1.bf16.msra.mxu0 0
  %5705 = vmatprep.subr.bf16.mxu0 0
  %5706 = vmatpush1.bf16.msra.mxu0 0
  %5707 = vmatprep.subr.bf16.mxu0 0
  %5708 = vmatpush1.bf16.msra.mxu0 0
  %5709 = vmatprep.subr.bf16.mxu0 0
  %5710 = vmatpush1.bf16.msra.mxu0 0
  %5711 = vmatprep.subr.bf16.mxu0 0
  %5712 = vmatpush1.bf16.msra.mxu0 0
  %5713 = vmatprep.subr.bf16.mxu0 0
  %5714 = vmatpush1.bf16.msra.mxu0 0
  %5715 = vmatprep.mubr.bf16.mxu0 0
  %5716 = vmatmul.mubr.bf16.gmra.mrb[0].mxu0 %v5490
  %v5717 = vpop.f32.mrb[0].mxu0
  %v5718 = vadd.f32 0.0, %v5717
  %v5719 = vpop.f32.mrb[0].mxu0
  %v5720 = vadd.f32 0.0, %v5719
  %v5721 = vpop.f32.mrb[0].mxu0
  %v5722 = vpop.f32.mrb[0].mxu0
  %5723 = vdwg.mxu0
  %5724 = vmatprep.subr.bf16.mxu0 %v5622
  %5725 = vmatpush1.bf16.msra.mxu0 %v5621
  %5726 = vmatprep.subr.bf16.mxu0 %v5626
  %5727 = vmatpush1.bf16.msra.mxu0 %v5625
  %5728 = vmatprep.subr.bf16.mxu0 %v5630
  %5729 = vmatpush1.bf16.msra.mxu0 %v5629
  %5730 = vmatprep.subr.bf16.mxu0 %v5634
  %5731 = vmatpush1.bf16.msra.mxu0 %v5633
  %5732 = vmatprep.subr.bf16.mxu0 %v5638
  %5733 = vmatpush1.bf16.msra.mxu0 %v5637
  %5734 = vmatprep.subr.bf16.mxu0 %v5642
  %5735 = vmatpush1.bf16.msra.mxu0 %v5641
  %5736 = vmatprep.subr.bf16.mxu0 %v5646
  %5737 = vmatpush1.bf16.msra.mxu0 %v5645
  %5738 = vmatprep.subr.bf16.mxu0 %v5650
  %5739 = vmatpush1.bf16.msra.mxu0 %v5649
  %5740 = vmatprep.subr.bf16.mxu0 0
  %5741 = vmatpush1.bf16.msra.mxu0 0
  %5742 = vmatprep.subr.bf16.mxu0 0
  %5743 = vmatpush1.bf16.msra.mxu0 0
  %5744 = vmatprep.subr.bf16.mxu0 0
  %5745 = vmatpush1.bf16.msra.mxu0 0
  %5746 = vmatprep.subr.bf16.mxu0 0
  %5747 = vmatpush1.bf16.msra.mxu0 0
  %5748 = vmatprep.subr.bf16.mxu0 0
  %5749 = vmatpush1.bf16.msra.mxu0 0
  %5750 = vmatprep.subr.bf16.mxu0 0
  %5751 = vmatpush1.bf16.msra.mxu0 0
  %5752 = vmatprep.subr.bf16.mxu0 0
  %5753 = vmatpush1.bf16.msra.mxu0 0
  %5754 = vmatprep.subr.bf16.mxu0 0
  %5755 = vmatpush1.bf16.msra.mxu0 0
  %5756 = vmatprep.mubr.bf16.mxu0 0
  %5757 = vmatmul.mubr.bf16.gmra.mrb[0].mxu0 %v5490
  %v5758 = vpop.f32.mrb[0].mxu0
  %v5759 = vadd.f32 0.0, %v5758
  %v5760 = vpop.f32.mrb[0].mxu0
  %v5761 = vadd.f32 0.0, %v5760
  %v5762 = vpop.f32.mrb[0].mxu0
  %v5763 = vpop.f32.mrb[0].mxu0
  %5764 = vdwg.mxu0
  %v5765 = vadd.f32 %v5486, %v5718
  %v5766 = vadd.f32 %v5487, %v5720
  %v5767 = vadd.f32 %v5488, %v5759
  %v5768 = vadd.f32 %v5489, %v5761
  %v5769 = vxor.u32 %v5765, 2147483648
  %v5770 = vmul.f32 %v5769, 1.442695
  %v5771 = vpow.pop %v5770
  %v5772 = vadd.f32 %v5771, 1.0
  %v5773 = vrcp.pop %v5772
  %v5774 = vmul.f32 1.0, %v5773
  %v5775 = vxor.u32 %v5766, 2147483648
  %v5776 = vmul.f32 %v5775, 1.442695
  %v5777 = vpow.pop %v5776
  %v5778 = vadd.f32 %v5777, 1.0
  %v5779 = vrcp.pop %v5778
  %v5780 = vmul.f32 1.0, %v5779
  %v5781 = vtanh.pop %v5767
  %v5782 = vxor.u32 %v5768, 2147483648
  %v5783 = vmul.f32 %v5782, 1.442695
  %v5784 = vpow.pop %v5783
  %v5785 = vadd.f32 %v5784, 1.0
  %v5786 = vrcp.pop %v5785
  %v5787 = vmul.f32 1.0, %v5786
  %v5788 = vld [vmem:[#allocation4] sm:$0xff]
  %v5789 = vmul.f32 %v5780, %v5788
  %v5790 = vmul.f32 %v5774, %v5781
  %v5791 = vadd.f32 %v5789, %v5790
  %v5792 = vtanh.pop %v5791
  %v5793 = vmul.f32 %v5787, %v5792
  %5794 = vst [vmem:[#allocation4] sm:$0xff] %v5791
  %v5795 = vpack.c.bf16 %v5793, %v5793
  %5796 = vst [vmem:[#allocation3] sm:$0xf] %v5795
  %v5797 = vld [vmem:[#allocation3] sm:$0xff]
  %v5798 = vld [vmem:[%s4] sm:$0xff]
  %v5799 = vld [vmem:[%s4 + $0x8] sm:$0xff]
  %v5800 = vld [vmem:[%s4 + $0x10] sm:$0xff]
  %v5801 = vld [vmem:[%s4 + $0x18] sm:$0xff]
  %v5802 = vld [vmem:[%s4 + $0x20] sm:$0xff]
  %v5803 = vld [vmem:[%s4 + $0x28] sm:$0xff]
  %v5804 = vld [vmem:[%s4 + $0x30] sm:$0xff]
  %v5805 = vld [vmem:[%s4 + $0x38] sm:$0xff]
  %v5806 = vld [vmem:[%s4 + $0x40] sm:$0xff]
  %v5807 = vld [vmem:[%s4 + $0x48] sm:$0xff]
  %v5808 = vld [vmem:[%s4 + $0x50] sm:$0xff]
  %v5809 = vld [vmem:[%s4 + $0x58] sm:$0xff]
  %v5810 = vld [vmem:[%s4 + $0x60] sm:$0xff]
  %v5811 = vld [vmem:[%s4 + $0x68] sm:$0xff]
  %v5812 = vld [vmem:[%s4 + $0x70] sm:$0xff]
  %v5813 = vld [vmem:[%s4 + $0x78] sm:$0xff]
  %v5814 = vld [vmem:[%s4 + $0x80] sm:$0xff]
  %v5815 = vld [vmem:[%s4 + $0x88] sm:$0xff]
  %v5816 = vld [vmem:[%s4 + $0x90] sm:$0xff]
  %v5817 = vld [vmem:[%s4 + $0x98] sm:$0xff]
  %v5818 = vld [vmem:[%s4 + $0xa0] sm:$0xff]
  %v5819 = vld [vmem:[%s4 + $0xa8] sm:$0xff]
  %v5820 = vld [vmem:[%s4 + $0xb0] sm:$0xff]
  %v5821 = vld [vmem:[%s4 + $0xb8] sm:$0xff]
  %v5822 = vld [vmem:[%s4 + $0xc0] sm:$0xff]
  %v5823 = vld [vmem:[%s4 + $0xc8] sm:$0xff]
  %v5824 = vld [vmem:[%s4 + $0xd0] sm:$0xff]
  %v5825 = vld [vmem:[%s4 + $0xd8] sm:$0xff]
  %v5826 = vld [vmem:[%s4 + $0xe0] sm:$0xff]
  %v5827 = vld [vmem:[%s4 + $0xe8] sm:$0xff]
  %v5828 = vld [vmem:[%s4 + $0xf0] sm:$0xff]
  %v5829 = vld [vmem:[%s4 + $0xf8] sm:$0xff]
  %v5830 = vld [vmem:[%s4 + $0x100] sm:$0xff]
  %v5831 = vld [vmem:[%s4 + $0x108] sm:$0xff]
  %v5832 = vld [vmem:[%s4 + $0x110] sm:$0xff]
  %v5833 = vld [vmem:[%s4 + $0x118] sm:$0xff]
  %v5834 = vld [vmem:[%s4 + $0x120] sm:$0xff]
  %v5835 = vld [vmem:[%s4 + $0x128] sm:$0xff]
  %v5836 = vld [vmem:[%s4 + $0x130] sm:$0xff]
  %v5837 = vld [vmem:[%s4 + $0x138] sm:$0xff]
  %v5838 = vld [vmem:[%s4 + $0x140] sm:$0xff]
  %v5839 = vld [vmem:[%s4 + $0x148] sm:$0xff]
  %v5840 = vld [vmem:[%s4 + $0x150] sm:$0xff]
  %v5841 = vld [vmem:[%s4 + $0x158] sm:$0xff]
  %v5842 = vld [vmem:[%s4 + $0x160] sm:$0xff]
  %v5843 = vld [vmem:[%s4 + $0x168] sm:$0xff]
  %v5844 = vld [vmem:[%s4 + $0x170] sm:$0xff]
  %v5845 = vld [vmem:[%s4 + $0x178] sm:$0xff]
  %v5846 = vld [vmem:[%s4 + $0x180] sm:$0xff]
  %v5847 = vld [vmem:[%s4 + $0x188] sm:$0xff]
  %v5848 = vld [vmem:[%s4 + $0x190] sm:$0xff]
  %v5849 = vld [vmem:[%s4 + $0x198] sm:$0xff]
  %v5850 = vld [vmem:[%s4 + $0x1a0] sm:$0xff]
  %v5851 = vld [vmem:[%s4 + $0x1a8] sm:$0xff]
  %v5852 = vld [vmem:[%s4 + $0x1b0] sm:$0xff]
  %v5853 = vld [vmem:[%s4 + $0x1b8] sm:$0xff]
  %v5854 = vld [vmem:[%s4 + $0x1c0] sm:$0xff]
  %v5855 = vld [vmem:[%s4 + $0x1c8] sm:$0xff]
  %v5856 = vld [vmem:[%s4 + $0x1d0] sm:$0xff]
  %v5857 = vld [vmem:[%s4 + $0x1d8] sm:$0xff]
  %v5858 = vld [vmem:[%s4 + $0x1e0] sm:$0xff]
  %v5859 = vld [vmem:[%s4 + $0x1e8] sm:$0xff]
  %v5860 = vld [vmem:[%s4 + $0x1f0] sm:$0xff]
  %v5861 = vld [vmem:[%s4 + $0x1f8] sm:$0xff]
  %v5862 = vld [vmem:[%s5] sm:$0xf]
  %v5864 = vlaneseq
  %v5865 = vshrl.u32 %v5864, 7
  %v5866 = vsub.s32 0, %v5865
  %v5867 = vrot.slane %v5862, %v5866
  %v5868 = vlaneseq
  %v5869 = vshrl.u32 %v5868, 7
  %v5870 = vsub.s32 1, %v5869
  %v5871 = vrot.slane %v5862, %v5870
  %v5872 = vlaneseq
  %v5873 = vshrl.u32 %v5872, 7
  %v5874 = vsub.s32 2, %v5873
  %v5875 = vrot.slane %v5862, %v5874
  %v5876 = vlaneseq
  %v5877 = vshrl.u32 %v5876, 7
  %v5878 = vsub.s32 3, %v5877
  %v5879 = vrot.slane %v5862, %v5878
  %v5885 = vunpack.c.l.b16 %v5797
  %v5886 = vunpack.c.h.b16 %v5797
  %v5887 = vpack.c.b16 %v5885, %v5885
  %v5888 = vpack.c.b16 %v5886, %v5886
  %v5955 = vunpack.c.l.b16 %v5798
  %v5956 = vunpack.c.h.b16 %v5798
  %v5957 = vunpack.c.l.b16 %v5799
  %v5958 = vunpack.c.h.b16 %v5799
  %v5959 = vunpack.c.l.b16 %v5800
  %v5960 = vunpack.c.h.b16 %v5800
  %v5961 = vunpack.c.l.b16 %v5801
  %v5962 = vunpack.c.h.b16 %v5801
  %v5963 = vunpack.c.l.b16 %v5802
  %v5964 = vunpack.c.h.b16 %v5802
  %v5965 = vunpack.c.l.b16 %v5803
  %v5966 = vunpack.c.h.b16 %v5803
  %v5967 = vunpack.c.l.b16 %v5804
  %v5968 = vunpack.c.h.b16 %v5804
  %v5969 = vunpack.c.l.b16 %v5805
  %v5970 = vunpack.c.h.b16 %v5805
  %v5971 = vunpack.c.l.b16 %v5806
  %v5972 = vunpack.c.h.b16 %v5806
  %v5973 = vunpack.c.l.b16 %v5807
  %v5974 = vunpack.c.h.b16 %v5807
  %v5975 = vunpack.c.l.b16 %v5808
  %v5976 = vunpack.c.h.b16 %v5808
  %v5977 = vunpack.c.l.b16 %v5809
  %v5978 = vunpack.c.h.b16 %v5809
  %v5979 = vunpack.c.l.b16 %v5810
  %v5980 = vunpack.c.h.b16 %v5810
  %v5981 = vunpack.c.l.b16 %v5811
  %v5982 = vunpack.c.h.b16 %v5811
  %v5983 = vunpack.c.l.b16 %v5812
  %v5984 = vunpack.c.h.b16 %v5812
  %v5985 = vunpack.c.l.b16 %v5813
  %v5986 = vunpack.c.h.b16 %v5813
  %v5987 = vunpack.c.l.b16 %v5814
  %v5988 = vunpack.c.h.b16 %v5814
  %v5989 = vunpack.c.l.b16 %v5815
  %v5990 = vunpack.c.h.b16 %v5815
  %v5991 = vunpack.c.l.b16 %v5816
  %v5992 = vunpack.c.h.b16 %v5816
  %v5993 = vunpack.c.l.b16 %v5817
  %v5994 = vunpack.c.h.b16 %v5817
  %v5995 = vunpack.c.l.b16 %v5818
  %v5996 = vunpack.c.h.b16 %v5818
  %v5997 = vunpack.c.l.b16 %v5819
  %v5998 = vunpack.c.h.b16 %v5819
  %v5999 = vunpack.c.l.b16 %v5820
  %v6000 = vunpack.c.h.b16 %v5820
  %v6001 = vunpack.c.l.b16 %v5821
  %v6002 = vunpack.c.h.b16 %v5821
  %v6003 = vunpack.c.l.b16 %v5822
  %v6004 = vunpack.c.h.b16 %v5822
  %v6005 = vunpack.c.l.b16 %v5823
  %v6006 = vunpack.c.h.b16 %v5823
  %v6007 = vunpack.c.l.b16 %v5824
  %v6008 = vunpack.c.h.b16 %v5824
  %v6009 = vunpack.c.l.b16 %v5825
  %v6010 = vunpack.c.h.b16 %v5825
  %v6011 = vunpack.c.l.b16 %v5826
  %v6012 = vunpack.c.h.b16 %v5826
  %v6013 = vunpack.c.l.b16 %v5827
  %v6014 = vunpack.c.h.b16 %v5827
  %v6015 = vunpack.c.l.b16 %v5828
  %v6016 = vunpack.c.h.b16 %v5828
  %v6017 = vunpack.c.l.b16 %v5829
  %v6018 = vunpack.c.h.b16 %v5829
  %v6019 = vunpack.c.l.b16 %v5830
  %v6020 = vunpack.c.h.b16 %v5830
  %v6021 = vunpack.c.l.b16 %v5831
  %v6022 = vunpack.c.h.b16 %v5831
  %v6023 = vunpack.c.l.b16 %v5832
  %v6024 = vunpack.c.h.b16 %v5832
  %v6025 = vunpack.c.l.b16 %v5833
  %v6026 = vunpack.c.h.b16 %v5833
  %v6027 = vunpack.c.l.b16 %v5834
  %v6028 = vunpack.c.h.b16 %v5834
  %v6029 = vunpack.c.l.b16 %v5835
  %v6030 = vunpack.c.h.b16 %v5835
  %v6031 = vunpack.c.l.b16 %v5836
  %v6032 = vunpack.c.h.b16 %v5836
  %v6033 = vunpack.c.l.b16 %v5837
  %v6034 = vunpack.c.h.b16 %v5837
  %v6035 = vunpack.c.l.b16 %v5838
  %v6036 = vunpack.c.h.b16 %v5838
  %v6037 = vunpack.c.l.b16 %v5839
  %v6038 = vunpack.c.h.b16 %v5839
  %v6039 = vunpack.c.l.b16 %v5840
  %v6040 = vunpack.c.h.b16 %v5840
  %v6041 = vunpack.c.l.b16 %v5841
  %v6042 = vunpack.c.h.b16 %v5841
  %v6043 = vunpack.c.l.b16 %v5842
  %v6044 = vunpack.c.h.b16 %v5842
  %v6045 = vunpack.c.l.b16 %v5843
  %v6046 = vunpack.c.h.b16 %v5843
  %v6047 = vunpack.c.l.b16 %v5844
  %v6048 = vunpack.c.h.b16 %v5844
  %v6049 = vunpack.c.l.b16 %v5845
  %v6050 = vunpack.c.h.b16 %v5845
  %v6051 = vunpack.c.l.b16 %v5846
  %v6052 = vunpack.c.h.b16 %v5846
  %v6053 = vunpack.c.l.b16 %v5847
  %v6054 = vunpack.c.h.b16 %v5847
  %v6055 = vunpack.c.l.b16 %v5848
  %v6056 = vunpack.c.h.b16 %v5848
  %v6057 = vunpack.c.l.b16 %v5849
  %v6058 = vunpack.c.h.b16 %v5849
  %v6059 = vunpack.c.l.b16 %v5850
  %v6060 = vunpack.c.h.b16 %v5850
  %v6061 = vunpack.c.l.b16 %v5851
  %v6062 = vunpack.c.h.b16 %v5851
  %v6063 = vunpack.c.l.b16 %v5852
  %v6064 = vunpack.c.h.b16 %v5852
  %v6065 = vunpack.c.l.b16 %v5853
  %v6066 = vunpack.c.h.b16 %v5853
  %v6067 = vunpack.c.l.b16 %v5854
  %v6068 = vunpack.c.h.b16 %v5854
  %v6069 = vunpack.c.l.b16 %v5855
  %v6070 = vunpack.c.h.b16 %v5855
  %v6071 = vunpack.c.l.b16 %v5856
  %v6072 = vunpack.c.h.b16 %v5856
  %v6073 = vunpack.c.l.b16 %v5857
  %v6074 = vunpack.c.h.b16 %v5857
  %v6075 = vunpack.c.l.b16 %v5858
  %v6076 = vunpack.c.h.b16 %v5858
  %v6077 = vunpack.c.l.b16 %v5859
  %v6078 = vunpack.c.h.b16 %v5859
  %v6079 = vunpack.c.l.b16 %v5860
  %v6080 = vunpack.c.h.b16 %v5860
  %v6081 = vunpack.c.l.b16 %v5861
  %v6082 = vunpack.c.h.b16 %v5861
  %v6083 = vpack.c.b16 %v5959, %v5955
  %v6084 = vpack.c.b16 %v5960, %v5956
  %v6085 = vpack.c.b16 %v5961, %v5957
  %v6086 = vpack.c.b16 %v5962, %v5958
  %v6087 = vpack.c.b16 %v5967, %v5963
  %v6088 = vpack.c.b16 %v5968, %v5964
  %v6089 = vpack.c.b16 %v5969, %v5965
  %v6090 = vpack.c.b16 %v5970, %v5966
  %v6091 = vpack.c.b16 %v5975, %v5971
  %v6092 = vpack.c.b16 %v5976, %v5972
  %v6093 = vpack.c.b16 %v5977, %v5973
  %v6094 = vpack.c.b16 %v5978, %v5974
  %v6095 = vpack.c.b16 %v5983, %v5979
  %v6096 = vpack.c.b16 %v5984, %v5980
  %v6097 = vpack.c.b16 %v5985, %v5981
  %v6098 = vpack.c.b16 %v5986, %v5982
  %v6099 = vpack.c.b16 %v5991, %v5987
  %v6100 = vpack.c.b16 %v5992, %v5988
  %v6101 = vpack.c.b16 %v5993, %v5989
  %v6102 = vpack.c.b16 %v5994, %v5990
  %v6103 = vpack.c.b16 %v5999, %v5995
  %v6104 = vpack.c.b16 %v6000, %v5996
  %v6105 = vpack.c.b16 %v6001, %v5997
  %v6106 = vpack.c.b16 %v6002, %v5998
  %v6107 = vpack.c.b16 %v6007, %v6003
  %v6108 = vpack.c.b16 %v6008, %v6004
  %v6109 = vpack.c.b16 %v6009, %v6005
  %v6110 = vpack.c.b16 %v6010, %v6006
  %v6111 = vpack.c.b16 %v6015, %v6011
  %v6112 = vpack.c.b16 %v6016, %v6012
  %v6113 = vpack.c.b16 %v6017, %v6013
  %v6114 = vpack.c.b16 %v6018, %v6014
  %v6115 = vpack.c.b16 %v6023, %v6019
  %v6116 = vpack.c.b16 %v6024, %v6020
  %v6117 = vpack.c.b16 %v6025, %v6021
  %v6118 = vpack.c.b16 %v6026, %v6022
  %v6119 = vpack.c.b16 %v6031, %v6027
  %v6120 = vpack.c.b16 %v6032, %v6028
  %v6121 = vpack.c.b16 %v6033, %v6029
  %v6122 = vpack.c.b16 %v6034, %v6030
  %v6123 = vpack.c.b16 %v6039, %v6035
  %v6124 = vpack.c.b16 %v6040, %v6036
  %v6125 = vpack.c.b16 %v6041, %v6037
  %v6126 = vpack.c.b16 %v6042, %v6038
  %v6127 = vpack.c.b16 %v6047, %v6043
  %v6128 = vpack.c.b16 %v6048, %v6044
  %v6129 = vpack.c.b16 %v6049, %v6045
  %v6130 = vpack.c.b16 %v6050, %v6046
  %v6131 = vpack.c.b16 %v6055, %v6051
  %v6132 = vpack.c.b16 %v6056, %v6052
  %v6133 = vpack.c.b16 %v6057, %v6053
  %v6134 = vpack.c.b16 %v6058, %v6054
  %v6135 = vpack.c.b16 %v6063, %v6059
  %v6136 = vpack.c.b16 %v6064, %v6060
  %v6137 = vpack.c.b16 %v6065, %v6061
  %v6138 = vpack.c.b16 %v6066, %v6062
  %v6139 = vpack.c.b16 %v6071, %v6067
  %v6140 = vpack.c.b16 %v6072, %v6068
  %v6141 = vpack.c.b16 %v6073, %v6069
  %v6142 = vpack.c.b16 %v6074, %v6070
  %v6143 = vpack.c.b16 %v6079, %v6075
  %v6144 = vpack.c.b16 %v6080, %v6076
  %v6145 = vpack.c.b16 %v6081, %v6077
  %v6146 = vpack.c.b16 %v6082, %v6078
  %6211 = vmatprep.subr.bf16.mxu0 %v6084
  %6212 = vmatpush1.bf16.msra.mxu0 %v6083
  %6213 = vmatprep.subr.bf16.mxu0 %v6088
  %6214 = vmatpush1.bf16.msra.mxu0 %v6087
  %6215 = vmatprep.subr.bf16.mxu0 %v6092
  %6216 = vmatpush1.bf16.msra.mxu0 %v6091
  %6217 = vmatprep.subr.bf16.mxu0 %v6096
  %6218 = vmatpush1.bf16.msra.mxu0 %v6095
  %6219 = vmatprep.subr.bf16.mxu0 %v6100
  %6220 = vmatpush1.bf16.msra.mxu0 %v6099
  %6221 = vmatprep.subr.bf16.mxu0 %v6104
  %6222 = vmatpush1.bf16.msra.mxu0 %v6103
  %6223 = vmatprep.subr.bf16.mxu0 %v6108
  %6224 = vmatpush1.bf16.msra.mxu0 %v6107
  %6225 = vmatprep.subr.bf16.mxu0 %v6112
  %6226 = vmatpush1.bf16.msra.mxu0 %v6111
  %6227 = vmatprep.subr.bf16.mxu0 %v6116
  %6228 = vmatpush1.bf16.msra.mxu0 %v6115
  %6229 = vmatprep.subr.bf16.mxu0 %v6120
  %6230 = vmatpush1.bf16.msra.mxu0 %v6119
  %6231 = vmatprep.subr.bf16.mxu0 %v6124
  %6232 = vmatpush1.bf16.msra.mxu0 %v6123
  %6233 = vmatprep.subr.bf16.mxu0 %v6128
  %6234 = vmatpush1.bf16.msra.mxu0 %v6127
  %6235 = vmatprep.subr.bf16.mxu0 %v6132
  %6236 = vmatpush1.bf16.msra.mxu0 %v6131
  %6237 = vmatprep.subr.bf16.mxu0 %v6136
  %6238 = vmatpush1.bf16.msra.mxu0 %v6135
  %6239 = vmatprep.subr.bf16.mxu0 %v6140
  %6240 = vmatpush1.bf16.msra.mxu0 %v6139
  %6241 = vmatprep.subr.bf16.mxu0 %v6144
  %6242 = vmatpush1.bf16.msra.mxu0 %v6143
  %6243 = vmatprep.mubr.bf16.mxu0 %v5888
  %6244 = vmatmul.mubr.bf16.gmra.mrb[0].mxu0 %v5887
  %v6245 = vpop.f32.mrb[0].mxu0
  %v6246 = vadd.f32 %v5867, %v6245
  %v6247 = vpop.f32.mrb[0].mxu0
  %v6248 = vadd.f32 %v5871, %v6247
  %v6249 = vpop.f32.mrb[0].mxu0
  %v6250 = vpop.f32.mrb[0].mxu0
  %6251 = vdwg.mxu0
  %6252 = vmatprep.subr.bf16.mxu0 %v6086
  %6253 = vmatpush1.bf16.msra.mxu0 %v6085
  %6254 = vmatprep.subr.bf16.mxu0 %v6090
  %6255 = vmatpush1.bf16.msra.mxu0 %v6089
  %6256 = vmatprep.subr.bf16.mxu0 %v6094
  %6257 = vmatpush1.bf16.msra.mxu0 %v6093
  %6258 = vmatprep.subr.bf16.mxu0 %v6098
  %6259 = vmatpush1.bf16.msra.mxu0 %v6097
  %6260 = vmatprep.subr.bf16.mxu0 %v6102
  %6261 = vmatpush1.bf16.msra.mxu0 %v6101
  %6262 = vmatprep.subr.bf16.mxu0 %v6106
  %6263 = vmatpush1.bf16.msra.mxu0 %v6105
  %6264 = vmatprep.subr.bf16.mxu0 %v6110
  %6265 = vmatpush1.bf16.msra.mxu0 %v6109
  %6266 = vmatprep.subr.bf16.mxu0 %v6114
  %6267 = vmatpush1.bf16.msra.mxu0 %v6113
  %6268 = vmatprep.subr.bf16.mxu0 %v6118
  %6269 = vmatpush1.bf16.msra.mxu0 %v6117
  %6270 = vmatprep.subr.bf16.mxu0 %v6122
  %6271 = vmatpush1.bf16.msra.mxu0 %v6121
  %6272 = vmatprep.subr.bf16.mxu0 %v6126
  %6273 = vmatpush1.bf16.msra.mxu0 %v6125
  %6274 = vmatprep.subr.bf16.mxu0 %v6130
  %6275 = vmatpush1.bf16.msra.mxu0 %v6129
  %6276 = vmatprep.subr.bf16.mxu0 %v6134
  %6277 = vmatpush1.bf16.msra.mxu0 %v6133
  %6278 = vmatprep.subr.bf16.mxu0 %v6138
  %6279 = vmatpush1.bf16.msra.mxu0 %v6137
  %6280 = vmatprep.subr.bf16.mxu0 %v6142
  %6281 = vmatpush1.bf16.msra.mxu0 %v6141
  %6282 = vmatprep.subr.bf16.mxu0 %v6146
  %6283 = vmatpush1.bf16.msra.mxu0 %v6145
  %6284 = vmatprep.mubr.bf16.mxu0 %v5888
  %6285 = vmatmul.mubr.bf16.gmra.mrb[0].mxu0 %v5887
  %v6286 = vpop.f32.mrb[0].mxu0
  %v6287 = vadd.f32 %v5875, %v6286
  %v6288 = vpop.f32.mrb[0].mxu0
  %v6289 = vadd.f32 %v5879, %v6288
  %v6290 = vpop.f32.mrb[0].mxu0
  %v6291 = vpop.f32.mrb[0].mxu0
  %6292 = vdwg.mxu0
  %v6293 = vxor.u32 %v6246, 2147483648
  %v6294 = vmul.f32 %v6293, 1.442695
  %v6295 = vpow.pop %v6294
  %v6296 = vadd.f32 %v6295, 1.0
  %v6297 = vrcp.pop %v6296
  %v6298 = vmul.f32 1.0, %v6297
  %v6299 = vxor.u32 %v6248, 2147483648
  %v6300 = vmul.f32 %v6299, 1.442695
  %v6301 = vpow.pop %v6300
  %v6302 = vadd.f32 %v6301, 1.0
  %v6303 = vrcp.pop %v6302
  %v6304 = vmul.f32 1.0, %v6303
  %v6305 = vtanh.pop %v6287
  %v6306 = vxor.u32 %v6289, 2147483648
  %v6307 = vmul.f32 %v6306, 1.442695
  %v6308 = vpow.pop %v6307
  %v6309 = vadd.f32 %v6308, 1.0
  %v6310 = vrcp.pop %v6309
  %v6311 = vmul.f32 1.0, %v6310
  %v6312 = vld [vmem:[#allocation5] sm:$0xff]
  %v6313 = vmul.f32 %v6304, %v6312
  %v6314 = vmul.f32 %v6298, %v6305
  %v6315 = vadd.f32 %v6313, %v6314
  %v6316 = vtanh.pop %v6315
  %v6317 = vmul.f32 %v6311, %v6316
  %6318 = vst [vmem:[#allocation5] sm:$0xff] %v6315
  %6319 = vst [vmem:[#allocation6] sm:$0xff] %v6317
  %v6320 = vpack.c.bf16 %v6317, %v6317
  %6321 = vst [vmem:[#allocation3 + $0x4] sm:$0xf] %v6320
  %s6322 = scalar_lea.vmem [#allocation2], 224
  %v6323 = vld [vmem:[%s6322] sm:$0xff]
  %v6324 = vld [vmem:[%s6322 + $0x8] sm:$0xff]
  %v6325 = vld [vmem:[%s6322 + $0x10] sm:$0xff]
  %v6326 = vld [vmem:[%s6322 + $0x18] sm:$0xff]
  %v6327 = vld [vmem:[#allocation3] sm:$0xf]
  %v6328 = vld [vmem:[%s2] sm:$0xff]
  %v6329 = vld [vmem:[%s2 + $0x8] sm:$0xff]
  %v6330 = vld [vmem:[%s2 + $0x10] sm:$0xff]
  %v6331 = vld [vmem:[%s2 + $0x18] sm:$0xff]
  %v6332 = vld [vmem:[%s2 + $0x20] sm:$0xff]
  %v6333 = vld [vmem:[%s2 + $0x28] sm:$0xff]
  %v6334 = vld [vmem:[%s2 + $0x30] sm:$0xff]
  %v6335 = vld [vmem:[%s2 + $0x38] sm:$0xff]
  %v6336 = vld [vmem:[%s2 + $0x40] sm:$0xff]
  %v6337 = vld [vmem:[%s2 + $0x48] sm:$0xff]
  %v6338 = vld [vmem:[%s2 + $0x50] sm:$0xff]
  %v6339 = vld [vmem:[%s2 + $0x58] sm:$0xff]
  %v6340 = vld [vmem:[%s2 + $0x60] sm:$0xff]
  %v6341 = vld [vmem:[%s2 + $0x68] sm:$0xff]
  %v6342 = vld [vmem:[%s2 + $0x70] sm:$0xff]
  %v6343 = vld [vmem:[%s2 + $0x78] sm:$0xff]
  %v6344 = vld [vmem:[%s2 + $0x80] sm:$0xff]
  %v6345 = vld [vmem:[%s2 + $0x88] sm:$0xff]
  %v6346 = vld [vmem:[%s2 + $0x90] sm:$0xff]
  %v6347 = vld [vmem:[%s2 + $0x98] sm:$0xff]
  %v6348 = vld [vmem:[%s2 + $0xa0] sm:$0xff]
  %v6349 = vld [vmem:[%s2 + $0xa8] sm:$0xff]
  %v6350 = vld [vmem:[%s2 + $0xb0] sm:$0xff]
  %v6351 = vld [vmem:[%s2 + $0xb8] sm:$0xff]
  %v6352 = vld [vmem:[%s2 + $0xc0] sm:$0xff]
  %v6353 = vld [vmem:[%s2 + $0xc8] sm:$0xff]
  %v6354 = vld [vmem:[%s2 + $0xd0] sm:$0xff]
  %v6355 = vld [vmem:[%s2 + $0xd8] sm:$0xff]
  %v6356 = vld [vmem:[%s2 + $0xe0] sm:$0xff]
  %v6357 = vld [vmem:[%s2 + $0xe8] sm:$0xff]
  %v6358 = vld [vmem:[%s2 + $0xf0] sm:$0xff]
  %v6359 = vld [vmem:[%s2 + $0xf8] sm:$0xff]
  %v6392 = vunpack.c.l.b16 %v6328
  %v6393 = vunpack.c.h.b16 %v6328
  %v6394 = vunpack.c.l.b16 %v6329
  %v6395 = vunpack.c.h.b16 %v6329
  %v6396 = vunpack.c.l.b16 %v6330
  %v6397 = vunpack.c.h.b16 %v6330
  %v6398 = vunpack.c.l.b16 %v6331
  %v6399 = vunpack.c.h.b16 %v6331
  %v6400 = vunpack.c.l.b16 %v6332
  %v6401 = vunpack.c.h.b16 %v6332
  %v6402 = vunpack.c.l.b16 %v6333
  %v6403 = vunpack.c.h.b16 %v6333
  %v6404 = vunpack.c.l.b16 %v6334
  %v6405 = vunpack.c.h.b16 %v6334
  %v6406 = vunpack.c.l.b16 %v6335
  %v6407 = vunpack.c.h.b16 %v6335
  %v6408 = vunpack.c.l.b16 %v6336
  %v6409 = vunpack.c.h.b16 %v6336
  %v6410 = vunpack.c.l.b16 %v6337
  %v6411 = vunpack.c.h.b16 %v6337
  %v6412 = vunpack.c.l.b16 %v6338
  %v6413 = vunpack.c.h.b16 %v6338
  %v6414 = vunpack.c.l.b16 %v6339
  %v6415 = vunpack.c.h.b16 %v6339
  %v6416 = vunpack.c.l.b16 %v6340
  %v6417 = vunpack.c.h.b16 %v6340
  %v6418 = vunpack.c.l.b16 %v6341
  %v6419 = vunpack.c.h.b16 %v6341
  %v6420 = vunpack.c.l.b16 %v6342
  %v6421 = vunpack.c.h.b16 %v6342
  %v6422 = vunpack.c.l.b16 %v6343
  %v6423 = vunpack.c.h.b16 %v6343
  %v6424 = vunpack.c.l.b16 %v6344
  %v6425 = vunpack.c.h.b16 %v6344
  %v6426 = vunpack.c.l.b16 %v6345
  %v6427 = vunpack.c.h.b16 %v6345
  %v6428 = vunpack.c.l.b16 %v6346
  %v6429 = vunpack.c.h.b16 %v6346
  %v6430 = vunpack.c.l.b16 %v6347
  %v6431 = vunpack.c.h.b16 %v6347
  %v6432 = vunpack.c.l.b16 %v6348
  %v6433 = vunpack.c.h.b16 %v6348
  %v6434 = vunpack.c.l.b16 %v6349
  %v6435 = vunpack.c.h.b16 %v6349
  %v6436 = vunpack.c.l.b16 %v6350
  %v6437 = vunpack.c.h.b16 %v6350
  %v6438 = vunpack.c.l.b16 %v6351
  %v6439 = vunpack.c.h.b16 %v6351
  %v6440 = vunpack.c.l.b16 %v6352
  %v6441 = vunpack.c.h.b16 %v6352
  %v6442 = vunpack.c.l.b16 %v6353
  %v6443 = vunpack.c.h.b16 %v6353
  %v6444 = vunpack.c.l.b16 %v6354
  %v6445 = vunpack.c.h.b16 %v6354
  %v6446 = vunpack.c.l.b16 %v6355
  %v6447 = vunpack.c.h.b16 %v6355
  %v6448 = vunpack.c.l.b16 %v6356
  %v6449 = vunpack.c.h.b16 %v6356
  %v6450 = vunpack.c.l.b16 %v6357
  %v6451 = vunpack.c.h.b16 %v6357
  %v6452 = vunpack.c.l.b16 %v6358
  %v6453 = vunpack.c.h.b16 %v6358
  %v6454 = vunpack.c.l.b16 %v6359
  %v6455 = vunpack.c.h.b16 %v6359
  %v6456 = vpack.c.b16 %v6396, %v6392
  %v6457 = vpack.c.b16 %v6397, %v6393
  %v6458 = vpack.c.b16 %v6398, %v6394
  %v6459 = vpack.c.b16 %v6399, %v6395
  %v6460 = vpack.c.b16 %v6404, %v6400
  %v6461 = vpack.c.b16 %v6405, %v6401
  %v6462 = vpack.c.b16 %v6406, %v6402
  %v6463 = vpack.c.b16 %v6407, %v6403
  %v6464 = vpack.c.b16 %v6412, %v6408
  %v6465 = vpack.c.b16 %v6413, %v6409
  %v6466 = vpack.c.b16 %v6414, %v6410
  %v6467 = vpack.c.b16 %v6415, %v6411
  %v6468 = vpack.c.b16 %v6420, %v6416
  %v6469 = vpack.c.b16 %v6421, %v6417
  %v6470 = vpack.c.b16 %v6422, %v6418
  %v6471 = vpack.c.b16 %v6423, %v6419
  %v6472 = vpack.c.b16 %v6428, %v6424
  %v6473 = vpack.c.b16 %v6429, %v6425
  %v6474 = vpack.c.b16 %v6430, %v6426
  %v6475 = vpack.c.b16 %v6431, %v6427
  %v6476 = vpack.c.b16 %v6436, %v6432
  %v6477 = vpack.c.b16 %v6437, %v6433
  %v6478 = vpack.c.b16 %v6438, %v6434
  %v6479 = vpack.c.b16 %v6439, %v6435
  %v6480 = vpack.c.b16 %v6444, %v6440
  %v6481 = vpack.c.b16 %v6445, %v6441
  %v6482 = vpack.c.b16 %v6446, %v6442
  %v6483 = vpack.c.b16 %v6447, %v6443
  %v6484 = vpack.c.b16 %v6452, %v6448
  %v6485 = vpack.c.b16 %v6453, %v6449
  %v6486 = vpack.c.b16 %v6454, %v6450
  %v6487 = vpack.c.b16 %v6455, %v6451
  %6520 = vmatprep.subr.bf16.mxu0 %v6457
  %6521 = vmatpush1.bf16.msra.mxu0 %v6456
  %6522 = vmatprep.subr.bf16.mxu0 %v6461
  %6523 = vmatpush1.bf16.msra.mxu0 %v6460
  %6524 = vmatprep.subr.bf16.mxu0 %v6465
  %6525 = vmatpush1.bf16.msra.mxu0 %v6464
  %6526 = vmatprep.subr.bf16.mxu0 %v6469
  %6527 = vmatpush1.bf16.msra.mxu0 %v6468
  %6528 = vmatprep.subr.bf16.mxu0 %v6473
  %6529 = vmatpush1.bf16.msra.mxu0 %v6472
  %6530 = vmatprep.subr.bf16.mxu0 %v6477
  %6531 = vmatpush1.bf16.msra.mxu0 %v6476
  %6532 = vmatprep.subr.bf16.mxu0 %v6481
  %6533 = vmatpush1.bf16.msra.mxu0 %v6480
  %6534 = vmatprep.subr.bf16.mxu0 %v6485
  %6535 = vmatpush1.bf16.msra.mxu0 %v6484
  %6536 = vmatprep.subr.bf16.mxu0 0
  %6537 = vmatpush1.bf16.msra.mxu0 0
  %6538 = vmatprep.subr.bf16.mxu0 0
  %6539 = vmatpush1.bf16.msra.mxu0 0
  %6540 = vmatprep.subr.bf16.mxu0 0
  %6541 = vmatpush1.bf16.msra.mxu0 0
  %6542 = vmatprep.subr.bf16.mxu0 0
  %6543 = vmatpush1.bf16.msra.mxu0 0
  %6544 = vmatprep.subr.bf16.mxu0 0
  %6545 = vmatpush1.bf16.msra.mxu0 0
  %6546 = vmatprep.subr.bf16.mxu0 0
  %6547 = vmatpush1.bf16.msra.mxu0 0
  %6548 = vmatprep.subr.bf16.mxu0 0
  %6549 = vmatpush1.bf16.msra.mxu0 0
  %6550 = vmatprep.subr.bf16.mxu0 0
  %6551 = vmatpush1.bf16.msra.mxu0 0
  %6552 = vmatprep.mubr.bf16.mxu0 0
  %6553 = vmatmul.mubr.bf16.gmra.mrb[0].mxu0 %v6327
  %v6554 = vpop.f32.mrb[0].mxu0
  %v6555 = vadd.f32 0.0, %v6554
  %v6556 = vpop.f32.mrb[0].mxu0
  %v6557 = vadd.f32 0.0, %v6556
  %v6558 = vpop.f32.mrb[0].mxu0
  %v6559 = vpop.f32.mrb[0].mxu0
  %6560 = vdwg.mxu0
  %6561 = vmatprep.subr.bf16.mxu0 %v6459
  %6562 = vmatpush1.bf16.msra.mxu0 %v6458
  %6563 = vmatprep.subr.bf16.mxu0 %v6463
  %6564 = vmatpush1.bf16.msra.mxu0 %v6462
  %6565 = vmatprep.subr.bf16.mxu0 %v6467
  %6566 = vmatpush1.bf16.msra.mxu0 %v6466
  %6567 = vmatprep.subr.bf16.mxu0 %v6471
  %6568 = vmatpush1.bf16.msra.mxu0 %v6470
  %6569 = vmatprep.subr.bf16.mxu0 %v6475
  %6570 = vmatpush1.bf16.msra.mxu0 %v6474
  %6571 = vmatprep.subr.bf16.mxu0 %v6479
  %6572 = vmatpush1.bf16.msra.mxu0 %v6478
  %6573 = vmatprep.subr.bf16.mxu0 %v6483
  %6574 = vmatpush1.bf16.msra.mxu0 %v6482
  %6575 = vmatprep.subr.bf16.mxu0 %v6487
  %6576 = vmatpush1.bf16.msra.mxu0 %v6486
  %6577 = vmatprep.subr.bf16.mxu0 0
  %6578 = vmatpush1.bf16.msra.mxu0 0
  %6579 = vmatprep.subr.bf16.mxu0 0
  %6580 = vmatpush1.bf16.msra.mxu0 0
  %6581 = vmatprep.subr.bf16.mxu0 0
  %6582 = vmatpush1.bf16.msra.mxu0 0
  %6583 = vmatprep.subr.bf16.mxu0 0
  %6584 = vmatpush1.bf16.msra.mxu0 0
  %6585 = vmatprep.subr.bf16.mxu0 0
  %6586 = vmatpush1.bf16.msra.mxu0 0
  %6587 = vmatprep.subr.bf16.mxu0 0
  %6588 = vmatpush1.bf16.msra.mxu0 0
  %6589 = vmatprep.subr.bf16.mxu0 0
  %6590 = vmatpush1.bf16.msra.mxu0 0
  %6591 = vmatprep.subr.bf16.mxu0 0
  %6592 = vmatpush1.bf16.msra.mxu0 0
  %6593 = vmatprep.mubr.bf16.mxu0 0
  %6594 = vmatmul.mubr.bf16.gmra.mrb[0].mxu0 %v6327
  %v6595 = vpop.f32.mrb[0].mxu0
  %v6596 = vadd.f32 0.0, %v6595
  %v6597 = vpop.f32.mrb[0].mxu0
  %v6598 = vadd.f32 0.0, %v6597
  %v6599 = vpop.f32.mrb[0].mxu0
  %v6600 = vpop.f32.mrb[0].mxu0
  %6601 = vdwg.mxu0
  %v6602 = vadd.f32 %v6323, %v6555
  %v6603 = vadd.f32 %v6324, %v6557
  %v6604 = vadd.f32 %v6325, %v6596
  %v6605 = vadd.f32 %v6326, %v6598
  %v6606 = vxor.u32 %v6602, 2147483648
  %v6607 = vmul.f32 %v6606, 1.442695
  %v6608 = vpow.pop %v6607
  %v6609 = vadd.f32 %v6608, 1.0
  %v6610 = vrcp.pop %v6609
  %v6611 = vmul.f32 1.0, %v6610
  %v6612 = vxor.u32 %v6603, 2147483648
  %v6613 = vmul.f32 %v6612, 1.442695
  %v6614 = vpow.pop %v6613
  %v6615 = vadd.f32 %v6614, 1.0
  %v6616 = vrcp.pop %v6615
  %v6617 = vmul.f32 1.0, %v6616
  %v6618 = vtanh.pop %v6604
  %v6619 = vxor.u32 %v6605, 2147483648
  %v6620 = vmul.f32 %v6619, 1.442695
  %v6621 = vpow.pop %v6620
  %v6622 = vadd.f32 %v6621, 1.0
  %v6623 = vrcp.pop %v6622
  %v6624 = vmul.f32 1.0, %v6623
  %v6625 = vld [vmem:[#allocation4] sm:$0xff]
  %v6626 = vmul.f32 %v6617, %v6625
  %v6627 = vmul.f32 %v6611, %v6618
  %v6628 = vadd.f32 %v6626, %v6627
  %v6629 = vtanh.pop %v6628
  %v6630 = vmul.f32 %v6624, %v6629
  %6631 = vst [vmem:[#allocation4] sm:$0xff] %v6628
  %v6632 = vpack.c.bf16 %v6630, %v6630
  %6633 = vst [vmem:[#allocation3] sm:$0xf] %v6632
  %v6634 = vld [vmem:[#allocation3] sm:$0xff]
  %v6635 = vld [vmem:[%s4] sm:$0xff]
  %v6636 = vld [vmem:[%s4 + $0x8] sm:$0xff]
  %v6637 = vld [vmem:[%s4 + $0x10] sm:$0xff]
  %v6638 = vld [vmem:[%s4 + $0x18] sm:$0xff]
  %v6639 = vld [vmem:[%s4 + $0x20] sm:$0xff]
  %v6640 = vld [vmem:[%s4 + $0x28] sm:$0xff]
  %v6641 = vld [vmem:[%s4 + $0x30] sm:$0xff]
  %v6642 = vld [vmem:[%s4 + $0x38] sm:$0xff]
  %v6643 = vld [vmem:[%s4 + $0x40] sm:$0xff]
  %v6644 = vld [vmem:[%s4 + $0x48] sm:$0xff]
  %v6645 = vld [vmem:[%s4 + $0x50] sm:$0xff]
  %v6646 = vld [vmem:[%s4 + $0x58] sm:$0xff]
  %v6647 = vld [vmem:[%s4 + $0x60] sm:$0xff]
  %v6648 = vld [vmem:[%s4 + $0x68] sm:$0xff]
  %v6649 = vld [vmem:[%s4 + $0x70] sm:$0xff]
  %v6650 = vld [vmem:[%s4 + $0x78] sm:$0xff]
  %v6651 = vld [vmem:[%s4 + $0x80] sm:$0xff]
  %v6652 = vld [vmem:[%s4 + $0x88] sm:$0xff]
  %v6653 = vld [vmem:[%s4 + $0x90] sm:$0xff]
  %v6654 = vld [vmem:[%s4 + $0x98] sm:$0xff]
  %v6655 = vld [vmem:[%s4 + $0xa0] sm:$0xff]
  %v6656 = vld [vmem:[%s4 + $0xa8] sm:$0xff]
  %v6657 = vld [vmem:[%s4 + $0xb0] sm:$0xff]
  %v6658 = vld [vmem:[%s4 + $0xb8] sm:$0xff]
  %v6659 = vld [vmem:[%s4 + $0xc0] sm:$0xff]
  %v6660 = vld [vmem:[%s4 + $0xc8] sm:$0xff]
  %v6661 = vld [vmem:[%s4 + $0xd0] sm:$0xff]
  %v6662 = vld [vmem:[%s4 + $0xd8] sm:$0xff]
  %v6663 = vld [vmem:[%s4 + $0xe0] sm:$0xff]
  %v6664 = vld [vmem:[%s4 + $0xe8] sm:$0xff]
  %v6665 = vld [vmem:[%s4 + $0xf0] sm:$0xff]
  %v6666 = vld [vmem:[%s4 + $0xf8] sm:$0xff]
  %v6667 = vld [vmem:[%s4 + $0x100] sm:$0xff]
  %v6668 = vld [vmem:[%s4 + $0x108] sm:$0xff]
  %v6669 = vld [vmem:[%s4 + $0x110] sm:$0xff]
  %v6670 = vld [vmem:[%s4 + $0x118] sm:$0xff]
  %v6671 = vld [vmem:[%s4 + $0x120] sm:$0xff]
  %v6672 = vld [vmem:[%s4 + $0x128] sm:$0xff]
  %v6673 = vld [vmem:[%s4 + $0x130] sm:$0xff]
  %v6674 = vld [vmem:[%s4 + $0x138] sm:$0xff]
  %v6675 = vld [vmem:[%s4 + $0x140] sm:$0xff]
  %v6676 = vld [vmem:[%s4 + $0x148] sm:$0xff]
  %v6677 = vld [vmem:[%s4 + $0x150] sm:$0xff]
  %v6678 = vld [vmem:[%s4 + $0x158] sm:$0xff]
  %v6679 = vld [vmem:[%s4 + $0x160] sm:$0xff]
  %v6680 = vld [vmem:[%s4 + $0x168] sm:$0xff]
  %v6681 = vld [vmem:[%s4 + $0x170] sm:$0xff]
  %v6682 = vld [vmem:[%s4 + $0x178] sm:$0xff]
  %v6683 = vld [vmem:[%s4 + $0x180] sm:$0xff]
  %v6684 = vld [vmem:[%s4 + $0x188] sm:$0xff]
  %v6685 = vld [vmem:[%s4 + $0x190] sm:$0xff]
  %v6686 = vld [vmem:[%s4 + $0x198] sm:$0xff]
  %v6687 = vld [vmem:[%s4 + $0x1a0] sm:$0xff]
  %v6688 = vld [vmem:[%s4 + $0x1a8] sm:$0xff]
  %v6689 = vld [vmem:[%s4 + $0x1b0] sm:$0xff]
  %v6690 = vld [vmem:[%s4 + $0x1b8] sm:$0xff]
  %v6691 = vld [vmem:[%s4 + $0x1c0] sm:$0xff]
  %v6692 = vld [vmem:[%s4 + $0x1c8] sm:$0xff]
  %v6693 = vld [vmem:[%s4 + $0x1d0] sm:$0xff]
  %v6694 = vld [vmem:[%s4 + $0x1d8] sm:$0xff]
  %v6695 = vld [vmem:[%s4 + $0x1e0] sm:$0xff]
  %v6696 = vld [vmem:[%s4 + $0x1e8] sm:$0xff]
  %v6697 = vld [vmem:[%s4 + $0x1f0] sm:$0xff]
  %v6698 = vld [vmem:[%s4 + $0x1f8] sm:$0xff]
  %v6699 = vld [vmem:[%s5] sm:$0xf]
  %v6701 = vlaneseq
  %v6702 = vshrl.u32 %v6701, 7
  %v6703 = vsub.s32 0, %v6702
  %v6704 = vrot.slane %v6699, %v6703
  %v6705 = vlaneseq
  %v6706 = vshrl.u32 %v6705, 7
  %v6707 = vsub.s32 1, %v6706
  %v6708 = vrot.slane %v6699, %v6707
  %v6709 = vlaneseq
  %v6710 = vshrl.u32 %v6709, 7
  %v6711 = vsub.s32 2, %v6710
  %v6712 = vrot.slane %v6699, %v6711
  %v6713 = vlaneseq
  %v6714 = vshrl.u32 %v6713, 7
  %v6715 = vsub.s32 3, %v6714
  %v6716 = vrot.slane %v6699, %v6715
  %v6722 = vunpack.c.l.b16 %v6634
  %v6723 = vunpack.c.h.b16 %v6634
  %v6724 = vpack.c.b16 %v6722, %v6722
  %v6725 = vpack.c.b16 %v6723, %v6723
  %v6792 = vunpack.c.l.b16 %v6635
  %v6793 = vunpack.c.h.b16 %v6635
  %v6794 = vunpack.c.l.b16 %v6636
  %v6795 = vunpack.c.h.b16 %v6636
  %v6796 = vunpack.c.l.b16 %v6637
  %v6797 = vunpack.c.h.b16 %v6637
  %v6798 = vunpack.c.l.b16 %v6638
  %v6799 = vunpack.c.h.b16 %v6638
  %v6800 = vunpack.c.l.b16 %v6639
  %v6801 = vunpack.c.h.b16 %v6639
  %v6802 = vunpack.c.l.b16 %v6640
  %v6803 = vunpack.c.h.b16 %v6640
  %v6804 = vunpack.c.l.b16 %v6641
  %v6805 = vunpack.c.h.b16 %v6641
  %v6806 = vunpack.c.l.b16 %v6642
  %v6807 = vunpack.c.h.b16 %v6642
  %v6808 = vunpack.c.l.b16 %v6643
  %v6809 = vunpack.c.h.b16 %v6643
  %v6810 = vunpack.c.l.b16 %v6644
  %v6811 = vunpack.c.h.b16 %v6644
  %v6812 = vunpack.c.l.b16 %v6645
  %v6813 = vunpack.c.h.b16 %v6645
  %v6814 = vunpack.c.l.b16 %v6646
  %v6815 = vunpack.c.h.b16 %v6646
  %v6816 = vunpack.c.l.b16 %v6647
  %v6817 = vunpack.c.h.b16 %v6647
  %v6818 = vunpack.c.l.b16 %v6648
  %v6819 = vunpack.c.h.b16 %v6648
  %v6820 = vunpack.c.l.b16 %v6649
  %v6821 = vunpack.c.h.b16 %v6649
  %v6822 = vunpack.c.l.b16 %v6650
  %v6823 = vunpack.c.h.b16 %v6650
  %v6824 = vunpack.c.l.b16 %v6651
  %v6825 = vunpack.c.h.b16 %v6651
  %v6826 = vunpack.c.l.b16 %v6652
  %v6827 = vunpack.c.h.b16 %v6652
  %v6828 = vunpack.c.l.b16 %v6653
  %v6829 = vunpack.c.h.b16 %v6653
  %v6830 = vunpack.c.l.b16 %v6654
  %v6831 = vunpack.c.h.b16 %v6654
  %v6832 = vunpack.c.l.b16 %v6655
  %v6833 = vunpack.c.h.b16 %v6655
  %v6834 = vunpack.c.l.b16 %v6656
  %v6835 = vunpack.c.h.b16 %v6656
  %v6836 = vunpack.c.l.b16 %v6657
  %v6837 = vunpack.c.h.b16 %v6657
  %v6838 = vunpack.c.l.b16 %v6658
  %v6839 = vunpack.c.h.b16 %v6658
  %v6840 = vunpack.c.l.b16 %v6659
  %v6841 = vunpack.c.h.b16 %v6659
  %v6842 = vunpack.c.l.b16 %v6660
  %v6843 = vunpack.c.h.b16 %v6660
  %v6844 = vunpack.c.l.b16 %v6661
  %v6845 = vunpack.c.h.b16 %v6661
  %v6846 = vunpack.c.l.b16 %v6662
  %v6847 = vunpack.c.h.b16 %v6662
  %v6848 = vunpack.c.l.b16 %v6663
  %v6849 = vunpack.c.h.b16 %v6663
  %v6850 = vunpack.c.l.b16 %v6664
  %v6851 = vunpack.c.h.b16 %v6664
  %v6852 = vunpack.c.l.b16 %v6665
  %v6853 = vunpack.c.h.b16 %v6665
  %v6854 = vunpack.c.l.b16 %v6666
  %v6855 = vunpack.c.h.b16 %v6666
  %v6856 = vunpack.c.l.b16 %v6667
  %v6857 = vunpack.c.h.b16 %v6667
  %v6858 = vunpack.c.l.b16 %v6668
  %v6859 = vunpack.c.h.b16 %v6668
  %v6860 = vunpack.c.l.b16 %v6669
  %v6861 = vunpack.c.h.b16 %v6669
  %v6862 = vunpack.c.l.b16 %v6670
  %v6863 = vunpack.c.h.b16 %v6670
  %v6864 = vunpack.c.l.b16 %v6671
  %v6865 = vunpack.c.h.b16 %v6671
  %v6866 = vunpack.c.l.b16 %v6672
  %v6867 = vunpack.c.h.b16 %v6672
  %v6868 = vunpack.c.l.b16 %v6673
  %v6869 = vunpack.c.h.b16 %v6673
  %v6870 = vunpack.c.l.b16 %v6674
  %v6871 = vunpack.c.h.b16 %v6674
  %v6872 = vunpack.c.l.b16 %v6675
  %v6873 = vunpack.c.h.b16 %v6675
  %v6874 = vunpack.c.l.b16 %v6676
  %v6875 = vunpack.c.h.b16 %v6676
  %v6876 = vunpack.c.l.b16 %v6677
  %v6877 = vunpack.c.h.b16 %v6677
  %v6878 = vunpack.c.l.b16 %v6678
  %v6879 = vunpack.c.h.b16 %v6678
  %v6880 = vunpack.c.l.b16 %v6679
  %v6881 = vunpack.c.h.b16 %v6679
  %v6882 = vunpack.c.l.b16 %v6680
  %v6883 = vunpack.c.h.b16 %v6680
  %v6884 = vunpack.c.l.b16 %v6681
  %v6885 = vunpack.c.h.b16 %v6681
  %v6886 = vunpack.c.l.b16 %v6682
  %v6887 = vunpack.c.h.b16 %v6682
  %v6888 = vunpack.c.l.b16 %v6683
  %v6889 = vunpack.c.h.b16 %v6683
  %v6890 = vunpack.c.l.b16 %v6684
  %v6891 = vunpack.c.h.b16 %v6684
  %v6892 = vunpack.c.l.b16 %v6685
  %v6893 = vunpack.c.h.b16 %v6685
  %v6894 = vunpack.c.l.b16 %v6686
  %v6895 = vunpack.c.h.b16 %v6686
  %v6896 = vunpack.c.l.b16 %v6687
  %v6897 = vunpack.c.h.b16 %v6687
  %v6898 = vunpack.c.l.b16 %v6688
  %v6899 = vunpack.c.h.b16 %v6688
  %v6900 = vunpack.c.l.b16 %v6689
  %v6901 = vunpack.c.h.b16 %v6689
  %v6902 = vunpack.c.l.b16 %v6690
  %v6903 = vunpack.c.h.b16 %v6690
  %v6904 = vunpack.c.l.b16 %v6691
  %v6905 = vunpack.c.h.b16 %v6691
  %v6906 = vunpack.c.l.b16 %v6692
  %v6907 = vunpack.c.h.b16 %v6692
  %v6908 = vunpack.c.l.b16 %v6693
  %v6909 = vunpack.c.h.b16 %v6693
  %v6910 = vunpack.c.l.b16 %v6694
  %v6911 = vunpack.c.h.b16 %v6694
  %v6912 = vunpack.c.l.b16 %v6695
  %v6913 = vunpack.c.h.b16 %v6695
  %v6914 = vunpack.c.l.b16 %v6696
  %v6915 = vunpack.c.h.b16 %v6696
  %v6916 = vunpack.c.l.b16 %v6697
  %v6917 = vunpack.c.h.b16 %v6697
  %v6918 = vunpack.c.l.b16 %v6698
  %v6919 = vunpack.c.h.b16 %v6698
  %v6920 = vpack.c.b16 %v6796, %v6792
  %v6921 = vpack.c.b16 %v6797, %v6793
  %v6922 = vpack.c.b16 %v6798, %v6794
  %v6923 = vpack.c.b16 %v6799, %v6795
  %v6924 = vpack.c.b16 %v6804, %v6800
  %v6925 = vpack.c.b16 %v6805, %v6801
  %v6926 = vpack.c.b16 %v6806, %v6802
  %v6927 = vpack.c.b16 %v6807, %v6803
  %v6928 = vpack.c.b16 %v6812, %v6808
  %v6929 = vpack.c.b16 %v6813, %v6809
  %v6930 = vpack.c.b16 %v6814, %v6810
  %v6931 = vpack.c.b16 %v6815, %v6811
  %v6932 = vpack.c.b16 %v6820, %v6816
  %v6933 = vpack.c.b16 %v6821, %v6817
  %v6934 = vpack.c.b16 %v6822, %v6818
  %v6935 = vpack.c.b16 %v6823, %v6819
  %v6936 = vpack.c.b16 %v6828, %v6824
  %v6937 = vpack.c.b16 %v6829, %v6825
  %v6938 = vpack.c.b16 %v6830, %v6826
  %v6939 = vpack.c.b16 %v6831, %v6827
  %v6940 = vpack.c.b16 %v6836, %v6832
  %v6941 = vpack.c.b16 %v6837, %v6833
  %v6942 = vpack.c.b16 %v6838, %v6834
  %v6943 = vpack.c.b16 %v6839, %v6835
  %v6944 = vpack.c.b16 %v6844, %v6840
  %v6945 = vpack.c.b16 %v6845, %v6841
  %v6946 = vpack.c.b16 %v6846, %v6842
  %v6947 = vpack.c.b16 %v6847, %v6843
  %v6948 = vpack.c.b16 %v6852, %v6848
  %v6949 = vpack.c.b16 %v6853, %v6849
  %v6950 = vpack.c.b16 %v6854, %v6850
  %v6951 = vpack.c.b16 %v6855, %v6851
  %v6952 = vpack.c.b16 %v6860, %v6856
  %v6953 = vpack.c.b16 %v6861, %v6857
  %v6954 = vpack.c.b16 %v6862, %v6858
  %v6955 = vpack.c.b16 %v6863, %v6859
  %v6956 = vpack.c.b16 %v6868, %v6864
  %v6957 = vpack.c.b16 %v6869, %v6865
  %v6958 = vpack.c.b16 %v6870, %v6866
  %v6959 = vpack.c.b16 %v6871, %v6867
  %v6960 = vpack.c.b16 %v6876, %v6872
  %v6961 = vpack.c.b16 %v6877, %v6873
  %v6962 = vpack.c.b16 %v6878, %v6874
  %v6963 = vpack.c.b16 %v6879, %v6875
  %v6964 = vpack.c.b16 %v6884, %v6880
  %v6965 = vpack.c.b16 %v6885, %v6881
  %v6966 = vpack.c.b16 %v6886, %v6882
  %v6967 = vpack.c.b16 %v6887, %v6883
  %v6968 = vpack.c.b16 %v6892, %v6888
  %v6969 = vpack.c.b16 %v6893, %v6889
  %v6970 = vpack.c.b16 %v6894, %v6890
  %v6971 = vpack.c.b16 %v6895, %v6891
  %v6972 = vpack.c.b16 %v6900, %v6896
  %v6973 = vpack.c.b16 %v6901, %v6897
  %v6974 = vpack.c.b16 %v6902, %v6898
  %v6975 = vpack.c.b16 %v6903, %v6899
  %v6976 = vpack.c.b16 %v6908, %v6904
  %v6977 = vpack.c.b16 %v6909, %v6905
  %v6978 = vpack.c.b16 %v6910, %v6906
  %v6979 = vpack.c.b16 %v6911, %v6907
  %v6980 = vpack.c.b16 %v6916, %v6912
  %v6981 = vpack.c.b16 %v6917, %v6913
  %v6982 = vpack.c.b16 %v6918, %v6914
  %v6983 = vpack.c.b16 %v6919, %v6915
  %7048 = vmatprep.subr.bf16.mxu0 %v6921
  %7049 = vmatpush1.bf16.msra.mxu0 %v6920
  %7050 = vmatprep.subr.bf16.mxu0 %v6925
  %7051 = vmatpush1.bf16.msra.mxu0 %v6924
  %7052 = vmatprep.subr.bf16.mxu0 %v6929
  %7053 = vmatpush1.bf16.msra.mxu0 %v6928
  %7054 = vmatprep.subr.bf16.mxu0 %v6933
  %7055 = vmatpush1.bf16.msra.mxu0 %v6932
  %7056 = vmatprep.subr.bf16.mxu0 %v6937
  %7057 = vmatpush1.bf16.msra.mxu0 %v6936
  %7058 = vmatprep.subr.bf16.mxu0 %v6941
  %7059 = vmatpush1.bf16.msra.mxu0 %v6940
  %7060 = vmatprep.subr.bf16.mxu0 %v6945
  %7061 = vmatpush1.bf16.msra.mxu0 %v6944
  %7062 = vmatprep.subr.bf16.mxu0 %v6949
  %7063 = vmatpush1.bf16.msra.mxu0 %v6948
  %7064 = vmatprep.subr.bf16.mxu0 %v6953
  %7065 = vmatpush1.bf16.msra.mxu0 %v6952
  %7066 = vmatprep.subr.bf16.mxu0 %v6957
  %7067 = vmatpush1.bf16.msra.mxu0 %v6956
  %7068 = vmatprep.subr.bf16.mxu0 %v6961
  %7069 = vmatpush1.bf16.msra.mxu0 %v6960
  %7070 = vmatprep.subr.bf16.mxu0 %v6965
  %7071 = vmatpush1.bf16.msra.mxu0 %v6964
  %7072 = vmatprep.subr.bf16.mxu0 %v6969
  %7073 = vmatpush1.bf16.msra.mxu0 %v6968
  %7074 = vmatprep.subr.bf16.mxu0 %v6973
  %7075 = vmatpush1.bf16.msra.mxu0 %v6972
  %7076 = vmatprep.subr.bf16.mxu0 %v6977
  %7077 = vmatpush1.bf16.msra.mxu0 %v6976
  %7078 = vmatprep.subr.bf16.mxu0 %v6981
  %7079 = vmatpush1.bf16.msra.mxu0 %v6980
  %7080 = vmatprep.mubr.bf16.mxu0 %v6725
  %7081 = vmatmul.mubr.bf16.gmra.mrb[0].mxu0 %v6724
  %v7082 = vpop.f32.mrb[0].mxu0
  %v7083 = vadd.f32 %v6704, %v7082
  %v7084 = vpop.f32.mrb[0].mxu0
  %v7085 = vadd.f32 %v6708, %v7084
  %v7086 = vpop.f32.mrb[0].mxu0
  %v7087 = vpop.f32.mrb[0].mxu0
  %7088 = vdwg.mxu0
  %7089 = vmatprep.subr.bf16.mxu0 %v6923
  %7090 = vmatpush1.bf16.msra.mxu0 %v6922
  %7091 = vmatprep.subr.bf16.mxu0 %v6927
  %7092 = vmatpush1.bf16.msra.mxu0 %v6926
  %7093 = vmatprep.subr.bf16.mxu0 %v6931
  %7094 = vmatpush1.bf16.msra.mxu0 %v6930
  %7095 = vmatprep.subr.bf16.mxu0 %v6935
  %7096 = vmatpush1.bf16.msra.mxu0 %v6934
  %7097 = vmatprep.subr.bf16.mxu0 %v6939
  %7098 = vmatpush1.bf16.msra.mxu0 %v6938
  %7099 = vmatprep.subr.bf16.mxu0 %v6943
  %7100 = vmatpush1.bf16.msra.mxu0 %v6942
  %7101 = vmatprep.subr.bf16.mxu0 %v6947
  %7102 = vmatpush1.bf16.msra.mxu0 %v6946
  %7103 = vmatprep.subr.bf16.mxu0 %v6951
  %7104 = vmatpush1.bf16.msra.mxu0 %v6950
  %7105 = vmatprep.subr.bf16.mxu0 %v6955
  %7106 = vmatpush1.bf16.msra.mxu0 %v6954
  %7107 = vmatprep.subr.bf16.mxu0 %v6959
  %7108 = vmatpush1.bf16.msra.mxu0 %v6958
  %7109 = vmatprep.subr.bf16.mxu0 %v6963
  %7110 = vmatpush1.bf16.msra.mxu0 %v6962
  %7111 = vmatprep.subr.bf16.mxu0 %v6967
  %7112 = vmatpush1.bf16.msra.mxu0 %v6966
  %7113 = vmatprep.subr.bf16.mxu0 %v6971
  %7114 = vmatpush1.bf16.msra.mxu0 %v6970
  %7115 = vmatprep.subr.bf16.mxu0 %v6975
  %7116 = vmatpush1.bf16.msra.mxu0 %v6974
  %7117 = vmatprep.subr.bf16.mxu0 %v6979
  %7118 = vmatpush1.bf16.msra.mxu0 %v6978
  %7119 = vmatprep.subr.bf16.mxu0 %v6983
  %7120 = vmatpush1.bf16.msra.mxu0 %v6982
  %7121 = vmatprep.mubr.bf16.mxu0 %v6725
  %7122 = vmatmul.mubr.bf16.gmra.mrb[0].mxu0 %v6724
  %v7123 = vpop.f32.mrb[0].mxu0
  %v7124 = vadd.f32 %v6712, %v7123
  %v7125 = vpop.f32.mrb[0].mxu0
  %v7126 = vadd.f32 %v6716, %v7125
  %v7127 = vpop.f32.mrb[0].mxu0
  %v7128 = vpop.f32.mrb[0].mxu0
  %7129 = vdwg.mxu0
  %v7130 = vxor.u32 %v7083, 2147483648
  %v7131 = vmul.f32 %v7130, 1.442695
  %v7132 = vpow.pop %v7131
  %v7133 = vadd.f32 %v7132, 1.0
  %v7134 = vrcp.pop %v7133
  %v7135 = vmul.f32 1.0, %v7134
  %v7136 = vxor.u32 %v7085, 2147483648
  %v7137 = vmul.f32 %v7136, 1.442695
  %v7138 = vpow.pop %v7137
  %v7139 = vadd.f32 %v7138, 1.0
  %v7140 = vrcp.pop %v7139
  %v7141 = vmul.f32 1.0, %v7140
  %v7142 = vtanh.pop %v7124
  %v7143 = vxor.u32 %v7126, 2147483648
  %v7144 = vmul.f32 %v7143, 1.442695
  %v7145 = vpow.pop %v7144
  %v7146 = vadd.f32 %v7145, 1.0
  %v7147 = vrcp.pop %v7146
  %v7148 = vmul.f32 1.0, %v7147
  %v7149 = vld [vmem:[#allocation5] sm:$0xff]
  %v7150 = vmul.f32 %v7141, %v7149
  %v7151 = vmul.f32 %v7135, %v7142
  %v7152 = vadd.f32 %v7150, %v7151
  %v7153 = vtanh.pop %v7152
  %v7154 = vmul.f32 %v7148, %v7153
  %7155 = vst [vmem:[#allocation5] sm:$0xff] %v7152
  %7156 = vst [vmem:[#allocation6] sm:$0xff] %v7154
  %v7157 = vpack.c.bf16 %v7154, %v7154
  %7158 = vst [vmem:[#allocation3 + $0x4] sm:$0xf] %v7157
  // Predicated region
  $region38: #{lstm_regressor_pallas.1} parent=0 // pred_check
    %p7159 = pneg %p32
  $region39: #{lstm_regressor_pallas.1} parent=0 // pred_check_branch
    %7161 = sbr.rel (%p7159) target = $region41
  $region40: #{lstm_regressor_pallas.1} parent=0 // pred_region
    %v7162 = vld [vmem:[#allocation6] sm:$0xff]
    %v7163 = vld [vmem:[%s6] sm:$0x1]
    %v7165 = vlaneseq
    %v7166 = vshrl.u32 %v7165, 7
    %v7167 = vsub.s32 0, %v7166
    %v7168 = vrot.slane %v7163, %v7167
    %v7170 = vmul.f32 %v7162, %v7168
    %7171 = vadd.xlane.f32.xlu0 %v7170
    %v7172 = vpop.xlane.xlu0 %7171
    %v7173 = vld [vmem:[#allocation7] sm:$0x1]
    %v7175 = vlaneseq
    %v7176 = vshrl.u32 %v7175, 7
    %v7177 = vsub.s32 0, %v7176
    %v7178 = vrot.slane %v7173, %v7177
    %v7180 = vadd.f32 %v7172, %v7178
    %vm7181 = vcmask 7168
    %7182 = vst.msk [vmem:[%s8] sm:$0xff] %vm7181, %v7180
  $region41: #{lstm_regressor_pallas.1} parent=0 // pred_fallthru
    _
  // Predicated region
  $region42: #{lstm_regressor_pallas.1} parent=0 // pred_check
    _
  $region43: #{lstm_regressor_pallas.1} parent=0 // pred_check_branch
    %7184 = sbr.rel (0) target = $region45
  $region44: #{lstm_regressor_pallas.1} parent=0 // pred_region
    _
  $region45: #{lstm_regressor_pallas.1} parent=0 // pred_fallthru
    _
  // Predicated region
  $region46: #{lstm_regressor_pallas.1} parent=0 // pred_check
    _
  $region47: #{lstm_regressor_pallas.1} parent=0 // pred_check_branch
    %7186 = sbr.rel (0) target = $region49
  $region48: #{lstm_regressor_pallas.1} parent=0 // pred_region
    _
  $region49: #{lstm_regressor_pallas.1} parent=0 // pred_fallthru
    _

</llo_original>
